<compile_context>
chip_gen: v5e
topology: v5e:2x2
jax: 0.10.0
libtpu: 0.0.40
codegen_flags: <defaults>
</compile_context>

<pallas_src>
import functools

import jax
import jax.numpy as jnp
from jax import lax
from jax.experimental import pallas as pl
from jax.experimental.pallas import tpu as pltpu


def _round_up(x, m):
    return (x + m - 1) // m * m


def _sigmoid_via_tanh(x):
    # sigmoid(x) == 0.5*tanh(0.5*x) + 0.5 : exact, single EUP op (vs exp +
    # reciprocal) — the EUP slot sits on the serial LSTM critical path.
    return 0.5 * jnp.tanh(0.5 * x) + 0.5


def wave_lstm_kernel(dilations, layer_dim, hp, filters, bt, chunk_t,
                     x_ref, c0w_ref, c0b_ref, tw_ref, tb_ref, sw_ref, sb_ref,
                     c1w_ref, c1b_ref, bn_s_ref, bn_b_ref, *rest):
    # rest = [w_ih_0, w_hh_0, b_0, ..., out_ref, act_ping, act_pong]
    n_lstm = 3 * layer_dim
    lstm_refs = rest[:n_lstm]
    out_ref = rest[n_lstm]
    act_refs = (rest[n_lstm + 1], rest[n_lstm + 2])

    F, HP = filters, hp
    N = x_ref.shape[1]                      # = L * bt (time-major flat rows)
    L = N // bt
    AW = act_refs[0].shape[-1]              # lane-padded activation width

    def shift_t(v, s_t):
        """y[row of time t] = v[row of time t + s_t], zero padded.

        Time-major flat layout (row = t*bt + b): a shift of s_t timesteps is a
        shift of s_t*bt rows; bt % 8 == 0 keeps it sublane-tile aligned and
        prevents cross-batch leakage."""
        if s_t == 0:
            return v
        s = s_t * bt
        c = v.shape[-1]
        z = jnp.zeros((abs(s), c), v.dtype)
        if s > 0:
            return jnp.concatenate([v[s:, :], z], axis=0)
        return jnp.concatenate([z, v[:N + s, :]], axis=0)

    def conv3(parts, taps, b):
        """3-tap dilated 'same' conv = three accumulated MXU matmuls; no
        (N, 3C) concat temp is ever materialized."""
        acc = jnp.dot(parts[0], taps[0], preferred_element_type=jnp.float32)
        acc = acc + jnp.dot(parts[1], taps[1], preferred_element_type=jnp.float32)
        acc = acc + jnp.dot(parts[2], taps[2], preferred_element_type=jnp.float32)
        return acc + b

    # ---- conv1d_0: input_dim -> filters, k=3, padding=1 --------------------
    xb = x_ref[0].astype(jnp.bfloat16)                          # (N, Cin)
    x = conv3((shift_t(xb, -1), xb, shift_t(xb, 1)),
              (c0w_ref[0], c0w_ref[1], c0w_ref[2]), c0b_ref[...])   # (N, F) f32
    res_x = x

    # ---- dilated gated residual stack ---------------------------------------
    c1w = c1w_ref[...]                                          # (F, F) bf16
    c1b = c1b_ref[...]                                          # (1, F) f32
    for i, d in enumerate(dilations):
        xg = x.astype(jnp.bfloat16)
        parts = (shift_t(xg, -d), xg, shift_t(xg, d))           # shared by branches
        t_pre = conv3(parts, (tw_ref[i, 0], tw_ref[i, 1], tw_ref[i, 2]),
                      tb_ref[i])
        s_pre = conv3(parts, (sw_ref[i, 0], sw_ref[i, 1], sw_ref[i, 2]),
                      sb_ref[i])
        g = jnp.tanh(t_pre) * _sigmoid_via_tanh(s_pre)          # no lane slicing
        x = jnp.dot(g.astype(jnp.bfloat16), c1w,
                    preferred_element_type=jnp.float32) + c1b   # 1x1 conv
        res_x = res_x + x

    # ---- post: BatchNorm1d (eval, running stats folded) + Dropout(0.1) ------
    # TODO(synk): training-mode batch-statistics BN / stochastic dropout not
    #             implemented; this reproduces module.eval() semantics.
    cur = res_x * bn_s_ref[...] + bn_b_ref[...]                 # (N, F)

    # Lane-pad the conv output once and park it in the first activation ref so
    # every LSTM layer reads an aligned lane-dense (N, AW) slab.
    if AW > F:
        cur = jnp.concatenate(
            [cur, jnp.zeros((N, AW - F), jnp.float32)], axis=-1)
    act_refs[0][...] = cur

    # ---- multi-layer LSTM (batch_first, zero initial state) -----------------
    rows = chunk_t * bt
    n_chunks = L // chunk_t
    for l in range(layer_dim):
        src = act_refs[l % 2]
        last = l == layer_dim - 1
        dst = None if last else act_refs[(l + 1) % 2]
        w_ih = lstm_refs[3 * l][...]            # (AW, 4*HP) bf16, gates [i|f|o|g]
        w_hh = lstm_refs[3 * l + 1][...]        # (HP, 4*HP) f32 (recurrent path)
        b = lstm_refs[3 * l + 2][...]           # (1, 4*HP)  f32

        def chunk_step(ci, carry, src=src, dst=dst, last=last,
                       w_ih=w_ih, w_hh=w_hh, b=b):
            h, c = carry                                        # (bt, HP) f32
            r0 = pl.multiple_of(ci * rows, rows)
            # Per-chunk input projection: no whole-sequence (N, 4*HP) scratch.
            xc = src[pl.ds(r0, rows), :]                        # aligned read
            pre = jnp.dot(xc.astype(jnp.bfloat16), w_ih,
                          preferred_element_type=jnp.float32) + b
            for j in range(chunk_t):                            # unrolled steps
                # Recurrent operand kept in f32 (tiny matmul; avoids compounding
                # bf16 rounding over L steps).  TODO(synk): keep w_hh resident
                # in the MXU (matmul_push_rhs/acc_lhs) across the chunk on
                # v5e/v6e to skip the per-step weight reload.
                gates = pre[j * bt:(j + 1) * bt, :] + jnp.dot(
                    h, w_hh, preferred_element_type=jnp.float32)  # (bt, 4*HP)
                sg = _sigmoid_via_tanh(gates[:, :3 * HP])       # i,f,o: aligned
                gg = jnp.tanh(gates[:, 3 * HP:])
                c = sg[:, HP:2 * HP] * c + sg[:, :HP] * gg
                h = sg[:, 2 * HP:3 * HP] * jnp.tanh(c)
                start = pl.multiple_of(ci * rows + j * bt, bt)
                if last:                      # lane-dense aligned (8,128) store
                    out_ref[0, pl.ds(start, bt), :] = h
                else:
                    dst[pl.ds(start, bt), :] = h
            return h, c

        zero = jnp.zeros((bt, HP), jnp.float32)
        lax.fori_loop(0, n_chunks, chunk_step, (zero, zero))


def wave_lstm_layer(x, params, *, kernel_size, dilations, hidden_dim, layer_dim,
                    block_b=None):
    """x: (B, input_dim, L) float32 (PyTorch NCL).  Returns (B, hidden_dim, L)."""
    B, Cin, L = x.shape
    F = params["conv0_b"].shape[-1]
    H = hidden_dim
    D = len(dilations)
    assert kernel_size == 3, "3-tap conv path assumes kernel_size == 3"
    assert max(dilations) < L, "dilation must be smaller than sequence length"
    assert layer_dim >= 1

    # Lane-padded widths: each LSTM gate gets its own 128-lane block; the
    # hidden sequence / output slab is lane-dense.
    HP = _round_up(H, 128)
    AW = max(HP, _round_up(F, 128))
    assert AW == HP, "activation lane width must equal padded hidden width"

    # block_b: batch rows per timestep inside the kernel slab.  Multiple of 8
    # (f32 sublane) so time-shifts, gate slices and per-step h stores stay tile
    # aligned.  Default folds the whole (padded) batch; on v7x pass
    # block_b = _round_up(-(-B // 2), 8) so both TensorCores get a grid block.
    if block_b is None:
        block_b = _round_up(B, 8)
    assert block_b % 8 == 0
    Bp = _round_up(B, block_b)
    nb = Bp // block_b
    N = L * block_b
    chunk_t = next(c for c in (8, 4, 2, 1) if L % c == 0)

    if Bp != B:    # zero-pad batch; padded rows never mix with real rows
        x = jnp.concatenate([x, jnp.zeros((Bp - B, Cin, L), x.dtype)], axis=0)

    # ---- time-major input slab per block: row = t*block_b + b_local ---------
    xt = jnp.transpose(x, (0, 2, 1))                            # (Bp, L, Cin)
    xt = (xt.reshape(nb, block_b, L, Cin)
            .transpose(0, 2, 1, 3)
            .reshape(nb, N, Cin))

    # ---- conv weights: tap-major (k, Cin, Cout); matmul operands bf16 -------
    c0w = params["conv0_w"].astype(jnp.bfloat16)                # (k, Cin, F)
    tw = params["tanh_w"].astype(jnp.bfloat16)                  # (D, k, F, F)
    sw = params["sigm_w"].astype(jnp.bfloat16)
    c1w = params["conv1_w"].astype(jnp.bfloat16)                # (F, F)

    # ---- LSTM: PyTorch [i,f,g,o] -> [i,f,o,g]; each gate padded to an HP-lane
    #      block, rows zero-padded to the activation / hidden width ----------
    def pack_gates(w, pad_rows):
        w = jnp.concatenate([w[:, :2 * H], w[:, 3 * H:], w[:, 2 * H:3 * H]],
                            axis=-1)
        rows = w.shape[0]
        out = jnp.zeros((pad_rows, 4 * HP), w.dtype)
        for k in range(4):
            out = out.at[:rows, k * HP:k * HP + H].set(w[:, k * H:(k + 1) * H])
        return out

    lstm_in = []
    for (w_ih, w_hh, b) in params["lstm"]:
        lstm_in += [pack_gates(w_ih, AW).astype(jnp.bfloat16),
                    pack_gates(w_hh, HP),          # f32 recurrent weights
                    pack_gates(b, 1)]

    inputs = [xt, c0w, params["conv0_b"], tw, params["tanh_b"], sw,
              params["sigm_b"], c1w, params["conv1_b"],
              params["bn_scale"], params["bn_shift"]] + lstm_in

    def full_spec(a):
        nd = a.ndim
        # TODO(synk): on v7x pass pipeline_mode=pl.Buffered(1) for these
        #             constant-index weight specs (no double-buffer needed).
        return pl.BlockSpec(a.shape, lambda bb, nd=nd: (0,) * nd)

    in_specs = ([pl.BlockSpec((1, N, Cin), lambda bb: (bb, 0, 0))]
                + [full_spec(a) for a in inputs[1:]])
    out_spec = pl.BlockSpec((1, N, AW), lambda bb: (bb, 0, 0))

    # ---- VMEM budget: raise the scoped limit only when the working set needs
    #      it (defaults: 16 MiB v5e / 32 MiB v6e+) ----------------------------
    weight_bytes = sum(int(a.size) * a.dtype.itemsize for a in inputs[1:])
    vmem_est = (2 * N * AW * 4                       # activation ping/pong
                + 2 * N * Cin * 4 + 2 * N * AW * 4   # double-buffered in/out
                + 2 * weight_bytes
                + 8 * N * F * 4)                     # conv-stack live values
    vmem_limit = None
    if vmem_est > 24 * 1024 * 1024:
        vmem_limit = min(int(vmem_est * 5 // 4), 100 * 1024 * 1024)

    # Advisory cost estimate so XLA schedules neighbors around the long call.
    flops = nb * (2 * N * Cin * F * 3
                  + D * (2 * 3 * 2 * N * F * F + 2 * N * F * F)
                  + layer_dim * (2 * N * AW * 4 * HP + 2 * N * HP * 4 * HP))
    transcendentals = nb * (2 * D * N * F + layer_dim * N * 5 * HP)
    bytes_accessed = int(xt.size) * 4 + nb * N * AW * 4 + weight_bytes
    cost = pl.CostEstimate(flops=int(flops),
                           transcendentals=int(transcendentals),
                           bytes_accessed=int(bytes_accessed))

    kernel = functools.partial(wave_lstm_kernel, tuple(dilations), layer_dim,
                               HP, F, block_b, chunk_t)

    out = pl.pallas_call(
        kernel,
        out_shape=jax.ShapeDtypeStruct((nb, N, AW), jnp.float32),
        grid=(nb,),
        in_specs=in_specs,
        out_specs=out_spec,
        scratch_shapes=[pltpu.VMEM((N, AW), jnp.float32),   # layer input (ping)
                        pltpu.VMEM((N, AW), jnp.float32)],  # layer input (pong)
        compiler_params=pltpu.CompilerParams(
            dimension_semantics=("parallel",),
            vmem_limit_bytes=vmem_limit),
        cost_estimate=cost,
    )(*inputs)

    # (nb, L*block_b, AW) time-major -> (B, hidden_dim, L); strip lane & batch
    # padding wrapper-side (free XLA layout plumbing).
    out = (out.reshape(nb, L, block_b, AW)
              .transpose(0, 2, 3, 1)
              .reshape(Bp, AW, L))
    return out[:B, :H, :]


def init_params(key, filters, kernel_size, dilation_depth, input_dim,
                hidden_dim, layer_dim):
    D, k, F, H = dilation_depth, kernel_size, filters, hidden_dim
    keys = iter(jax.random.split(key, 64))

    def rnd(shape, scale=0.1):
        return (scale * jax.random.normal(next(keys), shape)).astype(jnp.float32)

    p = dict(
        conv0_w=rnd((k, input_dim, F)),      # tap-major, (Cin, Cout) per tap
        conv0_b=rnd((1, F)),
        tanh_w=rnd((D, k, F, F)),
        tanh_b=rnd((D, 1, F)),
        sigm_w=rnd((D, k, F, F)),
        sigm_b=rnd((D, 1, F)),
        conv1_w=rnd((F, F)),                 # 1x1 conv as (Cin, Cout)
        conv1_b=rnd((1, F)),
    )
    # BatchNorm1d eval params: gamma/beta random, running stats at PyTorch init.
    gamma = 1.0 + rnd((1, F))
    beta = rnd((1, F))
    run_mean = jnp.zeros((1, F), jnp.float32)
    run_var = jnp.ones((1, F), jnp.float32)
    scale = gamma / jnp.sqrt(run_var + 1e-5)
    p["bn_scale"] = scale
    p["bn_shift"] = beta - run_mean * scale

    lstm = []
    for l in range(layer_dim):
        in_size = F if l == 0 else H
        w_ih = rnd((in_size, 4 * H))         # PyTorch gate order i, f, g, o
        w_hh = rnd((H, 4 * H))
        b = rnd((1, 4 * H))                  # b_ih + b_hh combined
        lstm.append((w_ih, w_hh, b))
    p["lstm"] = lstm
    return p


if __name__ == "__main__":
    # Module config (small, consistent with the forward pass).
    filters, kernel_size, dilation_depth = 8, 3, 3
    input_dim, hidden_dim, layer_dim = 4, 16, 2
    B, L = 2, 16

    key = jax.random.PRNGKey(0)
    kx, kp = jax.random.split(key)
    x = jax.random.normal(kx, (B, input_dim, L), dtype=jnp.float32)
    params = init_params(kp, filters, kernel_size, dilation_depth,
                         input_dim, hidden_dim, layer_dim)

    dilations = [2 ** i for i in range(dilation_depth)]
    out = wave_lstm_layer(x, params, kernel_size=kernel_size,
                          dilations=dilations, hidden_dim=hidden_dim,
                          layer_dim=layer_dim)
    out = jax.block_until_ready(out)
    assert out.shape == (B, hidden_dim, L), out.shape
    assert bool(jnp.all(jnp.isfinite(out)))
    print("KERNEL_OK")
</pallas_src>

<mosaic_0001>
module attributes {stable_mosaic.version = 11 : i64} {
  func.func @wave_lstm_kernel(%arg0: i32, %arg1: memref<1x128x4xf32, #tpu.memory_space<vmem>>, %arg2: memref<3x4x8xbf16, #tpu.memory_space<vmem>>, %arg3: memref<1x8xf32, #tpu.memory_space<vmem>>, %arg4: memref<3x3x8x8xbf16, #tpu.memory_space<vmem>>, %arg5: memref<3x1x8xf32, #tpu.memory_space<vmem>>, %arg6: memref<3x3x8x8xbf16, #tpu.memory_space<vmem>>, %arg7: memref<3x1x8xf32, #tpu.memory_space<vmem>>, %arg8: memref<8x8xbf16, #tpu.memory_space<vmem>>, %arg9: memref<1x8xf32, #tpu.memory_space<vmem>>, %arg10: memref<1x8xf32, #tpu.memory_space<vmem>>, %arg11: memref<1x8xf32, #tpu.memory_space<vmem>>, %arg12: memref<128x512xbf16, #tpu.memory_space<vmem>>, %arg13: memref<128x512xf32, #tpu.memory_space<vmem>>, %arg14: memref<1x512xf32, #tpu.memory_space<vmem>>, %arg15: memref<128x512xbf16, #tpu.memory_space<vmem>>, %arg16: memref<128x512xf32, #tpu.memory_space<vmem>>, %arg17: memref<1x512xf32, #tpu.memory_space<vmem>>, %arg18: memref<1x128x128xf32, #tpu.memory_space<vmem>>, %arg19: memref<128x128xf32, #tpu.memory_space<vmem>>, %arg20: memref<128x128xf32, #tpu.memory_space<vmem>>) attributes {dimension_semantics = [#tpu.dimension_semantics<parallel>], iteration_bounds = array<i64: 1>, scalar_prefetch = 0 : i64, scratch_operands = 2 : i64, tpu.core_type = #tpu.core_type<tc>, window_params = [{transform_indices = @transform_0, window_bounds = array<i64: 1, 128, 4>}, {pipeline_mode = #tpu.pipeline_mode<synchronous>, transform_indices = @transform_1, window_bounds = array<i64: 3, 4, 8>}, {pipeline_mode = #tpu.pipeline_mode<synchronous>, transform_indices = @transform_2, window_bounds = array<i64: 1, 8>}, {pipeline_mode = #tpu.pipeline_mode<synchronous>, transform_indices = @transform_3, window_bounds = array<i64: 3, 3, 8, 8>}, {pipeline_mode = #tpu.pipeline_mode<synchronous>, transform_indices = @transform_4, window_bounds = array<i64: 3, 1, 8>}, {pipeline_mode = #tpu.pipeline_mode<synchronous>, transform_indices = @transform_5, window_bounds = array<i64: 3, 3, 8, 8>}, {pipeline_mode = #tpu.pipeline_mode<synchronous>, transform_indices = @transform_6, window_bounds = array<i64: 3, 1, 8>}, {pipeline_mode = #tpu.pipeline_mode<synchronous>, transform_indices = @transform_7, window_bounds = array<i64: 8, 8>}, {pipeline_mode = #tpu.pipeline_mode<synchronous>, transform_indices = @transform_8, window_bounds = array<i64: 1, 8>}, {pipeline_mode = #tpu.pipeline_mode<synchronous>, transform_indices = @transform_9, window_bounds = array<i64: 1, 8>}, {pipeline_mode = #tpu.pipeline_mode<synchronous>, transform_indices = @transform_10, window_bounds = array<i64: 1, 8>}, {pipeline_mode = #tpu.pipeline_mode<synchronous>, transform_indices = @transform_11, window_bounds = array<i64: 128, 512>}, {pipeline_mode = #tpu.pipeline_mode<synchronous>, transform_indices = @transform_12, window_bounds = array<i64: 128, 512>}, {pipeline_mode = #tpu.pipeline_mode<synchronous>, transform_indices = @transform_13, window_bounds = array<i64: 1, 512>}, {pipeline_mode = #tpu.pipeline_mode<synchronous>, transform_indices = @transform_14, window_bounds = array<i64: 128, 512>}, {pipeline_mode = #tpu.pipeline_mode<synchronous>, transform_indices = @transform_15, window_bounds = array<i64: 128, 512>}, {pipeline_mode = #tpu.pipeline_mode<synchronous>, transform_indices = @transform_16, window_bounds = array<i64: 1, 512>}, {transform_indices = @transform_17, window_bounds = array<i64: 1, 128, 128>}]} {
    %c0 = arith.constant 0 : index
    %c0_0 = arith.constant 0 : index
    %c0_1 = arith.constant 0 : index
    %0 = vector.load %arg1[%c0, %c0_0, %c0_1] : memref<1x128x4xf32, #tpu.memory_space<vmem>>, vector<1x128x4xf32>
    %1 = vector.shape_cast %0 : vector<1x128x4xf32> to vector<128x4xf32>
    %2 = arith.truncf %1 : vector<128x4xf32> to vector<128x4xbf16>
    %cst = arith.constant 0.000000e+00 : bf16
    %3 = vector.broadcast %cst : bf16 to vector<8x4xbf16>
    %4 = vector.extract_strided_slice %2 {offsets = [0, 0], sizes = [120, 4], strides = [1, 1]} : vector<128x4xbf16> to vector<120x4xbf16>
    %5 = tpu.concatenate %3, %4 in 0 : vector<8x4xbf16>, vector<120x4xbf16> -> vector<128x4xbf16>
    %cst_2 = arith.constant 0.000000e+00 : bf16
    %6 = vector.broadcast %cst_2 : bf16 to vector<8x4xbf16>
    %7 = vector.extract_strided_slice %2 {offsets = [8, 0], sizes = [120, 4], strides = [1, 1]} : vector<128x4xbf16> to vector<120x4xbf16>
    %8 = tpu.concatenate %7, %6 in 0 : vector<120x4xbf16>, vector<8x4xbf16> -> vector<128x4xbf16>
    %c0_3 = arith.constant 0 : index
    %c0_4 = arith.constant 0 : index
    %c0_5 = arith.constant 0 : index
    %9 = vector.load %arg2[%c0_3, %c0_4, %c0_5] : memref<3x4x8xbf16, #tpu.memory_space<vmem>>, vector<1x4x8xbf16>
    %10 = vector.shape_cast %9 : vector<1x4x8xbf16> to vector<4x8xbf16>
    %c1 = arith.constant 1 : index
    %c0_6 = arith.constant 0 : index
    %c0_7 = arith.constant 0 : index
    %11 = vector.load %arg2[%c1, %c0_6, %c0_7] : memref<3x4x8xbf16, #tpu.memory_space<vmem>>, vector<1x4x8xbf16>
    %12 = vector.shape_cast %11 : vector<1x4x8xbf16> to vector<4x8xbf16>
    %c2 = arith.constant 2 : index
    %c0_8 = arith.constant 0 : index
    %c0_9 = arith.constant 0 : index
    %13 = vector.load %arg2[%c2, %c0_8, %c0_9] : memref<3x4x8xbf16, #tpu.memory_space<vmem>>, vector<1x4x8xbf16>
    %14 = vector.shape_cast %13 : vector<1x4x8xbf16> to vector<4x8xbf16>
    %c0_10 = arith.constant 0 : index
    %c0_11 = arith.constant 0 : index
    %15 = vector.load %arg3[%c0_10, %c0_11] : memref<1x8xf32, #tpu.memory_space<vmem>>, vector<1x8xf32>
    %cst_12 = arith.constant dense<0.000000e+00> : vector<128x8xf32>
    %16 = tpu.matmul %5, %10, %cst_12 {dimension_numbers = #tpu.dot_dimension_numbers<[1], [0], [0], [1], [0, 0, 1, 1], [], []>} : vector<128x4xbf16>, vector<4x8xbf16>, vector<128x8xf32> -> vector<128x8xf32>
    %cst_13 = arith.constant dense<0.000000e+00> : vector<128x8xf32>
    %17 = tpu.matmul %2, %12, %cst_13 {dimension_numbers = #tpu.dot_dimension_numbers<[1], [0], [0], [1], [0, 0, 1, 1], [], []>} : vector<128x4xbf16>, vector<4x8xbf16>, vector<128x8xf32> -> vector<128x8xf32>
    %18 = arith.addf %16, %17 : vector<128x8xf32>
    %cst_14 = arith.constant dense<0.000000e+00> : vector<128x8xf32>
    %19 = tpu.matmul %8, %14, %cst_14 {dimension_numbers = #tpu.dot_dimension_numbers<[1], [0], [0], [1], [0, 0, 1, 1], [], []>} : vector<128x4xbf16>, vector<4x8xbf16>, vector<128x8xf32> -> vector<128x8xf32>
    %20 = arith.addf %18, %19 : vector<128x8xf32>
    %21 = vector.broadcast %15 : vector<1x8xf32> to vector<128x8xf32>
    %22 = arith.addf %20, %21 : vector<128x8xf32>
    %c0_15 = arith.constant 0 : index
    %c0_16 = arith.constant 0 : index
    %23 = vector.load %arg8[%c0_15, %c0_16] : memref<8x8xbf16, #tpu.memory_space<vmem>>, vector<8x8xbf16>
    %c0_17 = arith.constant 0 : index
    %c0_18 = arith.constant 0 : index
    %24 = vector.load %arg9[%c0_17, %c0_18] : memref<1x8xf32, #tpu.memory_space<vmem>>, vector<1x8xf32>
    %25 = arith.truncf %22 : vector<128x8xf32> to vector<128x8xbf16>
    %cst_19 = arith.constant 0.000000e+00 : bf16
    %26 = vector.broadcast %cst_19 : bf16 to vector<8x8xbf16>
    %27 = vector.extract_strided_slice %25 {offsets = [0, 0], sizes = [120, 8], strides = [1, 1]} : vector<128x8xbf16> to vector<120x8xbf16>
    %28 = tpu.concatenate %26, %27 in 0 : vector<8x8xbf16>, vector<120x8xbf16> -> vector<128x8xbf16>
    %cst_20 = arith.constant 0.000000e+00 : bf16
    %29 = vector.broadcast %cst_20 : bf16 to vector<8x8xbf16>
    %30 = vector.extract_strided_slice %25 {offsets = [8, 0], sizes = [120, 8], strides = [1, 1]} : vector<128x8xbf16> to vector<120x8xbf16>
    %31 = tpu.concatenate %30, %29 in 0 : vector<120x8xbf16>, vector<8x8xbf16> -> vector<128x8xbf16>
    %c0_21 = arith.constant 0 : index
    %c0_22 = arith.constant 0 : index
    %c0_23 = arith.constant 0 : index
    %c0_24 = arith.constant 0 : index
    %32 = vector.load %arg4[%c0_21, %c0_22, %c0_23, %c0_24] : memref<3x3x8x8xbf16, #tpu.memory_space<vmem>>, vector<1x1x8x8xbf16>
    %33 = vector.shape_cast %32 : vector<1x1x8x8xbf16> to vector<8x8xbf16>
    %c0_25 = arith.constant 0 : index
    %c1_26 = arith.constant 1 : index
    %c0_27 = arith.constant 0 : index
    %c0_28 = arith.constant 0 : index
    %34 = vector.load %arg4[%c0_25, %c1_26, %c0_27, %c0_28] : memref<3x3x8x8xbf16, #tpu.memory_space<vmem>>, vector<1x1x8x8xbf16>
    %35 = vector.shape_cast %34 : vector<1x1x8x8xbf16> to vector<8x8xbf16>
    %c0_29 = arith.constant 0 : index
    %c2_30 = arith.constant 2 : index
    %c0_31 = arith.constant 0 : index
    %c0_32 = arith.constant 0 : index
    %36 = vector.load %arg4[%c0_29, %c2_30, %c0_31, %c0_32] : memref<3x3x8x8xbf16, #tpu.memory_space<vmem>>, vector<1x1x8x8xbf16>
    %37 = vector.shape_cast %36 : vector<1x1x8x8xbf16> to vector<8x8xbf16>
    %c0_33 = arith.constant 0 : index
    %c0_34 = arith.constant 0 : index
    %c0_35 = arith.constant 0 : index
    %38 = vector.load %arg5[%c0_33, %c0_34, %c0_35] : memref<3x1x8xf32, #tpu.memory_space<vmem>>, vector<1x1x8xf32>
    %39 = vector.shape_cast %38 : vector<1x1x8xf32> to vector<1x8xf32>
    %cst_36 = arith.constant dense<0.000000e+00> : vector<128x8xf32>
    %40 = tpu.matmul %28, %33, %cst_36 {dimension_numbers = #tpu.dot_dimension_numbers<[1], [0], [0], [1], [0, 0, 1, 1], [], []>} : vector<128x8xbf16>, vector<8x8xbf16>, vector<128x8xf32> -> vector<128x8xf32>
    %cst_37 = arith.constant dense<0.000000e+00> : vector<128x8xf32>
    %41 = tpu.matmul %25, %35, %cst_37 {dimension_numbers = #tpu.dot_dimension_numbers<[1], [0], [0], [1], [0, 0, 1, 1], [], []>} : vector<128x8xbf16>, vector<8x8xbf16>, vector<128x8xf32> -> vector<128x8xf32>
    %42 = arith.addf %40, %41 : vector<128x8xf32>
    %cst_38 = arith.constant dense<0.000000e+00> : vector<128x8xf32>
    %43 = tpu.matmul %31, %37, %cst_38 {dimension_numbers = #tpu.dot_dimension_numbers<[1], [0], [0], [1], [0, 0, 1, 1], [], []>} : vector<128x8xbf16>, vector<8x8xbf16>, vector<128x8xf32> -> vector<128x8xf32>
    %44 = arith.addf %42, %43 : vector<128x8xf32>
    %45 = vector.broadcast %39 : vector<1x8xf32> to vector<128x8xf32>
    %46 = arith.addf %44, %45 : vector<128x8xf32>
    %c0_39 = arith.constant 0 : index
    %c0_40 = arith.constant 0 : index
    %c0_41 = arith.constant 0 : index
    %c0_42 = arith.constant 0 : index
    %47 = vector.load %arg6[%c0_39, %c0_40, %c0_41, %c0_42] : memref<3x3x8x8xbf16, #tpu.memory_space<vmem>>, vector<1x1x8x8xbf16>
    %48 = vector.shape_cast %47 : vector<1x1x8x8xbf16> to vector<8x8xbf16>
    %c0_43 = arith.constant 0 : index
    %c1_44 = arith.constant 1 : index
    %c0_45 = arith.constant 0 : index
    %c0_46 = arith.constant 0 : index
    %49 = vector.load %arg6[%c0_43, %c1_44, %c0_45, %c0_46] : memref<3x3x8x8xbf16, #tpu.memory_space<vmem>>, vector<1x1x8x8xbf16>
    %50 = vector.shape_cast %49 : vector<1x1x8x8xbf16> to vector<8x8xbf16>
    %c0_47 = arith.constant 0 : index
    %c2_48 = arith.constant 2 : index
    %c0_49 = arith.constant 0 : index
    %c0_50 = arith.constant 0 : index
    %51 = vector.load %arg6[%c0_47, %c2_48, %c0_49, %c0_50] : memref<3x3x8x8xbf16, #tpu.memory_space<vmem>>, vector<1x1x8x8xbf16>
    %52 = vector.shape_cast %51 : vector<1x1x8x8xbf16> to vector<8x8xbf16>
    %c0_51 = arith.constant 0 : index
    %c0_52 = arith.constant 0 : index
    %c0_53 = arith.constant 0 : index
    %53 = vector.load %arg7[%c0_51, %c0_52, %c0_53] : memref<3x1x8xf32, #tpu.memory_space<vmem>>, vector<1x1x8xf32>
    %54 = vector.shape_cast %53 : vector<1x1x8xf32> to vector<1x8xf32>
    %cst_54 = arith.constant dense<0.000000e+00> : vector<128x8xf32>
    %55 = tpu.matmul %28, %48, %cst_54 {dimension_numbers = #tpu.dot_dimension_numbers<[1], [0], [0], [1], [0, 0, 1, 1], [], []>} : vector<128x8xbf16>, vector<8x8xbf16>, vector<128x8xf32> -> vector<128x8xf32>
    %cst_55 = arith.constant dense<0.000000e+00> : vector<128x8xf32>
    %56 = tpu.matmul %25, %50, %cst_55 {dimension_numbers = #tpu.dot_dimension_numbers<[1], [0], [0], [1], [0, 0, 1, 1], [], []>} : vector<128x8xbf16>, vector<8x8xbf16>, vector<128x8xf32> -> vector<128x8xf32>
    %57 = arith.addf %55, %56 : vector<128x8xf32>
    %cst_56 = arith.constant dense<0.000000e+00> : vector<128x8xf32>
    %58 = tpu.matmul %31, %52, %cst_56 {dimension_numbers = #tpu.dot_dimension_numbers<[1], [0], [0], [1], [0, 0, 1, 1], [], []>} : vector<128x8xbf16>, vector<8x8xbf16>, vector<128x8xf32> -> vector<128x8xf32>
    %59 = arith.addf %57, %58 : vector<128x8xf32>
    %60 = vector.broadcast %54 : vector<1x8xf32> to vector<128x8xf32>
    %61 = arith.addf %59, %60 : vector<128x8xf32>
    %62 = math.tanh %46 : vector<128x8xf32>
    %cst_57 = arith.constant 5.000000e-01 : f32
    %63 = vector.broadcast %cst_57 : f32 to vector<128x8xf32>
    %64 = arith.mulf %63, %61 : vector<128x8xf32>
    %65 = math.tanh %64 : vector<128x8xf32>
    %cst_58 = arith.constant 5.000000e-01 : f32
    %66 = vector.broadcast %cst_58 : f32 to vector<128x8xf32>
    %67 = arith.mulf %66, %65 : vector<128x8xf32>
    %cst_59 = arith.constant 5.000000e-01 : f32
    %68 = vector.broadcast %cst_59 : f32 to vector<128x8xf32>
    %69 = arith.addf %67, %68 : vector<128x8xf32>
    %70 = arith.mulf %62, %69 : vector<128x8xf32>
    %71 = arith.truncf %70 : vector<128x8xf32> to vector<128x8xbf16>
    %cst_60 = arith.constant dense<0.000000e+00> : vector<128x8xf32>
    %72 = tpu.matmul %71, %23, %cst_60 {dimension_numbers = #tpu.dot_dimension_numbers<[1], [0], [0], [1], [0, 0, 1, 1], [], []>} : vector<128x8xbf16>, vector<8x8xbf16>, vector<128x8xf32> -> vector<128x8xf32>
    %73 = vector.broadcast %24 : vector<1x8xf32> to vector<128x8xf32>
    %74 = arith.addf %72, %73 : vector<128x8xf32>
    %75 = arith.addf %22, %74 : vector<128x8xf32>
    %76 = arith.truncf %74 : vector<128x8xf32> to vector<128x8xbf16>
    %cst_61 = arith.constant 0.000000e+00 : bf16
    %77 = vector.broadcast %cst_61 : bf16 to vector<16x8xbf16>
    %78 = vector.extract_strided_slice %76 {offsets = [0, 0], sizes = [112, 8], strides = [1, 1]} : vector<128x8xbf16> to vector<112x8xbf16>
    %79 = tpu.concatenate %77, %78 in 0 : vector<16x8xbf16>, vector<112x8xbf16> -> vector<128x8xbf16>
    %cst_62 = arith.constant 0.000000e+00 : bf16
    %80 = vector.broadcast %cst_62 : bf16 to vector<16x8xbf16>
    %81 = vector.extract_strided_slice %76 {offsets = [16, 0], sizes = [112, 8], strides = [1, 1]} : vector<128x8xbf16> to vector<112x8xbf16>
    %82 = tpu.concatenate %81, %80 in 0 : vector<112x8xbf16>, vector<16x8xbf16> -> vector<128x8xbf16>
    %c1_63 = arith.constant 1 : index
    %c0_64 = arith.constant 0 : index
    %c0_65 = arith.constant 0 : index
    %c0_66 = arith.constant 0 : index
    %83 = vector.load %arg4[%c1_63, %c0_64, %c0_65, %c0_66] : memref<3x3x8x8xbf16, #tpu.memory_space<vmem>>, vector<1x1x8x8xbf16>
    %84 = vector.shape_cast %83 : vector<1x1x8x8xbf16> to vector<8x8xbf16>
    %c1_67 = arith.constant 1 : index
    %c1_68 = arith.constant 1 : index
    %c0_69 = arith.constant 0 : index
    %c0_70 = arith.constant 0 : index
    %85 = vector.load %arg4[%c1_67, %c1_68, %c0_69, %c0_70] : memref<3x3x8x8xbf16, #tpu.memory_space<vmem>>, vector<1x1x8x8xbf16>
    %86 = vector.shape_cast %85 : vector<1x1x8x8xbf16> to vector<8x8xbf16>
    %c1_71 = arith.constant 1 : index
    %c2_72 = arith.constant 2 : index
    %c0_73 = arith.constant 0 : index
    %c0_74 = arith.constant 0 : index
    %87 = vector.load %arg4[%c1_71, %c2_72, %c0_73, %c0_74] : memref<3x3x8x8xbf16, #tpu.memory_space<vmem>>, vector<1x1x8x8xbf16>
    %88 = vector.shape_cast %87 : vector<1x1x8x8xbf16> to vector<8x8xbf16>
    %c1_75 = arith.constant 1 : index
    %c0_76 = arith.constant 0 : index
    %c0_77 = arith.constant 0 : index
    %89 = vector.load %arg5[%c1_75, %c0_76, %c0_77] : memref<3x1x8xf32, #tpu.memory_space<vmem>>, vector<1x1x8xf32>
    %90 = vector.shape_cast %89 : vector<1x1x8xf32> to vector<1x8xf32>
    %cst_78 = arith.constant dense<0.000000e+00> : vector<128x8xf32>
    %91 = tpu.matmul %79, %84, %cst_78 {dimension_numbers = #tpu.dot_dimension_numbers<[1], [0], [0], [1], [0, 0, 1, 1], [], []>} : vector<128x8xbf16>, vector<8x8xbf16>, vector<128x8xf32> -> vector<128x8xf32>
    %cst_79 = arith.constant dense<0.000000e+00> : vector<128x8xf32>
    %92 = tpu.matmul %76, %86, %cst_79 {dimension_numbers = #tpu.dot_dimension_numbers<[1], [0], [0], [1], [0, 0, 1, 1], [], []>} : vector<128x8xbf16>, vector<8x8xbf16>, vector<128x8xf32> -> vector<128x8xf32>
    %93 = arith.addf %91, %92 : vector<128x8xf32>
    %cst_80 = arith.constant dense<0.000000e+00> : vector<128x8xf32>
    %94 = tpu.matmul %82, %88, %cst_80 {dimension_numbers = #tpu.dot_dimension_numbers<[1], [0], [0], [1], [0, 0, 1, 1], [], []>} : vector<128x8xbf16>, vector<8x8xbf16>, vector<128x8xf32> -> vector<128x8xf32>
    %95 = arith.addf %93, %94 : vector<128x8xf32>
    %96 = vector.broadcast %90 : vector<1x8xf32> to vector<128x8xf32>
    %97 = arith.addf %95, %96 : vector<128x8xf32>
    %c1_81 = arith.constant 1 : index
    %c0_82 = arith.constant 0 : index
    %c0_83 = arith.constant 0 : index
    %c0_84 = arith.constant 0 : index
    %98 = vector.load %arg6[%c1_81, %c0_82, %c0_83, %c0_84] : memref<3x3x8x8xbf16, #tpu.memory_space<vmem>>, vector<1x1x8x8xbf16>
    %99 = vector.shape_cast %98 : vector<1x1x8x8xbf16> to vector<8x8xbf16>
    %c1_85 = arith.constant 1 : index
    %c1_86 = arith.constant 1 : index
    %c0_87 = arith.constant 0 : index
    %c0_88 = arith.constant 0 : index
    %100 = vector.load %arg6[%c1_85, %c1_86, %c0_87, %c0_88] : memref<3x3x8x8xbf16, #tpu.memory_space<vmem>>, vector<1x1x8x8xbf16>
    %101 = vector.shape_cast %100 : vector<1x1x8x8xbf16> to vector<8x8xbf16>
    %c1_89 = arith.constant 1 : index
    %c2_90 = arith.constant 2 : index
    %c0_91 = arith.constant 0 : index
    %c0_92 = arith.constant 0 : index
    %102 = vector.load %arg6[%c1_89, %c2_90, %c0_91, %c0_92] : memref<3x3x8x8xbf16, #tpu.memory_space<vmem>>, vector<1x1x8x8xbf16>
    %103 = vector.shape_cast %102 : vector<1x1x8x8xbf16> to vector<8x8xbf16>
    %c1_93 = arith.constant 1 : index
    %c0_94 = arith.constant 0 : index
    %c0_95 = arith.constant 0 : index
    %104 = vector.load %arg7[%c1_93, %c0_94, %c0_95] : memref<3x1x8xf32, #tpu.memory_space<vmem>>, vector<1x1x8xf32>
    %105 = vector.shape_cast %104 : vector<1x1x8xf32> to vector<1x8xf32>
    %cst_96 = arith.constant dense<0.000000e+00> : vector<128x8xf32>
    %106 = tpu.matmul %79, %99, %cst_96 {dimension_numbers = #tpu.dot_dimension_numbers<[1], [0], [0], [1], [0, 0, 1, 1], [], []>} : vector<128x8xbf16>, vector<8x8xbf16>, vector<128x8xf32> -> vector<128x8xf32>
    %cst_97 = arith.constant dense<0.000000e+00> : vector<128x8xf32>
    %107 = tpu.matmul %76, %101, %cst_97 {dimension_numbers = #tpu.dot_dimension_numbers<[1], [0], [0], [1], [0, 0, 1, 1], [], []>} : vector<128x8xbf16>, vector<8x8xbf16>, vector<128x8xf32> -> vector<128x8xf32>
    %108 = arith.addf %106, %107 : vector<128x8xf32>
    %cst_98 = arith.constant dense<0.000000e+00> : vector<128x8xf32>
    %109 = tpu.matmul %82, %103, %cst_98 {dimension_numbers = #tpu.dot_dimension_numbers<[1], [0], [0], [1], [0, 0, 1, 1], [], []>} : vector<128x8xbf16>, vector<8x8xbf16>, vector<128x8xf32> -> vector<128x8xf32>
    %110 = arith.addf %108, %109 : vector<128x8xf32>
    %111 = vector.broadcast %105 : vector<1x8xf32> to vector<128x8xf32>
    %112 = arith.addf %110, %111 : vector<128x8xf32>
    %113 = math.tanh %97 : vector<128x8xf32>
    %cst_99 = arith.constant 5.000000e-01 : f32
    %114 = vector.broadcast %cst_99 : f32 to vector<128x8xf32>
    %115 = arith.mulf %114, %112 : vector<128x8xf32>
    %116 = math.tanh %115 : vector<128x8xf32>
    %cst_100 = arith.constant 5.000000e-01 : f32
    %117 = vector.broadcast %cst_100 : f32 to vector<128x8xf32>
    %118 = arith.mulf %117, %116 : vector<128x8xf32>
    %cst_101 = arith.constant 5.000000e-01 : f32
    %119 = vector.broadcast %cst_101 : f32 to vector<128x8xf32>
    %120 = arith.addf %118, %119 : vector<128x8xf32>
    %121 = arith.mulf %113, %120 : vector<128x8xf32>
    %122 = arith.truncf %121 : vector<128x8xf32> to vector<128x8xbf16>
    %cst_102 = arith.constant dense<0.000000e+00> : vector<128x8xf32>
    %123 = tpu.matmul %122, %23, %cst_102 {dimension_numbers = #tpu.dot_dimension_numbers<[1], [0], [0], [1], [0, 0, 1, 1], [], []>} : vector<128x8xbf16>, vector<8x8xbf16>, vector<128x8xf32> -> vector<128x8xf32>
    %124 = vector.broadcast %24 : vector<1x8xf32> to vector<128x8xf32>
    %125 = arith.addf %123, %124 : vector<128x8xf32>
    %126 = arith.addf %75, %125 : vector<128x8xf32>
    %127 = arith.truncf %125 : vector<128x8xf32> to vector<128x8xbf16>
    %cst_103 = arith.constant 0.000000e+00 : bf16
    %128 = vector.broadcast %cst_103 : bf16 to vector<32x8xbf16>
    %129 = vector.extract_strided_slice %127 {offsets = [0, 0], sizes = [96, 8], strides = [1, 1]} : vector<128x8xbf16> to vector<96x8xbf16>
    %130 = tpu.concatenate %128, %129 in 0 : vector<32x8xbf16>, vector<96x8xbf16> -> vector<128x8xbf16>
    %cst_104 = arith.constant 0.000000e+00 : bf16
    %131 = vector.broadcast %cst_104 : bf16 to vector<32x8xbf16>
    %132 = vector.extract_strided_slice %127 {offsets = [32, 0], sizes = [96, 8], strides = [1, 1]} : vector<128x8xbf16> to vector<96x8xbf16>
    %133 = tpu.concatenate %132, %131 in 0 : vector<96x8xbf16>, vector<32x8xbf16> -> vector<128x8xbf16>
    %c2_105 = arith.constant 2 : index
    %c0_106 = arith.constant 0 : index
    %c0_107 = arith.constant 0 : index
    %c0_108 = arith.constant 0 : index
    %134 = vector.load %arg4[%c2_105, %c0_106, %c0_107, %c0_108] : memref<3x3x8x8xbf16, #tpu.memory_space<vmem>>, vector<1x1x8x8xbf16>
    %135 = vector.shape_cast %134 : vector<1x1x8x8xbf16> to vector<8x8xbf16>
    %c2_109 = arith.constant 2 : index
    %c1_110 = arith.constant 1 : index
    %c0_111 = arith.constant 0 : index
    %c0_112 = arith.constant 0 : index
    %136 = vector.load %arg4[%c2_109, %c1_110, %c0_111, %c0_112] : memref<3x3x8x8xbf16, #tpu.memory_space<vmem>>, vector<1x1x8x8xbf16>
    %137 = vector.shape_cast %136 : vector<1x1x8x8xbf16> to vector<8x8xbf16>
    %c2_113 = arith.constant 2 : index
    %c2_114 = arith.constant 2 : index
    %c0_115 = arith.constant 0 : index
    %c0_116 = arith.constant 0 : index
    %138 = vector.load %arg4[%c2_113, %c2_114, %c0_115, %c0_116] : memref<3x3x8x8xbf16, #tpu.memory_space<vmem>>, vector<1x1x8x8xbf16>
    %139 = vector.shape_cast %138 : vector<1x1x8x8xbf16> to vector<8x8xbf16>
    %c2_117 = arith.constant 2 : index
    %c0_118 = arith.constant 0 : index
    %c0_119 = arith.constant 0 : index
    %140 = vector.load %arg5[%c2_117, %c0_118, %c0_119] : memref<3x1x8xf32, #tpu.memory_space<vmem>>, vector<1x1x8xf32>
    %141 = vector.shape_cast %140 : vector<1x1x8xf32> to vector<1x8xf32>
    %cst_120 = arith.constant dense<0.000000e+00> : vector<128x8xf32>
    %142 = tpu.matmul %130, %135, %cst_120 {dimension_numbers = #tpu.dot_dimension_numbers<[1], [0], [0], [1], [0, 0, 1, 1], [], []>} : vector<128x8xbf16>, vector<8x8xbf16>, vector<128x8xf32> -> vector<128x8xf32>
    %cst_121 = arith.constant dense<0.000000e+00> : vector<128x8xf32>
    %143 = tpu.matmul %127, %137, %cst_121 {dimension_numbers = #tpu.dot_dimension_numbers<[1], [0], [0], [1], [0, 0, 1, 1], [], []>} : vector<128x8xbf16>, vector<8x8xbf16>, vector<128x8xf32> -> vector<128x8xf32>
    %144 = arith.addf %142, %143 : vector<128x8xf32>
    %cst_122 = arith.constant dense<0.000000e+00> : vector<128x8xf32>
    %145 = tpu.matmul %133, %139, %cst_122 {dimension_numbers = #tpu.dot_dimension_numbers<[1], [0], [0], [1], [0, 0, 1, 1], [], []>} : vector<128x8xbf16>, vector<8x8xbf16>, vector<128x8xf32> -> vector<128x8xf32>
    %146 = arith.addf %144, %145 : vector<128x8xf32>
    %147 = vector.broadcast %141 : vector<1x8xf32> to vector<128x8xf32>
    %148 = arith.addf %146, %147 : vector<128x8xf32>
    %c2_123 = arith.constant 2 : index
    %c0_124 = arith.constant 0 : index
    %c0_125 = arith.constant 0 : index
    %c0_126 = arith.constant 0 : index
    %149 = vector.load %arg6[%c2_123, %c0_124, %c0_125, %c0_126] : memref<3x3x8x8xbf16, #tpu.memory_space<vmem>>, vector<1x1x8x8xbf16>
    %150 = vector.shape_cast %149 : vector<1x1x8x8xbf16> to vector<8x8xbf16>
    %c2_127 = arith.constant 2 : index
    %c1_128 = arith.constant 1 : index
    %c0_129 = arith.constant 0 : index
    %c0_130 = arith.constant 0 : index
    %151 = vector.load %arg6[%c2_127, %c1_128, %c0_129, %c0_130] : memref<3x3x8x8xbf16, #tpu.memory_space<vmem>>, vector<1x1x8x8xbf16>
    %152 = vector.shape_cast %151 : vector<1x1x8x8xbf16> to vector<8x8xbf16>
    %c2_131 = arith.constant 2 : index
    %c2_132 = arith.constant 2 : index
    %c0_133 = arith.constant 0 : index
    %c0_134 = arith.constant 0 : index
    %153 = vector.load %arg6[%c2_131, %c2_132, %c0_133, %c0_134] : memref<3x3x8x8xbf16, #tpu.memory_space<vmem>>, vector<1x1x8x8xbf16>
    %154 = vector.shape_cast %153 : vector<1x1x8x8xbf16> to vector<8x8xbf16>
    %c2_135 = arith.constant 2 : index
    %c0_136 = arith.constant 0 : index
    %c0_137 = arith.constant 0 : index
    %155 = vector.load %arg7[%c2_135, %c0_136, %c0_137] : memref<3x1x8xf32, #tpu.memory_space<vmem>>, vector<1x1x8xf32>
    %156 = vector.shape_cast %155 : vector<1x1x8xf32> to vector<1x8xf32>
    %cst_138 = arith.constant dense<0.000000e+00> : vector<128x8xf32>
    %157 = tpu.matmul %130, %150, %cst_138 {dimension_numbers = #tpu.dot_dimension_numbers<[1], [0], [0], [1], [0, 0, 1, 1], [], []>} : vector<128x8xbf16>, vector<8x8xbf16>, vector<128x8xf32> -> vector<128x8xf32>
    %cst_139 = arith.constant dense<0.000000e+00> : vector<128x8xf32>
    %158 = tpu.matmul %127, %152, %cst_139 {dimension_numbers = #tpu.dot_dimension_numbers<[1], [0], [0], [1], [0, 0, 1, 1], [], []>} : vector<128x8xbf16>, vector<8x8xbf16>, vector<128x8xf32> -> vector<128x8xf32>
    %159 = arith.addf %157, %158 : vector<128x8xf32>
    %cst_140 = arith.constant dense<0.000000e+00> : vector<128x8xf32>
    %160 = tpu.matmul %133, %154, %cst_140 {dimension_numbers = #tpu.dot_dimension_numbers<[1], [0], [0], [1], [0, 0, 1, 1], [], []>} : vector<128x8xbf16>, vector<8x8xbf16>, vector<128x8xf32> -> vector<128x8xf32>
    %161 = arith.addf %159, %160 : vector<128x8xf32>
    %162 = vector.broadcast %156 : vector<1x8xf32> to vector<128x8xf32>
    %163 = arith.addf %161, %162 : vector<128x8xf32>
    %164 = math.tanh %148 : vector<128x8xf32>
    %cst_141 = arith.constant 5.000000e-01 : f32
    %165 = vector.broadcast %cst_141 : f32 to vector<128x8xf32>
    %166 = arith.mulf %165, %163 : vector<128x8xf32>
    %167 = math.tanh %166 : vector<128x8xf32>
    %cst_142 = arith.constant 5.000000e-01 : f32
    %168 = vector.broadcast %cst_142 : f32 to vector<128x8xf32>
    %169 = arith.mulf %168, %167 : vector<128x8xf32>
    %cst_143 = arith.constant 5.000000e-01 : f32
    %170 = vector.broadcast %cst_143 : f32 to vector<128x8xf32>
    %171 = arith.addf %169, %170 : vector<128x8xf32>
    %172 = arith.mulf %164, %171 : vector<128x8xf32>
    %173 = arith.truncf %172 : vector<128x8xf32> to vector<128x8xbf16>
    %cst_144 = arith.constant dense<0.000000e+00> : vector<128x8xf32>
    %174 = tpu.matmul %173, %23, %cst_144 {dimension_numbers = #tpu.dot_dimension_numbers<[1], [0], [0], [1], [0, 0, 1, 1], [], []>} : vector<128x8xbf16>, vector<8x8xbf16>, vector<128x8xf32> -> vector<128x8xf32>
    %175 = vector.broadcast %24 : vector<1x8xf32> to vector<128x8xf32>
    %176 = arith.addf %174, %175 : vector<128x8xf32>
    %177 = arith.addf %126, %176 : vector<128x8xf32>
    %c0_145 = arith.constant 0 : index
    %c0_146 = arith.constant 0 : index
    %178 = vector.load %arg10[%c0_145, %c0_146] : memref<1x8xf32, #tpu.memory_space<vmem>>, vector<1x8xf32>
    %179 = vector.broadcast %178 : vector<1x8xf32> to vector<128x8xf32>
    %180 = arith.mulf %177, %179 : vector<128x8xf32>
    %c0_147 = arith.constant 0 : index
    %c0_148 = arith.constant 0 : index
    %181 = vector.load %arg11[%c0_147, %c0_148] : memref<1x8xf32, #tpu.memory_space<vmem>>, vector<1x8xf32>
    %182 = vector.broadcast %181 : vector<1x8xf32> to vector<128x8xf32>
    %183 = arith.addf %180, %182 : vector<128x8xf32>
    %cst_149 = arith.constant 0.000000e+00 : f32
    %184 = vector.broadcast %cst_149 : f32 to vector<128x120xf32>
    %185 = tpu.concatenate %183, %184 in 1 : vector<128x8xf32>, vector<128x120xf32> -> vector<128x128xf32>
    %c0_150 = arith.constant 0 : index
    %c0_151 = arith.constant 0 : index
    %186 = vector.load %arg19[%c0_150, %c0_151] : memref<128x128xf32, #tpu.memory_space<vmem>>, vector<128x128xf32>
    tpu.vector_store %arg19[%c0_150, %c0_151], %185 {strides = array<i32>} : memref<128x128xf32, #tpu.memory_space<vmem>>, vector<128x128xf32>,
    %c0_152 = arith.constant 0 : index
    %c0_153 = arith.constant 0 : index
    %187 = vector.load %arg12[%c0_152, %c0_153] : memref<128x512xbf16, #tpu.memory_space<vmem>>, vector<128x512xbf16>
    %c0_154 = arith.constant 0 : index
    %c0_155 = arith.constant 0 : index
    %188 = vector.load %arg13[%c0_154, %c0_155] : memref<128x512xf32, #tpu.memory_space<vmem>>, vector<128x512xf32>
    %c0_156 = arith.constant 0 : index
    %c0_157 = arith.constant 0 : index
    %189 = vector.load %arg14[%c0_156, %c0_157] : memref<1x512xf32, #tpu.memory_space<vmem>>, vector<1x512xf32>
    %cst_158 = arith.constant 0.000000e+00 : f32
    %190 = vector.broadcast %cst_158 : f32 to vector<8x128xf32>
    %c0_i32 = arith.constant 0 : i32
    %c2_i32 = arith.constant 2 : i32
    %191 = arith.addi %c0_i32, %c2_i32 : i32
    %c1_i32 = arith.constant 1 : i32
    %192:2 = scf.for %arg21 = %c0_i32 to %191 step %c1_i32 iter_args(%arg22 = %190, %arg23 = %190) -> (vector<8x128xf32>, vector<8x128xf32>)  : i32 {
      %c64_i32 = arith.constant 64 : i32
      %199 = arith.muli %arg21, %c64_i32 : i32
      %200 = tpu.assume_multiple %199, 64 : i32
      %201 = arith.index_cast %200 : i32 to index
      %c0_171 = arith.constant 0 : index
      %202 = vector.load %arg19[%201, %c0_171] : memref<128x128xf32, #tpu.memory_space<vmem>>, vector<64x128xf32>
      %203 = arith.truncf %202 : vector<64x128xf32> to vector<64x128xbf16>
      %cst_172 = arith.constant dense<0.000000e+00> : vector<64x512xf32>
      %204 = tpu.matmul %203, %187, %cst_172 {dimension_numbers = #tpu.dot_dimension_numbers<[1], [0], [0], [1], [0, 0, 1, 1], [], []>} : vector<64x128xbf16>, vector<128x512xbf16>, vector<64x512xf32> -> vector<64x512xf32>
      %205 = vector.broadcast %189 : vector<1x512xf32> to vector<64x512xf32>
      %206 = arith.addf %204, %205 : vector<64x512xf32>
      %207 = vector.extract_strided_slice %206 {offsets = [0, 0], sizes = [8, 512], strides = [1, 1]} : vector<64x512xf32> to vector<8x512xf32>
      %cst_173 = arith.constant dense<0.000000e+00> : vector<8x512xf32>
      %208 = tpu.matmul %arg22, %188, %cst_173 {dimension_numbers = #tpu.dot_dimension_numbers<[1], [0], [0], [1], [0, 0, 1, 1], [], []>} : vector<8x128xf32>, vector<128x512xf32>, vector<8x512xf32> -> vector<8x512xf32>
      %209 = arith.addf %207, %208 : vector<8x512xf32>
      %210 = vector.extract_strided_slice %209 {offsets = [0, 0], sizes = [8, 384], strides = [1, 1]} : vector<8x512xf32> to vector<8x384xf32>
      %cst_174 = arith.constant 5.000000e-01 : f32
      %211 = vector.broadcast %cst_174 : f32 to vector<8x384xf32>
      %212 = arith.mulf %211, %210 : vector<8x384xf32>
      %213 = math.tanh %212 : vector<8x384xf32>
      %cst_175 = arith.constant 5.000000e-01 : f32
      %214 = vector.broadcast %cst_175 : f32 to vector<8x384xf32>
      %215 = arith.mulf %214, %213 : vector<8x384xf32>
      %cst_176 = arith.constant 5.000000e-01 : f32
      %216 = vector.broadcast %cst_176 : f32 to vector<8x384xf32>
      %217 = arith.addf %215, %216 : vector<8x384xf32>
      %218 = vector.extract_strided_slice %209 {offsets = [0, 384], sizes = [8, 128], strides = [1, 1]} : vector<8x512xf32> to vector<8x128xf32>
      %219 = math.tanh %218 : vector<8x128xf32>
      %220 = vector.extract_strided_slice %217 {offsets = [0, 128], sizes = [8, 128], strides = [1, 1]} : vector<8x384xf32> to vector<8x128xf32>
      %221 = arith.mulf %220, %arg23 : vector<8x128xf32>
      %222 = vector.extract_strided_slice %217 {offsets = [0, 0], sizes = [8, 128], strides = [1, 1]} : vector<8x384xf32> to vector<8x128xf32>
      %223 = arith.mulf %222, %219 : vector<8x128xf32>
      %224 = arith.addf %221, %223 : vector<8x128xf32>
      %225 = vector.extract_strided_slice %217 {offsets = [0, 256], sizes = [8, 128], strides = [1, 1]} : vector<8x384xf32> to vector<8x128xf32>
      %226 = math.tanh %224 : vector<8x128xf32>
      %227 = arith.mulf %225, %226 : vector<8x128xf32>
      %c64_i32_177 = arith.constant 64 : i32
      %228 = arith.muli %arg21, %c64_i32_177 : i32
      %c0_i32_178 = arith.constant 0 : i32
      %229 = arith.addi %228, %c0_i32_178 : i32
      %230 = tpu.assume_multiple %229, 8 : i32
      %231 = arith.index_cast %230 : i32 to index
      %c0_179 = arith.constant 0 : index
      %232 = vector.load %arg20[%231, %c0_179] : memref<128x128xf32, #tpu.memory_space<vmem>>, vector<8x128xf32>
      tpu.vector_store %arg20[%231, %c0_179], %227 {strides = array<i32>} : memref<128x128xf32, #tpu.memory_space<vmem>>, vector<8x128xf32>,
      %233 = vector.extract_strided_slice %206 {offsets = [8, 0], sizes = [8, 512], strides = [1, 1]} : vector<64x512xf32> to vector<8x512xf32>
      %cst_180 = arith.constant dense<0.000000e+00> : vector<8x512xf32>
      %234 = tpu.matmul %227, %188, %cst_180 {dimension_numbers = #tpu.dot_dimension_numbers<[1], [0], [0], [1], [0, 0, 1, 1], [], []>} : vector<8x128xf32>, vector<128x512xf32>, vector<8x512xf32> -> vector<8x512xf32>
      %235 = arith.addf %233, %234 : vector<8x512xf32>
      %236 = vector.extract_strided_slice %235 {offsets = [0, 0], sizes = [8, 384], strides = [1, 1]} : vector<8x512xf32> to vector<8x384xf32>
      %cst_181 = arith.constant 5.000000e-01 : f32
      %237 = vector.broadcast %cst_181 : f32 to vector<8x384xf32>
      %238 = arith.mulf %237, %236 : vector<8x384xf32>
      %239 = math.tanh %238 : vector<8x384xf32>
      %cst_182 = arith.constant 5.000000e-01 : f32
      %240 = vector.broadcast %cst_182 : f32 to vector<8x384xf32>
      %241 = arith.mulf %240, %239 : vector<8x384xf32>
      %cst_183 = arith.constant 5.000000e-01 : f32
      %242 = vector.broadcast %cst_183 : f32 to vector<8x384xf32>
      %243 = arith.addf %241, %242 : vector<8x384xf32>
      %244 = vector.extract_strided_slice %235 {offsets = [0, 384], sizes = [8, 128], strides = [1, 1]} : vector<8x512xf32> to vector<8x128xf32>
      %245 = math.tanh %244 : vector<8x128xf32>
      %246 = vector.extract_strided_slice %243 {offsets = [0, 128], sizes = [8, 128], strides = [1, 1]} : vector<8x384xf32> to vector<8x128xf32>
      %247 = arith.mulf %246, %224 : vector<8x128xf32>
      %248 = vector.extract_strided_slice %243 {offsets = [0, 0], sizes = [8, 128], strides = [1, 1]} : vector<8x384xf32> to vector<8x128xf32>
      %249 = arith.mulf %248, %245 : vector<8x128xf32>
      %250 = arith.addf %247, %249 : vector<8x128xf32>
      %251 = vector.extract_strided_slice %243 {offsets = [0, 256], sizes = [8, 128], strides = [1, 1]} : vector<8x384xf32> to vector<8x128xf32>
      %252 = math.tanh %250 : vector<8x128xf32>
      %253 = arith.mulf %251, %252 : vector<8x128xf32>
      %c64_i32_184 = arith.constant 64 : i32
      %254 = arith.muli %arg21, %c64_i32_184 : i32
      %c8_i32 = arith.constant 8 : i32
      %255 = arith.addi %254, %c8_i32 : i32
      %256 = tpu.assume_multiple %255, 8 : i32
      %257 = arith.index_cast %256 : i32 to index
      %c0_185 = arith.constant 0 : index
      %258 = vector.load %arg20[%257, %c0_185] : memref<128x128xf32, #tpu.memory_space<vmem>>, vector<8x128xf32>
      tpu.vector_store %arg20[%257, %c0_185], %253 {strides = array<i32>} : memref<128x128xf32, #tpu.memory_space<vmem>>, vector<8x128xf32>,
      %259 = vector.extract_strided_slice %206 {offsets = [16, 0], sizes = [8, 512], strides = [1, 1]} : vector<64x512xf32> to vector<8x512xf32>
      %cst_186 = arith.constant dense<0.000000e+00> : vector<8x512xf32>
      %260 = tpu.matmul %253, %188, %cst_186 {dimension_numbers = #tpu.dot_dimension_numbers<[1], [0], [0], [1], [0, 0, 1, 1], [], []>} : vector<8x128xf32>, vector<128x512xf32>, vector<8x512xf32> -> vector<8x512xf32>
      %261 = arith.addf %259, %260 : vector<8x512xf32>
      %262 = vector.extract_strided_slice %261 {offsets = [0, 0], sizes = [8, 384], strides = [1, 1]} : vector<8x512xf32> to vector<8x384xf32>
      %cst_187 = arith.constant 5.000000e-01 : f32
      %263 = vector.broadcast %cst_187 : f32 to vector<8x384xf32>
      %264 = arith.mulf %263, %262 : vector<8x384xf32>
      %265 = math.tanh %264 : vector<8x384xf32>
      %cst_188 = arith.constant 5.000000e-01 : f32
      %266 = vector.broadcast %cst_188 : f32 to vector<8x384xf32>
      %267 = arith.mulf %266, %265 : vector<8x384xf32>
      %cst_189 = arith.constant 5.000000e-01 : f32
      %268 = vector.broadcast %cst_189 : f32 to vector<8x384xf32>
      %269 = arith.addf %267, %268 : vector<8x384xf32>
      %270 = vector.extract_strided_slice %261 {offsets = [0, 384], sizes = [8, 128], strides = [1, 1]} : vector<8x512xf32> to vector<8x128xf32>
      %271 = math.tanh %270 : vector<8x128xf32>
      %272 = vector.extract_strided_slice %269 {offsets = [0, 128], sizes = [8, 128], strides = [1, 1]} : vector<8x384xf32> to vector<8x128xf32>
      %273 = arith.mulf %272, %250 : vector<8x128xf32>
      %274 = vector.extract_strided_slice %269 {offsets = [0, 0], sizes = [8, 128], strides = [1, 1]} : vector<8x384xf32> to vector<8x128xf32>
      %275 = arith.mulf %274, %271 : vector<8x128xf32>
      %276 = arith.addf %273, %275 : vector<8x128xf32>
      %277 = vector.extract_strided_slice %269 {offsets = [0, 256], sizes = [8, 128], strides = [1, 1]} : vector<8x384xf32> to vector<8x128xf32>
      %278 = math.tanh %276 : vector<8x128xf32>
      %279 = arith.mulf %277, %278 : vector<8x128xf32>
      %c64_i32_190 = arith.constant 64 : i32
      %280 = arith.muli %arg21, %c64_i32_190 : i32
      %c16_i32 = arith.constant 16 : i32
      %281 = arith.addi %280, %c16_i32 : i32
      %282 = tpu.assume_multiple %281, 8 : i32
      %283 = arith.index_cast %282 : i32 to index
      %c0_191 = arith.constant 0 : index
      %284 = vector.load %arg20[%283, %c0_191] : memref<128x128xf32, #tpu.memory_space<vmem>>, vector<8x128xf32>
      tpu.vector_store %arg20[%283, %c0_191], %279 {strides = array<i32>} : memref<128x128xf32, #tpu.memory_space<vmem>>, vector<8x128xf32>,
      %285 = vector.extract_strided_slice %206 {offsets = [24, 0], sizes = [8, 512], strides = [1, 1]} : vector<64x512xf32> to vector<8x512xf32>
      %cst_192 = arith.constant dense<0.000000e+00> : vector<8x512xf32>
      %286 = tpu.matmul %279, %188, %cst_192 {dimension_numbers = #tpu.dot_dimension_numbers<[1], [0], [0], [1], [0, 0, 1, 1], [], []>} : vector<8x128xf32>, vector<128x512xf32>, vector<8x512xf32> -> vector<8x512xf32>
      %287 = arith.addf %285, %286 : vector<8x512xf32>
      %288 = vector.extract_strided_slice %287 {offsets = [0, 0], sizes = [8, 384], strides = [1, 1]} : vector<8x512xf32> to vector<8x384xf32>
      %cst_193 = arith.constant 5.000000e-01 : f32
      %289 = vector.broadcast %cst_193 : f32 to vector<8x384xf32>
      %290 = arith.mulf %289, %288 : vector<8x384xf32>
      %291 = math.tanh %290 : vector<8x384xf32>
      %cst_194 = arith.constant 5.000000e-01 : f32
      %292 = vector.broadcast %cst_194 : f32 to vector<8x384xf32>
      %293 = arith.mulf %292, %291 : vector<8x384xf32>
      %cst_195 = arith.constant 5.000000e-01 : f32
      %294 = vector.broadcast %cst_195 : f32 to vector<8x384xf32>
      %295 = arith.addf %293, %294 : vector<8x384xf32>
      %296 = vector.extract_strided_slice %287 {offsets = [0, 384], sizes = [8, 128], strides = [1, 1]} : vector<8x512xf32> to vector<8x128xf32>
      %297 = math.tanh %296 : vector<8x128xf32>
      %298 = vector.extract_strided_slice %295 {offsets = [0, 128], sizes = [8, 128], strides = [1, 1]} : vector<8x384xf32> to vector<8x128xf32>
      %299 = arith.mulf %298, %276 : vector<8x128xf32>
      %300 = vector.extract_strided_slice %295 {offsets = [0, 0], sizes = [8, 128], strides = [1, 1]} : vector<8x384xf32> to vector<8x128xf32>
      %301 = arith.mulf %300, %297 : vector<8x128xf32>
      %302 = arith.addf %299, %301 : vector<8x128xf32>
      %303 = vector.extract_strided_slice %295 {offsets = [0, 256], sizes = [8, 128], strides = [1, 1]} : vector<8x384xf32> to vector<8x128xf32>
      %304 = math.tanh %302 : vector<8x128xf32>
      %305 = arith.mulf %303, %304 : vector<8x128xf32>
      %c64_i32_196 = arith.constant 64 : i32
      %306 = arith.muli %arg21, %c64_i32_196 : i32
      %c24_i32 = arith.constant 24 : i32
      %307 = arith.addi %306, %c24_i32 : i32
      %308 = tpu.assume_multiple %307, 8 : i32
      %309 = arith.index_cast %308 : i32 to index
      %c0_197 = arith.constant 0 : index
      %310 = vector.load %arg20[%309, %c0_197] : memref<128x128xf32, #tpu.memory_space<vmem>>, vector<8x128xf32>
      tpu.vector_store %arg20[%309, %c0_197], %305 {strides = array<i32>} : memref<128x128xf32, #tpu.memory_space<vmem>>, vector<8x128xf32>,
      %311 = vector.extract_strided_slice %206 {offsets = [32, 0], sizes = [8, 512], strides = [1, 1]} : vector<64x512xf32> to vector<8x512xf32>
      %cst_198 = arith.constant dense<0.000000e+00> : vector<8x512xf32>
      %312 = tpu.matmul %305, %188, %cst_198 {dimension_numbers = #tpu.dot_dimension_numbers<[1], [0], [0], [1], [0, 0, 1, 1], [], []>} : vector<8x128xf32>, vector<128x512xf32>, vector<8x512xf32> -> vector<8x512xf32>
      %313 = arith.addf %311, %312 : vector<8x512xf32>
      %314 = vector.extract_strided_slice %313 {offsets = [0, 0], sizes = [8, 384], strides = [1, 1]} : vector<8x512xf32> to vector<8x384xf32>
      %cst_199 = arith.constant 5.000000e-01 : f32
      %315 = vector.broadcast %cst_199 : f32 to vector<8x384xf32>
      %316 = arith.mulf %315, %314 : vector<8x384xf32>
      %317 = math.tanh %316 : vector<8x384xf32>
      %cst_200 = arith.constant 5.000000e-01 : f32
      %318 = vector.broadcast %cst_200 : f32 to vector<8x384xf32>
      %319 = arith.mulf %318, %317 : vector<8x384xf32>
      %cst_201 = arith.constant 5.000000e-01 : f32
      %320 = vector.broadcast %cst_201 : f32 to vector<8x384xf32>
      %321 = arith.addf %319, %320 : vector<8x384xf32>
      %322 = vector.extract_strided_slice %313 {offsets = [0, 384], sizes = [8, 128], strides = [1, 1]} : vector<8x512xf32> to vector<8x128xf32>
      %323 = math.tanh %322 : vector<8x128xf32>
      %324 = vector.extract_strided_slice %321 {offsets = [0, 128], sizes = [8, 128], strides = [1, 1]} : vector<8x384xf32> to vector<8x128xf32>
      %325 = arith.mulf %324, %302 : vector<8x128xf32>
      %326 = vector.extract_strided_slice %321 {offsets = [0, 0], sizes = [8, 128], strides = [1, 1]} : vector<8x384xf32> to vector<8x128xf32>
      %327 = arith.mulf %326, %323 : vector<8x128xf32>
      %328 = arith.addf %325, %327 : vector<8x128xf32>
      %329 = vector.extract_strided_slice %321 {offsets = [0, 256], sizes = [8, 128], strides = [1, 1]} : vector<8x384xf32> to vector<8x128xf32>
      %330 = math.tanh %328 : vector<8x128xf32>
      %331 = arith.mulf %329, %330 : vector<8x128xf32>
      %c64_i32_202 = arith.constant 64 : i32
      %332 = arith.muli %arg21, %c64_i32_202 : i32
      %c32_i32 = arith.constant 32 : i32
      %333 = arith.addi %332, %c32_i32 : i32
      %334 = tpu.assume_multiple %333, 8 : i32
      %335 = arith.index_cast %334 : i32 to index
      %c0_203 = arith.constant 0 : index
      %336 = vector.load %arg20[%335, %c0_203] : memref<128x128xf32, #tpu.memory_space<vmem>>, vector<8x128xf32>
      tpu.vector_store %arg20[%335, %c0_203], %331 {strides = array<i32>} : memref<128x128xf32, #tpu.memory_space<vmem>>, vector<8x128xf32>,
      %337 = vector.extract_strided_slice %206 {offsets = [40, 0], sizes = [8, 512], strides = [1, 1]} : vector<64x512xf32> to vector<8x512xf32>
      %cst_204 = arith.constant dense<0.000000e+00> : vector<8x512xf32>
      %338 = tpu.matmul %331, %188, %cst_204 {dimension_numbers = #tpu.dot_dimension_numbers<[1], [0], [0], [1], [0, 0, 1, 1], [], []>} : vector<8x128xf32>, vector<128x512xf32>, vector<8x512xf32> -> vector<8x512xf32>
      %339 = arith.addf %337, %338 : vector<8x512xf32>
      %340 = vector.extract_strided_slice %339 {offsets = [0, 0], sizes = [8, 384], strides = [1, 1]} : vector<8x512xf32> to vector<8x384xf32>
      %cst_205 = arith.constant 5.000000e-01 : f32
      %341 = vector.broadcast %cst_205 : f32 to vector<8x384xf32>
      %342 = arith.mulf %341, %340 : vector<8x384xf32>
      %343 = math.tanh %342 : vector<8x384xf32>
      %cst_206 = arith.constant 5.000000e-01 : f32
      %344 = vector.broadcast %cst_206 : f32 to vector<8x384xf32>
      %345 = arith.mulf %344, %343 : vector<8x384xf32>
      %cst_207 = arith.constant 5.000000e-01 : f32
      %346 = vector.broadcast %cst_207 : f32 to vector<8x384xf32>
      %347 = arith.addf %345, %346 : vector<8x384xf32>
      %348 = vector.extract_strided_slice %339 {offsets = [0, 384], sizes = [8, 128], strides = [1, 1]} : vector<8x512xf32> to vector<8x128xf32>
      %349 = math.tanh %348 : vector<8x128xf32>
      %350 = vector.extract_strided_slice %347 {offsets = [0, 128], sizes = [8, 128], strides = [1, 1]} : vector<8x384xf32> to vector<8x128xf32>
      %351 = arith.mulf %350, %328 : vector<8x128xf32>
      %352 = vector.extract_strided_slice %347 {offsets = [0, 0], sizes = [8, 128], strides = [1, 1]} : vector<8x384xf32> to vector<8x128xf32>
      %353 = arith.mulf %352, %349 : vector<8x128xf32>
      %354 = arith.addf %351, %353 : vector<8x128xf32>
      %355 = vector.extract_strided_slice %347 {offsets = [0, 256], sizes = [8, 128], strides = [1, 1]} : vector<8x384xf32> to vector<8x128xf32>
      %356 = math.tanh %354 : vector<8x128xf32>
      %357 = arith.mulf %355, %356 : vector<8x128xf32>
      %c64_i32_208 = arith.constant 64 : i32
      %358 = arith.muli %arg21, %c64_i32_208 : i32
      %c40_i32 = arith.constant 40 : i32
      %359 = arith.addi %358, %c40_i32 : i32
      %360 = tpu.assume_multiple %359, 8 : i32
      %361 = arith.index_cast %360 : i32 to index
      %c0_209 = arith.constant 0 : index
      %362 = vector.load %arg20[%361, %c0_209] : memref<128x128xf32, #tpu.memory_space<vmem>>, vector<8x128xf32>
      tpu.vector_store %arg20[%361, %c0_209], %357 {strides = array<i32>} : memref<128x128xf32, #tpu.memory_space<vmem>>, vector<8x128xf32>,
      %363 = vector.extract_strided_slice %206 {offsets = [48, 0], sizes = [8, 512], strides = [1, 1]} : vector<64x512xf32> to vector<8x512xf32>
      %cst_210 = arith.constant dense<0.000000e+00> : vector<8x512xf32>
      %364 = tpu.matmul %357, %188, %cst_210 {dimension_numbers = #tpu.dot_dimension_numbers<[1], [0], [0], [1], [0, 0, 1, 1], [], []>} : vector<8x128xf32>, vector<128x512xf32>, vector<8x512xf32> -> vector<8x512xf32>
      %365 = arith.addf %363, %364 : vector<8x512xf32>
      %366 = vector.extract_strided_slice %365 {offsets = [0, 0], sizes = [8, 384], strides = [1, 1]} : vector<8x512xf32> to vector<8x384xf32>
      %cst_211 = arith.constant 5.000000e-01 : f32
      %367 = vector.broadcast %cst_211 : f32 to vector<8x384xf32>
      %368 = arith.mulf %367, %366 : vector<8x384xf32>
      %369 = math.tanh %368 : vector<8x384xf32>
      %cst_212 = arith.constant 5.000000e-01 : f32
      %370 = vector.broadcast %cst_212 : f32 to vector<8x384xf32>
      %371 = arith.mulf %370, %369 : vector<8x384xf32>
      %cst_213 = arith.constant 5.000000e-01 : f32
      %372 = vector.broadcast %cst_213 : f32 to vector<8x384xf32>
      %373 = arith.addf %371, %372 : vector<8x384xf32>
      %374 = vector.extract_strided_slice %365 {offsets = [0, 384], sizes = [8, 128], strides = [1, 1]} : vector<8x512xf32> to vector<8x128xf32>
      %375 = math.tanh %374 : vector<8x128xf32>
      %376 = vector.extract_strided_slice %373 {offsets = [0, 128], sizes = [8, 128], strides = [1, 1]} : vector<8x384xf32> to vector<8x128xf32>
      %377 = arith.mulf %376, %354 : vector<8x128xf32>
      %378 = vector.extract_strided_slice %373 {offsets = [0, 0], sizes = [8, 128], strides = [1, 1]} : vector<8x384xf32> to vector<8x128xf32>
      %379 = arith.mulf %378, %375 : vector<8x128xf32>
      %380 = arith.addf %377, %379 : vector<8x128xf32>
      %381 = vector.extract_strided_slice %373 {offsets = [0, 256], sizes = [8, 128], strides = [1, 1]} : vector<8x384xf32> to vector<8x128xf32>
      %382 = math.tanh %380 : vector<8x128xf32>
      %383 = arith.mulf %381, %382 : vector<8x128xf32>
      %c64_i32_214 = arith.constant 64 : i32
      %384 = arith.muli %arg21, %c64_i32_214 : i32
      %c48_i32 = arith.constant 48 : i32
      %385 = arith.addi %384, %c48_i32 : i32
      %386 = tpu.assume_multiple %385, 8 : i32
      %387 = arith.index_cast %386 : i32 to index
      %c0_215 = arith.constant 0 : index
      %388 = vector.load %arg20[%387, %c0_215] : memref<128x128xf32, #tpu.memory_space<vmem>>, vector<8x128xf32>
      tpu.vector_store %arg20[%387, %c0_215], %383 {strides = array<i32>} : memref<128x128xf32, #tpu.memory_space<vmem>>, vector<8x128xf32>,
      %389 = vector.extract_strided_slice %206 {offsets = [56, 0], sizes = [8, 512], strides = [1, 1]} : vector<64x512xf32> to vector<8x512xf32>
      %cst_216 = arith.constant dense<0.000000e+00> : vector<8x512xf32>
      %390 = tpu.matmul %383, %188, %cst_216 {dimension_numbers = #tpu.dot_dimension_numbers<[1], [0], [0], [1], [0, 0, 1, 1], [], []>} : vector<8x128xf32>, vector<128x512xf32>, vector<8x512xf32> -> vector<8x512xf32>
      %391 = arith.addf %389, %390 : vector<8x512xf32>
      %392 = vector.extract_strided_slice %391 {offsets = [0, 0], sizes = [8, 384], strides = [1, 1]} : vector<8x512xf32> to vector<8x384xf32>
      %cst_217 = arith.constant 5.000000e-01 : f32
      %393 = vector.broadcast %cst_217 : f32 to vector<8x384xf32>
      %394 = arith.mulf %393, %392 : vector<8x384xf32>
      %395 = math.tanh %394 : vector<8x384xf32>
      %cst_218 = arith.constant 5.000000e-01 : f32
      %396 = vector.broadcast %cst_218 : f32 to vector<8x384xf32>
      %397 = arith.mulf %396, %395 : vector<8x384xf32>
      %cst_219 = arith.constant 5.000000e-01 : f32
      %398 = vector.broadcast %cst_219 : f32 to vector<8x384xf32>
      %399 = arith.addf %397, %398 : vector<8x384xf32>
      %400 = vector.extract_strided_slice %391 {offsets = [0, 384], sizes = [8, 128], strides = [1, 1]} : vector<8x512xf32> to vector<8x128xf32>
      %401 = math.tanh %400 : vector<8x128xf32>
      %402 = vector.extract_strided_slice %399 {offsets = [0, 128], sizes = [8, 128], strides = [1, 1]} : vector<8x384xf32> to vector<8x128xf32>
      %403 = arith.mulf %402, %380 : vector<8x128xf32>
      %404 = vector.extract_strided_slice %399 {offsets = [0, 0], sizes = [8, 128], strides = [1, 1]} : vector<8x384xf32> to vector<8x128xf32>
      %405 = arith.mulf %404, %401 : vector<8x128xf32>
      %406 = arith.addf %403, %405 : vector<8x128xf32>
      %407 = vector.extract_strided_slice %399 {offsets = [0, 256], sizes = [8, 128], strides = [1, 1]} : vector<8x384xf32> to vector<8x128xf32>
      %408 = math.tanh %406 : vector<8x128xf32>
      %409 = arith.mulf %407, %408 : vector<8x128xf32>
      %c64_i32_220 = arith.constant 64 : i32
      %410 = arith.muli %arg21, %c64_i32_220 : i32
      %c56_i32 = arith.constant 56 : i32
      %411 = arith.addi %410, %c56_i32 : i32
      %412 = tpu.assume_multiple %411, 8 : i32
      %413 = arith.index_cast %412 : i32 to index
      %c0_221 = arith.constant 0 : index
      %414 = vector.load %arg20[%413, %c0_221] : memref<128x128xf32, #tpu.memory_space<vmem>>, vector<8x128xf32>
      tpu.vector_store %arg20[%413, %c0_221], %409 {strides = array<i32>} : memref<128x128xf32, #tpu.memory_space<vmem>>, vector<8x128xf32>,
      scf.yield %409, %406 : vector<8x128xf32>, vector<8x128xf32>
    }
    %c2_i32_159 = arith.constant 2 : i32
    %c0_160 = arith.constant 0 : index
    %c0_161 = arith.constant 0 : index
    %193 = vector.load %arg15[%c0_160, %c0_161] : memref<128x512xbf16, #tpu.memory_space<vmem>>, vector<128x512xbf16>
    %c0_162 = arith.constant 0 : index
    %c0_163 = arith.constant 0 : index
    %194 = vector.load %arg16[%c0_162, %c0_163] : memref<128x512xf32, #tpu.memory_space<vmem>>, vector<128x512xf32>
    %c0_164 = arith.constant 0 : index
    %c0_165 = arith.constant 0 : index
    %195 = vector.load %arg17[%c0_164, %c0_165] : memref<1x512xf32, #tpu.memory_space<vmem>>, vector<1x512xf32>
    %cst_166 = arith.constant 0.000000e+00 : f32
    %196 = vector.broadcast %cst_166 : f32 to vector<8x128xf32>
    %c0_i32_167 = arith.constant 0 : i32
    %c2_i32_168 = arith.constant 2 : i32
    %197 = arith.addi %c0_i32_167, %c2_i32_168 : i32
    %c1_i32_169 = arith.constant 1 : i32
    %198:2 = scf.for %arg21 = %c0_i32_167 to %197 step %c1_i32_169 iter_args(%arg22 = %196, %arg23 = %196) -> (vector<8x128xf32>, vector<8x128xf32>)  : i32 {
      %c64_i32 = arith.constant 64 : i32
      %199 = arith.muli %arg21, %c64_i32 : i32
      %200 = tpu.assume_multiple %199, 64 : i32
      %201 = arith.index_cast %200 : i32 to index
      %c0_171 = arith.constant 0 : index
      %202 = vector.load %arg20[%201, %c0_171] : memref<128x128xf32, #tpu.memory_space<vmem>>, vector<64x128xf32>
      %203 = arith.truncf %202 : vector<64x128xf32> to vector<64x128xbf16>
      %cst_172 = arith.constant dense<0.000000e+00> : vector<64x512xf32>
      %204 = tpu.matmul %203, %193, %cst_172 {dimension_numbers = #tpu.dot_dimension_numbers<[1], [0], [0], [1], [0, 0, 1, 1], [], []>} : vector<64x128xbf16>, vector<128x512xbf16>, vector<64x512xf32> -> vector<64x512xf32>
      %205 = vector.broadcast %195 : vector<1x512xf32> to vector<64x512xf32>
      %206 = arith.addf %204, %205 : vector<64x512xf32>
      %207 = vector.extract_strided_slice %206 {offsets = [0, 0], sizes = [8, 512], strides = [1, 1]} : vector<64x512xf32> to vector<8x512xf32>
      %cst_173 = arith.constant dense<0.000000e+00> : vector<8x512xf32>
      %208 = tpu.matmul %arg22, %194, %cst_173 {dimension_numbers = #tpu.dot_dimension_numbers<[1], [0], [0], [1], [0, 0, 1, 1], [], []>} : vector<8x128xf32>, vector<128x512xf32>, vector<8x512xf32> -> vector<8x512xf32>
      %209 = arith.addf %207, %208 : vector<8x512xf32>
      %210 = vector.extract_strided_slice %209 {offsets = [0, 0], sizes = [8, 384], strides = [1, 1]} : vector<8x512xf32> to vector<8x384xf32>
      %cst_174 = arith.constant 5.000000e-01 : f32
      %211 = vector.broadcast %cst_174 : f32 to vector<8x384xf32>
      %212 = arith.mulf %211, %210 : vector<8x384xf32>
      %213 = math.tanh %212 : vector<8x384xf32>
      %cst_175 = arith.constant 5.000000e-01 : f32
      %214 = vector.broadcast %cst_175 : f32 to vector<8x384xf32>
      %215 = arith.mulf %214, %213 : vector<8x384xf32>
      %cst_176 = arith.constant 5.000000e-01 : f32
      %216 = vector.broadcast %cst_176 : f32 to vector<8x384xf32>
      %217 = arith.addf %215, %216 : vector<8x384xf32>
      %218 = vector.extract_strided_slice %209 {offsets = [0, 384], sizes = [8, 128], strides = [1, 1]} : vector<8x512xf32> to vector<8x128xf32>
      %219 = math.tanh %218 : vector<8x128xf32>
      %220 = vector.extract_strided_slice %217 {offsets = [0, 128], sizes = [8, 128], strides = [1, 1]} : vector<8x384xf32> to vector<8x128xf32>
      %221 = arith.mulf %220, %arg23 : vector<8x128xf32>
      %222 = vector.extract_strided_slice %217 {offsets = [0, 0], sizes = [8, 128], strides = [1, 1]} : vector<8x384xf32> to vector<8x128xf32>
      %223 = arith.mulf %222, %219 : vector<8x128xf32>
      %224 = arith.addf %221, %223 : vector<8x128xf32>
      %225 = vector.extract_strided_slice %217 {offsets = [0, 256], sizes = [8, 128], strides = [1, 1]} : vector<8x384xf32> to vector<8x128xf32>
      %226 = math.tanh %224 : vector<8x128xf32>
      %227 = arith.mulf %225, %226 : vector<8x128xf32>
      %c64_i32_177 = arith.constant 64 : i32
      %228 = arith.muli %arg21, %c64_i32_177 : i32
      %c0_i32_178 = arith.constant 0 : i32
      %229 = arith.addi %228, %c0_i32_178 : i32
      %230 = tpu.assume_multiple %229, 8 : i32
      %c0_179 = arith.constant 0 : index
      %231 = arith.index_cast %230 : i32 to index
      %c0_180 = arith.constant 0 : index
      %232 = vector.load %arg18[%c0_179, %231, %c0_180] : memref<1x128x128xf32, #tpu.memory_space<vmem>>, vector<1x8x128xf32>
      %233 = vector.shape_cast %232 : vector<1x8x128xf32> to vector<8x128xf32>
      %234 = vector.shape_cast %227 : vector<8x128xf32> to vector<1x8x128xf32>
      tpu.vector_store %arg18[%c0_179, %231, %c0_180], %234 {strides = array<i32>} : memref<1x128x128xf32, #tpu.memory_space<vmem>>, vector<1x8x128xf32>,
      %235 = vector.extract_strided_slice %206 {offsets = [8, 0], sizes = [8, 512], strides = [1, 1]} : vector<64x512xf32> to vector<8x512xf32>
      %cst_181 = arith.constant dense<0.000000e+00> : vector<8x512xf32>
      %236 = tpu.matmul %227, %194, %cst_181 {dimension_numbers = #tpu.dot_dimension_numbers<[1], [0], [0], [1], [0, 0, 1, 1], [], []>} : vector<8x128xf32>, vector<128x512xf32>, vector<8x512xf32> -> vector<8x512xf32>
      %237 = arith.addf %235, %236 : vector<8x512xf32>
      %238 = vector.extract_strided_slice %237 {offsets = [0, 0], sizes = [8, 384], strides = [1, 1]} : vector<8x512xf32> to vector<8x384xf32>
      %cst_182 = arith.constant 5.000000e-01 : f32
      %239 = vector.broadcast %cst_182 : f32 to vector<8x384xf32>
      %240 = arith.mulf %239, %238 : vector<8x384xf32>
      %241 = math.tanh %240 : vector<8x384xf32>
      %cst_183 = arith.constant 5.000000e-01 : f32
      %242 = vector.broadcast %cst_183 : f32 to vector<8x384xf32>
      %243 = arith.mulf %242, %241 : vector<8x384xf32>
      %cst_184 = arith.constant 5.000000e-01 : f32
      %244 = vector.broadcast %cst_184 : f32 to vector<8x384xf32>
      %245 = arith.addf %243, %244 : vector<8x384xf32>
      %246 = vector.extract_strided_slice %237 {offsets = [0, 384], sizes = [8, 128], strides = [1, 1]} : vector<8x512xf32> to vector<8x128xf32>
      %247 = math.tanh %246 : vector<8x128xf32>
      %248 = vector.extract_strided_slice %245 {offsets = [0, 128], sizes = [8, 128], strides = [1, 1]} : vector<8x384xf32> to vector<8x128xf32>
      %249 = arith.mulf %248, %224 : vector<8x128xf32>
      %250 = vector.extract_strided_slice %245 {offsets = [0, 0], sizes = [8, 128], strides = [1, 1]} : vector<8x384xf32> to vector<8x128xf32>
      %251 = arith.mulf %250, %247 : vector<8x128xf32>
      %252 = arith.addf %249, %251 : vector<8x128xf32>
      %253 = vector.extract_strided_slice %245 {offsets = [0, 256], sizes = [8, 128], strides = [1, 1]} : vector<8x384xf32> to vector<8x128xf32>
      %254 = math.tanh %252 : vector<8x128xf32>
      %255 = arith.mulf %253, %254 : vector<8x128xf32>
      %c64_i32_185 = arith.constant 64 : i32
      %256 = arith.muli %arg21, %c64_i32_185 : i32
      %c8_i32 = arith.constant 8 : i32
      %257 = arith.addi %256, %c8_i32 : i32
      %258 = tpu.assume_multiple %257, 8 : i32
      %c0_186 = arith.constant 0 : index
      %259 = arith.index_cast %258 : i32 to index
      %c0_187 = arith.constant 0 : index
      %260 = vector.load %arg18[%c0_186, %259, %c0_187] : memref<1x128x128xf32, #tpu.memory_space<vmem>>, vector<1x8x128xf32>
      %261 = vector.shape_cast %260 : vector<1x8x128xf32> to vector<8x128xf32>
      %262 = vector.shape_cast %255 : vector<8x128xf32> to vector<1x8x128xf32>
      tpu.vector_store %arg18[%c0_186, %259, %c0_187], %262 {strides = array<i32>} : memref<1x128x128xf32, #tpu.memory_space<vmem>>, vector<1x8x128xf32>,
      %263 = vector.extract_strided_slice %206 {offsets = [16, 0], sizes = [8, 512], strides = [1, 1]} : vector<64x512xf32> to vector<8x512xf32>
      %cst_188 = arith.constant dense<0.000000e+00> : vector<8x512xf32>
      %264 = tpu.matmul %255, %194, %cst_188 {dimension_numbers = #tpu.dot_dimension_numbers<[1], [0], [0], [1], [0, 0, 1, 1], [], []>} : vector<8x128xf32>, vector<128x512xf32>, vector<8x512xf32> -> vector<8x512xf32>
      %265 = arith.addf %263, %264 : vector<8x512xf32>
      %266 = vector.extract_strided_slice %265 {offsets = [0, 0], sizes = [8, 384], strides = [1, 1]} : vector<8x512xf32> to vector<8x384xf32>
      %cst_189 = arith.constant 5.000000e-01 : f32
      %267 = vector.broadcast %cst_189 : f32 to vector<8x384xf32>
      %268 = arith.mulf %267, %266 : vector<8x384xf32>
      %269 = math.tanh %268 : vector<8x384xf32>
      %cst_190 = arith.constant 5.000000e-01 : f32
      %270 = vector.broadcast %cst_190 : f32 to vector<8x384xf32>
      %271 = arith.mulf %270, %269 : vector<8x384xf32>
      %cst_191 = arith.constant 5.000000e-01 : f32
      %272 = vector.broadcast %cst_191 : f32 to vector<8x384xf32>
      %273 = arith.addf %271, %272 : vector<8x384xf32>
      %274 = vector.extract_strided_slice %265 {offsets = [0, 384], sizes = [8, 128], strides = [1, 1]} : vector<8x512xf32> to vector<8x128xf32>
      %275 = math.tanh %274 : vector<8x128xf32>
      %276 = vector.extract_strided_slice %273 {offsets = [0, 128], sizes = [8, 128], strides = [1, 1]} : vector<8x384xf32> to vector<8x128xf32>
      %277 = arith.mulf %276, %252 : vector<8x128xf32>
      %278 = vector.extract_strided_slice %273 {offsets = [0, 0], sizes = [8, 128], strides = [1, 1]} : vector<8x384xf32> to vector<8x128xf32>
      %279 = arith.mulf %278, %275 : vector<8x128xf32>
      %280 = arith.addf %277, %279 : vector<8x128xf32>
      %281 = vector.extract_strided_slice %273 {offsets = [0, 256], sizes = [8, 128], strides = [1, 1]} : vector<8x384xf32> to vector<8x128xf32>
      %282 = math.tanh %280 : vector<8x128xf32>
      %283 = arith.mulf %281, %282 : vector<8x128xf32>
      %c64_i32_192 = arith.constant 64 : i32
      %284 = arith.muli %arg21, %c64_i32_192 : i32
      %c16_i32 = arith.constant 16 : i32
      %285 = arith.addi %284, %c16_i32 : i32
      %286 = tpu.assume_multiple %285, 8 : i32
      %c0_193 = arith.constant 0 : index
      %287 = arith.index_cast %286 : i32 to index
      %c0_194 = arith.constant 0 : index
      %288 = vector.load %arg18[%c0_193, %287, %c0_194] : memref<1x128x128xf32, #tpu.memory_space<vmem>>, vector<1x8x128xf32>
      %289 = vector.shape_cast %288 : vector<1x8x128xf32> to vector<8x128xf32>
      %290 = vector.shape_cast %283 : vector<8x128xf32> to vector<1x8x128xf32>
      tpu.vector_store %arg18[%c0_193, %287, %c0_194], %290 {strides = array<i32>} : memref<1x128x128xf32, #tpu.memory_space<vmem>>, vector<1x8x128xf32>,
      %291 = vector.extract_strided_slice %206 {offsets = [24, 0], sizes = [8, 512], strides = [1, 1]} : vector<64x512xf32> to vector<8x512xf32>
      %cst_195 = arith.constant dense<0.000000e+00> : vector<8x512xf32>
      %292 = tpu.matmul %283, %194, %cst_195 {dimension_numbers = #tpu.dot_dimension_numbers<[1], [0], [0], [1], [0, 0, 1, 1], [], []>} : vector<8x128xf32>, vector<128x512xf32>, vector<8x512xf32> -> vector<8x512xf32>
      %293 = arith.addf %291, %292 : vector<8x512xf32>
      %294 = vector.extract_strided_slice %293 {offsets = [0, 0], sizes = [8, 384], strides = [1, 1]} : vector<8x512xf32> to vector<8x384xf32>
      %cst_196 = arith.constant 5.000000e-01 : f32
      %295 = vector.broadcast %cst_196 : f32 to vector<8x384xf32>
      %296 = arith.mulf %295, %294 : vector<8x384xf32>
      %297 = math.tanh %296 : vector<8x384xf32>
      %cst_197 = arith.constant 5.000000e-01 : f32
      %298 = vector.broadcast %cst_197 : f32 to vector<8x384xf32>
      %299 = arith.mulf %298, %297 : vector<8x384xf32>
      %cst_198 = arith.constant 5.000000e-01 : f32
      %300 = vector.broadcast %cst_198 : f32 to vector<8x384xf32>
      %301 = arith.addf %299, %300 : vector<8x384xf32>
      %302 = vector.extract_strided_slice %293 {offsets = [0, 384], sizes = [8, 128], strides = [1, 1]} : vector<8x512xf32> to vector<8x128xf32>
      %303 = math.tanh %302 : vector<8x128xf32>
      %304 = vector.extract_strided_slice %301 {offsets = [0, 128], sizes = [8, 128], strides = [1, 1]} : vector<8x384xf32> to vector<8x128xf32>
      %305 = arith.mulf %304, %280 : vector<8x128xf32>
      %306 = vector.extract_strided_slice %301 {offsets = [0, 0], sizes = [8, 128], strides = [1, 1]} : vector<8x384xf32> to vector<8x128xf32>
      %307 = arith.mulf %306, %303 : vector<8x128xf32>
      %308 = arith.addf %305, %307 : vector<8x128xf32>
      %309 = vector.extract_strided_slice %301 {offsets = [0, 256], sizes = [8, 128], strides = [1, 1]} : vector<8x384xf32> to vector<8x128xf32>
      %310 = math.tanh %308 : vector<8x128xf32>
      %311 = arith.mulf %309, %310 : vector<8x128xf32>
      %c64_i32_199 = arith.constant 64 : i32
      %312 = arith.muli %arg21, %c64_i32_199 : i32
      %c24_i32 = arith.constant 24 : i32
      %313 = arith.addi %312, %c24_i32 : i32
      %314 = tpu.assume_multiple %313, 8 : i32
      %c0_200 = arith.constant 0 : index
      %315 = arith.index_cast %314 : i32 to index
      %c0_201 = arith.constant 0 : index
      %316 = vector.load %arg18[%c0_200, %315, %c0_201] : memref<1x128x128xf32, #tpu.memory_space<vmem>>, vector<1x8x128xf32>
      %317 = vector.shape_cast %316 : vector<1x8x128xf32> to vector<8x128xf32>
      %318 = vector.shape_cast %311 : vector<8x128xf32> to vector<1x8x128xf32>
      tpu.vector_store %arg18[%c0_200, %315, %c0_201], %318 {strides = array<i32>} : memref<1x128x128xf32, #tpu.memory_space<vmem>>, vector<1x8x128xf32>,
      %319 = vector.extract_strided_slice %206 {offsets = [32, 0], sizes = [8, 512], strides = [1, 1]} : vector<64x512xf32> to vector<8x512xf32>
      %cst_202 = arith.constant dense<0.000000e+00> : vector<8x512xf32>
      %320 = tpu.matmul %311, %194, %cst_202 {dimension_numbers = #tpu.dot_dimension_numbers<[1], [0], [0], [1], [0, 0, 1, 1], [], []>} : vector<8x128xf32>, vector<128x512xf32>, vector<8x512xf32> -> vector<8x512xf32>
      %321 = arith.addf %319, %320 : vector<8x512xf32>
      %322 = vector.extract_strided_slice %321 {offsets = [0, 0], sizes = [8, 384], strides = [1, 1]} : vector<8x512xf32> to vector<8x384xf32>
      %cst_203 = arith.constant 5.000000e-01 : f32
      %323 = vector.broadcast %cst_203 : f32 to vector<8x384xf32>
      %324 = arith.mulf %323, %322 : vector<8x384xf32>
      %325 = math.tanh %324 : vector<8x384xf32>
      %cst_204 = arith.constant 5.000000e-01 : f32
      %326 = vector.broadcast %cst_204 : f32 to vector<8x384xf32>
      %327 = arith.mulf %326, %325 : vector<8x384xf32>
      %cst_205 = arith.constant 5.000000e-01 : f32
      %328 = vector.broadcast %cst_205 : f32 to vector<8x384xf32>
      %329 = arith.addf %327, %328 : vector<8x384xf32>
      %330 = vector.extract_strided_slice %321 {offsets = [0, 384], sizes = [8, 128], strides = [1, 1]} : vector<8x512xf32> to vector<8x128xf32>
      %331 = math.tanh %330 : vector<8x128xf32>
      %332 = vector.extract_strided_slice %329 {offsets = [0, 128], sizes = [8, 128], strides = [1, 1]} : vector<8x384xf32> to vector<8x128xf32>
      %333 = arith.mulf %332, %308 : vector<8x128xf32>
      %334 = vector.extract_strided_slice %329 {offsets = [0, 0], sizes = [8, 128], strides = [1, 1]} : vector<8x384xf32> to vector<8x128xf32>
      %335 = arith.mulf %334, %331 : vector<8x128xf32>
      %336 = arith.addf %333, %335 : vector<8x128xf32>
      %337 = vector.extract_strided_slice %329 {offsets = [0, 256], sizes = [8, 128], strides = [1, 1]} : vector<8x384xf32> to vector<8x128xf32>
      %338 = math.tanh %336 : vector<8x128xf32>
      %339 = arith.mulf %337, %338 : vector<8x128xf32>
      %c64_i32_206 = arith.constant 64 : i32
      %340 = arith.muli %arg21, %c64_i32_206 : i32
      %c32_i32 = arith.constant 32 : i32
      %341 = arith.addi %340, %c32_i32 : i32
      %342 = tpu.assume_multiple %341, 8 : i32
      %c0_207 = arith.constant 0 : index
      %343 = arith.index_cast %342 : i32 to index
      %c0_208 = arith.constant 0 : index
      %344 = vector.load %arg18[%c0_207, %343, %c0_208] : memref<1x128x128xf32, #tpu.memory_space<vmem>>, vector<1x8x128xf32>
      %345 = vector.shape_cast %344 : vector<1x8x128xf32> to vector<8x128xf32>
      %346 = vector.shape_cast %339 : vector<8x128xf32> to vector<1x8x128xf32>
      tpu.vector_store %arg18[%c0_207, %343, %c0_208], %346 {strides = array<i32>} : memref<1x128x128xf32, #tpu.memory_space<vmem>>, vector<1x8x128xf32>,
      %347 = vector.extract_strided_slice %206 {offsets = [40, 0], sizes = [8, 512], strides = [1, 1]} : vector<64x512xf32> to vector<8x512xf32>
      %cst_209 = arith.constant dense<0.000000e+00> : vector<8x512xf32>
      %348 = tpu.matmul %339, %194, %cst_209 {dimension_numbers = #tpu.dot_dimension_numbers<[1], [0], [0], [1], [0, 0, 1, 1], [], []>} : vector<8x128xf32>, vector<128x512xf32>, vector<8x512xf32> -> vector<8x512xf32>
      %349 = arith.addf %347, %348 : vector<8x512xf32>
      %350 = vector.extract_strided_slice %349 {offsets = [0, 0], sizes = [8, 384], strides = [1, 1]} : vector<8x512xf32> to vector<8x384xf32>
      %cst_210 = arith.constant 5.000000e-01 : f32
      %351 = vector.broadcast %cst_210 : f32 to vector<8x384xf32>
      %352 = arith.mulf %351, %350 : vector<8x384xf32>
      %353 = math.tanh %352 : vector<8x384xf32>
      %cst_211 = arith.constant 5.000000e-01 : f32
      %354 = vector.broadcast %cst_211 : f32 to vector<8x384xf32>
      %355 = arith.mulf %354, %353 : vector<8x384xf32>
      %cst_212 = arith.constant 5.000000e-01 : f32
      %356 = vector.broadcast %cst_212 : f32 to vector<8x384xf32>
      %357 = arith.addf %355, %356 : vector<8x384xf32>
      %358 = vector.extract_strided_slice %349 {offsets = [0, 384], sizes = [8, 128], strides = [1, 1]} : vector<8x512xf32> to vector<8x128xf32>
      %359 = math.tanh %358 : vector<8x128xf32>
      %360 = vector.extract_strided_slice %357 {offsets = [0, 128], sizes = [8, 128], strides = [1, 1]} : vector<8x384xf32> to vector<8x128xf32>
      %361 = arith.mulf %360, %336 : vector<8x128xf32>
      %362 = vector.extract_strided_slice %357 {offsets = [0, 0], sizes = [8, 128], strides = [1, 1]} : vector<8x384xf32> to vector<8x128xf32>
      %363 = arith.mulf %362, %359 : vector<8x128xf32>
      %364 = arith.addf %361, %363 : vector<8x128xf32>
      %365 = vector.extract_strided_slice %357 {offsets = [0, 256], sizes = [8, 128], strides = [1, 1]} : vector<8x384xf32> to vector<8x128xf32>
      %366 = math.tanh %364 : vector<8x128xf32>
      %367 = arith.mulf %365, %366 : vector<8x128xf32>
      %c64_i32_213 = arith.constant 64 : i32
      %368 = arith.muli %arg21, %c64_i32_213 : i32
      %c40_i32 = arith.constant 40 : i32
      %369 = arith.addi %368, %c40_i32 : i32
      %370 = tpu.assume_multiple %369, 8 : i32
      %c0_214 = arith.constant 0 : index
      %371 = arith.index_cast %370 : i32 to index
      %c0_215 = arith.constant 0 : index
      %372 = vector.load %arg18[%c0_214, %371, %c0_215] : memref<1x128x128xf32, #tpu.memory_space<vmem>>, vector<1x8x128xf32>
      %373 = vector.shape_cast %372 : vector<1x8x128xf32> to vector<8x128xf32>
      %374 = vector.shape_cast %367 : vector<8x128xf32> to vector<1x8x128xf32>
      tpu.vector_store %arg18[%c0_214, %371, %c0_215], %374 {strides = array<i32>} : memref<1x128x128xf32, #tpu.memory_space<vmem>>, vector<1x8x128xf32>,
      %375 = vector.extract_strided_slice %206 {offsets = [48, 0], sizes = [8, 512], strides = [1, 1]} : vector<64x512xf32> to vector<8x512xf32>
      %cst_216 = arith.constant dense<0.000000e+00> : vector<8x512xf32>
      %376 = tpu.matmul %367, %194, %cst_216 {dimension_numbers = #tpu.dot_dimension_numbers<[1], [0], [0], [1], [0, 0, 1, 1], [], []>} : vector<8x128xf32>, vector<128x512xf32>, vector<8x512xf32> -> vector<8x512xf32>
      %377 = arith.addf %375, %376 : vector<8x512xf32>
      %378 = vector.extract_strided_slice %377 {offsets = [0, 0], sizes = [8, 384], strides = [1, 1]} : vector<8x512xf32> to vector<8x384xf32>
      %cst_217 = arith.constant 5.000000e-01 : f32
      %379 = vector.broadcast %cst_217 : f32 to vector<8x384xf32>
      %380 = arith.mulf %379, %378 : vector<8x384xf32>
      %381 = math.tanh %380 : vector<8x384xf32>
      %cst_218 = arith.constant 5.000000e-01 : f32
      %382 = vector.broadcast %cst_218 : f32 to vector<8x384xf32>
      %383 = arith.mulf %382, %381 : vector<8x384xf32>
      %cst_219 = arith.constant 5.000000e-01 : f32
      %384 = vector.broadcast %cst_219 : f32 to vector<8x384xf32>
      %385 = arith.addf %383, %384 : vector<8x384xf32>
      %386 = vector.extract_strided_slice %377 {offsets = [0, 384], sizes = [8, 128], strides = [1, 1]} : vector<8x512xf32> to vector<8x128xf32>
      %387 = math.tanh %386 : vector<8x128xf32>
      %388 = vector.extract_strided_slice %385 {offsets = [0, 128], sizes = [8, 128], strides = [1, 1]} : vector<8x384xf32> to vector<8x128xf32>
      %389 = arith.mulf %388, %364 : vector<8x128xf32>
      %390 = vector.extract_strided_slice %385 {offsets = [0, 0], sizes = [8, 128], strides = [1, 1]} : vector<8x384xf32> to vector<8x128xf32>
      %391 = arith.mulf %390, %387 : vector<8x128xf32>
      %392 = arith.addf %389, %391 : vector<8x128xf32>
      %393 = vector.extract_strided_slice %385 {offsets = [0, 256], sizes = [8, 128], strides = [1, 1]} : vector<8x384xf32> to vector<8x128xf32>
      %394 = math.tanh %392 : vector<8x128xf32>
      %395 = arith.mulf %393, %394 : vector<8x128xf32>
      %c64_i32_220 = arith.constant 64 : i32
      %396 = arith.muli %arg21, %c64_i32_220 : i32
      %c48_i32 = arith.constant 48 : i32
      %397 = arith.addi %396, %c48_i32 : i32
      %398 = tpu.assume_multiple %397, 8 : i32
      %c0_221 = arith.constant 0 : index
      %399 = arith.index_cast %398 : i32 to index
      %c0_222 = arith.constant 0 : index
      %400 = vector.load %arg18[%c0_221, %399, %c0_222] : memref<1x128x128xf32, #tpu.memory_space<vmem>>, vector<1x8x128xf32>
      %401 = vector.shape_cast %400 : vector<1x8x128xf32> to vector<8x128xf32>
      %402 = vector.shape_cast %395 : vector<8x128xf32> to vector<1x8x128xf32>
      tpu.vector_store %arg18[%c0_221, %399, %c0_222], %402 {strides = array<i32>} : memref<1x128x128xf32, #tpu.memory_space<vmem>>, vector<1x8x128xf32>,
      %403 = vector.extract_strided_slice %206 {offsets = [56, 0], sizes = [8, 512], strides = [1, 1]} : vector<64x512xf32> to vector<8x512xf32>
      %cst_223 = arith.constant dense<0.000000e+00> : vector<8x512xf32>
      %404 = tpu.matmul %395, %194, %cst_223 {dimension_numbers = #tpu.dot_dimension_numbers<[1], [0], [0], [1], [0, 0, 1, 1], [], []>} : vector<8x128xf32>, vector<128x512xf32>, vector<8x512xf32> -> vector<8x512xf32>
      %405 = arith.addf %403, %404 : vector<8x512xf32>
      %406 = vector.extract_strided_slice %405 {offsets = [0, 0], sizes = [8, 384], strides = [1, 1]} : vector<8x512xf32> to vector<8x384xf32>
      %cst_224 = arith.constant 5.000000e-01 : f32
      %407 = vector.broadcast %cst_224 : f32 to vector<8x384xf32>
      %408 = arith.mulf %407, %406 : vector<8x384xf32>
      %409 = math.tanh %408 : vector<8x384xf32>
      %cst_225 = arith.constant 5.000000e-01 : f32
      %410 = vector.broadcast %cst_225 : f32 to vector<8x384xf32>
      %411 = arith.mulf %410, %409 : vector<8x384xf32>
      %cst_226 = arith.constant 5.000000e-01 : f32
      %412 = vector.broadcast %cst_226 : f32 to vector<8x384xf32>
      %413 = arith.addf %411, %412 : vector<8x384xf32>
      %414 = vector.extract_strided_slice %405 {offsets = [0, 384], sizes = [8, 128], strides = [1, 1]} : vector<8x512xf32> to vector<8x128xf32>
      %415 = math.tanh %414 : vector<8x128xf32>
      %416 = vector.extract_strided_slice %413 {offsets = [0, 128], sizes = [8, 128], strides = [1, 1]} : vector<8x384xf32> to vector<8x128xf32>
      %417 = arith.mulf %416, %392 : vector<8x128xf32>
      %418 = vector.extract_strided_slice %413 {offsets = [0, 0], sizes = [8, 128], strides = [1, 1]} : vector<8x384xf32> to vector<8x128xf32>
      %419 = arith.mulf %418, %415 : vector<8x128xf32>
      %420 = arith.addf %417, %419 : vector<8x128xf32>
      %421 = vector.extract_strided_slice %413 {offsets = [0, 256], sizes = [8, 128], strides = [1, 1]} : vector<8x384xf32> to vector<8x128xf32>
      %422 = math.tanh %420 : vector<8x128xf32>
      %423 = arith.mulf %421, %422 : vector<8x128xf32>
      %c64_i32_227 = arith.constant 64 : i32
      %424 = arith.muli %arg21, %c64_i32_227 : i32
      %c56_i32 = arith.constant 56 : i32
      %425 = arith.addi %424, %c56_i32 : i32
      %426 = tpu.assume_multiple %425, 8 : i32
      %c0_228 = arith.constant 0 : index
      %427 = arith.index_cast %426 : i32 to index
      %c0_229 = arith.constant 0 : index
      %428 = vector.load %arg18[%c0_228, %427, %c0_229] : memref<1x128x128xf32, #tpu.memory_space<vmem>>, vector<1x8x128xf32>
      %429 = vector.shape_cast %428 : vector<1x8x128xf32> to vector<8x128xf32>
      %430 = vector.shape_cast %423 : vector<8x128xf32> to vector<1x8x128xf32>
      tpu.vector_store %arg18[%c0_228, %427, %c0_229], %430 {strides = array<i32>} : memref<1x128x128xf32, #tpu.memory_space<vmem>>, vector<1x8x128xf32>,
      scf.yield %423, %420 : vector<8x128xf32>, vector<8x128xf32>
    }
    %c2_i32_170 = arith.constant 2 : i32
    return
  }
  func.func @transform_0(%arg0: i32) -> (i32, i32, i32) {
    %c0_i32 = arith.constant 0 : i32
    %c0_i32_0 = arith.constant 0 : i32
    %c0_i32_1 = arith.constant 0 : i32
    return %arg0, %c0_i32, %c0_i32_0 : i32, i32, i32
  }
  func.func @transform_1(%arg0: i32) -> (i32, i32, i32) {
    %c0_i32 = arith.constant 0 : i32
    %c0_i32_0 = arith.constant 0 : i32
    %c0_i32_1 = arith.constant 0 : i32
    %c0_i32_2 = arith.constant 0 : i32
    return %c0_i32, %c0_i32_0, %c0_i32_1 : i32, i32, i32
  }
  func.func @transform_2(%arg0: i32) -> (i32, i32) {
    %c0_i32 = arith.constant 0 : i32
    %c0_i32_0 = arith.constant 0 : i32
    %c0_i32_1 = arith.constant 0 : i32
    return %c0_i32, %c0_i32_0 : i32, i32
  }
  func.func @transform_3(%arg0: i32) -> (i32, i32, i32, i32) {
    %c0_i32 = arith.constant 0 : i32
    %c0_i32_0 = arith.constant 0 : i32
    %c0_i32_1 = arith.constant 0 : i32
    %c0_i32_2 = arith.constant 0 : i32
    %c0_i32_3 = arith.constant 0 : i32
    return %c0_i32, %c0_i32_0, %c0_i32_1, %c0_i32_2 : i32, i32, i32, i32
  }
  func.func @transform_4(%arg0: i32) -> (i32, i32, i32) {
    %c0_i32 = arith.constant 0 : i32
    %c0_i32_0 = arith.constant 0 : i32
    %c0_i32_1 = arith.constant 0 : i32
    %c0_i32_2 = arith.constant 0 : i32
    return %c0_i32, %c0_i32_0, %c0_i32_1 : i32, i32, i32
  }
  func.func @transform_5(%arg0: i32) -> (i32, i32, i32, i32) {
    %c0_i32 = arith.constant 0 : i32
    %c0_i32_0 = arith.constant 0 : i32
    %c0_i32_1 = arith.constant 0 : i32
    %c0_i32_2 = arith.constant 0 : i32
    %c0_i32_3 = arith.constant 0 : i32
    return %c0_i32, %c0_i32_0, %c0_i32_1, %c0_i32_2 : i32, i32, i32, i32
  }
  func.func @transform_6(%arg0: i32) -> (i32, i32, i32) {
    %c0_i32 = arith.constant 0 : i32
    %c0_i32_0 = arith.constant 0 : i32
    %c0_i32_1 = arith.constant 0 : i32
    %c0_i32_2 = arith.constant 0 : i32
    return %c0_i32, %c0_i32_0, %c0_i32_1 : i32, i32, i32
  }
  func.func @transform_7(%arg0: i32) -> (i32, i32) {
    %c0_i32 = arith.constant 0 : i32
    %c0_i32_0 = arith.constant 0 : i32
    %c0_i32_1 = arith.constant 0 : i32
    return %c0_i32, %c0_i32_0 : i32, i32
  }
  func.func @transform_8(%arg0: i32) -> (i32, i32) {
    %c0_i32 = arith.constant 0 : i32
    %c0_i32_0 = arith.constant 0 : i32
    %c0_i32_1 = arith.constant 0 : i32
    return %c0_i32, %c0_i32_0 : i32, i32
  }
  func.func @transform_9(%arg0: i32) -> (i32, i32) {
    %c0_i32 = arith.constant 0 : i32
    %c0_i32_0 = arith.constant 0 : i32
    %c0_i32_1 = arith.constant 0 : i32
    return %c0_i32, %c0_i32_0 : i32, i32
  }
  func.func @transform_10(%arg0: i32) -> (i32, i32) {
    %c0_i32 = arith.constant 0 : i32
    %c0_i32_0 = arith.constant 0 : i32
    %c0_i32_1 = arith.constant 0 : i32
    return %c0_i32, %c0_i32_0 : i32, i32
  }
  func.func @transform_11(%arg0: i32) -> (i32, i32) {
    %c0_i32 = arith.constant 0 : i32
    %c0_i32_0 = arith.constant 0 : i32
    %c0_i32_1 = arith.constant 0 : i32
    return %c0_i32, %c0_i32_0 : i32, i32
  }
  func.func @transform_12(%arg0: i32) -> (i32, i32) {
    %c0_i32 = arith.constant 0 : i32
    %c0_i32_0 = arith.constant 0 : i32
    %c0_i32_1 = arith.constant 0 : i32
    return %c0_i32, %c0_i32_0 : i32, i32
  }
  func.func @transform_13(%arg0: i32) -> (i32, i32) {
    %c0_i32 = arith.constant 0 : i32
    %c0_i32_0 = arith.constant 0 : i32
    %c0_i32_1 = arith.constant 0 : i32
    return %c0_i32, %c0_i32_0 : i32, i32
  }
  func.func @transform_14(%arg0: i32) -> (i32, i32) {
    %c0_i32 = arith.constant 0 : i32
    %c0_i32_0 = arith.constant 0 : i32
    %c0_i32_1 = arith.constant 0 : i32
    return %c0_i32, %c0_i32_0 : i32, i32
  }
  func.func @transform_15(%arg0: i32) -> (i32, i32) {
    %c0_i32 = arith.constant 0 : i32
    %c0_i32_0 = arith.constant 0 : i32
    %c0_i32_1 = arith.constant 0 : i32
    return %c0_i32, %c0_i32_0 : i32, i32
  }
  func.func @transform_16(%arg0: i32) -> (i32, i32) {
    %c0_i32 = arith.constant 0 : i32
    %c0_i32_0 = arith.constant 0 : i32
    %c0_i32_1 = arith.constant 0 : i32
    return %c0_i32, %c0_i32_0 : i32, i32
  }
  func.func @transform_17(%arg0: i32) -> (i32, i32, i32) {
    %c0_i32 = arith.constant 0 : i32
    %c0_i32_0 = arith.constant 0 : i32
    %c0_i32_1 = arith.constant 0 : i32
    return %arg0, %c0_i32, %c0_i32_0 : i32, i32, i32
  }
}

</mosaic_0001>

<llo_original>
// kernel: tpu_custom_call.1
$region0: #{tpu_custom_call.1}
  #allocation0 [shape = 'u32[]', space=smem, size = 0x4, offset = 0x4, fixed_abs, tag = 'smem constant byte address 0x4 - core index']
  #allocation1 [shape = 'u32[72,128]{1,0:T(1,128)}', space=vmem, size = 0x9000, scoped, tag = 'internal scratch']
  #allocation2 [shape = 'f32[128,128]{1,0:T(8,128)}', space=vmem, size = 0x10000, scoped, tag = 'scratch operand']
  #allocation3 [shape = 'f32[128,128]{1,0:T(8,128)}', space=vmem, size = 0x10000, scoped, tag = 'scratch operand']
  %s0 = inlined_call_operand.vmem [shape: f32[1,128,4], index: 0, kind: input, shape index: {}]
  %s1 = inlined_call_operand.vmem [shape: bf16[3,4,8], index: 1, kind: input, shape index: {}]
  %s2 = inlined_call_operand.vmem [shape: f32[1,8], index: 2, kind: input, shape index: {}]
  %s3 = inlined_call_operand.vmem [shape: bf16[3,3,8,8], index: 3, kind: input, shape index: {}]
  %s4 = inlined_call_operand.vmem [shape: f32[3,1,8], index: 4, kind: input, shape index: {}]
  %s5 = inlined_call_operand.vmem [shape: bf16[3,3,8,8], index: 5, kind: input, shape index: {}]
  %s6 = inlined_call_operand.vmem [shape: f32[3,1,8], index: 6, kind: input, shape index: {}]
  %s7 = inlined_call_operand.vmem [shape: bf16[8,8], index: 7, kind: input, shape index: {}]
  %s8 = inlined_call_operand.vmem [shape: f32[1,8], index: 8, kind: input, shape index: {}]
  %s9 = inlined_call_operand.vmem [shape: f32[1,8], index: 9, kind: input, shape index: {}]
  %s10 = inlined_call_operand.vmem [shape: f32[1,8], index: 10, kind: input, shape index: {}]
  %s11 = inlined_call_operand.hbm [shape: bf16[128,512], index: 11, kind: input, shape index: {}]
  %s12 = inlined_call_operand.hbm [shape: f32[128,512], index: 12, kind: input, shape index: {}]
  %s13 = inlined_call_operand.vmem [shape: f32[1,512], index: 13, kind: input, shape index: {}]
  %s14 = inlined_call_operand.hbm [shape: bf16[128,512], index: 14, kind: input, shape index: {}]
  %s15 = inlined_call_operand.hbm [shape: f32[128,512], index: 15, kind: input, shape index: {}]
  %s16 = inlined_call_operand.vmem [shape: f32[1,512], index: 16, kind: input, shape index: {}]
  %s17 = inlined_call_operand.hbm [shape: f32[1,128,128], index: 17, kind: output, shape index: {}]
  %s18 = sld [smem:[#allocation0]]
  $region108: #{tpu_custom_call.1} parent=0
    _
  %s20 = ssub.s32 1, %s18
  %s21 = scalar_select 0, %s20, %s18
  $region1: #{tpu_custom_call.1} parent=0
    #allocation4 [shape = 'u8[131072]{0}', space=vmem, size = 0x20000, scoped, tag = 'input window, operand 11, single buffered']
    #allocation5 [shape = 's32[1]{0}', space=sflag, size = 0x4, scoped, tag = 'scoped memory for tpu_custom_call.1']
    #allocation6 [shape = 's32[1]{0}', space=sflag, size = 0x4, scoped, tag = 'scoped memory for tpu_custom_call.1']
    #allocation7 [shape = 'u8[262144]{0}', space=vmem, size = 0x40000, scoped, tag = 'input window, operand 12, single buffered']
    #allocation8 [shape = 's32[1]{0}', space=sflag, size = 0x4, scoped, tag = 'scoped memory for tpu_custom_call.1']
    #allocation9 [shape = 'u8[131072]{0}', space=vmem, size = 0x20000, scoped, tag = 'input window, operand 14, single buffered']
    #allocation10 [shape = 'u8[262144]{0}', space=vmem, size = 0x40000, scoped, tag = 'input window, operand 15, single buffered']
    #allocation11 [shape = 's32[1]{0}', space=sflag, size = 0x4, scoped, tag = 'scoped memory for tpu_custom_call.1']
    #allocation12 [shape = 'u8[65536]{0}', space=vmem, size = 0x10000, scoped, tag = 'output window, operand 0, single buffered']
    %22 = vsyncpa [#allocation5], 0
    %23 = vsyncpa [#allocation8], 0
    %24 = vsyncpa [#allocation11], 0
    %25 = vsyncpa [#allocation6], 0
    // Predicated region
    $region2: #{tpu_custom_call.1} parent=1 // pred_check
      _
    $region3: #{tpu_custom_call.1} parent=1 // pred_check_branch
      %27 = sbr.rel (0) target = $region5
    $region4: #{tpu_custom_call.1} parent=1 // pred_region
      _
    $region5: #{tpu_custom_call.1} parent=1 // pred_fallthru
      _
    // Predicated region
    $region6: #{tpu_custom_call.1} parent=1 // pred_check
      _
    $region7: #{tpu_custom_call.1} parent=1 // pred_check_branch
      %29 = sbr.rel (0) target = $region9
    $region8: #{tpu_custom_call.1} parent=1 // pred_region
      _
    $region9: #{tpu_custom_call.1} parent=1 // pred_fallthru
      _
    // Predicated region
    $region10: #{tpu_custom_call.1} parent=1 // pred_check
      _
    $region11: #{tpu_custom_call.1} parent=1 // pred_check_branch
      %31 = sbr.rel (0) target = $region13
    $region12: #{tpu_custom_call.1} parent=1 // pred_region
      _
    $region13: #{tpu_custom_call.1} parent=1 // pred_fallthru
      _
    // Predicated region
    $region14: #{tpu_custom_call.1} parent=1 // pred_check
      _
    $region15: #{tpu_custom_call.1} parent=1 // pred_check_branch
      %33 = sbr.rel (0) target = $region17
    $region16: #{tpu_custom_call.1} parent=1 // pred_region
      _
    $region17: #{tpu_custom_call.1} parent=1 // pred_fallthru
      _
    // Predicated region
    $region18: #{tpu_custom_call.1} parent=1 // pred_check
      _
    $region19: #{tpu_custom_call.1} parent=1 // pred_check_branch
      %35 = sbr.rel (0) target = $region21
    $region20: #{tpu_custom_call.1} parent=1 // pred_region
      _
    $region21: #{tpu_custom_call.1} parent=1 // pred_fallthru
      _
    // Predicated region
    $region22: #{tpu_custom_call.1} parent=1 // pred_check
      _
    $region23: #{tpu_custom_call.1} parent=1 // pred_check_branch
      %37 = sbr.rel (0) target = $region25
    $region24: #{tpu_custom_call.1} parent=1 // pred_region
      _
    $region25: #{tpu_custom_call.1} parent=1 // pred_fallthru
      _
    // Predicated region
    $region26: #{tpu_custom_call.1} parent=1 // pred_check
      _
    $region27: #{tpu_custom_call.1} parent=1 // pred_check_branch
      %39 = sbr.rel (0) target = $region29
    $region28: #{tpu_custom_call.1} parent=1 // pred_region
      _
    $region29: #{tpu_custom_call.1} parent=1 // pred_fallthru
      _
    // Predicated region
    $region30: #{tpu_custom_call.1} parent=1 // pred_check
      _
    $region31: #{tpu_custom_call.1} parent=1 // pred_check_branch
      %41 = sbr.rel (0) target = $region33
    $region32: #{tpu_custom_call.1} parent=1 // pred_region
      _
    $region33: #{tpu_custom_call.1} parent=1 // pred_fallthru
      _
    // Predicated region
    $region34: #{tpu_custom_call.1} parent=1 // pred_check
      _
    $region35: #{tpu_custom_call.1} parent=1 // pred_check_branch
      %43 = sbr.rel (0) target = $region37
    $region36: #{tpu_custom_call.1} parent=1 // pred_region
      _
    $region37: #{tpu_custom_call.1} parent=1 // pred_fallthru
      _
    // Predicated region
    $region38: #{tpu_custom_call.1} parent=1 // pred_check
      _
    $region39: #{tpu_custom_call.1} parent=1 // pred_check_branch
      %45 = sbr.rel (0) target = $region41
    $region40: #{tpu_custom_call.1} parent=1 // pred_region
      _
    $region41: #{tpu_custom_call.1} parent=1 // pred_fallthru
      _
    // Predicated region
    $region42: #{tpu_custom_call.1} parent=1 // pred_check
      _
    $region43: #{tpu_custom_call.1} parent=1 // pred_check_branch
      %47 = sbr.rel (0) target = $region45
    $region44: #{tpu_custom_call.1} parent=1 // pred_region
      _
    $region45: #{tpu_custom_call.1} parent=1 // pred_fallthru
      _
    // Predicated region
    $region46: #{tpu_custom_call.1} parent=1 // pred_check
      _
    $region47: #{tpu_custom_call.1} parent=1 // pred_check_branch
      %49 = sbr.rel (0) target = $region49
    $region48: #{tpu_custom_call.1} parent=1 // pred_region
      %51 = vsyncadd [#allocation5], 0
      %s52 = sshll.u32 %s11, 4
      %s53 = int_to_ptr.hbm [resolvable:$true] %s52
      %s54 = sshll.u32 [#allocation4], 4
      %s55 = int_to_ptr.vmem [resolvable:$true] %s54
      %60 = dma.hbm_to_vmem [thread:$0]  %s53, 4096, %s55, [#allocation5], 256, 256, 16
    $region49: #{tpu_custom_call.1} parent=1 // pred_fallthru
      _
    // Predicated region
    $region50: #{tpu_custom_call.1} parent=1 // pred_check
      _
    $region51: #{tpu_custom_call.1} parent=1 // pred_check_branch
      %62 = sbr.rel (0) target = $region53
    $region52: #{tpu_custom_call.1} parent=1 // pred_region
      %64 = vsyncadd [#allocation8], 0
      %s65 = sshll.u32 %s12, 4
      %s66 = int_to_ptr.hbm [resolvable:$true] %s65
      %s67 = sshll.u32 [#allocation7], 4
      %s68 = int_to_ptr.vmem [resolvable:$true] %s67
      %73 = dma.hbm_to_vmem [thread:$0]  %s66, 8192, %s68, [#allocation8], 512, 512, 32
    $region53: #{tpu_custom_call.1} parent=1 // pred_fallthru
      _
    // Predicated region
    $region54: #{tpu_custom_call.1} parent=1 // pred_check
      _
    $region55: #{tpu_custom_call.1} parent=1 // pred_check_branch
      %75 = sbr.rel (0) target = $region57
    $region56: #{tpu_custom_call.1} parent=1 // pred_region
      _
    $region57: #{tpu_custom_call.1} parent=1 // pred_fallthru
      _
    // Predicated region
    $region58: #{tpu_custom_call.1} parent=1 // pred_check
      _
    $region59: #{tpu_custom_call.1} parent=1 // pred_check_branch
      %77 = sbr.rel (0) target = $region61
    $region60: #{tpu_custom_call.1} parent=1 // pred_region
      %79 = vsyncadd [#allocation8], 0
      %s80 = sshll.u32 %s14, 4
      %s81 = int_to_ptr.hbm [resolvable:$true] %s80
      %s82 = sshll.u32 [#allocation9], 4
      %s83 = int_to_ptr.vmem [resolvable:$true] %s82
      %88 = dma.hbm_to_vmem [thread:$0]  %s81, 4096, %s83, [#allocation8], 256, 256, 16
    $region61: #{tpu_custom_call.1} parent=1 // pred_fallthru
      _
    // Predicated region
    $region62: #{tpu_custom_call.1} parent=1 // pred_check
      _
    $region63: #{tpu_custom_call.1} parent=1 // pred_check_branch
      %90 = sbr.rel (0) target = $region65
    $region64: #{tpu_custom_call.1} parent=1 // pred_region
      %92 = vsyncadd [#allocation11], 0
      %s93 = sshll.u32 %s15, 4
      %s94 = int_to_ptr.hbm [resolvable:$true] %s93
      %s95 = sshll.u32 [#allocation10], 4
      %s96 = int_to_ptr.vmem [resolvable:$true] %s95
      %101 = dma.hbm_to_vmem [thread:$0]  %s94, 8192, %s96, [#allocation11], 512, 512, 32
    $region65: #{tpu_custom_call.1} parent=1 // pred_fallthru
      _
    // Predicated region
    $region66: #{tpu_custom_call.1} parent=1 // pred_check
      _
    $region67: #{tpu_custom_call.1} parent=1 // pred_check_branch
      %103 = sbr.rel (0) target = $region69
    $region68: #{tpu_custom_call.1} parent=1 // pred_region
      _
    $region69: #{tpu_custom_call.1} parent=1 // pred_fallthru
      _
    // Predicated region
    $region70: #{tpu_custom_call.1} parent=1 // pred_check
      _
    $region71: #{tpu_custom_call.1} parent=1 // pred_check_branch
      %105 = sbr.rel (0) target = $region73
    $region72: #{tpu_custom_call.1} parent=1 // pred_region
      %107 = dma.done [#allocation5], 4096
    $region73: #{tpu_custom_call.1} parent=1 // pred_fallthru
      _
    // Predicated region
    $region74: #{tpu_custom_call.1} parent=1 // pred_check
      _
    $region75: #{tpu_custom_call.1} parent=1 // pred_check_branch
      %109 = sbr.rel (0) target = $region77
    $region76: #{tpu_custom_call.1} parent=1 // pred_region
      %111 = dma.done [#allocation8], 8192
    $region77: #{tpu_custom_call.1} parent=1 // pred_fallthru
      _
    // Predicated region
    $region78: #{tpu_custom_call.1} parent=1 // pred_check
      _
    $region79: #{tpu_custom_call.1} parent=1 // pred_check_branch
      %113 = sbr.rel (0) target = $region81
    $region80: #{tpu_custom_call.1} parent=1 // pred_region
      %115 = dma.done [#allocation8], 4096
    $region81: #{tpu_custom_call.1} parent=1 // pred_fallthru
      _
    // Predicated region
    $region82: #{tpu_custom_call.1} parent=1 // pred_check
      _
    $region83: #{tpu_custom_call.1} parent=1 // pred_check_branch
      %117 = sbr.rel (0) target = $region85
    $region84: #{tpu_custom_call.1} parent=1 // pred_region
      %119 = dma.done [#allocation11], 8192
    $region85: #{tpu_custom_call.1} parent=1 // pred_fallthru
      _
    %v121 = vld [vmem:[%s0] sm:$0xff]
    %v122 = vld [vmem:[%s0 + $0x8] sm:$0xff]
    %v123 = vld [vmem:[%s0 + $0x10] sm:$0xff]
    %v124 = vld [vmem:[%s0 + $0x18] sm:$0xff]
    %v125 = vld [vmem:[%s0 + $0x20] sm:$0xff]
    %v126 = vld [vmem:[%s0 + $0x28] sm:$0xff]
    %v127 = vld [vmem:[%s0 + $0x30] sm:$0xff]
    %v128 = vld [vmem:[%s0 + $0x38] sm:$0xff]
    %v129 = vld [vmem:[%s0 + $0x40] sm:$0xff]
    %v130 = vld [vmem:[%s0 + $0x48] sm:$0xff]
    %v131 = vld [vmem:[%s0 + $0x50] sm:$0xff]
    %v132 = vld [vmem:[%s0 + $0x58] sm:$0xff]
    %v133 = vld [vmem:[%s0 + $0x60] sm:$0xff]
    %v134 = vld [vmem:[%s0 + $0x68] sm:$0xff]
    %v135 = vld [vmem:[%s0 + $0x70] sm:$0xff]
    %v136 = vld [vmem:[%s0 + $0x78] sm:$0xff]
    %v137 = vpack.c.bf16 %v121, %v121
    %v138 = vpack.c.bf16 %v122, %v122
    %v139 = vpack.c.bf16 %v123, %v123
    %v140 = vpack.c.bf16 %v124, %v124
    %v141 = vpack.c.bf16 %v125, %v125
    %v142 = vpack.c.bf16 %v126, %v126
    %v143 = vpack.c.bf16 %v127, %v127
    %v144 = vpack.c.bf16 %v128, %v128
    %v145 = vpack.c.bf16 %v129, %v129
    %v146 = vpack.c.bf16 %v130, %v130
    %v147 = vpack.c.bf16 %v131, %v131
    %v148 = vpack.c.bf16 %v132, %v132
    %v149 = vpack.c.bf16 %v133, %v133
    %v150 = vpack.c.bf16 %v134, %v134
    %v151 = vpack.c.bf16 %v135, %v135
    %v152 = vpack.c.bf16 %v136, %v136
    %v168 = vunpack.c.l.b16 %v137
    %v169 = vunpack.c.l.b16 %v138
    %v170 = vunpack.c.l.b16 %v139
    %v171 = vunpack.c.l.b16 %v140
    %v172 = vunpack.c.l.b16 %v141
    %v173 = vunpack.c.l.b16 %v142
    %v174 = vunpack.c.l.b16 %v143
    %v175 = vunpack.c.l.b16 %v144
    %v176 = vunpack.c.l.b16 %v145
    %v177 = vunpack.c.l.b16 %v146
    %v178 = vunpack.c.l.b16 %v147
    %v179 = vunpack.c.l.b16 %v148
    %v180 = vunpack.c.l.b16 %v149
    %v181 = vunpack.c.l.b16 %v150
    %v182 = vunpack.c.l.b16 %v151
    %v183 = vpack.c.b16 %v168, %v168
    %v184 = vpack.c.b16 %v170, %v169
    %v185 = vpack.c.b16 %v172, %v171
    %v186 = vpack.c.b16 %v174, %v173
    %v187 = vpack.c.b16 %v176, %v175
    %v188 = vpack.c.b16 %v178, %v177
    %v189 = vpack.c.b16 %v180, %v179
    %v190 = vpack.c.b16 %v182, %v181
    %vm191 = vcmask 1043456
    %v194 = vsel %vm191, 0, %v183
    %v196 = vunpack.c.l.b16 %v152
    %v197 = vpack.c.b16 %v196, %v196
    %v199 = vsel %vm191, %v197, 0
    %v200 = vld [vmem:[%s1] sm:$0x3]
    %s201 = scalar_lea.vmem %s1, 2
    %v202 = vld [vmem:[%s201] sm:$0x3]
    %s203 = scalar_lea.vmem %s1, 4
    %v204 = vld [vmem:[%s203] sm:$0x3]
    %v205 = vld [vmem:[%s2] sm:$0x1]
    %v206 = vpack.c.b16 %v169, %v168
    %v207 = vpack.c.b16 %v171, %v170
    %v208 = vpack.c.b16 %v173, %v172
    %v209 = vpack.c.b16 %v175, %v174
    %v210 = vpack.c.b16 %v177, %v176
    %v211 = vpack.c.b16 %v179, %v178
    %v212 = vpack.c.b16 %v181, %v180
    %v213 = vpack.c.b16 %v196, %v182
    %vm214 = vcmask 31744
    %v216 = vsel %vm214, %v206, 0
    %v219 = vsel %vm214, %v207, 0
    %v222 = vsel %vm214, %v208, 0
    %v225 = vsel %vm214, %v209, 0
    %v228 = vsel %vm214, %v210, 0
    %v231 = vsel %vm214, %v211, 0
    %v234 = vsel %vm214, %v212, 0
    %v237 = vsel %vm214, %v213, 0
    %vm239 = vcmask 1041408
    %v241 = vsel %vm239, %v202, 0
    %243 = vmatpush.bf16.msra.mxu0 0
    %244 = vmatpush.bf16.msra.mxu0 0
    %245 = vmatpush.bf16.msra.mxu0 0
    %246 = vmatpush.bf16.msra.mxu0 0
    %247 = vmatpush.bf16.msra.mxu0 0
    %248 = vmatpush.bf16.msra.mxu0 0
    %249 = vmatpush.bf16.msra.mxu0 0
    %250 = vmatpush.bf16.msra.mxu0 %v241
    %251 = vmatmul.bf16.gmra.mxu0 %v216
    %v252 = vpop.f32.mrf.mxu0
    %v253 = vadd.f32 0.0, %v252
    %v254 = vpop.f32.mrf.mxu0
    %v255 = vadd.f32 0.0, %v254
    %256 = vmatmul.bf16.gmra.mxu0 %v219
    %v257 = vpop.f32.mrf.mxu0
    %v258 = vadd.f32 0.0, %v257
    %v259 = vpop.f32.mrf.mxu0
    %v260 = vadd.f32 0.0, %v259
    %261 = vmatmul.bf16.gmra.mxu0 %v222
    %v262 = vpop.f32.mrf.mxu0
    %v263 = vadd.f32 0.0, %v262
    %v264 = vpop.f32.mrf.mxu0
    %v265 = vadd.f32 0.0, %v264
    %266 = vmatmul.bf16.gmra.mxu0 %v225
    %v267 = vpop.f32.mrf.mxu0
    %v268 = vadd.f32 0.0, %v267
    %v269 = vpop.f32.mrf.mxu0
    %v270 = vadd.f32 0.0, %v269
    %271 = vmatmul.bf16.gmra.mxu0 %v228
    %v272 = vpop.f32.mrf.mxu0
    %v273 = vadd.f32 0.0, %v272
    %v274 = vpop.f32.mrf.mxu0
    %v275 = vadd.f32 0.0, %v274
    %276 = vmatmul.bf16.gmra.mxu0 %v231
    %v277 = vpop.f32.mrf.mxu0
    %v278 = vadd.f32 0.0, %v277
    %v279 = vpop.f32.mrf.mxu0
    %v280 = vadd.f32 0.0, %v279
    %281 = vmatmul.bf16.gmra.mxu0 %v234
    %v282 = vpop.f32.mrf.mxu0
    %v283 = vadd.f32 0.0, %v282
    %v284 = vpop.f32.mrf.mxu0
    %v285 = vadd.f32 0.0, %v284
    %286 = vmatmul.bf16.gmra.mxu0 %v237
    %v287 = vpop.f32.mrf.mxu0
    %v288 = vadd.f32 0.0, %v287
    %v289 = vpop.f32.mrf.mxu0
    %v290 = vadd.f32 0.0, %v289
    %291 = vdwg.mxu0
    %v292 = vsel %vm214, %v194, 0
    %v295 = vsel %vm214, %v184, 0
    %v298 = vsel %vm214, %v185, 0
    %v301 = vsel %vm214, %v186, 0
    %v304 = vsel %vm214, %v187, 0
    %v307 = vsel %vm214, %v188, 0
    %v310 = vsel %vm214, %v189, 0
    %v313 = vsel %vm214, %v190, 0
    %v316 = vsel %vm239, %v200, 0
    %318 = vmatpush.bf16.msra.mxu0 0
    %319 = vmatpush.bf16.msra.mxu0 0
    %320 = vmatpush.bf16.msra.mxu0 0
    %321 = vmatpush.bf16.msra.mxu0 0
    %322 = vmatpush.bf16.msra.mxu0 0
    %323 = vmatpush.bf16.msra.mxu0 0
    %324 = vmatpush.bf16.msra.mxu0 0
    %325 = vmatpush.bf16.msra.mxu0 %v316
    %326 = vmatmul.bf16.gmra.mxu0 %v292
    %v327 = vpop.f32.mrf.mxu0
    %v328 = vadd.f32 %v253, %v327
    %v329 = vpop.f32.mrf.mxu0
    %v330 = vadd.f32 %v255, %v329
    %331 = vmatmul.bf16.gmra.mxu0 %v295
    %v332 = vpop.f32.mrf.mxu0
    %v333 = vadd.f32 %v258, %v332
    %v334 = vpop.f32.mrf.mxu0
    %v335 = vadd.f32 %v260, %v334
    %336 = vmatmul.bf16.gmra.mxu0 %v298
    %v337 = vpop.f32.mrf.mxu0
    %v338 = vadd.f32 %v263, %v337
    %v339 = vpop.f32.mrf.mxu0
    %v340 = vadd.f32 %v265, %v339
    %341 = vmatmul.bf16.gmra.mxu0 %v301
    %v342 = vpop.f32.mrf.mxu0
    %v343 = vadd.f32 %v268, %v342
    %v344 = vpop.f32.mrf.mxu0
    %v345 = vadd.f32 %v270, %v344
    %346 = vmatmul.bf16.gmra.mxu0 %v304
    %v347 = vpop.f32.mrf.mxu0
    %v348 = vadd.f32 %v273, %v347
    %v349 = vpop.f32.mrf.mxu0
    %v350 = vadd.f32 %v275, %v349
    %351 = vmatmul.bf16.gmra.mxu0 %v307
    %v352 = vpop.f32.mrf.mxu0
    %v353 = vadd.f32 %v278, %v352
    %v354 = vpop.f32.mrf.mxu0
    %v355 = vadd.f32 %v280, %v354
    %356 = vmatmul.bf16.gmra.mxu0 %v310
    %v357 = vpop.f32.mrf.mxu0
    %v358 = vadd.f32 %v283, %v357
    %v359 = vpop.f32.mrf.mxu0
    %v360 = vadd.f32 %v285, %v359
    %361 = vmatmul.bf16.gmra.mxu0 %v313
    %v362 = vpop.f32.mrf.mxu0
    %v363 = vadd.f32 %v288, %v362
    %v364 = vpop.f32.mrf.mxu0
    %v365 = vadd.f32 %v290, %v364
    %366 = vdwg.mxu0
    %v367 = vsel %vm214, %v199, 0
    %v370 = vsel %vm239, %v204, 0
    %372 = vmatpush.bf16.msra.mxu0 0
    %373 = vmatpush.bf16.msra.mxu0 0
    %374 = vmatpush.bf16.msra.mxu0 0
    %375 = vmatpush.bf16.msra.mxu0 0
    %376 = vmatpush.bf16.msra.mxu0 0
    %377 = vmatpush.bf16.msra.mxu0 0
    %378 = vmatpush.bf16.msra.mxu0 0
    %379 = vmatpush.bf16.msra.mxu0 %v370
    %380 = vmatmul.bf16.gmra.mxu0 %v295
    %v381 = vpop.f32.mrf.mxu0
    %v382 = vadd.f32 0.0, %v381
    %v383 = vpop.f32.mrf.mxu0
    %v384 = vadd.f32 0.0, %v383
    %385 = vmatmul.bf16.gmra.mxu0 %v298
    %v386 = vpop.f32.mrf.mxu0
    %v387 = vadd.f32 0.0, %v386
    %v388 = vpop.f32.mrf.mxu0
    %v389 = vadd.f32 0.0, %v388
    %390 = vmatmul.bf16.gmra.mxu0 %v301
    %v391 = vpop.f32.mrf.mxu0
    %v392 = vadd.f32 0.0, %v391
    %v393 = vpop.f32.mrf.mxu0
    %v394 = vadd.f32 0.0, %v393
    %395 = vmatmul.bf16.gmra.mxu0 %v304
    %v396 = vpop.f32.mrf.mxu0
    %v397 = vadd.f32 0.0, %v396
    %v398 = vpop.f32.mrf.mxu0
    %v399 = vadd.f32 0.0, %v398
    %400 = vmatmul.bf16.gmra.mxu0 %v307
    %v401 = vpop.f32.mrf.mxu0
    %v402 = vadd.f32 0.0, %v401
    %v403 = vpop.f32.mrf.mxu0
    %v404 = vadd.f32 0.0, %v403
    %405 = vmatmul.bf16.gmra.mxu0 %v310
    %v406 = vpop.f32.mrf.mxu0
    %v407 = vadd.f32 0.0, %v406
    %v408 = vpop.f32.mrf.mxu0
    %v409 = vadd.f32 0.0, %v408
    %410 = vmatmul.bf16.gmra.mxu0 %v313
    %v411 = vpop.f32.mrf.mxu0
    %v412 = vadd.f32 0.0, %v411
    %v413 = vpop.f32.mrf.mxu0
    %v414 = vadd.f32 0.0, %v413
    %415 = vmatmul.bf16.gmra.mxu0 %v367
    %v416 = vpop.f32.mrf.mxu0
    %v417 = vadd.f32 0.0, %v416
    %v418 = vpop.f32.mrf.mxu0
    %v419 = vadd.f32 0.0, %v418
    %420 = vdwg.mxu0
    %v421 = vadd.f32 %v328, %v382
    %v422 = vadd.f32 %v330, %v384
    %v423 = vadd.f32 %v333, %v387
    %v424 = vadd.f32 %v335, %v389
    %v425 = vadd.f32 %v338, %v392
    %v426 = vadd.f32 %v340, %v394
    %v427 = vadd.f32 %v343, %v397
    %v428 = vadd.f32 %v345, %v399
    %v429 = vadd.f32 %v348, %v402
    %v430 = vadd.f32 %v350, %v404
    %v431 = vadd.f32 %v353, %v407
    %v432 = vadd.f32 %v355, %v409
    %v433 = vadd.f32 %v358, %v412
    %v434 = vadd.f32 %v360, %v414
    %v435 = vadd.f32 %v363, %v417
    %v436 = vadd.f32 %v365, %v419
    %v438 = vperm.slane %v205, 0
    %v440 = vadd.f32 %v421, %v438
    %v441 = vadd.f32 %v422, %v438
    %v442 = vadd.f32 %v423, %v438
    %v443 = vadd.f32 %v424, %v438
    %v444 = vadd.f32 %v425, %v438
    %v445 = vadd.f32 %v426, %v438
    %v446 = vadd.f32 %v427, %v438
    %v447 = vadd.f32 %v428, %v438
    %v448 = vadd.f32 %v429, %v438
    %v449 = vadd.f32 %v430, %v438
    %v450 = vadd.f32 %v431, %v438
    %v451 = vadd.f32 %v432, %v438
    %v452 = vadd.f32 %v433, %v438
    %v453 = vadd.f32 %v434, %v438
    %v454 = vadd.f32 %v435, %v438
    %v455 = vadd.f32 %v436, %v438
    %v456 = vld [vmem:[%s7] sm:$0xf]
    %v457 = vld [vmem:[%s8] sm:$0x1]
    %v458 = vpack.c.bf16 %v440, %v440
    %v459 = vpack.c.bf16 %v441, %v441
    %v460 = vpack.c.bf16 %v442, %v442
    %v461 = vpack.c.bf16 %v443, %v443
    %v462 = vpack.c.bf16 %v444, %v444
    %v463 = vpack.c.bf16 %v445, %v445
    %v464 = vpack.c.bf16 %v446, %v446
    %v465 = vpack.c.bf16 %v447, %v447
    %v466 = vpack.c.bf16 %v448, %v448
    %v467 = vpack.c.bf16 %v449, %v449
    %v468 = vpack.c.bf16 %v450, %v450
    %v469 = vpack.c.bf16 %v451, %v451
    %v470 = vpack.c.bf16 %v452, %v452
    %v471 = vpack.c.bf16 %v453, %v453
    %v472 = vpack.c.bf16 %v454, %v454
    %v473 = vpack.c.bf16 %v455, %v455
    %v489 = vunpack.c.l.b16 %v458
    %v490 = vunpack.c.l.b16 %v459
    %v491 = vunpack.c.l.b16 %v460
    %v492 = vunpack.c.l.b16 %v461
    %v493 = vunpack.c.l.b16 %v462
    %v494 = vunpack.c.l.b16 %v463
    %v495 = vunpack.c.l.b16 %v464
    %v496 = vunpack.c.l.b16 %v465
    %v497 = vunpack.c.l.b16 %v466
    %v498 = vunpack.c.l.b16 %v467
    %v499 = vunpack.c.l.b16 %v468
    %v500 = vunpack.c.l.b16 %v469
    %v501 = vunpack.c.l.b16 %v470
    %v502 = vunpack.c.l.b16 %v471
    %v503 = vunpack.c.l.b16 %v472
    %v504 = vpack.c.b16 %v489, %v489
    %v505 = vpack.c.b16 %v491, %v490
    %v506 = vpack.c.b16 %v493, %v492
    %v507 = vpack.c.b16 %v495, %v494
    %v508 = vpack.c.b16 %v497, %v496
    %v509 = vpack.c.b16 %v499, %v498
    %v510 = vpack.c.b16 %v501, %v500
    %v511 = vpack.c.b16 %v503, %v502
    %v513 = vsel %vm191, 0, %v504
    %v515 = vunpack.c.l.b16 %v473
    %v516 = vpack.c.b16 %v515, %v515
    %v518 = vsel %vm191, %v516, 0
    %v519 = vld [vmem:[%s3] sm:$0xf]
    %s520 = scalar_lea.vmem %s3, 4
    %v521 = vld [vmem:[%s520] sm:$0xf]
    %s522 = scalar_lea.vmem %s3, 8
    %v523 = vld [vmem:[%s522] sm:$0xf]
    %v524 = vld [vmem:[%s4] sm:$0x1]
    %v525 = vpack.c.b16 %v490, %v489
    %v526 = vpack.c.b16 %v492, %v491
    %v527 = vpack.c.b16 %v494, %v493
    %v528 = vpack.c.b16 %v496, %v495
    %v529 = vpack.c.b16 %v498, %v497
    %v530 = vpack.c.b16 %v500, %v499
    %v531 = vpack.c.b16 %v502, %v501
    %v532 = vpack.c.b16 %v515, %v503
    %vm533 = vcmask 64512
    %v535 = vsel %vm533, %v525, 0
    %v538 = vsel %vm533, %v526, 0
    %v541 = vsel %vm533, %v527, 0
    %v544 = vsel %vm533, %v528, 0
    %v547 = vsel %vm533, %v529, 0
    %v550 = vsel %vm533, %v530, 0
    %v553 = vsel %vm533, %v531, 0
    %v556 = vsel %vm533, %v532, 0
    %v559 = vsel %vm191, %v521, 0
    %561 = vmatpush.bf16.msra.mxu0 0
    %562 = vmatpush.bf16.msra.mxu0 0
    %563 = vmatpush.bf16.msra.mxu0 0
    %564 = vmatpush.bf16.msra.mxu0 0
    %565 = vmatpush.bf16.msra.mxu0 0
    %566 = vmatpush.bf16.msra.mxu0 0
    %567 = vmatpush.bf16.msra.mxu0 0
    %568 = vmatpush.bf16.msra.mxu0 %v559
    %569 = vmatmul.bf16.gmra.mxu0 %v535
    %v570 = vpop.f32.mrf.mxu0
    %v571 = vadd.f32 0.0, %v570
    %v572 = vpop.f32.mrf.mxu0
    %v573 = vadd.f32 0.0, %v572
    %574 = vmatmul.bf16.gmra.mxu0 %v538
    %v575 = vpop.f32.mrf.mxu0
    %v576 = vadd.f32 0.0, %v575
    %v577 = vpop.f32.mrf.mxu0
    %v578 = vadd.f32 0.0, %v577
    %579 = vmatmul.bf16.gmra.mxu0 %v541
    %v580 = vpop.f32.mrf.mxu0
    %v581 = vadd.f32 0.0, %v580
    %v582 = vpop.f32.mrf.mxu0
    %v583 = vadd.f32 0.0, %v582
    %584 = vmatmul.bf16.gmra.mxu0 %v544
    %v585 = vpop.f32.mrf.mxu0
    %v586 = vadd.f32 0.0, %v585
    %v587 = vpop.f32.mrf.mxu0
    %v588 = vadd.f32 0.0, %v587
    %589 = vmatmul.bf16.gmra.mxu0 %v547
    %v590 = vpop.f32.mrf.mxu0
    %v591 = vadd.f32 0.0, %v590
    %v592 = vpop.f32.mrf.mxu0
    %v593 = vadd.f32 0.0, %v592
    %594 = vmatmul.bf16.gmra.mxu0 %v550
    %v595 = vpop.f32.mrf.mxu0
    %v596 = vadd.f32 0.0, %v595
    %v597 = vpop.f32.mrf.mxu0
    %v598 = vadd.f32 0.0, %v597
    %599 = vmatmul.bf16.gmra.mxu0 %v553
    %v600 = vpop.f32.mrf.mxu0
    %v601 = vadd.f32 0.0, %v600
    %v602 = vpop.f32.mrf.mxu0
    %v603 = vadd.f32 0.0, %v602
    %604 = vmatmul.bf16.gmra.mxu0 %v556
    %v605 = vpop.f32.mrf.mxu0
    %v606 = vadd.f32 0.0, %v605
    %v607 = vpop.f32.mrf.mxu0
    %v608 = vadd.f32 0.0, %v607
    %609 = vdwg.mxu0
    %v610 = vsel %vm533, %v513, 0
    %v613 = vsel %vm533, %v505, 0
    %v616 = vsel %vm533, %v506, 0
    %v619 = vsel %vm533, %v507, 0
    %v622 = vsel %vm533, %v508, 0
    %v625 = vsel %vm533, %v509, 0
    %v628 = vsel %vm533, %v510, 0
    %v631 = vsel %vm533, %v511, 0
    %v634 = vsel %vm191, %v519, 0
    %636 = vmatpush.bf16.msra.mxu0 0
    %637 = vmatpush.bf16.msra.mxu0 0
    %638 = vmatpush.bf16.msra.mxu0 0
    %639 = vmatpush.bf16.msra.mxu0 0
    %640 = vmatpush.bf16.msra.mxu0 0
    %641 = vmatpush.bf16.msra.mxu0 0
    %642 = vmatpush.bf16.msra.mxu0 0
    %643 = vmatpush.bf16.msra.mxu0 %v634
    %644 = vmatmul.bf16.gmra.mxu0 %v610
    %v645 = vpop.f32.mrf.mxu0
    %v646 = vadd.f32 %v571, %v645
    %v647 = vpop.f32.mrf.mxu0
    %v648 = vadd.f32 %v573, %v647
    %649 = vmatmul.bf16.gmra.mxu0 %v613
    %v650 = vpop.f32.mrf.mxu0
    %v651 = vadd.f32 %v576, %v650
    %v652 = vpop.f32.mrf.mxu0
    %v653 = vadd.f32 %v578, %v652
    %654 = vmatmul.bf16.gmra.mxu0 %v616
    %v655 = vpop.f32.mrf.mxu0
    %v656 = vadd.f32 %v581, %v655
    %v657 = vpop.f32.mrf.mxu0
    %v658 = vadd.f32 %v583, %v657
    %659 = vmatmul.bf16.gmra.mxu0 %v619
    %v660 = vpop.f32.mrf.mxu0
    %v661 = vadd.f32 %v586, %v660
    %v662 = vpop.f32.mrf.mxu0
    %v663 = vadd.f32 %v588, %v662
    %664 = vmatmul.bf16.gmra.mxu0 %v622
    %v665 = vpop.f32.mrf.mxu0
    %v666 = vadd.f32 %v591, %v665
    %v667 = vpop.f32.mrf.mxu0
    %v668 = vadd.f32 %v593, %v667
    %669 = vmatmul.bf16.gmra.mxu0 %v625
    %v670 = vpop.f32.mrf.mxu0
    %v671 = vadd.f32 %v596, %v670
    %v672 = vpop.f32.mrf.mxu0
    %v673 = vadd.f32 %v598, %v672
    %674 = vmatmul.bf16.gmra.mxu0 %v628
    %v675 = vpop.f32.mrf.mxu0
    %v676 = vadd.f32 %v601, %v675
    %v677 = vpop.f32.mrf.mxu0
    %v678 = vadd.f32 %v603, %v677
    %679 = vmatmul.bf16.gmra.mxu0 %v631
    %v680 = vpop.f32.mrf.mxu0
    %v681 = vadd.f32 %v606, %v680
    %v682 = vpop.f32.mrf.mxu0
    %v683 = vadd.f32 %v608, %v682
    %684 = vdwg.mxu0
    %v685 = vsel %vm533, %v518, 0
    %v688 = vsel %vm191, %v523, 0
    %690 = vmatpush.bf16.msra.mxu0 0
    %691 = vmatpush.bf16.msra.mxu0 0
    %692 = vmatpush.bf16.msra.mxu0 0
    %693 = vmatpush.bf16.msra.mxu0 0
    %694 = vmatpush.bf16.msra.mxu0 0
    %695 = vmatpush.bf16.msra.mxu0 0
    %696 = vmatpush.bf16.msra.mxu0 0
    %697 = vmatpush.bf16.msra.mxu0 %v688
    %698 = vmatmul.bf16.gmra.mxu0 %v613
    %v699 = vpop.f32.mrf.mxu0
    %v700 = vadd.f32 0.0, %v699
    %v701 = vpop.f32.mrf.mxu0
    %v702 = vadd.f32 0.0, %v701
    %703 = vmatmul.bf16.gmra.mxu0 %v616
    %v704 = vpop.f32.mrf.mxu0
    %v705 = vadd.f32 0.0, %v704
    %v706 = vpop.f32.mrf.mxu0
    %v707 = vadd.f32 0.0, %v706
    %708 = vmatmul.bf16.gmra.mxu0 %v619
    %v709 = vpop.f32.mrf.mxu0
    %v710 = vadd.f32 0.0, %v709
    %v711 = vpop.f32.mrf.mxu0
    %v712 = vadd.f32 0.0, %v711
    %713 = vmatmul.bf16.gmra.mxu0 %v622
    %v714 = vpop.f32.mrf.mxu0
    %v715 = vadd.f32 0.0, %v714
    %v716 = vpop.f32.mrf.mxu0
    %v717 = vadd.f32 0.0, %v716
    %718 = vmatmul.bf16.gmra.mxu0 %v625
    %v719 = vpop.f32.mrf.mxu0
    %v720 = vadd.f32 0.0, %v719
    %v721 = vpop.f32.mrf.mxu0
    %v722 = vadd.f32 0.0, %v721
    %723 = vmatmul.bf16.gmra.mxu0 %v628
    %v724 = vpop.f32.mrf.mxu0
    %v725 = vadd.f32 0.0, %v724
    %v726 = vpop.f32.mrf.mxu0
    %v727 = vadd.f32 0.0, %v726
    %728 = vmatmul.bf16.gmra.mxu0 %v631
    %v729 = vpop.f32.mrf.mxu0
    %v730 = vadd.f32 0.0, %v729
    %v731 = vpop.f32.mrf.mxu0
    %v732 = vadd.f32 0.0, %v731
    %733 = vmatmul.bf16.gmra.mxu0 %v685
    %v734 = vpop.f32.mrf.mxu0
    %v735 = vadd.f32 0.0, %v734
    %v736 = vpop.f32.mrf.mxu0
    %v737 = vadd.f32 0.0, %v736
    %738 = vdwg.mxu0
    %v739 = vadd.f32 %v646, %v700
    %v740 = vadd.f32 %v648, %v702
    %v741 = vadd.f32 %v651, %v705
    %v742 = vadd.f32 %v653, %v707
    %v743 = vadd.f32 %v656, %v710
    %v744 = vadd.f32 %v658, %v712
    %v745 = vadd.f32 %v661, %v715
    %v746 = vadd.f32 %v663, %v717
    %v747 = vadd.f32 %v666, %v720
    %v748 = vadd.f32 %v668, %v722
    %v749 = vadd.f32 %v671, %v725
    %v750 = vadd.f32 %v673, %v727
    %v751 = vadd.f32 %v676, %v730
    %v752 = vadd.f32 %v678, %v732
    %v753 = vadd.f32 %v681, %v735
    %v754 = vadd.f32 %v683, %v737
    %v756 = vperm.slane %v524, 0
    %v758 = vadd.f32 %v739, %v756
    %v759 = vadd.f32 %v740, %v756
    %v760 = vadd.f32 %v741, %v756
    %v761 = vadd.f32 %v742, %v756
    %v762 = vadd.f32 %v743, %v756
    %v763 = vadd.f32 %v744, %v756
    %v764 = vadd.f32 %v745, %v756
    %v765 = vadd.f32 %v746, %v756
    %v766 = vadd.f32 %v747, %v756
    %v767 = vadd.f32 %v748, %v756
    %v768 = vadd.f32 %v749, %v756
    %v769 = vadd.f32 %v750, %v756
    %v770 = vadd.f32 %v751, %v756
    %v771 = vadd.f32 %v752, %v756
    %v772 = vadd.f32 %v753, %v756
    %v773 = vadd.f32 %v754, %v756
    %v774 = vld [vmem:[%s5] sm:$0xf]
    %s775 = scalar_lea.vmem %s5, 4
    %v776 = vld [vmem:[%s775] sm:$0xf]
    %s777 = scalar_lea.vmem %s5, 8
    %v778 = vld [vmem:[%s777] sm:$0xf]
    %v779 = vld [vmem:[%s6] sm:$0x1]
    %v781 = vsel %vm191, %v776, 0
    %783 = vmatpush.bf16.msra.mxu0 0
    %784 = vmatpush.bf16.msra.mxu0 0
    %785 = vmatpush.bf16.msra.mxu0 0
    %786 = vmatpush.bf16.msra.mxu0 0
    %787 = vmatpush.bf16.msra.mxu0 0
    %788 = vmatpush.bf16.msra.mxu0 0
    %789 = vmatpush.bf16.msra.mxu0 0
    %790 = vmatpush.bf16.msra.mxu0 %v781
    %791 = vmatmul.bf16.gmra.mxu0 %v535
    %v792 = vpop.f32.mrf.mxu0
    %v793 = vadd.f32 0.0, %v792
    %v794 = vpop.f32.mrf.mxu0
    %v795 = vadd.f32 0.0, %v794
    %796 = vmatmul.bf16.gmra.mxu0 %v538
    %v797 = vpop.f32.mrf.mxu0
    %v798 = vadd.f32 0.0, %v797
    %v799 = vpop.f32.mrf.mxu0
    %v800 = vadd.f32 0.0, %v799
    %801 = vmatmul.bf16.gmra.mxu0 %v541
    %v802 = vpop.f32.mrf.mxu0
    %v803 = vadd.f32 0.0, %v802
    %v804 = vpop.f32.mrf.mxu0
    %v805 = vadd.f32 0.0, %v804
    %806 = vmatmul.bf16.gmra.mxu0 %v544
    %v807 = vpop.f32.mrf.mxu0
    %v808 = vadd.f32 0.0, %v807
    %v809 = vpop.f32.mrf.mxu0
    %v810 = vadd.f32 0.0, %v809
    %811 = vmatmul.bf16.gmra.mxu0 %v547
    %v812 = vpop.f32.mrf.mxu0
    %v813 = vadd.f32 0.0, %v812
    %v814 = vpop.f32.mrf.mxu0
    %v815 = vadd.f32 0.0, %v814
    %816 = vmatmul.bf16.gmra.mxu0 %v550
    %v817 = vpop.f32.mrf.mxu0
    %v818 = vadd.f32 0.0, %v817
    %v819 = vpop.f32.mrf.mxu0
    %v820 = vadd.f32 0.0, %v819
    %821 = vmatmul.bf16.gmra.mxu0 %v553
    %v822 = vpop.f32.mrf.mxu0
    %v823 = vadd.f32 0.0, %v822
    %v824 = vpop.f32.mrf.mxu0
    %v825 = vadd.f32 0.0, %v824
    %826 = vmatmul.bf16.gmra.mxu0 %v556
    %v827 = vpop.f32.mrf.mxu0
    %v828 = vadd.f32 0.0, %v827
    %v829 = vpop.f32.mrf.mxu0
    %v830 = vadd.f32 0.0, %v829
    %831 = vdwg.mxu0
    %v833 = vsel %vm191, %v774, 0
    %835 = vmatpush.bf16.msra.mxu0 0
    %836 = vmatpush.bf16.msra.mxu0 0
    %837 = vmatpush.bf16.msra.mxu0 0
    %838 = vmatpush.bf16.msra.mxu0 0
    %839 = vmatpush.bf16.msra.mxu0 0
    %840 = vmatpush.bf16.msra.mxu0 0
    %841 = vmatpush.bf16.msra.mxu0 0
    %842 = vmatpush.bf16.msra.mxu0 %v833
    %843 = vmatmul.bf16.gmra.mxu0 %v610
    %v844 = vpop.f32.mrf.mxu0
    %v845 = vadd.f32 %v793, %v844
    %v846 = vpop.f32.mrf.mxu0
    %v847 = vadd.f32 %v795, %v846
    %848 = vmatmul.bf16.gmra.mxu0 %v613
    %v849 = vpop.f32.mrf.mxu0
    %v850 = vadd.f32 %v798, %v849
    %v851 = vpop.f32.mrf.mxu0
    %v852 = vadd.f32 %v800, %v851
    %853 = vmatmul.bf16.gmra.mxu0 %v616
    %v854 = vpop.f32.mrf.mxu0
    %v855 = vadd.f32 %v803, %v854
    %v856 = vpop.f32.mrf.mxu0
    %v857 = vadd.f32 %v805, %v856
    %858 = vmatmul.bf16.gmra.mxu0 %v619
    %v859 = vpop.f32.mrf.mxu0
    %v860 = vadd.f32 %v808, %v859
    %v861 = vpop.f32.mrf.mxu0
    %v862 = vadd.f32 %v810, %v861
    %863 = vmatmul.bf16.gmra.mxu0 %v622
    %v864 = vpop.f32.mrf.mxu0
    %v865 = vadd.f32 %v813, %v864
    %v866 = vpop.f32.mrf.mxu0
    %v867 = vadd.f32 %v815, %v866
    %868 = vmatmul.bf16.gmra.mxu0 %v625
    %v869 = vpop.f32.mrf.mxu0
    %v870 = vadd.f32 %v818, %v869
    %v871 = vpop.f32.mrf.mxu0
    %v872 = vadd.f32 %v820, %v871
    %873 = vmatmul.bf16.gmra.mxu0 %v628
    %v874 = vpop.f32.mrf.mxu0
    %v875 = vadd.f32 %v823, %v874
    %v876 = vpop.f32.mrf.mxu0
    %v877 = vadd.f32 %v825, %v876
    %878 = vmatmul.bf16.gmra.mxu0 %v631
    %v879 = vpop.f32.mrf.mxu0
    %v880 = vadd.f32 %v828, %v879
    %v881 = vpop.f32.mrf.mxu0
    %v882 = vadd.f32 %v830, %v881
    %883 = vdwg.mxu0
    %v885 = vsel %vm191, %v778, 0
    %887 = vmatpush.bf16.msra.mxu0 0
    %888 = vmatpush.bf16.msra.mxu0 0
    %889 = vmatpush.bf16.msra.mxu0 0
    %890 = vmatpush.bf16.msra.mxu0 0
    %891 = vmatpush.bf16.msra.mxu0 0
    %892 = vmatpush.bf16.msra.mxu0 0
    %893 = vmatpush.bf16.msra.mxu0 0
    %894 = vmatpush.bf16.msra.mxu0 %v885
    %895 = vmatmul.bf16.gmra.mxu0 %v613
    %v896 = vpop.f32.mrf.mxu0
    %v897 = vadd.f32 0.0, %v896
    %v898 = vpop.f32.mrf.mxu0
    %v899 = vadd.f32 0.0, %v898
    %900 = vmatmul.bf16.gmra.mxu0 %v616
    %v901 = vpop.f32.mrf.mxu0
    %v902 = vadd.f32 0.0, %v901
    %v903 = vpop.f32.mrf.mxu0
    %v904 = vadd.f32 0.0, %v903
    %905 = vmatmul.bf16.gmra.mxu0 %v619
    %v906 = vpop.f32.mrf.mxu0
    %v907 = vadd.f32 0.0, %v906
    %v908 = vpop.f32.mrf.mxu0
    %v909 = vadd.f32 0.0, %v908
    %910 = vmatmul.bf16.gmra.mxu0 %v622
    %v911 = vpop.f32.mrf.mxu0
    %v912 = vadd.f32 0.0, %v911
    %v913 = vpop.f32.mrf.mxu0
    %v914 = vadd.f32 0.0, %v913
    %915 = vmatmul.bf16.gmra.mxu0 %v625
    %v916 = vpop.f32.mrf.mxu0
    %v917 = vadd.f32 0.0, %v916
    %v918 = vpop.f32.mrf.mxu0
    %v919 = vadd.f32 0.0, %v918
    %920 = vmatmul.bf16.gmra.mxu0 %v628
    %v921 = vpop.f32.mrf.mxu0
    %v922 = vadd.f32 0.0, %v921
    %v923 = vpop.f32.mrf.mxu0
    %v924 = vadd.f32 0.0, %v923
    %925 = vmatmul.bf16.gmra.mxu0 %v631
    %v926 = vpop.f32.mrf.mxu0
    %v927 = vadd.f32 0.0, %v926
    %v928 = vpop.f32.mrf.mxu0
    %v929 = vadd.f32 0.0, %v928
    %930 = vmatmul.bf16.gmra.mxu0 %v685
    %v931 = vpop.f32.mrf.mxu0
    %v932 = vadd.f32 0.0, %v931
    %v933 = vpop.f32.mrf.mxu0
    %v934 = vadd.f32 0.0, %v933
    %935 = vdwg.mxu0
    %v936 = vadd.f32 %v845, %v897
    %v937 = vadd.f32 %v847, %v899
    %v938 = vadd.f32 %v850, %v902
    %v939 = vadd.f32 %v852, %v904
    %v940 = vadd.f32 %v855, %v907
    %v941 = vadd.f32 %v857, %v909
    %v942 = vadd.f32 %v860, %v912
    %v943 = vadd.f32 %v862, %v914
    %v944 = vadd.f32 %v865, %v917
    %v945 = vadd.f32 %v867, %v919
    %v946 = vadd.f32 %v870, %v922
    %v947 = vadd.f32 %v872, %v924
    %v948 = vadd.f32 %v875, %v927
    %v949 = vadd.f32 %v877, %v929
    %v950 = vadd.f32 %v880, %v932
    %v951 = vadd.f32 %v882, %v934
    %v953 = vperm.slane %v779, 0
    %v955 = vadd.f32 %v936, %v953
    %v956 = vadd.f32 %v937, %v953
    %v957 = vadd.f32 %v938, %v953
    %v958 = vadd.f32 %v939, %v953
    %v959 = vadd.f32 %v940, %v953
    %v960 = vadd.f32 %v941, %v953
    %v961 = vadd.f32 %v942, %v953
    %v962 = vadd.f32 %v943, %v953
    %v963 = vadd.f32 %v944, %v953
    %v964 = vadd.f32 %v945, %v953
    %v965 = vadd.f32 %v946, %v953
    %v966 = vadd.f32 %v947, %v953
    %v967 = vadd.f32 %v948, %v953
    %v968 = vadd.f32 %v949, %v953
    %v969 = vadd.f32 %v950, %v953
    %v970 = vadd.f32 %v951, %v953
    %v971 = vtanh.pop %v758
    %v972 = vtanh.pop %v759
    %v973 = vtanh.pop %v760
    %v974 = vtanh.pop %v761
    %v975 = vtanh.pop %v762
    %v976 = vtanh.pop %v763
    %v977 = vtanh.pop %v764
    %v978 = vtanh.pop %v765
    %v979 = vtanh.pop %v766
    %v980 = vtanh.pop %v767
    %v981 = vtanh.pop %v768
    %v982 = vtanh.pop %v769
    %v983 = vtanh.pop %v770
    %v984 = vtanh.pop %v771
    %v985 = vtanh.pop %v772
    %v986 = vtanh.pop %v773
    %v987 = vmul.f32 %v955, 0.5
    %v988 = vmul.f32 %v956, 0.5
    %v989 = vmul.f32 %v957, 0.5
    %v990 = vmul.f32 %v958, 0.5
    %v991 = vmul.f32 %v959, 0.5
    %v992 = vmul.f32 %v960, 0.5
    %v993 = vmul.f32 %v961, 0.5
    %v994 = vmul.f32 %v962, 0.5
    %v995 = vmul.f32 %v963, 0.5
    %v996 = vmul.f32 %v964, 0.5
    %v997 = vmul.f32 %v965, 0.5
    %v998 = vmul.f32 %v966, 0.5
    %v999 = vmul.f32 %v967, 0.5
    %v1000 = vmul.f32 %v968, 0.5
    %v1001 = vmul.f32 %v969, 0.5
    %v1002 = vmul.f32 %v970, 0.5
    %v1003 = vtanh.pop %v987
    %v1004 = vtanh.pop %v988
    %v1005 = vtanh.pop %v989
    %v1006 = vtanh.pop %v990
    %v1007 = vtanh.pop %v991
    %v1008 = vtanh.pop %v992
    %v1009 = vtanh.pop %v993
    %v1010 = vtanh.pop %v994
    %v1011 = vtanh.pop %v995
    %v1012 = vtanh.pop %v996
    %v1013 = vtanh.pop %v997
    %v1014 = vtanh.pop %v998
    %v1015 = vtanh.pop %v999
    %v1016 = vtanh.pop %v1000
    %v1017 = vtanh.pop %v1001
    %v1018 = vtanh.pop %v1002
    %v1019 = vmul.f32 %v1003, 0.5
    %v1020 = vmul.f32 %v1004, 0.5
    %v1021 = vmul.f32 %v1005, 0.5
    %v1022 = vmul.f32 %v1006, 0.5
    %v1023 = vmul.f32 %v1007, 0.5
    %v1024 = vmul.f32 %v1008, 0.5
    %v1025 = vmul.f32 %v1009, 0.5
    %v1026 = vmul.f32 %v1010, 0.5
    %v1027 = vmul.f32 %v1011, 0.5
    %v1028 = vmul.f32 %v1012, 0.5
    %v1029 = vmul.f32 %v1013, 0.5
    %v1030 = vmul.f32 %v1014, 0.5
    %v1031 = vmul.f32 %v1015, 0.5
    %v1032 = vmul.f32 %v1016, 0.5
    %v1033 = vmul.f32 %v1017, 0.5
    %v1034 = vmul.f32 %v1018, 0.5
    %v1035 = vadd.f32 %v1019, 0.5
    %v1036 = vadd.f32 %v1020, 0.5
    %v1037 = vadd.f32 %v1021, 0.5
    %v1038 = vadd.f32 %v1022, 0.5
    %v1039 = vadd.f32 %v1023, 0.5
    %v1040 = vadd.f32 %v1024, 0.5
    %v1041 = vadd.f32 %v1025, 0.5
    %v1042 = vadd.f32 %v1026, 0.5
    %v1043 = vadd.f32 %v1027, 0.5
    %v1044 = vadd.f32 %v1028, 0.5
    %v1045 = vadd.f32 %v1029, 0.5
    %v1046 = vadd.f32 %v1030, 0.5
    %v1047 = vadd.f32 %v1031, 0.5
    %v1048 = vadd.f32 %v1032, 0.5
    %v1049 = vadd.f32 %v1033, 0.5
    %v1050 = vadd.f32 %v1034, 0.5
    %v1051 = vmul.f32 %v971, %v1035
    %v1052 = vmul.f32 %v972, %v1036
    %v1053 = vmul.f32 %v973, %v1037
    %v1054 = vmul.f32 %v974, %v1038
    %v1055 = vmul.f32 %v975, %v1039
    %v1056 = vmul.f32 %v976, %v1040
    %v1057 = vmul.f32 %v977, %v1041
    %v1058 = vmul.f32 %v978, %v1042
    %v1059 = vmul.f32 %v979, %v1043
    %v1060 = vmul.f32 %v980, %v1044
    %v1061 = vmul.f32 %v981, %v1045
    %v1062 = vmul.f32 %v982, %v1046
    %v1063 = vmul.f32 %v983, %v1047
    %v1064 = vmul.f32 %v984, %v1048
    %v1065 = vmul.f32 %v985, %v1049
    %v1066 = vmul.f32 %v986, %v1050
    %v1067 = vpack.c.bf16 %v1052, %v1051
    %v1068 = vpack.c.bf16 %v1054, %v1053
    %v1069 = vpack.c.bf16 %v1056, %v1055
    %v1070 = vpack.c.bf16 %v1058, %v1057
    %v1071 = vpack.c.bf16 %v1060, %v1059
    %v1072 = vpack.c.bf16 %v1062, %v1061
    %v1073 = vpack.c.bf16 %v1064, %v1063
    %v1074 = vpack.c.bf16 %v1066, %v1065
    %v1076 = vperm.slane %v457, 0
    %v1079 = vsel %vm533, %v1067, 0
    %v1082 = vsel %vm533, %v1068, 0
    %v1085 = vsel %vm533, %v1069, 0
    %v1088 = vsel %vm533, %v1070, 0
    %v1091 = vsel %vm533, %v1071, 0
    %v1094 = vsel %vm533, %v1072, 0
    %v1097 = vsel %vm533, %v1073, 0
    %v1100 = vsel %vm533, %v1074, 0
    %v1103 = vsel %vm191, %v456, 0
    %1105 = vmatpush.bf16.msra.mxu0 0
    %1106 = vmatpush.bf16.msra.mxu0 0
    %1107 = vmatpush.bf16.msra.mxu0 0
    %1108 = vmatpush.bf16.msra.mxu0 0
    %1109 = vmatpush.bf16.msra.mxu0 0
    %1110 = vmatpush.bf16.msra.mxu0 0
    %1111 = vmatpush.bf16.msra.mxu0 0
    %1112 = vmatpush.bf16.msra.mxu0 %v1103
    %1113 = vmatmul.bf16.gmra.mxu0 %v1079
    %v1114 = vpop.f32.mrf.mxu0
    %v1115 = vadd.f32 %v1076, %v1114
    %v1116 = vpop.f32.mrf.mxu0
    %v1117 = vadd.f32 %v1076, %v1116
    %1118 = vmatmul.bf16.gmra.mxu0 %v1082
    %v1119 = vpop.f32.mrf.mxu0
    %v1120 = vadd.f32 %v1076, %v1119
    %v1121 = vpop.f32.mrf.mxu0
    %v1122 = vadd.f32 %v1076, %v1121
    %1123 = vmatmul.bf16.gmra.mxu0 %v1085
    %v1124 = vpop.f32.mrf.mxu0
    %v1125 = vadd.f32 %v1076, %v1124
    %v1126 = vpop.f32.mrf.mxu0
    %v1127 = vadd.f32 %v1076, %v1126
    %1128 = vmatmul.bf16.gmra.mxu0 %v1088
    %v1129 = vpop.f32.mrf.mxu0
    %v1130 = vadd.f32 %v1076, %v1129
    %v1131 = vpop.f32.mrf.mxu0
    %v1132 = vadd.f32 %v1076, %v1131
    %1133 = vmatmul.bf16.gmra.mxu0 %v1091
    %v1134 = vpop.f32.mrf.mxu0
    %v1135 = vadd.f32 %v1076, %v1134
    %v1136 = vpop.f32.mrf.mxu0
    %v1137 = vadd.f32 %v1076, %v1136
    %1138 = vmatmul.bf16.gmra.mxu0 %v1094
    %v1139 = vpop.f32.mrf.mxu0
    %v1140 = vadd.f32 %v1076, %v1139
    %v1141 = vpop.f32.mrf.mxu0
    %v1142 = vadd.f32 %v1076, %v1141
    %1143 = vmatmul.bf16.gmra.mxu0 %v1097
    %v1144 = vpop.f32.mrf.mxu0
    %v1145 = vadd.f32 %v1076, %v1144
    %v1146 = vpop.f32.mrf.mxu0
    %v1147 = vadd.f32 %v1076, %v1146
    %1148 = vmatmul.bf16.gmra.mxu0 %v1100
    %v1149 = vpop.f32.mrf.mxu0
    %v1150 = vadd.f32 %v1076, %v1149
    %v1151 = vpop.f32.mrf.mxu0
    %v1152 = vadd.f32 %v1076, %v1151
    %1153 = vdwg.mxu0
    %v1154 = vadd.f32 %v440, %v1115
    %v1155 = vadd.f32 %v441, %v1117
    %v1156 = vadd.f32 %v442, %v1120
    %v1157 = vadd.f32 %v443, %v1122
    %v1158 = vadd.f32 %v444, %v1125
    %v1159 = vadd.f32 %v445, %v1127
    %v1160 = vadd.f32 %v446, %v1130
    %v1161 = vadd.f32 %v447, %v1132
    %v1162 = vadd.f32 %v448, %v1135
    %v1163 = vadd.f32 %v449, %v1137
    %v1164 = vadd.f32 %v450, %v1140
    %v1165 = vadd.f32 %v451, %v1142
    %v1166 = vadd.f32 %v452, %v1145
    %v1167 = vadd.f32 %v453, %v1147
    %v1168 = vadd.f32 %v454, %v1150
    %v1169 = vadd.f32 %v455, %v1152
    %v1170 = vpack.c.bf16 %v1115, %v1115
    %v1171 = vpack.c.bf16 %v1117, %v1117
    %v1172 = vpack.c.bf16 %v1120, %v1120
    %v1173 = vpack.c.bf16 %v1122, %v1122
    %v1174 = vpack.c.bf16 %v1125, %v1125
    %v1175 = vpack.c.bf16 %v1127, %v1127
    %v1176 = vpack.c.bf16 %v1130, %v1130
    %v1177 = vpack.c.bf16 %v1132, %v1132
    %v1178 = vpack.c.bf16 %v1135, %v1135
    %v1179 = vpack.c.bf16 %v1137, %v1137
    %v1180 = vpack.c.bf16 %v1140, %v1140
    %v1181 = vpack.c.bf16 %v1142, %v1142
    %v1182 = vpack.c.bf16 %v1145, %v1145
    %v1183 = vpack.c.bf16 %v1147, %v1147
    %v1184 = vpack.c.bf16 %v1150, %v1150
    %v1185 = vpack.c.bf16 %v1152, %v1152
    %v1200 = vunpack.c.l.b16 %v1170
    %v1201 = vunpack.c.l.b16 %v1171
    %v1202 = vunpack.c.l.b16 %v1172
    %v1203 = vunpack.c.l.b16 %v1173
    %v1204 = vunpack.c.l.b16 %v1174
    %v1205 = vunpack.c.l.b16 %v1175
    %v1206 = vunpack.c.l.b16 %v1176
    %v1207 = vunpack.c.l.b16 %v1177
    %v1208 = vunpack.c.l.b16 %v1178
    %v1209 = vunpack.c.l.b16 %v1179
    %v1210 = vunpack.c.l.b16 %v1180
    %v1211 = vunpack.c.l.b16 %v1181
    %v1212 = vunpack.c.l.b16 %v1182
    %v1213 = vunpack.c.l.b16 %v1183
    %v1214 = vpack.c.b16 %v1201, %v1200
    %v1215 = vpack.c.b16 %v1203, %v1202
    %v1216 = vpack.c.b16 %v1205, %v1204
    %v1217 = vpack.c.b16 %v1207, %v1206
    %v1218 = vpack.c.b16 %v1209, %v1208
    %v1219 = vpack.c.b16 %v1211, %v1210
    %v1220 = vpack.c.b16 %v1213, %v1212
    %v1223 = vunpack.c.l.b16 %v1184
    %v1224 = vunpack.c.l.b16 %v1185
    %v1225 = vpack.c.b16 %v1224, %v1223
    %s1226 = scalar_lea.vmem %s3, 12
    %v1227 = vld [vmem:[%s1226] sm:$0xf]
    %s1228 = scalar_lea.vmem %s3, 16
    %v1229 = vld [vmem:[%s1228] sm:$0xf]
    %s1230 = scalar_lea.vmem %s3, 20
    %v1231 = vld [vmem:[%s1230] sm:$0xf]
    %s1232 = scalar_lea.vmem %s4, 1
    %v1233 = vld [vmem:[%s1232] sm:$0x1]
    %v1235 = vsel %vm533, %v1214, 0
    %v1238 = vsel %vm533, %v1215, 0
    %v1241 = vsel %vm533, %v1216, 0
    %v1244 = vsel %vm533, %v1217, 0
    %v1247 = vsel %vm533, %v1218, 0
    %v1250 = vsel %vm533, %v1219, 0
    %v1253 = vsel %vm533, %v1220, 0
    %v1256 = vsel %vm533, %v1225, 0
    %v1259 = vsel %vm191, %v1229, 0
    %1261 = vmatpush.bf16.msra.mxu0 0
    %1262 = vmatpush.bf16.msra.mxu0 0
    %1263 = vmatpush.bf16.msra.mxu0 0
    %1264 = vmatpush.bf16.msra.mxu0 0
    %1265 = vmatpush.bf16.msra.mxu0 0
    %1266 = vmatpush.bf16.msra.mxu0 0
    %1267 = vmatpush.bf16.msra.mxu0 0
    %1268 = vmatpush.bf16.msra.mxu0 %v1259
    %1269 = vmatmul.bf16.gmra.mxu0 %v1235
    %v1270 = vpop.f32.mrf.mxu0
    %v1271 = vadd.f32 0.0, %v1270
    %v1272 = vpop.f32.mrf.mxu0
    %v1273 = vadd.f32 0.0, %v1272
    %1274 = vmatmul.bf16.gmra.mxu0 %v1238
    %v1275 = vpop.f32.mrf.mxu0
    %v1276 = vadd.f32 0.0, %v1275
    %v1277 = vpop.f32.mrf.mxu0
    %v1278 = vadd.f32 0.0, %v1277
    %1279 = vmatmul.bf16.gmra.mxu0 %v1241
    %v1280 = vpop.f32.mrf.mxu0
    %v1281 = vadd.f32 0.0, %v1280
    %v1282 = vpop.f32.mrf.mxu0
    %v1283 = vadd.f32 0.0, %v1282
    %1284 = vmatmul.bf16.gmra.mxu0 %v1244
    %v1285 = vpop.f32.mrf.mxu0
    %v1286 = vadd.f32 0.0, %v1285
    %v1287 = vpop.f32.mrf.mxu0
    %v1288 = vadd.f32 0.0, %v1287
    %1289 = vmatmul.bf16.gmra.mxu0 %v1247
    %v1290 = vpop.f32.mrf.mxu0
    %v1291 = vadd.f32 0.0, %v1290
    %v1292 = vpop.f32.mrf.mxu0
    %v1293 = vadd.f32 0.0, %v1292
    %1294 = vmatmul.bf16.gmra.mxu0 %v1250
    %v1295 = vpop.f32.mrf.mxu0
    %v1296 = vadd.f32 0.0, %v1295
    %v1297 = vpop.f32.mrf.mxu0
    %v1298 = vadd.f32 0.0, %v1297
    %1299 = vmatmul.bf16.gmra.mxu0 %v1253
    %v1300 = vpop.f32.mrf.mxu0
    %v1301 = vadd.f32 0.0, %v1300
    %v1302 = vpop.f32.mrf.mxu0
    %v1303 = vadd.f32 0.0, %v1302
    %1304 = vmatmul.bf16.gmra.mxu0 %v1256
    %v1305 = vpop.f32.mrf.mxu0
    %v1306 = vadd.f32 0.0, %v1305
    %v1307 = vpop.f32.mrf.mxu0
    %v1308 = vadd.f32 0.0, %v1307
    %1309 = vdwg.mxu0
    %v1310 = vsel %vm533, 0, 0
    %v1313 = vsel %vm191, %v1227, 0
    %1315 = vmatpush.bf16.msra.mxu0 0
    %1316 = vmatpush.bf16.msra.mxu0 0
    %1317 = vmatpush.bf16.msra.mxu0 0
    %1318 = vmatpush.bf16.msra.mxu0 0
    %1319 = vmatpush.bf16.msra.mxu0 0
    %1320 = vmatpush.bf16.msra.mxu0 0
    %1321 = vmatpush.bf16.msra.mxu0 0
    %1322 = vmatpush.bf16.msra.mxu0 %v1313
    %1323 = vmatmul.bf16.gmra.mxu0 %v1310
    %v1324 = vpop.f32.mrf.mxu0
    %v1325 = vadd.f32 %v1271, %v1324
    %v1326 = vpop.f32.mrf.mxu0
    %v1327 = vadd.f32 %v1273, %v1326
    %1328 = vmatmul.bf16.gmra.mxu0 %v1235
    %v1329 = vpop.f32.mrf.mxu0
    %v1330 = vadd.f32 %v1276, %v1329
    %v1331 = vpop.f32.mrf.mxu0
    %v1332 = vadd.f32 %v1278, %v1331
    %1333 = vmatmul.bf16.gmra.mxu0 %v1238
    %v1334 = vpop.f32.mrf.mxu0
    %v1335 = vadd.f32 %v1281, %v1334
    %v1336 = vpop.f32.mrf.mxu0
    %v1337 = vadd.f32 %v1283, %v1336
    %1338 = vmatmul.bf16.gmra.mxu0 %v1241
    %v1339 = vpop.f32.mrf.mxu0
    %v1340 = vadd.f32 %v1286, %v1339
    %v1341 = vpop.f32.mrf.mxu0
    %v1342 = vadd.f32 %v1288, %v1341
    %1343 = vmatmul.bf16.gmra.mxu0 %v1244
    %v1344 = vpop.f32.mrf.mxu0
    %v1345 = vadd.f32 %v1291, %v1344
    %v1346 = vpop.f32.mrf.mxu0
    %v1347 = vadd.f32 %v1293, %v1346
    %1348 = vmatmul.bf16.gmra.mxu0 %v1247
    %v1349 = vpop.f32.mrf.mxu0
    %v1350 = vadd.f32 %v1296, %v1349
    %v1351 = vpop.f32.mrf.mxu0
    %v1352 = vadd.f32 %v1298, %v1351
    %1353 = vmatmul.bf16.gmra.mxu0 %v1250
    %v1354 = vpop.f32.mrf.mxu0
    %v1355 = vadd.f32 %v1301, %v1354
    %v1356 = vpop.f32.mrf.mxu0
    %v1357 = vadd.f32 %v1303, %v1356
    %1358 = vmatmul.bf16.gmra.mxu0 %v1253
    %v1359 = vpop.f32.mrf.mxu0
    %v1360 = vadd.f32 %v1306, %v1359
    %v1361 = vpop.f32.mrf.mxu0
    %v1362 = vadd.f32 %v1308, %v1361
    %1363 = vdwg.mxu0
    %v1365 = vsel %vm191, %v1231, 0
    %1367 = vmatpush.bf16.msra.mxu0 0
    %1368 = vmatpush.bf16.msra.mxu0 0
    %1369 = vmatpush.bf16.msra.mxu0 0
    %1370 = vmatpush.bf16.msra.mxu0 0
    %1371 = vmatpush.bf16.msra.mxu0 0
    %1372 = vmatpush.bf16.msra.mxu0 0
    %1373 = vmatpush.bf16.msra.mxu0 0
    %1374 = vmatpush.bf16.msra.mxu0 %v1365
    %1375 = vmatmul.bf16.gmra.mxu0 %v1238
    %v1376 = vpop.f32.mrf.mxu0
    %v1377 = vadd.f32 0.0, %v1376
    %v1378 = vpop.f32.mrf.mxu0
    %v1379 = vadd.f32 0.0, %v1378
    %1380 = vmatmul.bf16.gmra.mxu0 %v1241
    %v1381 = vpop.f32.mrf.mxu0
    %v1382 = vadd.f32 0.0, %v1381
    %v1383 = vpop.f32.mrf.mxu0
    %v1384 = vadd.f32 0.0, %v1383
    %1385 = vmatmul.bf16.gmra.mxu0 %v1244
    %v1386 = vpop.f32.mrf.mxu0
    %v1387 = vadd.f32 0.0, %v1386
    %v1388 = vpop.f32.mrf.mxu0
    %v1389 = vadd.f32 0.0, %v1388
    %1390 = vmatmul.bf16.gmra.mxu0 %v1247
    %v1391 = vpop.f32.mrf.mxu0
    %v1392 = vadd.f32 0.0, %v1391
    %v1393 = vpop.f32.mrf.mxu0
    %v1394 = vadd.f32 0.0, %v1393
    %1395 = vmatmul.bf16.gmra.mxu0 %v1250
    %v1396 = vpop.f32.mrf.mxu0
    %v1397 = vadd.f32 0.0, %v1396
    %v1398 = vpop.f32.mrf.mxu0
    %v1399 = vadd.f32 0.0, %v1398
    %1400 = vmatmul.bf16.gmra.mxu0 %v1253
    %v1401 = vpop.f32.mrf.mxu0
    %v1402 = vadd.f32 0.0, %v1401
    %v1403 = vpop.f32.mrf.mxu0
    %v1404 = vadd.f32 0.0, %v1403
    %1405 = vmatmul.bf16.gmra.mxu0 %v1256
    %v1406 = vpop.f32.mrf.mxu0
    %v1407 = vadd.f32 0.0, %v1406
    %v1408 = vpop.f32.mrf.mxu0
    %v1409 = vadd.f32 0.0, %v1408
    %1410 = vmatmul.bf16.gmra.mxu0 %v1310
    %v1411 = vpop.f32.mrf.mxu0
    %v1412 = vadd.f32 0.0, %v1411
    %v1413 = vpop.f32.mrf.mxu0
    %v1414 = vadd.f32 0.0, %v1413
    %1415 = vdwg.mxu0
    %v1416 = vadd.f32 %v1325, %v1377
    %v1417 = vadd.f32 %v1327, %v1379
    %v1418 = vadd.f32 %v1330, %v1382
    %v1419 = vadd.f32 %v1332, %v1384
    %v1420 = vadd.f32 %v1335, %v1387
    %v1421 = vadd.f32 %v1337, %v1389
    %v1422 = vadd.f32 %v1340, %v1392
    %v1423 = vadd.f32 %v1342, %v1394
    %v1424 = vadd.f32 %v1345, %v1397
    %v1425 = vadd.f32 %v1347, %v1399
    %v1426 = vadd.f32 %v1350, %v1402
    %v1427 = vadd.f32 %v1352, %v1404
    %v1428 = vadd.f32 %v1355, %v1407
    %v1429 = vadd.f32 %v1357, %v1409
    %v1430 = vadd.f32 %v1360, %v1412
    %v1431 = vadd.f32 %v1362, %v1414
    %v1433 = vperm.slane %v1233, 0
    %v1435 = vadd.f32 %v1416, %v1433
    %v1436 = vadd.f32 %v1417, %v1433
    %v1437 = vadd.f32 %v1418, %v1433
    %v1438 = vadd.f32 %v1419, %v1433
    %v1439 = vadd.f32 %v1420, %v1433
    %v1440 = vadd.f32 %v1421, %v1433
    %v1441 = vadd.f32 %v1422, %v1433
    %v1442 = vadd.f32 %v1423, %v1433
    %v1443 = vadd.f32 %v1424, %v1433
    %v1444 = vadd.f32 %v1425, %v1433
    %v1445 = vadd.f32 %v1426, %v1433
    %v1446 = vadd.f32 %v1427, %v1433
    %v1447 = vadd.f32 %v1428, %v1433
    %v1448 = vadd.f32 %v1429, %v1433
    %v1449 = vadd.f32 %v1430, %v1433
    %v1450 = vadd.f32 %v1431, %v1433
    %s1451 = scalar_lea.vmem %s5, 12
    %v1452 = vld [vmem:[%s1451] sm:$0xf]
    %s1453 = scalar_lea.vmem %s5, 16
    %v1454 = vld [vmem:[%s1453] sm:$0xf]
    %s1455 = scalar_lea.vmem %s5, 20
    %v1456 = vld [vmem:[%s1455] sm:$0xf]
    %s1457 = scalar_lea.vmem %s6, 1
    %v1458 = vld [vmem:[%s1457] sm:$0x1]
    %v1460 = vsel %vm191, %v1454, 0
    %1462 = vmatpush.bf16.msra.mxu0 0
    %1463 = vmatpush.bf16.msra.mxu0 0
    %1464 = vmatpush.bf16.msra.mxu0 0
    %1465 = vmatpush.bf16.msra.mxu0 0
    %1466 = vmatpush.bf16.msra.mxu0 0
    %1467 = vmatpush.bf16.msra.mxu0 0
    %1468 = vmatpush.bf16.msra.mxu0 0
    %1469 = vmatpush.bf16.msra.mxu0 %v1460
    %1470 = vmatmul.bf16.gmra.mxu0 %v1235
    %v1471 = vpop.f32.mrf.mxu0
    %v1472 = vadd.f32 0.0, %v1471
    %v1473 = vpop.f32.mrf.mxu0
    %v1474 = vadd.f32 0.0, %v1473
    %1475 = vmatmul.bf16.gmra.mxu0 %v1238
    %v1476 = vpop.f32.mrf.mxu0
    %v1477 = vadd.f32 0.0, %v1476
    %v1478 = vpop.f32.mrf.mxu0
    %v1479 = vadd.f32 0.0, %v1478
    %1480 = vmatmul.bf16.gmra.mxu0 %v1241
    %v1481 = vpop.f32.mrf.mxu0
    %v1482 = vadd.f32 0.0, %v1481
    %v1483 = vpop.f32.mrf.mxu0
    %v1484 = vadd.f32 0.0, %v1483
    %1485 = vmatmul.bf16.gmra.mxu0 %v1244
    %v1486 = vpop.f32.mrf.mxu0
    %v1487 = vadd.f32 0.0, %v1486
    %v1488 = vpop.f32.mrf.mxu0
    %v1489 = vadd.f32 0.0, %v1488
    %1490 = vmatmul.bf16.gmra.mxu0 %v1247
    %v1491 = vpop.f32.mrf.mxu0
    %v1492 = vadd.f32 0.0, %v1491
    %v1493 = vpop.f32.mrf.mxu0
    %v1494 = vadd.f32 0.0, %v1493
    %1495 = vmatmul.bf16.gmra.mxu0 %v1250
    %v1496 = vpop.f32.mrf.mxu0
    %v1497 = vadd.f32 0.0, %v1496
    %v1498 = vpop.f32.mrf.mxu0
    %v1499 = vadd.f32 0.0, %v1498
    %1500 = vmatmul.bf16.gmra.mxu0 %v1253
    %v1501 = vpop.f32.mrf.mxu0
    %v1502 = vadd.f32 0.0, %v1501
    %v1503 = vpop.f32.mrf.mxu0
    %v1504 = vadd.f32 0.0, %v1503
    %1505 = vmatmul.bf16.gmra.mxu0 %v1256
    %v1506 = vpop.f32.mrf.mxu0
    %v1507 = vadd.f32 0.0, %v1506
    %v1508 = vpop.f32.mrf.mxu0
    %v1509 = vadd.f32 0.0, %v1508
    %1510 = vdwg.mxu0
    %v1512 = vsel %vm191, %v1452, 0
    %1514 = vmatpush.bf16.msra.mxu0 0
    %1515 = vmatpush.bf16.msra.mxu0 0
    %1516 = vmatpush.bf16.msra.mxu0 0
    %1517 = vmatpush.bf16.msra.mxu0 0
    %1518 = vmatpush.bf16.msra.mxu0 0
    %1519 = vmatpush.bf16.msra.mxu0 0
    %1520 = vmatpush.bf16.msra.mxu0 0
    %1521 = vmatpush.bf16.msra.mxu0 %v1512
    %1522 = vmatmul.bf16.gmra.mxu0 %v1310
    %v1523 = vpop.f32.mrf.mxu0
    %v1524 = vadd.f32 %v1472, %v1523
    %v1525 = vpop.f32.mrf.mxu0
    %v1526 = vadd.f32 %v1474, %v1525
    %1527 = vmatmul.bf16.gmra.mxu0 %v1235
    %v1528 = vpop.f32.mrf.mxu0
    %v1529 = vadd.f32 %v1477, %v1528
    %v1530 = vpop.f32.mrf.mxu0
    %v1531 = vadd.f32 %v1479, %v1530
    %1532 = vmatmul.bf16.gmra.mxu0 %v1238
    %v1533 = vpop.f32.mrf.mxu0
    %v1534 = vadd.f32 %v1482, %v1533
    %v1535 = vpop.f32.mrf.mxu0
    %v1536 = vadd.f32 %v1484, %v1535
    %1537 = vmatmul.bf16.gmra.mxu0 %v1241
    %v1538 = vpop.f32.mrf.mxu0
    %v1539 = vadd.f32 %v1487, %v1538
    %v1540 = vpop.f32.mrf.mxu0
    %v1541 = vadd.f32 %v1489, %v1540
    %1542 = vmatmul.bf16.gmra.mxu0 %v1244
    %v1543 = vpop.f32.mrf.mxu0
    %v1544 = vadd.f32 %v1492, %v1543
    %v1545 = vpop.f32.mrf.mxu0
    %v1546 = vadd.f32 %v1494, %v1545
    %1547 = vmatmul.bf16.gmra.mxu0 %v1247
    %v1548 = vpop.f32.mrf.mxu0
    %v1549 = vadd.f32 %v1497, %v1548
    %v1550 = vpop.f32.mrf.mxu0
    %v1551 = vadd.f32 %v1499, %v1550
    %1552 = vmatmul.bf16.gmra.mxu0 %v1250
    %v1553 = vpop.f32.mrf.mxu0
    %v1554 = vadd.f32 %v1502, %v1553
    %v1555 = vpop.f32.mrf.mxu0
    %v1556 = vadd.f32 %v1504, %v1555
    %1557 = vmatmul.bf16.gmra.mxu0 %v1253
    %v1558 = vpop.f32.mrf.mxu0
    %v1559 = vadd.f32 %v1507, %v1558
    %v1560 = vpop.f32.mrf.mxu0
    %v1561 = vadd.f32 %v1509, %v1560
    %1562 = vdwg.mxu0
    %v1564 = vsel %vm191, %v1456, 0
    %1566 = vmatpush.bf16.msra.mxu0 0
    %1567 = vmatpush.bf16.msra.mxu0 0
    %1568 = vmatpush.bf16.msra.mxu0 0
    %1569 = vmatpush.bf16.msra.mxu0 0
    %1570 = vmatpush.bf16.msra.mxu0 0
    %1571 = vmatpush.bf16.msra.mxu0 0
    %1572 = vmatpush.bf16.msra.mxu0 0
    %1573 = vmatpush.bf16.msra.mxu0 %v1564
    %1574 = vmatmul.bf16.gmra.mxu0 %v1238
    %v1575 = vpop.f32.mrf.mxu0
    %v1576 = vadd.f32 0.0, %v1575
    %v1577 = vpop.f32.mrf.mxu0
    %v1578 = vadd.f32 0.0, %v1577
    %1579 = vmatmul.bf16.gmra.mxu0 %v1241
    %v1580 = vpop.f32.mrf.mxu0
    %v1581 = vadd.f32 0.0, %v1580
    %v1582 = vpop.f32.mrf.mxu0
    %v1583 = vadd.f32 0.0, %v1582
    %1584 = vmatmul.bf16.gmra.mxu0 %v1244
    %v1585 = vpop.f32.mrf.mxu0
    %v1586 = vadd.f32 0.0, %v1585
    %v1587 = vpop.f32.mrf.mxu0
    %v1588 = vadd.f32 0.0, %v1587
    %1589 = vmatmul.bf16.gmra.mxu0 %v1247
    %v1590 = vpop.f32.mrf.mxu0
    %v1591 = vadd.f32 0.0, %v1590
    %v1592 = vpop.f32.mrf.mxu0
    %v1593 = vadd.f32 0.0, %v1592
    %1594 = vmatmul.bf16.gmra.mxu0 %v1250
    %v1595 = vpop.f32.mrf.mxu0
    %v1596 = vadd.f32 0.0, %v1595
    %v1597 = vpop.f32.mrf.mxu0
    %v1598 = vadd.f32 0.0, %v1597
    %1599 = vmatmul.bf16.gmra.mxu0 %v1253
    %v1600 = vpop.f32.mrf.mxu0
    %v1601 = vadd.f32 0.0, %v1600
    %v1602 = vpop.f32.mrf.mxu0
    %v1603 = vadd.f32 0.0, %v1602
    %1604 = vmatmul.bf16.gmra.mxu0 %v1256
    %v1605 = vpop.f32.mrf.mxu0
    %v1606 = vadd.f32 0.0, %v1605
    %v1607 = vpop.f32.mrf.mxu0
    %v1608 = vadd.f32 0.0, %v1607
    %1609 = vmatmul.bf16.gmra.mxu0 %v1310
    %v1610 = vpop.f32.mrf.mxu0
    %v1611 = vadd.f32 0.0, %v1610
    %v1612 = vpop.f32.mrf.mxu0
    %v1613 = vadd.f32 0.0, %v1612
    %1614 = vdwg.mxu0
    %v1615 = vadd.f32 %v1524, %v1576
    %v1616 = vadd.f32 %v1526, %v1578
    %v1617 = vadd.f32 %v1529, %v1581
    %v1618 = vadd.f32 %v1531, %v1583
    %v1619 = vadd.f32 %v1534, %v1586
    %v1620 = vadd.f32 %v1536, %v1588
    %v1621 = vadd.f32 %v1539, %v1591
    %v1622 = vadd.f32 %v1541, %v1593
    %v1623 = vadd.f32 %v1544, %v1596
    %v1624 = vadd.f32 %v1546, %v1598
    %v1625 = vadd.f32 %v1549, %v1601
    %v1626 = vadd.f32 %v1551, %v1603
    %v1627 = vadd.f32 %v1554, %v1606
    %v1628 = vadd.f32 %v1556, %v1608
    %v1629 = vadd.f32 %v1559, %v1611
    %v1630 = vadd.f32 %v1561, %v1613
    %v1632 = vperm.slane %v1458, 0
    %v1634 = vadd.f32 %v1615, %v1632
    %v1635 = vadd.f32 %v1616, %v1632
    %v1636 = vadd.f32 %v1617, %v1632
    %v1637 = vadd.f32 %v1618, %v1632
    %v1638 = vadd.f32 %v1619, %v1632
    %v1639 = vadd.f32 %v1620, %v1632
    %v1640 = vadd.f32 %v1621, %v1632
    %v1641 = vadd.f32 %v1622, %v1632
    %v1642 = vadd.f32 %v1623, %v1632
    %v1643 = vadd.f32 %v1624, %v1632
    %v1644 = vadd.f32 %v1625, %v1632
    %v1645 = vadd.f32 %v1626, %v1632
    %v1646 = vadd.f32 %v1627, %v1632
    %v1647 = vadd.f32 %v1628, %v1632
    %v1648 = vadd.f32 %v1629, %v1632
    %v1649 = vadd.f32 %v1630, %v1632
    %v1650 = vtanh.pop %v1435
    %v1651 = vtanh.pop %v1436
    %v1652 = vtanh.pop %v1437
    %v1653 = vtanh.pop %v1438
    %v1654 = vtanh.pop %v1439
    %v1655 = vtanh.pop %v1440
    %v1656 = vtanh.pop %v1441
    %v1657 = vtanh.pop %v1442
    %v1658 = vtanh.pop %v1443
    %v1659 = vtanh.pop %v1444
    %v1660 = vtanh.pop %v1445
    %v1661 = vtanh.pop %v1446
    %v1662 = vtanh.pop %v1447
    %v1663 = vtanh.pop %v1448
    %v1664 = vtanh.pop %v1449
    %v1665 = vtanh.pop %v1450
    %v1666 = vmul.f32 %v1634, 0.5
    %v1667 = vmul.f32 %v1635, 0.5
    %v1668 = vmul.f32 %v1636, 0.5
    %v1669 = vmul.f32 %v1637, 0.5
    %v1670 = vmul.f32 %v1638, 0.5
    %v1671 = vmul.f32 %v1639, 0.5
    %v1672 = vmul.f32 %v1640, 0.5
    %v1673 = vmul.f32 %v1641, 0.5
    %v1674 = vmul.f32 %v1642, 0.5
    %v1675 = vmul.f32 %v1643, 0.5
    %v1676 = vmul.f32 %v1644, 0.5
    %v1677 = vmul.f32 %v1645, 0.5
    %v1678 = vmul.f32 %v1646, 0.5
    %v1679 = vmul.f32 %v1647, 0.5
    %v1680 = vmul.f32 %v1648, 0.5
    %v1681 = vmul.f32 %v1649, 0.5
    %v1682 = vtanh.pop %v1666
    %v1683 = vtanh.pop %v1667
    %v1684 = vtanh.pop %v1668
    %v1685 = vtanh.pop %v1669
    %v1686 = vtanh.pop %v1670
    %v1687 = vtanh.pop %v1671
    %v1688 = vtanh.pop %v1672
    %v1689 = vtanh.pop %v1673
    %v1690 = vtanh.pop %v1674
    %v1691 = vtanh.pop %v1675
    %v1692 = vtanh.pop %v1676
    %v1693 = vtanh.pop %v1677
    %v1694 = vtanh.pop %v1678
    %v1695 = vtanh.pop %v1679
    %v1696 = vtanh.pop %v1680
    %v1697 = vtanh.pop %v1681
    %v1698 = vmul.f32 %v1682, 0.5
    %v1699 = vmul.f32 %v1683, 0.5
    %v1700 = vmul.f32 %v1684, 0.5
    %v1701 = vmul.f32 %v1685, 0.5
    %v1702 = vmul.f32 %v1686, 0.5
    %v1703 = vmul.f32 %v1687, 0.5
    %v1704 = vmul.f32 %v1688, 0.5
    %v1705 = vmul.f32 %v1689, 0.5
    %v1706 = vmul.f32 %v1690, 0.5
    %v1707 = vmul.f32 %v1691, 0.5
    %v1708 = vmul.f32 %v1692, 0.5
    %v1709 = vmul.f32 %v1693, 0.5
    %v1710 = vmul.f32 %v1694, 0.5
    %v1711 = vmul.f32 %v1695, 0.5
    %v1712 = vmul.f32 %v1696, 0.5
    %v1713 = vmul.f32 %v1697, 0.5
    %v1714 = vadd.f32 %v1698, 0.5
    %v1715 = vadd.f32 %v1699, 0.5
    %v1716 = vadd.f32 %v1700, 0.5
    %v1717 = vadd.f32 %v1701, 0.5
    %v1718 = vadd.f32 %v1702, 0.5
    %v1719 = vadd.f32 %v1703, 0.5
    %v1720 = vadd.f32 %v1704, 0.5
    %v1721 = vadd.f32 %v1705, 0.5
    %v1722 = vadd.f32 %v1706, 0.5
    %v1723 = vadd.f32 %v1707, 0.5
    %v1724 = vadd.f32 %v1708, 0.5
    %v1725 = vadd.f32 %v1709, 0.5
    %v1726 = vadd.f32 %v1710, 0.5
    %v1727 = vadd.f32 %v1711, 0.5
    %v1728 = vadd.f32 %v1712, 0.5
    %v1729 = vadd.f32 %v1713, 0.5
    %v1730 = vmul.f32 %v1650, %v1714
    %v1731 = vmul.f32 %v1651, %v1715
    %v1732 = vmul.f32 %v1652, %v1716
    %v1733 = vmul.f32 %v1653, %v1717
    %v1734 = vmul.f32 %v1654, %v1718
    %v1735 = vmul.f32 %v1655, %v1719
    %v1736 = vmul.f32 %v1656, %v1720
    %v1737 = vmul.f32 %v1657, %v1721
    %v1738 = vmul.f32 %v1658, %v1722
    %v1739 = vmul.f32 %v1659, %v1723
    %v1740 = vmul.f32 %v1660, %v1724
    %v1741 = vmul.f32 %v1661, %v1725
    %v1742 = vmul.f32 %v1662, %v1726
    %v1743 = vmul.f32 %v1663, %v1727
    %v1744 = vmul.f32 %v1664, %v1728
    %v1745 = vmul.f32 %v1665, %v1729
    %v1746 = vpack.c.bf16 %v1731, %v1730
    %v1747 = vpack.c.bf16 %v1733, %v1732
    %v1748 = vpack.c.bf16 %v1735, %v1734
    %v1749 = vpack.c.bf16 %v1737, %v1736
    %v1750 = vpack.c.bf16 %v1739, %v1738
    %v1751 = vpack.c.bf16 %v1741, %v1740
    %v1752 = vpack.c.bf16 %v1743, %v1742
    %v1753 = vpack.c.bf16 %v1745, %v1744
    %v1755 = vsel %vm533, %v1746, 0
    %v1758 = vsel %vm533, %v1747, 0
    %v1761 = vsel %vm533, %v1748, 0
    %v1764 = vsel %vm533, %v1749, 0
    %v1767 = vsel %vm533, %v1750, 0
    %v1770 = vsel %vm533, %v1751, 0
    %v1773 = vsel %vm533, %v1752, 0
    %v1776 = vsel %vm533, %v1753, 0
    %1778 = vmatpush.bf16.msra.mxu0 0
    %1779 = vmatpush.bf16.msra.mxu0 0
    %1780 = vmatpush.bf16.msra.mxu0 0
    %1781 = vmatpush.bf16.msra.mxu0 0
    %1782 = vmatpush.bf16.msra.mxu0 0
    %1783 = vmatpush.bf16.msra.mxu0 0
    %1784 = vmatpush.bf16.msra.mxu0 0
    %1785 = vmatpush.bf16.msra.mxu0 %v1103
    %1786 = vmatmul.bf16.gmra.mxu0 %v1755
    %v1787 = vpop.f32.mrf.mxu0
    %v1788 = vadd.f32 %v1076, %v1787
    %v1789 = vpop.f32.mrf.mxu0
    %v1790 = vadd.f32 %v1076, %v1789
    %1791 = vmatmul.bf16.gmra.mxu0 %v1758
    %v1792 = vpop.f32.mrf.mxu0
    %v1793 = vadd.f32 %v1076, %v1792
    %v1794 = vpop.f32.mrf.mxu0
    %v1795 = vadd.f32 %v1076, %v1794
    %1796 = vmatmul.bf16.gmra.mxu0 %v1761
    %v1797 = vpop.f32.mrf.mxu0
    %v1798 = vadd.f32 %v1076, %v1797
    %v1799 = vpop.f32.mrf.mxu0
    %v1800 = vadd.f32 %v1076, %v1799
    %1801 = vmatmul.bf16.gmra.mxu0 %v1764
    %v1802 = vpop.f32.mrf.mxu0
    %v1803 = vadd.f32 %v1076, %v1802
    %v1804 = vpop.f32.mrf.mxu0
    %v1805 = vadd.f32 %v1076, %v1804
    %1806 = vmatmul.bf16.gmra.mxu0 %v1767
    %v1807 = vpop.f32.mrf.mxu0
    %v1808 = vadd.f32 %v1076, %v1807
    %v1809 = vpop.f32.mrf.mxu0
    %v1810 = vadd.f32 %v1076, %v1809
    %1811 = vmatmul.bf16.gmra.mxu0 %v1770
    %v1812 = vpop.f32.mrf.mxu0
    %v1813 = vadd.f32 %v1076, %v1812
    %v1814 = vpop.f32.mrf.mxu0
    %v1815 = vadd.f32 %v1076, %v1814
    %1816 = vmatmul.bf16.gmra.mxu0 %v1773
    %v1817 = vpop.f32.mrf.mxu0
    %v1818 = vadd.f32 %v1076, %v1817
    %v1819 = vpop.f32.mrf.mxu0
    %v1820 = vadd.f32 %v1076, %v1819
    %1821 = vmatmul.bf16.gmra.mxu0 %v1776
    %v1822 = vpop.f32.mrf.mxu0
    %v1823 = vadd.f32 %v1076, %v1822
    %v1824 = vpop.f32.mrf.mxu0
    %v1825 = vadd.f32 %v1076, %v1824
    %1826 = vdwg.mxu0
    %v1827 = vadd.f32 %v1154, %v1788
    %v1828 = vadd.f32 %v1155, %v1790
    %v1829 = vadd.f32 %v1156, %v1793
    %v1830 = vadd.f32 %v1157, %v1795
    %v1831 = vadd.f32 %v1158, %v1798
    %v1832 = vadd.f32 %v1159, %v1800
    %v1833 = vadd.f32 %v1160, %v1803
    %v1834 = vadd.f32 %v1161, %v1805
    %v1835 = vadd.f32 %v1162, %v1808
    %v1836 = vadd.f32 %v1163, %v1810
    %v1837 = vadd.f32 %v1164, %v1813
    %v1838 = vadd.f32 %v1165, %v1815
    %v1839 = vadd.f32 %v1166, %v1818
    %v1840 = vadd.f32 %v1167, %v1820
    %v1841 = vadd.f32 %v1168, %v1823
    %v1842 = vadd.f32 %v1169, %v1825
    %v1843 = vpack.c.bf16 %v1788, %v1788
    %v1844 = vpack.c.bf16 %v1790, %v1790
    %v1845 = vpack.c.bf16 %v1793, %v1793
    %v1846 = vpack.c.bf16 %v1795, %v1795
    %v1847 = vpack.c.bf16 %v1798, %v1798
    %v1848 = vpack.c.bf16 %v1800, %v1800
    %v1849 = vpack.c.bf16 %v1803, %v1803
    %v1850 = vpack.c.bf16 %v1805, %v1805
    %v1851 = vpack.c.bf16 %v1808, %v1808
    %v1852 = vpack.c.bf16 %v1810, %v1810
    %v1853 = vpack.c.bf16 %v1813, %v1813
    %v1854 = vpack.c.bf16 %v1815, %v1815
    %v1855 = vpack.c.bf16 %v1818, %v1818
    %v1856 = vpack.c.bf16 %v1820, %v1820
    %v1857 = vpack.c.bf16 %v1823, %v1823
    %v1858 = vpack.c.bf16 %v1825, %v1825
    %v1871 = vunpack.c.l.b16 %v1843
    %v1872 = vunpack.c.l.b16 %v1844
    %v1873 = vunpack.c.l.b16 %v1845
    %v1874 = vunpack.c.l.b16 %v1846
    %v1875 = vunpack.c.l.b16 %v1847
    %v1876 = vunpack.c.l.b16 %v1848
    %v1877 = vunpack.c.l.b16 %v1849
    %v1878 = vunpack.c.l.b16 %v1850
    %v1879 = vunpack.c.l.b16 %v1851
    %v1880 = vunpack.c.l.b16 %v1852
    %v1881 = vunpack.c.l.b16 %v1853
    %v1882 = vunpack.c.l.b16 %v1854
    %v1883 = vpack.c.b16 %v1872, %v1871
    %v1884 = vpack.c.b16 %v1874, %v1873
    %v1885 = vpack.c.b16 %v1876, %v1875
    %v1886 = vpack.c.b16 %v1878, %v1877
    %v1887 = vpack.c.b16 %v1880, %v1879
    %v1888 = vpack.c.b16 %v1882, %v1881
    %v1893 = vunpack.c.l.b16 %v1855
    %v1894 = vunpack.c.l.b16 %v1856
    %v1895 = vunpack.c.l.b16 %v1857
    %v1896 = vunpack.c.l.b16 %v1858
    %v1897 = vpack.c.b16 %v1894, %v1893
    %v1898 = vpack.c.b16 %v1896, %v1895
    %s1899 = scalar_lea.vmem %s3, 24
    %v1900 = vld [vmem:[%s1899] sm:$0xf]
    %s1901 = scalar_lea.vmem %s3, 28
    %v1902 = vld [vmem:[%s1901] sm:$0xf]
    %s1903 = scalar_lea.vmem %s3, 32
    %v1904 = vld [vmem:[%s1903] sm:$0xf]
    %s1905 = scalar_lea.vmem %s4, 2
    %v1906 = vld [vmem:[%s1905] sm:$0x1]
    %v1908 = vsel %vm533, %v1883, 0
    %v1911 = vsel %vm533, %v1884, 0
    %v1914 = vsel %vm533, %v1885, 0
    %v1917 = vsel %vm533, %v1886, 0
    %v1920 = vsel %vm533, %v1887, 0
    %v1923 = vsel %vm533, %v1888, 0
    %v1926 = vsel %vm533, %v1897, 0
    %v1929 = vsel %vm533, %v1898, 0
    %v1932 = vsel %vm191, %v1902, 0
    %1934 = vmatpush.bf16.msra.mxu0 0
    %1935 = vmatpush.bf16.msra.mxu0 0
    %1936 = vmatpush.bf16.msra.mxu0 0
    %1937 = vmatpush.bf16.msra.mxu0 0
    %1938 = vmatpush.bf16.msra.mxu0 0
    %1939 = vmatpush.bf16.msra.mxu0 0
    %1940 = vmatpush.bf16.msra.mxu0 0
    %1941 = vmatpush.bf16.msra.mxu0 %v1932
    %1942 = vmatmul.bf16.gmra.mxu0 %v1908
    %v1943 = vpop.f32.mrf.mxu0
    %v1944 = vadd.f32 0.0, %v1943
    %v1945 = vpop.f32.mrf.mxu0
    %v1946 = vadd.f32 0.0, %v1945
    %1947 = vmatmul.bf16.gmra.mxu0 %v1911
    %v1948 = vpop.f32.mrf.mxu0
    %v1949 = vadd.f32 0.0, %v1948
    %v1950 = vpop.f32.mrf.mxu0
    %v1951 = vadd.f32 0.0, %v1950
    %1952 = vmatmul.bf16.gmra.mxu0 %v1914
    %v1953 = vpop.f32.mrf.mxu0
    %v1954 = vadd.f32 0.0, %v1953
    %v1955 = vpop.f32.mrf.mxu0
    %v1956 = vadd.f32 0.0, %v1955
    %1957 = vmatmul.bf16.gmra.mxu0 %v1917
    %v1958 = vpop.f32.mrf.mxu0
    %v1959 = vadd.f32 0.0, %v1958
    %v1960 = vpop.f32.mrf.mxu0
    %v1961 = vadd.f32 0.0, %v1960
    %1962 = vmatmul.bf16.gmra.mxu0 %v1920
    %v1963 = vpop.f32.mrf.mxu0
    %v1964 = vadd.f32 0.0, %v1963
    %v1965 = vpop.f32.mrf.mxu0
    %v1966 = vadd.f32 0.0, %v1965
    %1967 = vmatmul.bf16.gmra.mxu0 %v1923
    %v1968 = vpop.f32.mrf.mxu0
    %v1969 = vadd.f32 0.0, %v1968
    %v1970 = vpop.f32.mrf.mxu0
    %v1971 = vadd.f32 0.0, %v1970
    %1972 = vmatmul.bf16.gmra.mxu0 %v1926
    %v1973 = vpop.f32.mrf.mxu0
    %v1974 = vadd.f32 0.0, %v1973
    %v1975 = vpop.f32.mrf.mxu0
    %v1976 = vadd.f32 0.0, %v1975
    %1977 = vmatmul.bf16.gmra.mxu0 %v1929
    %v1978 = vpop.f32.mrf.mxu0
    %v1979 = vadd.f32 0.0, %v1978
    %v1980 = vpop.f32.mrf.mxu0
    %v1981 = vadd.f32 0.0, %v1980
    %1982 = vdwg.mxu0
    %v1984 = vsel %vm191, %v1900, 0
    %1986 = vmatpush.bf16.msra.mxu0 0
    %1987 = vmatpush.bf16.msra.mxu0 0
    %1988 = vmatpush.bf16.msra.mxu0 0
    %1989 = vmatpush.bf16.msra.mxu0 0
    %1990 = vmatpush.bf16.msra.mxu0 0
    %1991 = vmatpush.bf16.msra.mxu0 0
    %1992 = vmatpush.bf16.msra.mxu0 0
    %1993 = vmatpush.bf16.msra.mxu0 %v1984
    %1994 = vmatmul.bf16.gmra.mxu0 %v1310
    %v1995 = vpop.f32.mrf.mxu0
    %v1996 = vadd.f32 %v1944, %v1995
    %v1997 = vpop.f32.mrf.mxu0
    %v1998 = vadd.f32 %v1946, %v1997
    %1999 = vmatmul.bf16.gmra.mxu0 %v1310
    %v2000 = vpop.f32.mrf.mxu0
    %v2001 = vadd.f32 %v1949, %v2000
    %v2002 = vpop.f32.mrf.mxu0
    %v2003 = vadd.f32 %v1951, %v2002
    %2004 = vmatmul.bf16.gmra.mxu0 %v1908
    %v2005 = vpop.f32.mrf.mxu0
    %v2006 = vadd.f32 %v1954, %v2005
    %v2007 = vpop.f32.mrf.mxu0
    %v2008 = vadd.f32 %v1956, %v2007
    %2009 = vmatmul.bf16.gmra.mxu0 %v1911
    %v2010 = vpop.f32.mrf.mxu0
    %v2011 = vadd.f32 %v1959, %v2010
    %v2012 = vpop.f32.mrf.mxu0
    %v2013 = vadd.f32 %v1961, %v2012
    %2014 = vmatmul.bf16.gmra.mxu0 %v1914
    %v2015 = vpop.f32.mrf.mxu0
    %v2016 = vadd.f32 %v1964, %v2015
    %v2017 = vpop.f32.mrf.mxu0
    %v2018 = vadd.f32 %v1966, %v2017
    %2019 = vmatmul.bf16.gmra.mxu0 %v1917
    %v2020 = vpop.f32.mrf.mxu0
    %v2021 = vadd.f32 %v1969, %v2020
    %v2022 = vpop.f32.mrf.mxu0
    %v2023 = vadd.f32 %v1971, %v2022
    %2024 = vmatmul.bf16.gmra.mxu0 %v1920
    %v2025 = vpop.f32.mrf.mxu0
    %v2026 = vadd.f32 %v1974, %v2025
    %v2027 = vpop.f32.mrf.mxu0
    %v2028 = vadd.f32 %v1976, %v2027
    %2029 = vmatmul.bf16.gmra.mxu0 %v1923
    %v2030 = vpop.f32.mrf.mxu0
    %v2031 = vadd.f32 %v1979, %v2030
    %v2032 = vpop.f32.mrf.mxu0
    %v2033 = vadd.f32 %v1981, %v2032
    %2034 = vdwg.mxu0
    %v2036 = vsel %vm191, %v1904, 0
    %2038 = vmatpush.bf16.msra.mxu0 0
    %2039 = vmatpush.bf16.msra.mxu0 0
    %2040 = vmatpush.bf16.msra.mxu0 0
    %2041 = vmatpush.bf16.msra.mxu0 0
    %2042 = vmatpush.bf16.msra.mxu0 0
    %2043 = vmatpush.bf16.msra.mxu0 0
    %2044 = vmatpush.bf16.msra.mxu0 0
    %2045 = vmatpush.bf16.msra.mxu0 %v2036
    %2046 = vmatmul.bf16.gmra.mxu0 %v1914
    %v2047 = vpop.f32.mrf.mxu0
    %v2048 = vadd.f32 0.0, %v2047
    %v2049 = vpop.f32.mrf.mxu0
    %v2050 = vadd.f32 0.0, %v2049
    %2051 = vmatmul.bf16.gmra.mxu0 %v1917
    %v2052 = vpop.f32.mrf.mxu0
    %v2053 = vadd.f32 0.0, %v2052
    %v2054 = vpop.f32.mrf.mxu0
    %v2055 = vadd.f32 0.0, %v2054
    %2056 = vmatmul.bf16.gmra.mxu0 %v1920
    %v2057 = vpop.f32.mrf.mxu0
    %v2058 = vadd.f32 0.0, %v2057
    %v2059 = vpop.f32.mrf.mxu0
    %v2060 = vadd.f32 0.0, %v2059
    %2061 = vmatmul.bf16.gmra.mxu0 %v1923
    %v2062 = vpop.f32.mrf.mxu0
    %v2063 = vadd.f32 0.0, %v2062
    %v2064 = vpop.f32.mrf.mxu0
    %v2065 = vadd.f32 0.0, %v2064
    %2066 = vmatmul.bf16.gmra.mxu0 %v1926
    %v2067 = vpop.f32.mrf.mxu0
    %v2068 = vadd.f32 0.0, %v2067
    %v2069 = vpop.f32.mrf.mxu0
    %v2070 = vadd.f32 0.0, %v2069
    %2071 = vmatmul.bf16.gmra.mxu0 %v1929
    %v2072 = vpop.f32.mrf.mxu0
    %v2073 = vadd.f32 0.0, %v2072
    %v2074 = vpop.f32.mrf.mxu0
    %v2075 = vadd.f32 0.0, %v2074
    %2076 = vmatmul.bf16.gmra.mxu0 %v1310
    %v2077 = vpop.f32.mrf.mxu0
    %v2078 = vadd.f32 0.0, %v2077
    %v2079 = vpop.f32.mrf.mxu0
    %v2080 = vadd.f32 0.0, %v2079
    %2081 = vmatmul.bf16.gmra.mxu0 %v1310
    %v2082 = vpop.f32.mrf.mxu0
    %v2083 = vadd.f32 0.0, %v2082
    %v2084 = vpop.f32.mrf.mxu0
    %v2085 = vadd.f32 0.0, %v2084
    %2086 = vdwg.mxu0
    %v2087 = vadd.f32 %v1996, %v2048
    %v2088 = vadd.f32 %v1998, %v2050
    %v2089 = vadd.f32 %v2001, %v2053
    %v2090 = vadd.f32 %v2003, %v2055
    %v2091 = vadd.f32 %v2006, %v2058
    %v2092 = vadd.f32 %v2008, %v2060
    %v2093 = vadd.f32 %v2011, %v2063
    %v2094 = vadd.f32 %v2013, %v2065
    %v2095 = vadd.f32 %v2016, %v2068
    %v2096 = vadd.f32 %v2018, %v2070
    %v2097 = vadd.f32 %v2021, %v2073
    %v2098 = vadd.f32 %v2023, %v2075
    %v2099 = vadd.f32 %v2026, %v2078
    %v2100 = vadd.f32 %v2028, %v2080
    %v2101 = vadd.f32 %v2031, %v2083
    %v2102 = vadd.f32 %v2033, %v2085
    %v2104 = vperm.slane %v1906, 0
    %v2106 = vadd.f32 %v2087, %v2104
    %v2107 = vadd.f32 %v2088, %v2104
    %v2108 = vadd.f32 %v2089, %v2104
    %v2109 = vadd.f32 %v2090, %v2104
    %v2110 = vadd.f32 %v2091, %v2104
    %v2111 = vadd.f32 %v2092, %v2104
    %v2112 = vadd.f32 %v2093, %v2104
    %v2113 = vadd.f32 %v2094, %v2104
    %v2114 = vadd.f32 %v2095, %v2104
    %v2115 = vadd.f32 %v2096, %v2104
    %v2116 = vadd.f32 %v2097, %v2104
    %v2117 = vadd.f32 %v2098, %v2104
    %v2118 = vadd.f32 %v2099, %v2104
    %v2119 = vadd.f32 %v2100, %v2104
    %v2120 = vadd.f32 %v2101, %v2104
    %v2121 = vadd.f32 %v2102, %v2104
    %s2122 = scalar_lea.vmem %s5, 24
    %v2123 = vld [vmem:[%s2122] sm:$0xf]
    %s2124 = scalar_lea.vmem %s5, 28
    %v2125 = vld [vmem:[%s2124] sm:$0xf]
    %s2126 = scalar_lea.vmem %s5, 32
    %v2127 = vld [vmem:[%s2126] sm:$0xf]
    %s2128 = scalar_lea.vmem %s6, 2
    %v2129 = vld [vmem:[%s2128] sm:$0x1]
    %v2131 = vsel %vm191, %v2125, 0
    %2133 = vmatpush.bf16.msra.mxu0 0
    %2134 = vmatpush.bf16.msra.mxu0 0
    %2135 = vmatpush.bf16.msra.mxu0 0
    %2136 = vmatpush.bf16.msra.mxu0 0
    %2137 = vmatpush.bf16.msra.mxu0 0
    %2138 = vmatpush.bf16.msra.mxu0 0
    %2139 = vmatpush.bf16.msra.mxu0 0
    %2140 = vmatpush.bf16.msra.mxu0 %v2131
    %2141 = vmatmul.bf16.gmra.mxu0 %v1908
    %v2142 = vpop.f32.mrf.mxu0
    %v2143 = vadd.f32 0.0, %v2142
    %v2144 = vpop.f32.mrf.mxu0
    %v2145 = vadd.f32 0.0, %v2144
    %2146 = vmatmul.bf16.gmra.mxu0 %v1911
    %v2147 = vpop.f32.mrf.mxu0
    %v2148 = vadd.f32 0.0, %v2147
    %v2149 = vpop.f32.mrf.mxu0
    %v2150 = vadd.f32 0.0, %v2149
    %2151 = vmatmul.bf16.gmra.mxu0 %v1914
    %v2152 = vpop.f32.mrf.mxu0
    %v2153 = vadd.f32 0.0, %v2152
    %v2154 = vpop.f32.mrf.mxu0
    %v2155 = vadd.f32 0.0, %v2154
    %2156 = vmatmul.bf16.gmra.mxu0 %v1917
    %v2157 = vpop.f32.mrf.mxu0
    %v2158 = vadd.f32 0.0, %v2157
    %v2159 = vpop.f32.mrf.mxu0
    %v2160 = vadd.f32 0.0, %v2159
    %2161 = vmatmul.bf16.gmra.mxu0 %v1920
    %v2162 = vpop.f32.mrf.mxu0
    %v2163 = vadd.f32 0.0, %v2162
    %v2164 = vpop.f32.mrf.mxu0
    %v2165 = vadd.f32 0.0, %v2164
    %2166 = vmatmul.bf16.gmra.mxu0 %v1923
    %v2167 = vpop.f32.mrf.mxu0
    %v2168 = vadd.f32 0.0, %v2167
    %v2169 = vpop.f32.mrf.mxu0
    %v2170 = vadd.f32 0.0, %v2169
    %2171 = vmatmul.bf16.gmra.mxu0 %v1926
    %v2172 = vpop.f32.mrf.mxu0
    %v2173 = vadd.f32 0.0, %v2172
    %v2174 = vpop.f32.mrf.mxu0
    %v2175 = vadd.f32 0.0, %v2174
    %2176 = vmatmul.bf16.gmra.mxu0 %v1929
    %v2177 = vpop.f32.mrf.mxu0
    %v2178 = vadd.f32 0.0, %v2177
    %v2179 = vpop.f32.mrf.mxu0
    %v2180 = vadd.f32 0.0, %v2179
    %2181 = vdwg.mxu0
    %v2183 = vsel %vm191, %v2123, 0
    %2185 = vmatpush.bf16.msra.mxu0 0
    %2186 = vmatpush.bf16.msra.mxu0 0
    %2187 = vmatpush.bf16.msra.mxu0 0
    %2188 = vmatpush.bf16.msra.mxu0 0
    %2189 = vmatpush.bf16.msra.mxu0 0
    %2190 = vmatpush.bf16.msra.mxu0 0
    %2191 = vmatpush.bf16.msra.mxu0 0
    %2192 = vmatpush.bf16.msra.mxu0 %v2183
    %2193 = vmatmul.bf16.gmra.mxu0 %v1310
    %v2194 = vpop.f32.mrf.mxu0
    %v2195 = vadd.f32 %v2143, %v2194
    %v2196 = vpop.f32.mrf.mxu0
    %v2197 = vadd.f32 %v2145, %v2196
    %2198 = vmatmul.bf16.gmra.mxu0 %v1310
    %v2199 = vpop.f32.mrf.mxu0
    %v2200 = vadd.f32 %v2148, %v2199
    %v2201 = vpop.f32.mrf.mxu0
    %v2202 = vadd.f32 %v2150, %v2201
    %2203 = vmatmul.bf16.gmra.mxu0 %v1908
    %v2204 = vpop.f32.mrf.mxu0
    %v2205 = vadd.f32 %v2153, %v2204
    %v2206 = vpop.f32.mrf.mxu0
    %v2207 = vadd.f32 %v2155, %v2206
    %2208 = vmatmul.bf16.gmra.mxu0 %v1911
    %v2209 = vpop.f32.mrf.mxu0
    %v2210 = vadd.f32 %v2158, %v2209
    %v2211 = vpop.f32.mrf.mxu0
    %v2212 = vadd.f32 %v2160, %v2211
    %2213 = vmatmul.bf16.gmra.mxu0 %v1914
    %v2214 = vpop.f32.mrf.mxu0
    %v2215 = vadd.f32 %v2163, %v2214
    %v2216 = vpop.f32.mrf.mxu0
    %v2217 = vadd.f32 %v2165, %v2216
    %2218 = vmatmul.bf16.gmra.mxu0 %v1917
    %v2219 = vpop.f32.mrf.mxu0
    %v2220 = vadd.f32 %v2168, %v2219
    %v2221 = vpop.f32.mrf.mxu0
    %v2222 = vadd.f32 %v2170, %v2221
    %2223 = vmatmul.bf16.gmra.mxu0 %v1920
    %v2224 = vpop.f32.mrf.mxu0
    %v2225 = vadd.f32 %v2173, %v2224
    %v2226 = vpop.f32.mrf.mxu0
    %v2227 = vadd.f32 %v2175, %v2226
    %2228 = vmatmul.bf16.gmra.mxu0 %v1923
    %v2229 = vpop.f32.mrf.mxu0
    %v2230 = vadd.f32 %v2178, %v2229
    %v2231 = vpop.f32.mrf.mxu0
    %v2232 = vadd.f32 %v2180, %v2231
    %2233 = vdwg.mxu0
    %v2235 = vsel %vm191, %v2127, 0
    %2237 = vmatpush.bf16.msra.mxu0 0
    %2238 = vmatpush.bf16.msra.mxu0 0
    %2239 = vmatpush.bf16.msra.mxu0 0
    %2240 = vmatpush.bf16.msra.mxu0 0
    %2241 = vmatpush.bf16.msra.mxu0 0
    %2242 = vmatpush.bf16.msra.mxu0 0
    %2243 = vmatpush.bf16.msra.mxu0 0
    %2244 = vmatpush.bf16.msra.mxu0 %v2235
    %2245 = vmatmul.bf16.gmra.mxu0 %v1914
    %v2246 = vpop.f32.mrf.mxu0
    %v2247 = vadd.f32 0.0, %v2246
    %v2248 = vpop.f32.mrf.mxu0
    %v2249 = vadd.f32 0.0, %v2248
    %2250 = vmatmul.bf16.gmra.mxu0 %v1917
    %v2251 = vpop.f32.mrf.mxu0
    %v2252 = vadd.f32 0.0, %v2251
    %v2253 = vpop.f32.mrf.mxu0
    %v2254 = vadd.f32 0.0, %v2253
    %2255 = vmatmul.bf16.gmra.mxu0 %v1920
    %v2256 = vpop.f32.mrf.mxu0
    %v2257 = vadd.f32 0.0, %v2256
    %v2258 = vpop.f32.mrf.mxu0
    %v2259 = vadd.f32 0.0, %v2258
    %2260 = vmatmul.bf16.gmra.mxu0 %v1923
    %v2261 = vpop.f32.mrf.mxu0
    %v2262 = vadd.f32 0.0, %v2261
    %v2263 = vpop.f32.mrf.mxu0
    %v2264 = vadd.f32 0.0, %v2263
    %2265 = vmatmul.bf16.gmra.mxu0 %v1926
    %v2266 = vpop.f32.mrf.mxu0
    %v2267 = vadd.f32 0.0, %v2266
    %v2268 = vpop.f32.mrf.mxu0
    %v2269 = vadd.f32 0.0, %v2268
    %2270 = vmatmul.bf16.gmra.mxu0 %v1929
    %v2271 = vpop.f32.mrf.mxu0
    %v2272 = vadd.f32 0.0, %v2271
    %v2273 = vpop.f32.mrf.mxu0
    %v2274 = vadd.f32 0.0, %v2273
    %2275 = vmatmul.bf16.gmra.mxu0 %v1310
    %v2276 = vpop.f32.mrf.mxu0
    %v2277 = vadd.f32 0.0, %v2276
    %v2278 = vpop.f32.mrf.mxu0
    %v2279 = vadd.f32 0.0, %v2278
    %2280 = vmatmul.bf16.gmra.mxu0 %v1310
    %v2281 = vpop.f32.mrf.mxu0
    %v2282 = vadd.f32 0.0, %v2281
    %v2283 = vpop.f32.mrf.mxu0
    %v2284 = vadd.f32 0.0, %v2283
    %2285 = vdwg.mxu0
    %v2286 = vadd.f32 %v2195, %v2247
    %v2287 = vadd.f32 %v2197, %v2249
    %v2288 = vadd.f32 %v2200, %v2252
    %v2289 = vadd.f32 %v2202, %v2254
    %v2290 = vadd.f32 %v2205, %v2257
    %v2291 = vadd.f32 %v2207, %v2259
    %v2292 = vadd.f32 %v2210, %v2262
    %v2293 = vadd.f32 %v2212, %v2264
    %v2294 = vadd.f32 %v2215, %v2267
    %v2295 = vadd.f32 %v2217, %v2269
    %v2296 = vadd.f32 %v2220, %v2272
    %v2297 = vadd.f32 %v2222, %v2274
    %v2298 = vadd.f32 %v2225, %v2277
    %v2299 = vadd.f32 %v2227, %v2279
    %v2300 = vadd.f32 %v2230, %v2282
    %v2301 = vadd.f32 %v2232, %v2284
    %v2303 = vperm.slane %v2129, 0
    %v2305 = vadd.f32 %v2286, %v2303
    %v2306 = vadd.f32 %v2287, %v2303
    %v2307 = vadd.f32 %v2288, %v2303
    %v2308 = vadd.f32 %v2289, %v2303
    %v2309 = vadd.f32 %v2290, %v2303
    %v2310 = vadd.f32 %v2291, %v2303
    %v2311 = vadd.f32 %v2292, %v2303
    %v2312 = vadd.f32 %v2293, %v2303
    %v2313 = vadd.f32 %v2294, %v2303
    %v2314 = vadd.f32 %v2295, %v2303
    %v2315 = vadd.f32 %v2296, %v2303
    %v2316 = vadd.f32 %v2297, %v2303
    %v2317 = vadd.f32 %v2298, %v2303
    %v2318 = vadd.f32 %v2299, %v2303
    %v2319 = vadd.f32 %v2300, %v2303
    %v2320 = vadd.f32 %v2301, %v2303
    %v2321 = vtanh.pop %v2106
    %v2322 = vtanh.pop %v2107
    %v2323 = vtanh.pop %v2108
    %v2324 = vtanh.pop %v2109
    %v2325 = vtanh.pop %v2110
    %v2326 = vtanh.pop %v2111
    %v2327 = vtanh.pop %v2112
    %v2328 = vtanh.pop %v2113
    %v2329 = vtanh.pop %v2114
    %v2330 = vtanh.pop %v2115
    %v2331 = vtanh.pop %v2116
    %v2332 = vtanh.pop %v2117
    %v2333 = vtanh.pop %v2118
    %v2334 = vtanh.pop %v2119
    %v2335 = vtanh.pop %v2120
    %v2336 = vtanh.pop %v2121
    %v2337 = vmul.f32 %v2305, 0.5
    %v2338 = vmul.f32 %v2306, 0.5
    %v2339 = vmul.f32 %v2307, 0.5
    %v2340 = vmul.f32 %v2308, 0.5
    %v2341 = vmul.f32 %v2309, 0.5
    %v2342 = vmul.f32 %v2310, 0.5
    %v2343 = vmul.f32 %v2311, 0.5
    %v2344 = vmul.f32 %v2312, 0.5
    %v2345 = vmul.f32 %v2313, 0.5
    %v2346 = vmul.f32 %v2314, 0.5
    %v2347 = vmul.f32 %v2315, 0.5
    %v2348 = vmul.f32 %v2316, 0.5
    %v2349 = vmul.f32 %v2317, 0.5
    %v2350 = vmul.f32 %v2318, 0.5
    %v2351 = vmul.f32 %v2319, 0.5
    %v2352 = vmul.f32 %v2320, 0.5
    %v2353 = vtanh.pop %v2337
    %v2354 = vtanh.pop %v2338
    %v2355 = vtanh.pop %v2339
    %v2356 = vtanh.pop %v2340
    %v2357 = vtanh.pop %v2341
    %v2358 = vtanh.pop %v2342
    %v2359 = vtanh.pop %v2343
    %v2360 = vtanh.pop %v2344
    %v2361 = vtanh.pop %v2345
    %v2362 = vtanh.pop %v2346
    %v2363 = vtanh.pop %v2347
    %v2364 = vtanh.pop %v2348
    %v2365 = vtanh.pop %v2349
    %v2366 = vtanh.pop %v2350
    %v2367 = vtanh.pop %v2351
    %v2368 = vtanh.pop %v2352
    %v2369 = vmul.f32 %v2353, 0.5
    %v2370 = vmul.f32 %v2354, 0.5
    %v2371 = vmul.f32 %v2355, 0.5
    %v2372 = vmul.f32 %v2356, 0.5
    %v2373 = vmul.f32 %v2357, 0.5
    %v2374 = vmul.f32 %v2358, 0.5
    %v2375 = vmul.f32 %v2359, 0.5
    %v2376 = vmul.f32 %v2360, 0.5
    %v2377 = vmul.f32 %v2361, 0.5
    %v2378 = vmul.f32 %v2362, 0.5
    %v2379 = vmul.f32 %v2363, 0.5
    %v2380 = vmul.f32 %v2364, 0.5
    %v2381 = vmul.f32 %v2365, 0.5
    %v2382 = vmul.f32 %v2366, 0.5
    %v2383 = vmul.f32 %v2367, 0.5
    %v2384 = vmul.f32 %v2368, 0.5
    %v2385 = vadd.f32 %v2369, 0.5
    %v2386 = vadd.f32 %v2370, 0.5
    %v2387 = vadd.f32 %v2371, 0.5
    %v2388 = vadd.f32 %v2372, 0.5
    %v2389 = vadd.f32 %v2373, 0.5
    %v2390 = vadd.f32 %v2374, 0.5
    %v2391 = vadd.f32 %v2375, 0.5
    %v2392 = vadd.f32 %v2376, 0.5
    %v2393 = vadd.f32 %v2377, 0.5
    %v2394 = vadd.f32 %v2378, 0.5
    %v2395 = vadd.f32 %v2379, 0.5
    %v2396 = vadd.f32 %v2380, 0.5
    %v2397 = vadd.f32 %v2381, 0.5
    %v2398 = vadd.f32 %v2382, 0.5
    %v2399 = vadd.f32 %v2383, 0.5
    %v2400 = vadd.f32 %v2384, 0.5
    %v2401 = vmul.f32 %v2321, %v2385
    %v2402 = vmul.f32 %v2322, %v2386
    %v2403 = vmul.f32 %v2323, %v2387
    %v2404 = vmul.f32 %v2324, %v2388
    %v2405 = vmul.f32 %v2325, %v2389
    %v2406 = vmul.f32 %v2326, %v2390
    %v2407 = vmul.f32 %v2327, %v2391
    %v2408 = vmul.f32 %v2328, %v2392
    %v2409 = vmul.f32 %v2329, %v2393
    %v2410 = vmul.f32 %v2330, %v2394
    %v2411 = vmul.f32 %v2331, %v2395
    %v2412 = vmul.f32 %v2332, %v2396
    %v2413 = vmul.f32 %v2333, %v2397
    %v2414 = vmul.f32 %v2334, %v2398
    %v2415 = vmul.f32 %v2335, %v2399
    %v2416 = vmul.f32 %v2336, %v2400
    %v2417 = vpack.c.bf16 %v2402, %v2401
    %v2418 = vpack.c.bf16 %v2404, %v2403
    %v2419 = vpack.c.bf16 %v2406, %v2405
    %v2420 = vpack.c.bf16 %v2408, %v2407
    %v2421 = vpack.c.bf16 %v2410, %v2409
    %v2422 = vpack.c.bf16 %v2412, %v2411
    %v2423 = vpack.c.bf16 %v2414, %v2413
    %v2424 = vpack.c.bf16 %v2416, %v2415
    %v2426 = vsel %vm533, %v2417, 0
    %v2429 = vsel %vm533, %v2418, 0
    %v2432 = vsel %vm533, %v2419, 0
    %v2435 = vsel %vm533, %v2420, 0
    %v2438 = vsel %vm533, %v2421, 0
    %v2441 = vsel %vm533, %v2422, 0
    %v2444 = vsel %vm533, %v2423, 0
    %v2447 = vsel %vm533, %v2424, 0
    %2449 = vmatpush.bf16.msra.mxu0 0
    %2450 = vmatpush.bf16.msra.mxu0 0
    %2451 = vmatpush.bf16.msra.mxu0 0
    %2452 = vmatpush.bf16.msra.mxu0 0
    %2453 = vmatpush.bf16.msra.mxu0 0
    %2454 = vmatpush.bf16.msra.mxu0 0
    %2455 = vmatpush.bf16.msra.mxu0 0
    %2456 = vmatpush.bf16.msra.mxu0 %v1103
    %2457 = vmatmul.bf16.gmra.mxu0 %v2426
    %v2458 = vpop.f32.mrf.mxu0
    %v2459 = vadd.f32 %v1076, %v2458
    %v2460 = vpop.f32.mrf.mxu0
    %v2461 = vadd.f32 %v1076, %v2460
    %2462 = vmatmul.bf16.gmra.mxu0 %v2429
    %v2463 = vpop.f32.mrf.mxu0
    %v2464 = vadd.f32 %v1076, %v2463
    %v2465 = vpop.f32.mrf.mxu0
    %v2466 = vadd.f32 %v1076, %v2465
    %2467 = vmatmul.bf16.gmra.mxu0 %v2432
    %v2468 = vpop.f32.mrf.mxu0
    %v2469 = vadd.f32 %v1076, %v2468
    %v2470 = vpop.f32.mrf.mxu0
    %v2471 = vadd.f32 %v1076, %v2470
    %2472 = vmatmul.bf16.gmra.mxu0 %v2435
    %v2473 = vpop.f32.mrf.mxu0
    %v2474 = vadd.f32 %v1076, %v2473
    %v2475 = vpop.f32.mrf.mxu0
    %v2476 = vadd.f32 %v1076, %v2475
    %2477 = vmatmul.bf16.gmra.mxu0 %v2438
    %v2478 = vpop.f32.mrf.mxu0
    %v2479 = vadd.f32 %v1076, %v2478
    %v2480 = vpop.f32.mrf.mxu0
    %v2481 = vadd.f32 %v1076, %v2480
    %2482 = vmatmul.bf16.gmra.mxu0 %v2441
    %v2483 = vpop.f32.mrf.mxu0
    %v2484 = vadd.f32 %v1076, %v2483
    %v2485 = vpop.f32.mrf.mxu0
    %v2486 = vadd.f32 %v1076, %v2485
    %2487 = vmatmul.bf16.gmra.mxu0 %v2444
    %v2488 = vpop.f32.mrf.mxu0
    %v2489 = vadd.f32 %v1076, %v2488
    %v2490 = vpop.f32.mrf.mxu0
    %v2491 = vadd.f32 %v1076, %v2490
    %2492 = vmatmul.bf16.gmra.mxu0 %v2447
    %v2493 = vpop.f32.mrf.mxu0
    %v2494 = vadd.f32 %v1076, %v2493
    %v2495 = vpop.f32.mrf.mxu0
    %v2496 = vadd.f32 %v1076, %v2495
    %2497 = vdwg.mxu0
    %v2498 = vadd.f32 %v1827, %v2459
    %v2499 = vadd.f32 %v1828, %v2461
    %v2500 = vadd.f32 %v1829, %v2464
    %v2501 = vadd.f32 %v1830, %v2466
    %v2502 = vadd.f32 %v1831, %v2469
    %v2503 = vadd.f32 %v1832, %v2471
    %v2504 = vadd.f32 %v1833, %v2474
    %v2505 = vadd.f32 %v1834, %v2476
    %v2506 = vadd.f32 %v1835, %v2479
    %v2507 = vadd.f32 %v1836, %v2481
    %v2508 = vadd.f32 %v1837, %v2484
    %v2509 = vadd.f32 %v1838, %v2486
    %v2510 = vadd.f32 %v1839, %v2489
    %v2511 = vadd.f32 %v1840, %v2491
    %v2512 = vadd.f32 %v1841, %v2494
    %v2513 = vadd.f32 %v1842, %v2496
    %v2514 = vld [vmem:[%s9] sm:$0x1]
    %v2516 = vperm.slane %v2514, 0
    %v2518 = vmul.f32 %v2498, %v2516
    %v2519 = vmul.f32 %v2499, %v2516
    %v2520 = vmul.f32 %v2500, %v2516
    %v2521 = vmul.f32 %v2501, %v2516
    %v2522 = vmul.f32 %v2502, %v2516
    %v2523 = vmul.f32 %v2503, %v2516
    %v2524 = vmul.f32 %v2504, %v2516
    %v2525 = vmul.f32 %v2505, %v2516
    %v2526 = vmul.f32 %v2506, %v2516
    %v2527 = vmul.f32 %v2507, %v2516
    %v2528 = vmul.f32 %v2508, %v2516
    %v2529 = vmul.f32 %v2509, %v2516
    %v2530 = vmul.f32 %v2510, %v2516
    %v2531 = vmul.f32 %v2511, %v2516
    %v2532 = vmul.f32 %v2512, %v2516
    %v2533 = vmul.f32 %v2513, %v2516
    %v2534 = vld [vmem:[%s10] sm:$0x1]
    %v2536 = vperm.slane %v2534, 0
    %v2538 = vadd.f32 %v2518, %v2536
    %v2539 = vadd.f32 %v2519, %v2536
    %v2540 = vadd.f32 %v2520, %v2536
    %v2541 = vadd.f32 %v2521, %v2536
    %v2542 = vadd.f32 %v2522, %v2536
    %v2543 = vadd.f32 %v2523, %v2536
    %v2544 = vadd.f32 %v2524, %v2536
    %v2545 = vadd.f32 %v2525, %v2536
    %v2546 = vadd.f32 %v2526, %v2536
    %v2547 = vadd.f32 %v2527, %v2536
    %v2548 = vadd.f32 %v2528, %v2536
    %v2549 = vadd.f32 %v2529, %v2536
    %v2550 = vadd.f32 %v2530, %v2536
    %v2551 = vadd.f32 %v2531, %v2536
    %v2552 = vadd.f32 %v2532, %v2536
    %v2553 = vadd.f32 %v2533, %v2536
    %v2554 = vsel %vm533, %v2538, 0.0
    %v2555 = vsel %vm533, %v2539, 0.0
    %v2556 = vsel %vm533, %v2540, 0.0
    %v2557 = vsel %vm533, %v2541, 0.0
    %v2558 = vsel %vm533, %v2542, 0.0
    %v2559 = vsel %vm533, %v2543, 0.0
    %v2560 = vsel %vm533, %v2544, 0.0
    %v2561 = vsel %vm533, %v2545, 0.0
    %v2562 = vsel %vm533, %v2546, 0.0
    %v2563 = vsel %vm533, %v2547, 0.0
    %v2564 = vsel %vm533, %v2548, 0.0
    %v2565 = vsel %vm533, %v2549, 0.0
    %v2566 = vsel %vm533, %v2550, 0.0
    %v2567 = vsel %vm533, %v2551, 0.0
    %v2568 = vsel %vm533, %v2552, 0.0
    %v2569 = vsel %vm533, %v2553, 0.0
    %2570 = vst [vmem:[#allocation2] sm:$0xff] %v2554
    %2571 = vst [vmem:[#allocation2 + $0x8] sm:$0xff] %v2555
    %2572 = vst [vmem:[#allocation2 + $0x10] sm:$0xff] %v2556
    %2573 = vst [vmem:[#allocation2 + $0x18] sm:$0xff] %v2557
    %2574 = vst [vmem:[#allocation2 + $0x20] sm:$0xff] %v2558
    %2575 = vst [vmem:[#allocation2 + $0x28] sm:$0xff] %v2559
    %2576 = vst [vmem:[#allocation2 + $0x30] sm:$0xff] %v2560
    %2577 = vst [vmem:[#allocation2 + $0x38] sm:$0xff] %v2561
    %2578 = vst [vmem:[#allocation2 + $0x40] sm:$0xff] %v2562
    %2579 = vst [vmem:[#allocation2 + $0x48] sm:$0xff] %v2563
    %2580 = vst [vmem:[#allocation2 + $0x50] sm:$0xff] %v2564
    %2581 = vst [vmem:[#allocation2 + $0x58] sm:$0xff] %v2565
    %2582 = vst [vmem:[#allocation2 + $0x60] sm:$0xff] %v2566
    %2583 = vst [vmem:[#allocation2 + $0x68] sm:$0xff] %v2567
    %2584 = vst [vmem:[#allocation2 + $0x70] sm:$0xff] %v2568
    %2585 = vst [vmem:[#allocation2 + $0x78] sm:$0xff] %v2569
    %v2586 = vld [vmem:[#allocation4] sm:$0xff]
    %v2587 = vld [vmem:[#allocation4 + $0x8] sm:$0xff]
    %v2588 = vld [vmem:[#allocation4 + $0x10] sm:$0xff]
    %v2589 = vld [vmem:[#allocation4 + $0x18] sm:$0xff]
    %v2590 = vld [vmem:[#allocation4 + $0x20] sm:$0xff]
    %v2591 = vld [vmem:[#allocation4 + $0x28] sm:$0xff]
    %v2592 = vld [vmem:[#allocation4 + $0x30] sm:$0xff]
    %v2593 = vld [vmem:[#allocation4 + $0x38] sm:$0xff]
    %v2594 = vld [vmem:[#allocation4 + $0x40] sm:$0xff]
    %v2595 = vld [vmem:[#allocation4 + $0x48] sm:$0xff]
    %v2596 = vld [vmem:[#allocation4 + $0x50] sm:$0xff]
    %v2597 = vld [vmem:[#allocation4 + $0x58] sm:$0xff]
    %v2598 = vld [vmem:[#allocation4 + $0x60] sm:$0xff]
    %v2599 = vld [vmem:[#allocation4 + $0x68] sm:$0xff]
    %v2600 = vld [vmem:[#allocation4 + $0x70] sm:$0xff]
    %v2601 = vld [vmem:[#allocation4 + $0x78] sm:$0xff]
    %v2602 = vld [vmem:[#allocation4 + $0x80] sm:$0xff]
    %v2603 = vld [vmem:[#allocation4 + $0x88] sm:$0xff]
    %v2604 = vld [vmem:[#allocation4 + $0x90] sm:$0xff]
    %v2605 = vld [vmem:[#allocation4 + $0x98] sm:$0xff]
    %v2606 = vld [vmem:[#allocation4 + $0xa0] sm:$0xff]
    %v2607 = vld [vmem:[#allocation4 + $0xa8] sm:$0xff]
    %v2608 = vld [vmem:[#allocation4 + $0xb0] sm:$0xff]
    %v2609 = vld [vmem:[#allocation4 + $0xb8] sm:$0xff]
    %v2610 = vld [vmem:[#allocation4 + $0xc0] sm:$0xff]
    %v2611 = vld [vmem:[#allocation4 + $0xc8] sm:$0xff]
    %v2612 = vld [vmem:[#allocation4 + $0xd0] sm:$0xff]
    %v2613 = vld [vmem:[#allocation4 + $0xd8] sm:$0xff]
    %v2614 = vld [vmem:[#allocation4 + $0xe0] sm:$0xff]
    %v2615 = vld [vmem:[#allocation4 + $0xe8] sm:$0xff]
    %v2616 = vld [vmem:[#allocation4 + $0xf0] sm:$0xff]
    %v2617 = vld [vmem:[#allocation4 + $0xf8] sm:$0xff]
    %v2618 = vld [vmem:[#allocation7] sm:$0xff]
    %v2619 = vld [vmem:[#allocation7 + $0x8] sm:$0xff]
    %v2620 = vld [vmem:[#allocation7 + $0x10] sm:$0xff]
    %v2621 = vld [vmem:[#allocation7 + $0x18] sm:$0xff]
    %v2622 = vld [vmem:[#allocation7 + $0x20] sm:$0xff]
    %v2623 = vld [vmem:[#allocation7 + $0x28] sm:$0xff]
    %v2624 = vld [vmem:[#allocation7 + $0x30] sm:$0xff]
    %v2625 = vld [vmem:[#allocation7 + $0x38] sm:$0xff]
    %v2626 = vld [vmem:[#allocation7 + $0x40] sm:$0xff]
    %v2627 = vld [vmem:[#allocation7 + $0x48] sm:$0xff]
    %v2628 = vld [vmem:[#allocation7 + $0x50] sm:$0xff]
    %v2629 = vld [vmem:[#allocation7 + $0x58] sm:$0xff]
    %v2630 = vld [vmem:[#allocation7 + $0x60] sm:$0xff]
    %v2631 = vld [vmem:[#allocation7 + $0x68] sm:$0xff]
    %v2632 = vld [vmem:[#allocation7 + $0x70] sm:$0xff]
    %v2633 = vld [vmem:[#allocation7 + $0x78] sm:$0xff]
    %v2634 = vld [vmem:[#allocation7 + $0x80] sm:$0xff]
    %v2635 = vld [vmem:[#allocation7 + $0x88] sm:$0xff]
    %v2636 = vld [vmem:[#allocation7 + $0x90] sm:$0xff]
    %v2637 = vld [vmem:[#allocation7 + $0x98] sm:$0xff]
    %v2638 = vld [vmem:[#allocation7 + $0xa0] sm:$0xff]
    %v2639 = vld [vmem:[#allocation7 + $0xa8] sm:$0xff]
    %v2640 = vld [vmem:[#allocation7 + $0xb0] sm:$0xff]
    %v2641 = vld [vmem:[#allocation7 + $0xb8] sm:$0xff]
    %v2642 = vld [vmem:[#allocation7 + $0xc0] sm:$0xff]
    %v2643 = vld [vmem:[#allocation7 + $0xc8] sm:$0xff]
    %v2644 = vld [vmem:[#allocation7 + $0xd0] sm:$0xff]
    %v2645 = vld [vmem:[#allocation7 + $0xd8] sm:$0xff]
    %v2646 = vld [vmem:[#allocation7 + $0xe0] sm:$0xff]
    %v2647 = vld [vmem:[#allocation7 + $0xe8] sm:$0xff]
    %v2648 = vld [vmem:[#allocation7 + $0xf0] sm:$0xff]
    %v2649 = vld [vmem:[#allocation7 + $0xf8] sm:$0xff]
    %v2650 = vld [vmem:[#allocation7 + $0x100] sm:$0xff]
    %v2651 = vld [vmem:[#allocation7 + $0x108] sm:$0xff]
    %v2652 = vld [vmem:[#allocation7 + $0x110] sm:$0xff]
    %v2653 = vld [vmem:[#allocation7 + $0x118] sm:$0xff]
    %v2654 = vld [vmem:[#allocation7 + $0x120] sm:$0xff]
    %v2655 = vld [vmem:[#allocation7 + $0x128] sm:$0xff]
    %v2656 = vld [vmem:[#allocation7 + $0x130] sm:$0xff]
    %v2657 = vld [vmem:[#allocation7 + $0x138] sm:$0xff]
    %v2658 = vld [vmem:[#allocation7 + $0x140] sm:$0xff]
    %v2659 = vld [vmem:[#allocation7 + $0x148] sm:$0xff]
    %v2660 = vld [vmem:[#allocation7 + $0x150] sm:$0xff]
    %v2661 = vld [vmem:[#allocation7 + $0x158] sm:$0xff]
    %v2662 = vld [vmem:[#allocation7 + $0x160] sm:$0xff]
    %v2663 = vld [vmem:[#allocation7 + $0x168] sm:$0xff]
    %v2664 = vld [vmem:[#allocation7 + $0x170] sm:$0xff]
    %v2665 = vld [vmem:[#allocation7 + $0x178] sm:$0xff]
    %v2666 = vld [vmem:[#allocation7 + $0x180] sm:$0xff]
    %v2667 = vld [vmem:[#allocation7 + $0x188] sm:$0xff]
    %v2668 = vld [vmem:[#allocation7 + $0x190] sm:$0xff]
    %v2669 = vld [vmem:[#allocation7 + $0x198] sm:$0xff]
    %v2670 = vld [vmem:[#allocation7 + $0x1a0] sm:$0xff]
    %v2671 = vld [vmem:[#allocation7 + $0x1a8] sm:$0xff]
    %v2672 = vld [vmem:[#allocation7 + $0x1b0] sm:$0xff]
    %v2673 = vld [vmem:[#allocation7 + $0x1b8] sm:$0xff]
    %v2674 = vld [vmem:[#allocation7 + $0x1c0] sm:$0xff]
    %v2675 = vld [vmem:[#allocation7 + $0x1c8] sm:$0xff]
    %v2676 = vld [vmem:[#allocation7 + $0x1d0] sm:$0xff]
    %v2677 = vld [vmem:[#allocation7 + $0x1d8] sm:$0xff]
    %v2678 = vld [vmem:[#allocation7 + $0x1e0] sm:$0xff]
    %v2679 = vld [vmem:[#allocation7 + $0x1e8] sm:$0xff]
    %v2680 = vld [vmem:[#allocation7 + $0x1f0] sm:$0xff]
    %v2681 = vld [vmem:[#allocation7 + $0x1f8] sm:$0xff]
    %v2682 = vld [vmem:[%s13] sm:$0xf]
    loop: start=0, step=1, limit=2
    $region86: #{tpu_custom_call.1} parent=1 // loop_pre_header
      _
    $region87: #{tpu_custom_call.1} parent=1 // loop_header
      %s2684 = sphi 0, %s2688
      %p2685 = scmp.ge.s32.totalorder %s2684, 2
      %v2689 = vphi 0.0, %v3825
      %v2690 = vphi 0.0, %v3823
    $region88: #{tpu_custom_call.1} parent=1 // loop_header_branch
      %2687 = sbr.rel (%p2685) target = $region92
    $region89: #{tpu_custom_call.1} parent=1 // loop_body
      %s2691 = smul.u32 %s2684, 64
      %s2692 = scalar_lea.vmem [#allocation2], %s2691
      %v2693 = vld [vmem:[%s2692] sm:$0xff]
      %v2694 = vld [vmem:[%s2692 + $0x8] sm:$0xff]
      %v2695 = vld [vmem:[%s2692 + $0x10] sm:$0xff]
      %v2696 = vld [vmem:[%s2692 + $0x18] sm:$0xff]
      %v2697 = vld [vmem:[%s2692 + $0x20] sm:$0xff]
      %v2698 = vld [vmem:[%s2692 + $0x28] sm:$0xff]
      %v2699 = vld [vmem:[%s2692 + $0x30] sm:$0xff]
      %v2700 = vld [vmem:[%s2692 + $0x38] sm:$0xff]
      %v2701 = vpack.c.bf16 %v2694, %v2693
      %v2702 = vpack.c.bf16 %v2696, %v2695
      %v2703 = vpack.c.bf16 %v2698, %v2697
      %v2704 = vpack.c.bf16 %v2700, %v2699
      %v2706 = vperm.slane %v2682, 0
      %v2707 = vperm.slane %v2682, 1
      %v2708 = vperm.slane %v2682, 2
      %v2709 = vperm.slane %v2682, 3
      %v2746 = vunpack.c.l.b16 %v2586
      %v2747 = vunpack.c.h.b16 %v2586
      %v2748 = vunpack.c.l.b16 %v2587
      %v2749 = vunpack.c.h.b16 %v2587
      %v2750 = vunpack.c.l.b16 %v2588
      %v2751 = vunpack.c.h.b16 %v2588
      %v2752 = vunpack.c.l.b16 %v2589
      %v2753 = vunpack.c.h.b16 %v2589
      %v2754 = vunpack.c.l.b16 %v2590
      %v2755 = vunpack.c.h.b16 %v2590
      %v2756 = vunpack.c.l.b16 %v2591
      %v2757 = vunpack.c.h.b16 %v2591
      %v2758 = vunpack.c.l.b16 %v2592
      %v2759 = vunpack.c.h.b16 %v2592
      %v2760 = vunpack.c.l.b16 %v2593
      %v2761 = vunpack.c.h.b16 %v2593
      %v2762 = vunpack.c.l.b16 %v2594
      %v2763 = vunpack.c.h.b16 %v2594
      %v2764 = vunpack.c.l.b16 %v2595
      %v2765 = vunpack.c.h.b16 %v2595
      %v2766 = vunpack.c.l.b16 %v2596
      %v2767 = vunpack.c.h.b16 %v2596
      %v2768 = vunpack.c.l.b16 %v2597
      %v2769 = vunpack.c.h.b16 %v2597
      %v2770 = vunpack.c.l.b16 %v2598
      %v2771 = vunpack.c.h.b16 %v2598
      %v2772 = vunpack.c.l.b16 %v2599
      %v2773 = vunpack.c.h.b16 %v2599
      %v2774 = vunpack.c.l.b16 %v2600
      %v2775 = vunpack.c.h.b16 %v2600
      %v2776 = vunpack.c.l.b16 %v2601
      %v2777 = vunpack.c.h.b16 %v2601
      %v2778 = vunpack.c.l.b16 %v2602
      %v2779 = vunpack.c.h.b16 %v2602
      %v2780 = vunpack.c.l.b16 %v2603
      %v2781 = vunpack.c.h.b16 %v2603
      %v2782 = vunpack.c.l.b16 %v2604
      %v2783 = vunpack.c.h.b16 %v2604
      %v2784 = vunpack.c.l.b16 %v2605
      %v2785 = vunpack.c.h.b16 %v2605
      %v2786 = vunpack.c.l.b16 %v2606
      %v2787 = vunpack.c.h.b16 %v2606
      %v2788 = vunpack.c.l.b16 %v2607
      %v2789 = vunpack.c.h.b16 %v2607
      %v2790 = vunpack.c.l.b16 %v2608
      %v2791 = vunpack.c.h.b16 %v2608
      %v2792 = vunpack.c.l.b16 %v2609
      %v2793 = vunpack.c.h.b16 %v2609
      %v2794 = vunpack.c.l.b16 %v2610
      %v2795 = vunpack.c.h.b16 %v2610
      %v2796 = vunpack.c.l.b16 %v2611
      %v2797 = vunpack.c.h.b16 %v2611
      %v2798 = vunpack.c.l.b16 %v2612
      %v2799 = vunpack.c.h.b16 %v2612
      %v2800 = vunpack.c.l.b16 %v2613
      %v2801 = vunpack.c.h.b16 %v2613
      %v2802 = vunpack.c.l.b16 %v2614
      %v2803 = vunpack.c.h.b16 %v2614
      %v2804 = vunpack.c.l.b16 %v2615
      %v2805 = vunpack.c.h.b16 %v2615
      %v2806 = vunpack.c.l.b16 %v2616
      %v2807 = vunpack.c.h.b16 %v2616
      %v2808 = vunpack.c.l.b16 %v2617
      %v2809 = vunpack.c.h.b16 %v2617
      %v2810 = vpack.c.b16 %v2750, %v2746
      %v2811 = vpack.c.b16 %v2751, %v2747
      %v2812 = vpack.c.b16 %v2752, %v2748
      %v2813 = vpack.c.b16 %v2753, %v2749
      %v2814 = vpack.c.b16 %v2758, %v2754
      %v2815 = vpack.c.b16 %v2759, %v2755
      %v2816 = vpack.c.b16 %v2760, %v2756
      %v2817 = vpack.c.b16 %v2761, %v2757
      %v2818 = vpack.c.b16 %v2766, %v2762
      %v2819 = vpack.c.b16 %v2767, %v2763
      %v2820 = vpack.c.b16 %v2768, %v2764
      %v2821 = vpack.c.b16 %v2769, %v2765
      %v2822 = vpack.c.b16 %v2774, %v2770
      %v2823 = vpack.c.b16 %v2775, %v2771
      %v2824 = vpack.c.b16 %v2776, %v2772
      %v2825 = vpack.c.b16 %v2777, %v2773
      %v2826 = vpack.c.b16 %v2782, %v2778
      %v2827 = vpack.c.b16 %v2783, %v2779
      %v2828 = vpack.c.b16 %v2784, %v2780
      %v2829 = vpack.c.b16 %v2785, %v2781
      %v2830 = vpack.c.b16 %v2790, %v2786
      %v2831 = vpack.c.b16 %v2791, %v2787
      %v2832 = vpack.c.b16 %v2792, %v2788
      %v2833 = vpack.c.b16 %v2793, %v2789
      %v2834 = vpack.c.b16 %v2798, %v2794
      %v2835 = vpack.c.b16 %v2799, %v2795
      %v2836 = vpack.c.b16 %v2800, %v2796
      %v2837 = vpack.c.b16 %v2801, %v2797
      %v2838 = vpack.c.b16 %v2806, %v2802
      %v2839 = vpack.c.b16 %v2807, %v2803
      %v2840 = vpack.c.b16 %v2808, %v2804
      %v2841 = vpack.c.b16 %v2809, %v2805
      %2874 = vmatpush.bf16.msra.mxu0 %v2838
      %2875 = vmatpush.bf16.msra.mxu0 %v2834
      %2876 = vmatpush.bf16.msra.mxu0 %v2830
      %2877 = vmatpush.bf16.msra.mxu0 %v2826
      %2878 = vmatpush.bf16.msra.mxu0 %v2822
      %2879 = vmatpush.bf16.msra.mxu0 %v2818
      %2880 = vmatpush.bf16.msra.mxu0 %v2814
      %2881 = vmatpush.bf16.msra.mxu0 %v2810
      %2882 = vmatmul.bf16.gmra.mxu0 %v2701
      %v2883 = vpop.f32.mrf.mxu0
      %v2884 = vadd.f32 %v2706, %v2883
      %v2885 = vpop.f32.mrf.mxu0
      %v2886 = vadd.f32 %v2706, %v2885
      %2887 = vmatmul.bf16.gmra.mxu0 %v2702
      %v2888 = vpop.f32.mrf.mxu0
      %v2889 = vadd.f32 %v2706, %v2888
      %v2890 = vpop.f32.mrf.mxu0
      %v2891 = vadd.f32 %v2706, %v2890
      %2892 = vmatmul.bf16.gmra.mxu0 %v2703
      %v2893 = vpop.f32.mrf.mxu0
      %v2894 = vadd.f32 %v2706, %v2893
      %v2895 = vpop.f32.mrf.mxu0
      %v2896 = vadd.f32 %v2706, %v2895
      %2897 = vmatmul.bf16.gmra.mxu0 %v2704
      %v2898 = vpop.f32.mrf.mxu0
      %v2899 = vadd.f32 %v2706, %v2898
      %v2900 = vpop.f32.mrf.mxu0
      %v2901 = vadd.f32 %v2706, %v2900
      %2902 = vdwg.mxu0
      %2903 = vmatpush.bf16.msra.mxu0 %v2839
      %2904 = vmatpush.bf16.msra.mxu0 %v2835
      %2905 = vmatpush.bf16.msra.mxu0 %v2831
      %2906 = vmatpush.bf16.msra.mxu0 %v2827
      %2907 = vmatpush.bf16.msra.mxu0 %v2823
      %2908 = vmatpush.bf16.msra.mxu0 %v2819
      %2909 = vmatpush.bf16.msra.mxu0 %v2815
      %2910 = vmatpush.bf16.msra.mxu0 %v2811
      %2911 = vmatmul.bf16.gmra.mxu0 %v2701
      %v2912 = vpop.f32.mrf.mxu0
      %v2913 = vadd.f32 %v2707, %v2912
      %v2914 = vpop.f32.mrf.mxu0
      %v2915 = vadd.f32 %v2707, %v2914
      %2916 = vmatmul.bf16.gmra.mxu0 %v2702
      %v2917 = vpop.f32.mrf.mxu0
      %v2918 = vadd.f32 %v2707, %v2917
      %v2919 = vpop.f32.mrf.mxu0
      %v2920 = vadd.f32 %v2707, %v2919
      %2921 = vmatmul.bf16.gmra.mxu0 %v2703
      %v2922 = vpop.f32.mrf.mxu0
      %v2923 = vadd.f32 %v2707, %v2922
      %v2924 = vpop.f32.mrf.mxu0
      %v2925 = vadd.f32 %v2707, %v2924
      %2926 = vmatmul.bf16.gmra.mxu0 %v2704
      %v2927 = vpop.f32.mrf.mxu0
      %v2928 = vadd.f32 %v2707, %v2927
      %v2929 = vpop.f32.mrf.mxu0
      %v2930 = vadd.f32 %v2707, %v2929
      %2931 = vdwg.mxu0
      %2932 = vmatpush.bf16.msra.mxu0 %v2840
      %2933 = vmatpush.bf16.msra.mxu0 %v2836
      %2934 = vmatpush.bf16.msra.mxu0 %v2832
      %2935 = vmatpush.bf16.msra.mxu0 %v2828
      %2936 = vmatpush.bf16.msra.mxu0 %v2824
      %2937 = vmatpush.bf16.msra.mxu0 %v2820
      %2938 = vmatpush.bf16.msra.mxu0 %v2816
      %2939 = vmatpush.bf16.msra.mxu0 %v2812
      %2940 = vmatmul.bf16.gmra.mxu0 %v2701
      %v2941 = vpop.f32.mrf.mxu0
      %v2942 = vadd.f32 %v2708, %v2941
      %v2943 = vpop.f32.mrf.mxu0
      %v2944 = vadd.f32 %v2708, %v2943
      %2945 = vmatmul.bf16.gmra.mxu0 %v2702
      %v2946 = vpop.f32.mrf.mxu0
      %v2947 = vadd.f32 %v2708, %v2946
      %v2948 = vpop.f32.mrf.mxu0
      %v2949 = vadd.f32 %v2708, %v2948
      %2950 = vmatmul.bf16.gmra.mxu0 %v2703
      %v2951 = vpop.f32.mrf.mxu0
      %v2952 = vadd.f32 %v2708, %v2951
      %v2953 = vpop.f32.mrf.mxu0
      %v2954 = vadd.f32 %v2708, %v2953
      %2955 = vmatmul.bf16.gmra.mxu0 %v2704
      %v2956 = vpop.f32.mrf.mxu0
      %v2957 = vadd.f32 %v2708, %v2956
      %v2958 = vpop.f32.mrf.mxu0
      %v2959 = vadd.f32 %v2708, %v2958
      %2960 = vdwg.mxu0
      %2961 = vmatpush.bf16.msra.mxu0 %v2841
      %2962 = vmatpush.bf16.msra.mxu0 %v2837
      %2963 = vmatpush.bf16.msra.mxu0 %v2833
      %2964 = vmatpush.bf16.msra.mxu0 %v2829
      %2965 = vmatpush.bf16.msra.mxu0 %v2825
      %2966 = vmatpush.bf16.msra.mxu0 %v2821
      %2967 = vmatpush.bf16.msra.mxu0 %v2817
      %2968 = vmatpush.bf16.msra.mxu0 %v2813
      %2969 = vmatmul.bf16.gmra.mxu0 %v2701
      %v2970 = vpop.f32.mrf.mxu0
      %v2971 = vadd.f32 %v2709, %v2970
      %v2972 = vpop.f32.mrf.mxu0
      %v2973 = vadd.f32 %v2709, %v2972
      %2974 = vmatmul.bf16.gmra.mxu0 %v2702
      %v2975 = vpop.f32.mrf.mxu0
      %v2976 = vadd.f32 %v2709, %v2975
      %v2977 = vpop.f32.mrf.mxu0
      %v2978 = vadd.f32 %v2709, %v2977
      %2979 = vmatmul.bf16.gmra.mxu0 %v2703
      %v2980 = vpop.f32.mrf.mxu0
      %v2981 = vadd.f32 %v2709, %v2980
      %v2982 = vpop.f32.mrf.mxu0
      %v2983 = vadd.f32 %v2709, %v2982
      %2984 = vmatmul.bf16.gmra.mxu0 %v2704
      %v2985 = vpop.f32.mrf.mxu0
      %v2986 = vadd.f32 %v2709, %v2985
      %v2987 = vpop.f32.mrf.mxu0
      %v2988 = vadd.f32 %v2709, %v2987
      %2989 = vdwg.mxu0
      %2990 = vmatpush.msra.mxu0 %v2678
      %2991 = vmatpush.msra.mxu0 %v2674
      %2992 = vmatpush.msra.mxu0 %v2670
      %2993 = vmatpush.msra.mxu0 %v2666
      %2994 = vmatpush.msra.mxu0 %v2662
      %2995 = vmatpush.msra.mxu0 %v2658
      %2996 = vmatpush.msra.mxu0 %v2654
      %2997 = vmatpush.msra.mxu0 %v2650
      %2998 = vmatpush.msra.mxu0 %v2646
      %2999 = vmatpush.msra.mxu0 %v2642
      %3000 = vmatpush.msra.mxu0 %v2638
      %3001 = vmatpush.msra.mxu0 %v2634
      %3002 = vmatpush.msra.mxu0 %v2630
      %3003 = vmatpush.msra.mxu0 %v2626
      %3004 = vmatpush.msra.mxu0 %v2622
      %3005 = vmatpush.msra.mxu0 %v2618
      %3006 = vmatmul.f32.gmra.mxu0 %v2689
      %v3007 = vpop.f32.mrf.mxu0
      %v3008 = vadd.f32 0.0, %v3007
      %3009 = vdwg.mxu0
      %3010 = vmatpush.msra.mxu0 %v2679
      %3011 = vmatpush.msra.mxu0 %v2675
      %3012 = vmatpush.msra.mxu0 %v2671
      %3013 = vmatpush.msra.mxu0 %v2667
      %3014 = vmatpush.msra.mxu0 %v2663
      %3015 = vmatpush.msra.mxu0 %v2659
      %3016 = vmatpush.msra.mxu0 %v2655
      %3017 = vmatpush.msra.mxu0 %v2651
      %3018 = vmatpush.msra.mxu0 %v2647
      %3019 = vmatpush.msra.mxu0 %v2643
      %3020 = vmatpush.msra.mxu0 %v2639
      %3021 = vmatpush.msra.mxu0 %v2635
      %3022 = vmatpush.msra.mxu0 %v2631
      %3023 = vmatpush.msra.mxu0 %v2627
      %3024 = vmatpush.msra.mxu0 %v2623
      %3025 = vmatpush.msra.mxu0 %v2619
      %3026 = vmatmul.f32.gmra.mxu0 %v2689
      %v3027 = vpop.f32.mrf.mxu0
      %v3028 = vadd.f32 0.0, %v3027
      %3029 = vdwg.mxu0
      %3030 = vmatpush.msra.mxu0 %v2680
      %3031 = vmatpush.msra.mxu0 %v2676
      %3032 = vmatpush.msra.mxu0 %v2672
      %3033 = vmatpush.msra.mxu0 %v2668
      %3034 = vmatpush.msra.mxu0 %v2664
      %3035 = vmatpush.msra.mxu0 %v2660
      %3036 = vmatpush.msra.mxu0 %v2656
      %3037 = vmatpush.msra.mxu0 %v2652
      %3038 = vmatpush.msra.mxu0 %v2648
      %3039 = vmatpush.msra.mxu0 %v2644
      %3040 = vmatpush.msra.mxu0 %v2640
      %3041 = vmatpush.msra.mxu0 %v2636
      %3042 = vmatpush.msra.mxu0 %v2632
      %3043 = vmatpush.msra.mxu0 %v2628
      %3044 = vmatpush.msra.mxu0 %v2624
      %3045 = vmatpush.msra.mxu0 %v2620
      %3046 = vmatmul.f32.gmra.mxu0 %v2689
      %v3047 = vpop.f32.mrf.mxu0
      %v3048 = vadd.f32 0.0, %v3047
      %3049 = vdwg.mxu0
      %3050 = vmatpush.msra.mxu0 %v2681
      %3051 = vmatpush.msra.mxu0 %v2677
      %3052 = vmatpush.msra.mxu0 %v2673
      %3053 = vmatpush.msra.mxu0 %v2669
      %3054 = vmatpush.msra.mxu0 %v2665
      %3055 = vmatpush.msra.mxu0 %v2661
      %3056 = vmatpush.msra.mxu0 %v2657
      %3057 = vmatpush.msra.mxu0 %v2653
      %3058 = vmatpush.msra.mxu0 %v2649
      %3059 = vmatpush.msra.mxu0 %v2645
      %3060 = vmatpush.msra.mxu0 %v2641
      %3061 = vmatpush.msra.mxu0 %v2637
      %3062 = vmatpush.msra.mxu0 %v2633
      %3063 = vmatpush.msra.mxu0 %v2629
      %3064 = vmatpush.msra.mxu0 %v2625
      %3065 = vmatpush.msra.mxu0 %v2621
      %3066 = vmatmul.f32.gmra.mxu0 %v2689
      %v3067 = vpop.f32.mrf.mxu0
      %v3068 = vadd.f32 0.0, %v3067
      %3069 = vdwg.mxu0
      %v3070 = vadd.f32 %v2884, %v3008
      %v3071 = vadd.f32 %v2913, %v3028
      %v3072 = vadd.f32 %v2942, %v3048
      %v3073 = vadd.f32 %v2971, %v3068
      %v3074 = vmul.f32 %v3070, 0.5
      %v3075 = vmul.f32 %v3071, 0.5
      %v3076 = vmul.f32 %v3072, 0.5
      %v3077 = vtanh.pop %v3074
      %v3078 = vtanh.pop %v3075
      %v3079 = vtanh.pop %v3076
      %v3080 = vmul.f32 %v3077, 0.5
      %v3081 = vmul.f32 %v3078, 0.5
      %v3082 = vmul.f32 %v3079, 0.5
      %v3083 = vadd.f32 %v3080, 0.5
      %v3084 = vadd.f32 %v3081, 0.5
      %v3085 = vadd.f32 %v3082, 0.5
      %v3086 = vtanh.pop %v3073
      %v3087 = vmul.f32 %v3084, %v2690
      %v3088 = vmul.f32 %v3083, %v3086
      %v3089 = vadd.f32 %v3087, %v3088
      %v3090 = vtanh.pop %v3089
      %v3091 = vmul.f32 %v3085, %v3090
      %s3092 = scalar_lea.vmem [#allocation3], %s2691
      %3093 = vst [vmem:[%s3092] sm:$0xff] %v3091
      %3094 = vmatpush.msra.mxu0 %v2678
      %3095 = vmatpush.msra.mxu0 %v2674
      %3096 = vmatpush.msra.mxu0 %v2670
      %3097 = vmatpush.msra.mxu0 %v2666
      %3098 = vmatpush.msra.mxu0 %v2662
      %3099 = vmatpush.msra.mxu0 %v2658
      %3100 = vmatpush.msra.mxu0 %v2654
      %3101 = vmatpush.msra.mxu0 %v2650
      %3102 = vmatpush.msra.mxu0 %v2646
      %3103 = vmatpush.msra.mxu0 %v2642
      %3104 = vmatpush.msra.mxu0 %v2638
      %3105 = vmatpush.msra.mxu0 %v2634
      %3106 = vmatpush.msra.mxu0 %v2630
      %3107 = vmatpush.msra.mxu0 %v2626
      %3108 = vmatpush.msra.mxu0 %v2622
      %3109 = vmatpush.msra.mxu0 %v2618
      %3110 = vmatmul.f32.gmra.mxu0 %v3091
      %v3111 = vpop.f32.mrf.mxu0
      %v3112 = vadd.f32 0.0, %v3111
      %3113 = vdwg.mxu0
      %3114 = vmatpush.msra.mxu0 %v2679
      %3115 = vmatpush.msra.mxu0 %v2675
      %3116 = vmatpush.msra.mxu0 %v2671
      %3117 = vmatpush.msra.mxu0 %v2667
      %3118 = vmatpush.msra.mxu0 %v2663
      %3119 = vmatpush.msra.mxu0 %v2659
      %3120 = vmatpush.msra.mxu0 %v2655
      %3121 = vmatpush.msra.mxu0 %v2651
      %3122 = vmatpush.msra.mxu0 %v2647
      %3123 = vmatpush.msra.mxu0 %v2643
      %3124 = vmatpush.msra.mxu0 %v2639
      %3125 = vmatpush.msra.mxu0 %v2635
      %3126 = vmatpush.msra.mxu0 %v2631
      %3127 = vmatpush.msra.mxu0 %v2627
      %3128 = vmatpush.msra.mxu0 %v2623
      %3129 = vmatpush.msra.mxu0 %v2619
      %3130 = vmatmul.f32.gmra.mxu0 %v3091
      %v3131 = vpop.f32.mrf.mxu0
      %v3132 = vadd.f32 0.0, %v3131
      %3133 = vdwg.mxu0
      %3134 = vmatpush.msra.mxu0 %v2680
      %3135 = vmatpush.msra.mxu0 %v2676
      %3136 = vmatpush.msra.mxu0 %v2672
      %3137 = vmatpush.msra.mxu0 %v2668
      %3138 = vmatpush.msra.mxu0 %v2664
      %3139 = vmatpush.msra.mxu0 %v2660
      %3140 = vmatpush.msra.mxu0 %v2656
      %3141 = vmatpush.msra.mxu0 %v2652
      %3142 = vmatpush.msra.mxu0 %v2648
      %3143 = vmatpush.msra.mxu0 %v2644
      %3144 = vmatpush.msra.mxu0 %v2640
      %3145 = vmatpush.msra.mxu0 %v2636
      %3146 = vmatpush.msra.mxu0 %v2632
      %3147 = vmatpush.msra.mxu0 %v2628
      %3148 = vmatpush.msra.mxu0 %v2624
      %3149 = vmatpush.msra.mxu0 %v2620
      %3150 = vmatmul.f32.gmra.mxu0 %v3091
      %v3151 = vpop.f32.mrf.mxu0
      %v3152 = vadd.f32 0.0, %v3151
      %3153 = vdwg.mxu0
      %3154 = vmatpush.msra.mxu0 %v2681
      %3155 = vmatpush.msra.mxu0 %v2677
      %3156 = vmatpush.msra.mxu0 %v2673
      %3157 = vmatpush.msra.mxu0 %v2669
      %3158 = vmatpush.msra.mxu0 %v2665
      %3159 = vmatpush.msra.mxu0 %v2661
      %3160 = vmatpush.msra.mxu0 %v2657
      %3161 = vmatpush.msra.mxu0 %v2653
      %3162 = vmatpush.msra.mxu0 %v2649
      %3163 = vmatpush.msra.mxu0 %v2645
      %3164 = vmatpush.msra.mxu0 %v2641
      %3165 = vmatpush.msra.mxu0 %v2637
      %3166 = vmatpush.msra.mxu0 %v2633
      %3167 = vmatpush.msra.mxu0 %v2629
      %3168 = vmatpush.msra.mxu0 %v2625
      %3169 = vmatpush.msra.mxu0 %v2621
      %3170 = vmatmul.f32.gmra.mxu0 %v3091
      %v3171 = vpop.f32.mrf.mxu0
      %v3172 = vadd.f32 0.0, %v3171
      %3173 = vdwg.mxu0
      %v3174 = vadd.f32 %v2886, %v3112
      %v3175 = vadd.f32 %v2915, %v3132
      %v3176 = vadd.f32 %v2944, %v3152
      %v3177 = vadd.f32 %v2973, %v3172
      %v3178 = vmul.f32 %v3174, 0.5
      %v3179 = vmul.f32 %v3175, 0.5
      %v3180 = vmul.f32 %v3176, 0.5
      %v3181 = vtanh.pop %v3178
      %v3182 = vtanh.pop %v3179
      %v3183 = vtanh.pop %v3180
      %v3184 = vmul.f32 %v3181, 0.5
      %v3185 = vmul.f32 %v3182, 0.5
      %v3186 = vmul.f32 %v3183, 0.5
      %v3187 = vadd.f32 %v3184, 0.5
      %v3188 = vadd.f32 %v3185, 0.5
      %v3189 = vadd.f32 %v3186, 0.5
      %v3190 = vtanh.pop %v3177
      %v3191 = vmul.f32 %v3188, %v3089
      %v3192 = vmul.f32 %v3187, %v3190
      %v3193 = vadd.f32 %v3191, %v3192
      %v3194 = vtanh.pop %v3193
      %v3195 = vmul.f32 %v3189, %v3194
      %s3196 = sadd.s32 %s2691, 8
      %s3197 = scalar_lea.vmem [#allocation3], %s3196
      %3198 = vst [vmem:[%s3197] sm:$0xff] %v3195
      %3199 = vmatpush.msra.mxu0 %v2678
      %3200 = vmatpush.msra.mxu0 %v2674
      %3201 = vmatpush.msra.mxu0 %v2670
      %3202 = vmatpush.msra.mxu0 %v2666
      %3203 = vmatpush.msra.mxu0 %v2662
      %3204 = vmatpush.msra.mxu0 %v2658
      %3205 = vmatpush.msra.mxu0 %v2654
      %3206 = vmatpush.msra.mxu0 %v2650
      %3207 = vmatpush.msra.mxu0 %v2646
      %3208 = vmatpush.msra.mxu0 %v2642
      %3209 = vmatpush.msra.mxu0 %v2638
      %3210 = vmatpush.msra.mxu0 %v2634
      %3211 = vmatpush.msra.mxu0 %v2630
      %3212 = vmatpush.msra.mxu0 %v2626
      %3213 = vmatpush.msra.mxu0 %v2622
      %3214 = vmatpush.msra.mxu0 %v2618
      %3215 = vmatmul.f32.gmra.mxu0 %v3195
      %v3216 = vpop.f32.mrf.mxu0
      %v3217 = vadd.f32 0.0, %v3216
      %3218 = vdwg.mxu0
      %3219 = vmatpush.msra.mxu0 %v2679
      %3220 = vmatpush.msra.mxu0 %v2675
      %3221 = vmatpush.msra.mxu0 %v2671
      %3222 = vmatpush.msra.mxu0 %v2667
      %3223 = vmatpush.msra.mxu0 %v2663
      %3224 = vmatpush.msra.mxu0 %v2659
      %3225 = vmatpush.msra.mxu0 %v2655
      %3226 = vmatpush.msra.mxu0 %v2651
      %3227 = vmatpush.msra.mxu0 %v2647
      %3228 = vmatpush.msra.mxu0 %v2643
      %3229 = vmatpush.msra.mxu0 %v2639
      %3230 = vmatpush.msra.mxu0 %v2635
      %3231 = vmatpush.msra.mxu0 %v2631
      %3232 = vmatpush.msra.mxu0 %v2627
      %3233 = vmatpush.msra.mxu0 %v2623
      %3234 = vmatpush.msra.mxu0 %v2619
      %3235 = vmatmul.f32.gmra.mxu0 %v3195
      %v3236 = vpop.f32.mrf.mxu0
      %v3237 = vadd.f32 0.0, %v3236
      %3238 = vdwg.mxu0
      %3239 = vmatpush.msra.mxu0 %v2680
      %3240 = vmatpush.msra.mxu0 %v2676
      %3241 = vmatpush.msra.mxu0 %v2672
      %3242 = vmatpush.msra.mxu0 %v2668
      %3243 = vmatpush.msra.mxu0 %v2664
      %3244 = vmatpush.msra.mxu0 %v2660
      %3245 = vmatpush.msra.mxu0 %v2656
      %3246 = vmatpush.msra.mxu0 %v2652
      %3247 = vmatpush.msra.mxu0 %v2648
      %3248 = vmatpush.msra.mxu0 %v2644
      %3249 = vmatpush.msra.mxu0 %v2640
      %3250 = vmatpush.msra.mxu0 %v2636
      %3251 = vmatpush.msra.mxu0 %v2632
      %3252 = vmatpush.msra.mxu0 %v2628
      %3253 = vmatpush.msra.mxu0 %v2624
      %3254 = vmatpush.msra.mxu0 %v2620
      %3255 = vmatmul.f32.gmra.mxu0 %v3195
      %v3256 = vpop.f32.mrf.mxu0
      %v3257 = vadd.f32 0.0, %v3256
      %3258 = vdwg.mxu0
      %3259 = vmatpush.msra.mxu0 %v2681
      %3260 = vmatpush.msra.mxu0 %v2677
      %3261 = vmatpush.msra.mxu0 %v2673
      %3262 = vmatpush.msra.mxu0 %v2669
      %3263 = vmatpush.msra.mxu0 %v2665
      %3264 = vmatpush.msra.mxu0 %v2661
      %3265 = vmatpush.msra.mxu0 %v2657
      %3266 = vmatpush.msra.mxu0 %v2653
      %3267 = vmatpush.msra.mxu0 %v2649
      %3268 = vmatpush.msra.mxu0 %v2645
      %3269 = vmatpush.msra.mxu0 %v2641
      %3270 = vmatpush.msra.mxu0 %v2637
      %3271 = vmatpush.msra.mxu0 %v2633
      %3272 = vmatpush.msra.mxu0 %v2629
      %3273 = vmatpush.msra.mxu0 %v2625
      %3274 = vmatpush.msra.mxu0 %v2621
      %3275 = vmatmul.f32.gmra.mxu0 %v3195
      %v3276 = vpop.f32.mrf.mxu0
      %v3277 = vadd.f32 0.0, %v3276
      %3278 = vdwg.mxu0
      %v3279 = vadd.f32 %v2889, %v3217
      %v3280 = vadd.f32 %v2918, %v3237
      %v3281 = vadd.f32 %v2947, %v3257
      %v3282 = vadd.f32 %v2976, %v3277
      %v3283 = vmul.f32 %v3279, 0.5
      %v3284 = vmul.f32 %v3280, 0.5
      %v3285 = vmul.f32 %v3281, 0.5
      %v3286 = vtanh.pop %v3283
      %v3287 = vtanh.pop %v3284
      %v3288 = vtanh.pop %v3285
      %v3289 = vmul.f32 %v3286, 0.5
      %v3290 = vmul.f32 %v3287, 0.5
      %v3291 = vmul.f32 %v3288, 0.5
      %v3292 = vadd.f32 %v3289, 0.5
      %v3293 = vadd.f32 %v3290, 0.5
      %v3294 = vadd.f32 %v3291, 0.5
      %v3295 = vtanh.pop %v3282
      %v3296 = vmul.f32 %v3293, %v3193
      %v3297 = vmul.f32 %v3292, %v3295
      %v3298 = vadd.f32 %v3296, %v3297
      %v3299 = vtanh.pop %v3298
      %v3300 = vmul.f32 %v3294, %v3299
      %s3301 = sadd.s32 %s2691, 16
      %s3302 = scalar_lea.vmem [#allocation3], %s3301
      %3303 = vst [vmem:[%s3302] sm:$0xff] %v3300
      %3304 = vmatpush.msra.mxu0 %v2678
      %3305 = vmatpush.msra.mxu0 %v2674
      %3306 = vmatpush.msra.mxu0 %v2670
      %3307 = vmatpush.msra.mxu0 %v2666
      %3308 = vmatpush.msra.mxu0 %v2662
      %3309 = vmatpush.msra.mxu0 %v2658
      %3310 = vmatpush.msra.mxu0 %v2654
      %3311 = vmatpush.msra.mxu0 %v2650
      %3312 = vmatpush.msra.mxu0 %v2646
      %3313 = vmatpush.msra.mxu0 %v2642
      %3314 = vmatpush.msra.mxu0 %v2638
      %3315 = vmatpush.msra.mxu0 %v2634
      %3316 = vmatpush.msra.mxu0 %v2630
      %3317 = vmatpush.msra.mxu0 %v2626
      %3318 = vmatpush.msra.mxu0 %v2622
      %3319 = vmatpush.msra.mxu0 %v2618
      %3320 = vmatmul.f32.gmra.mxu0 %v3300
      %v3321 = vpop.f32.mrf.mxu0
      %v3322 = vadd.f32 0.0, %v3321
      %3323 = vdwg.mxu0
      %3324 = vmatpush.msra.mxu0 %v2679
      %3325 = vmatpush.msra.mxu0 %v2675
      %3326 = vmatpush.msra.mxu0 %v2671
      %3327 = vmatpush.msra.mxu0 %v2667
      %3328 = vmatpush.msra.mxu0 %v2663
      %3329 = vmatpush.msra.mxu0 %v2659
      %3330 = vmatpush.msra.mxu0 %v2655
      %3331 = vmatpush.msra.mxu0 %v2651
      %3332 = vmatpush.msra.mxu0 %v2647
      %3333 = vmatpush.msra.mxu0 %v2643
      %3334 = vmatpush.msra.mxu0 %v2639
      %3335 = vmatpush.msra.mxu0 %v2635
      %3336 = vmatpush.msra.mxu0 %v2631
      %3337 = vmatpush.msra.mxu0 %v2627
      %3338 = vmatpush.msra.mxu0 %v2623
      %3339 = vmatpush.msra.mxu0 %v2619
      %3340 = vmatmul.f32.gmra.mxu0 %v3300
      %v3341 = vpop.f32.mrf.mxu0
      %v3342 = vadd.f32 0.0, %v3341
      %3343 = vdwg.mxu0
      %3344 = vmatpush.msra.mxu0 %v2680
      %3345 = vmatpush.msra.mxu0 %v2676
      %3346 = vmatpush.msra.mxu0 %v2672
      %3347 = vmatpush.msra.mxu0 %v2668
      %3348 = vmatpush.msra.mxu0 %v2664
      %3349 = vmatpush.msra.mxu0 %v2660
      %3350 = vmatpush.msra.mxu0 %v2656
      %3351 = vmatpush.msra.mxu0 %v2652
      %3352 = vmatpush.msra.mxu0 %v2648
      %3353 = vmatpush.msra.mxu0 %v2644
      %3354 = vmatpush.msra.mxu0 %v2640
      %3355 = vmatpush.msra.mxu0 %v2636
      %3356 = vmatpush.msra.mxu0 %v2632
      %3357 = vmatpush.msra.mxu0 %v2628
      %3358 = vmatpush.msra.mxu0 %v2624
      %3359 = vmatpush.msra.mxu0 %v2620
      %3360 = vmatmul.f32.gmra.mxu0 %v3300
      %v3361 = vpop.f32.mrf.mxu0
      %v3362 = vadd.f32 0.0, %v3361
      %3363 = vdwg.mxu0
      %3364 = vmatpush.msra.mxu0 %v2681
      %3365 = vmatpush.msra.mxu0 %v2677
      %3366 = vmatpush.msra.mxu0 %v2673
      %3367 = vmatpush.msra.mxu0 %v2669
      %3368 = vmatpush.msra.mxu0 %v2665
      %3369 = vmatpush.msra.mxu0 %v2661
      %3370 = vmatpush.msra.mxu0 %v2657
      %3371 = vmatpush.msra.mxu0 %v2653
      %3372 = vmatpush.msra.mxu0 %v2649
      %3373 = vmatpush.msra.mxu0 %v2645
      %3374 = vmatpush.msra.mxu0 %v2641
      %3375 = vmatpush.msra.mxu0 %v2637
      %3376 = vmatpush.msra.mxu0 %v2633
      %3377 = vmatpush.msra.mxu0 %v2629
      %3378 = vmatpush.msra.mxu0 %v2625
      %3379 = vmatpush.msra.mxu0 %v2621
      %3380 = vmatmul.f32.gmra.mxu0 %v3300
      %v3381 = vpop.f32.mrf.mxu0
      %v3382 = vadd.f32 0.0, %v3381
      %3383 = vdwg.mxu0
      %v3384 = vadd.f32 %v2891, %v3322
      %v3385 = vadd.f32 %v2920, %v3342
      %v3386 = vadd.f32 %v2949, %v3362
      %v3387 = vadd.f32 %v2978, %v3382
      %v3388 = vmul.f32 %v3384, 0.5
      %v3389 = vmul.f32 %v3385, 0.5
      %v3390 = vmul.f32 %v3386, 0.5
      %v3391 = vtanh.pop %v3388
      %v3392 = vtanh.pop %v3389
      %v3393 = vtanh.pop %v3390
      %v3394 = vmul.f32 %v3391, 0.5
      %v3395 = vmul.f32 %v3392, 0.5
      %v3396 = vmul.f32 %v3393, 0.5
      %v3397 = vadd.f32 %v3394, 0.5
      %v3398 = vadd.f32 %v3395, 0.5
      %v3399 = vadd.f32 %v3396, 0.5
      %v3400 = vtanh.pop %v3387
      %v3401 = vmul.f32 %v3398, %v3298
      %v3402 = vmul.f32 %v3397, %v3400
      %v3403 = vadd.f32 %v3401, %v3402
      %v3404 = vtanh.pop %v3403
      %v3405 = vmul.f32 %v3399, %v3404
      %s3406 = sadd.s32 %s2691, 24
      %s3407 = scalar_lea.vmem [#allocation3], %s3406
      %3408 = vst [vmem:[%s3407] sm:$0xff] %v3405
      %3409 = vmatpush.msra.mxu0 %v2678
      %3410 = vmatpush.msra.mxu0 %v2674
      %3411 = vmatpush.msra.mxu0 %v2670
      %3412 = vmatpush.msra.mxu0 %v2666
      %3413 = vmatpush.msra.mxu0 %v2662
      %3414 = vmatpush.msra.mxu0 %v2658
      %3415 = vmatpush.msra.mxu0 %v2654
      %3416 = vmatpush.msra.mxu0 %v2650
      %3417 = vmatpush.msra.mxu0 %v2646
      %3418 = vmatpush.msra.mxu0 %v2642
      %3419 = vmatpush.msra.mxu0 %v2638
      %3420 = vmatpush.msra.mxu0 %v2634
      %3421 = vmatpush.msra.mxu0 %v2630
      %3422 = vmatpush.msra.mxu0 %v2626
      %3423 = vmatpush.msra.mxu0 %v2622
      %3424 = vmatpush.msra.mxu0 %v2618
      %3425 = vmatmul.f32.gmra.mxu0 %v3405
      %v3426 = vpop.f32.mrf.mxu0
      %v3427 = vadd.f32 0.0, %v3426
      %3428 = vdwg.mxu0
      %3429 = vmatpush.msra.mxu0 %v2679
      %3430 = vmatpush.msra.mxu0 %v2675
      %3431 = vmatpush.msra.mxu0 %v2671
      %3432 = vmatpush.msra.mxu0 %v2667
      %3433 = vmatpush.msra.mxu0 %v2663
      %3434 = vmatpush.msra.mxu0 %v2659
      %3435 = vmatpush.msra.mxu0 %v2655
      %3436 = vmatpush.msra.mxu0 %v2651
      %3437 = vmatpush.msra.mxu0 %v2647
      %3438 = vmatpush.msra.mxu0 %v2643
      %3439 = vmatpush.msra.mxu0 %v2639
      %3440 = vmatpush.msra.mxu0 %v2635
      %3441 = vmatpush.msra.mxu0 %v2631
      %3442 = vmatpush.msra.mxu0 %v2627
      %3443 = vmatpush.msra.mxu0 %v2623
      %3444 = vmatpush.msra.mxu0 %v2619
      %3445 = vmatmul.f32.gmra.mxu0 %v3405
      %v3446 = vpop.f32.mrf.mxu0
      %v3447 = vadd.f32 0.0, %v3446
      %3448 = vdwg.mxu0
      %3449 = vmatpush.msra.mxu0 %v2680
      %3450 = vmatpush.msra.mxu0 %v2676
      %3451 = vmatpush.msra.mxu0 %v2672
      %3452 = vmatpush.msra.mxu0 %v2668
      %3453 = vmatpush.msra.mxu0 %v2664
      %3454 = vmatpush.msra.mxu0 %v2660
      %3455 = vmatpush.msra.mxu0 %v2656
      %3456 = vmatpush.msra.mxu0 %v2652
      %3457 = vmatpush.msra.mxu0 %v2648
      %3458 = vmatpush.msra.mxu0 %v2644
      %3459 = vmatpush.msra.mxu0 %v2640
      %3460 = vmatpush.msra.mxu0 %v2636
      %3461 = vmatpush.msra.mxu0 %v2632
      %3462 = vmatpush.msra.mxu0 %v2628
      %3463 = vmatpush.msra.mxu0 %v2624
      %3464 = vmatpush.msra.mxu0 %v2620
      %3465 = vmatmul.f32.gmra.mxu0 %v3405
      %v3466 = vpop.f32.mrf.mxu0
      %v3467 = vadd.f32 0.0, %v3466
      %3468 = vdwg.mxu0
      %3469 = vmatpush.msra.mxu0 %v2681
      %3470 = vmatpush.msra.mxu0 %v2677
      %3471 = vmatpush.msra.mxu0 %v2673
      %3472 = vmatpush.msra.mxu0 %v2669
      %3473 = vmatpush.msra.mxu0 %v2665
      %3474 = vmatpush.msra.mxu0 %v2661
      %3475 = vmatpush.msra.mxu0 %v2657
      %3476 = vmatpush.msra.mxu0 %v2653
      %3477 = vmatpush.msra.mxu0 %v2649
      %3478 = vmatpush.msra.mxu0 %v2645
      %3479 = vmatpush.msra.mxu0 %v2641
      %3480 = vmatpush.msra.mxu0 %v2637
      %3481 = vmatpush.msra.mxu0 %v2633
      %3482 = vmatpush.msra.mxu0 %v2629
      %3483 = vmatpush.msra.mxu0 %v2625
      %3484 = vmatpush.msra.mxu0 %v2621
      %3485 = vmatmul.f32.gmra.mxu0 %v3405
      %v3486 = vpop.f32.mrf.mxu0
      %v3487 = vadd.f32 0.0, %v3486
      %3488 = vdwg.mxu0
      %v3489 = vadd.f32 %v2894, %v3427
      %v3490 = vadd.f32 %v2923, %v3447
      %v3491 = vadd.f32 %v2952, %v3467
      %v3492 = vadd.f32 %v2981, %v3487
      %v3493 = vmul.f32 %v3489, 0.5
      %v3494 = vmul.f32 %v3490, 0.5
      %v3495 = vmul.f32 %v3491, 0.5
      %v3496 = vtanh.pop %v3493
      %v3497 = vtanh.pop %v3494
      %v3498 = vtanh.pop %v3495
      %v3499 = vmul.f32 %v3496, 0.5
      %v3500 = vmul.f32 %v3497, 0.5
      %v3501 = vmul.f32 %v3498, 0.5
      %v3502 = vadd.f32 %v3499, 0.5
      %v3503 = vadd.f32 %v3500, 0.5
      %v3504 = vadd.f32 %v3501, 0.5
      %v3505 = vtanh.pop %v3492
      %v3506 = vmul.f32 %v3503, %v3403
      %v3507 = vmul.f32 %v3502, %v3505
      %v3508 = vadd.f32 %v3506, %v3507
      %v3509 = vtanh.pop %v3508
      %v3510 = vmul.f32 %v3504, %v3509
      %s3511 = sadd.s32 %s2691, 32
      %s3512 = scalar_lea.vmem [#allocation3], %s3511
      %3513 = vst [vmem:[%s3512] sm:$0xff] %v3510
      %3514 = vmatpush.msra.mxu0 %v2678
      %3515 = vmatpush.msra.mxu0 %v2674
      %3516 = vmatpush.msra.mxu0 %v2670
      %3517 = vmatpush.msra.mxu0 %v2666
      %3518 = vmatpush.msra.mxu0 %v2662
      %3519 = vmatpush.msra.mxu0 %v2658
      %3520 = vmatpush.msra.mxu0 %v2654
      %3521 = vmatpush.msra.mxu0 %v2650
      %3522 = vmatpush.msra.mxu0 %v2646
      %3523 = vmatpush.msra.mxu0 %v2642
      %3524 = vmatpush.msra.mxu0 %v2638
      %3525 = vmatpush.msra.mxu0 %v2634
      %3526 = vmatpush.msra.mxu0 %v2630
      %3527 = vmatpush.msra.mxu0 %v2626
      %3528 = vmatpush.msra.mxu0 %v2622
      %3529 = vmatpush.msra.mxu0 %v2618
      %3530 = vmatmul.f32.gmra.mxu0 %v3510
      %v3531 = vpop.f32.mrf.mxu0
      %v3532 = vadd.f32 0.0, %v3531
      %3533 = vdwg.mxu0
      %3534 = vmatpush.msra.mxu0 %v2679
      %3535 = vmatpush.msra.mxu0 %v2675
      %3536 = vmatpush.msra.mxu0 %v2671
      %3537 = vmatpush.msra.mxu0 %v2667
      %3538 = vmatpush.msra.mxu0 %v2663
      %3539 = vmatpush.msra.mxu0 %v2659
      %3540 = vmatpush.msra.mxu0 %v2655
      %3541 = vmatpush.msra.mxu0 %v2651
      %3542 = vmatpush.msra.mxu0 %v2647
      %3543 = vmatpush.msra.mxu0 %v2643
      %3544 = vmatpush.msra.mxu0 %v2639
      %3545 = vmatpush.msra.mxu0 %v2635
      %3546 = vmatpush.msra.mxu0 %v2631
      %3547 = vmatpush.msra.mxu0 %v2627
      %3548 = vmatpush.msra.mxu0 %v2623
      %3549 = vmatpush.msra.mxu0 %v2619
      %3550 = vmatmul.f32.gmra.mxu0 %v3510
      %v3551 = vpop.f32.mrf.mxu0
      %v3552 = vadd.f32 0.0, %v3551
      %3553 = vdwg.mxu0
      %3554 = vmatpush.msra.mxu0 %v2680
      %3555 = vmatpush.msra.mxu0 %v2676
      %3556 = vmatpush.msra.mxu0 %v2672
      %3557 = vmatpush.msra.mxu0 %v2668
      %3558 = vmatpush.msra.mxu0 %v2664
      %3559 = vmatpush.msra.mxu0 %v2660
      %3560 = vmatpush.msra.mxu0 %v2656
      %3561 = vmatpush.msra.mxu0 %v2652
      %3562 = vmatpush.msra.mxu0 %v2648
      %3563 = vmatpush.msra.mxu0 %v2644
      %3564 = vmatpush.msra.mxu0 %v2640
      %3565 = vmatpush.msra.mxu0 %v2636
      %3566 = vmatpush.msra.mxu0 %v2632
      %3567 = vmatpush.msra.mxu0 %v2628
      %3568 = vmatpush.msra.mxu0 %v2624
      %3569 = vmatpush.msra.mxu0 %v2620
      %3570 = vmatmul.f32.gmra.mxu0 %v3510
      %v3571 = vpop.f32.mrf.mxu0
      %v3572 = vadd.f32 0.0, %v3571
      %3573 = vdwg.mxu0
      %3574 = vmatpush.msra.mxu0 %v2681
      %3575 = vmatpush.msra.mxu0 %v2677
      %3576 = vmatpush.msra.mxu0 %v2673
      %3577 = vmatpush.msra.mxu0 %v2669
      %3578 = vmatpush.msra.mxu0 %v2665
      %3579 = vmatpush.msra.mxu0 %v2661
      %3580 = vmatpush.msra.mxu0 %v2657
      %3581 = vmatpush.msra.mxu0 %v2653
      %3582 = vmatpush.msra.mxu0 %v2649
      %3583 = vmatpush.msra.mxu0 %v2645
      %3584 = vmatpush.msra.mxu0 %v2641
      %3585 = vmatpush.msra.mxu0 %v2637
      %3586 = vmatpush.msra.mxu0 %v2633
      %3587 = vmatpush.msra.mxu0 %v2629
      %3588 = vmatpush.msra.mxu0 %v2625
      %3589 = vmatpush.msra.mxu0 %v2621
      %3590 = vmatmul.f32.gmra.mxu0 %v3510
      %v3591 = vpop.f32.mrf.mxu0
      %v3592 = vadd.f32 0.0, %v3591
      %3593 = vdwg.mxu0
      %v3594 = vadd.f32 %v2896, %v3532
      %v3595 = vadd.f32 %v2925, %v3552
      %v3596 = vadd.f32 %v2954, %v3572
      %v3597 = vadd.f32 %v2983, %v3592
      %v3598 = vmul.f32 %v3594, 0.5
      %v3599 = vmul.f32 %v3595, 0.5
      %v3600 = vmul.f32 %v3596, 0.5
      %v3601 = vtanh.pop %v3598
      %v3602 = vtanh.pop %v3599
      %v3603 = vtanh.pop %v3600
      %v3604 = vmul.f32 %v3601, 0.5
      %v3605 = vmul.f32 %v3602, 0.5
      %v3606 = vmul.f32 %v3603, 0.5
      %v3607 = vadd.f32 %v3604, 0.5
      %v3608 = vadd.f32 %v3605, 0.5
      %v3609 = vadd.f32 %v3606, 0.5
      %v3610 = vtanh.pop %v3597
      %v3611 = vmul.f32 %v3608, %v3508
      %v3612 = vmul.f32 %v3607, %v3610
      %v3613 = vadd.f32 %v3611, %v3612
      %v3614 = vtanh.pop %v3613
      %v3615 = vmul.f32 %v3609, %v3614
      %s3616 = sadd.s32 %s2691, 40
      %s3617 = scalar_lea.vmem [#allocation3], %s3616
      %3618 = vst [vmem:[%s3617] sm:$0xff] %v3615
      %3619 = vmatpush.msra.mxu0 %v2678
      %3620 = vmatpush.msra.mxu0 %v2674
      %3621 = vmatpush.msra.mxu0 %v2670
      %3622 = vmatpush.msra.mxu0 %v2666
      %3623 = vmatpush.msra.mxu0 %v2662
      %3624 = vmatpush.msra.mxu0 %v2658
      %3625 = vmatpush.msra.mxu0 %v2654
      %3626 = vmatpush.msra.mxu0 %v2650
      %3627 = vmatpush.msra.mxu0 %v2646
      %3628 = vmatpush.msra.mxu0 %v2642
      %3629 = vmatpush.msra.mxu0 %v2638
      %3630 = vmatpush.msra.mxu0 %v2634
      %3631 = vmatpush.msra.mxu0 %v2630
      %3632 = vmatpush.msra.mxu0 %v2626
      %3633 = vmatpush.msra.mxu0 %v2622
      %3634 = vmatpush.msra.mxu0 %v2618
      %3635 = vmatmul.f32.gmra.mxu0 %v3615
      %v3636 = vpop.f32.mrf.mxu0
      %v3637 = vadd.f32 0.0, %v3636
      %3638 = vdwg.mxu0
      %3639 = vmatpush.msra.mxu0 %v2679
      %3640 = vmatpush.msra.mxu0 %v2675
      %3641 = vmatpush.msra.mxu0 %v2671
      %3642 = vmatpush.msra.mxu0 %v2667
      %3643 = vmatpush.msra.mxu0 %v2663
      %3644 = vmatpush.msra.mxu0 %v2659
      %3645 = vmatpush.msra.mxu0 %v2655
      %3646 = vmatpush.msra.mxu0 %v2651
      %3647 = vmatpush.msra.mxu0 %v2647
      %3648 = vmatpush.msra.mxu0 %v2643
      %3649 = vmatpush.msra.mxu0 %v2639
      %3650 = vmatpush.msra.mxu0 %v2635
      %3651 = vmatpush.msra.mxu0 %v2631
      %3652 = vmatpush.msra.mxu0 %v2627
      %3653 = vmatpush.msra.mxu0 %v2623
      %3654 = vmatpush.msra.mxu0 %v2619
      %3655 = vmatmul.f32.gmra.mxu0 %v3615
      %v3656 = vpop.f32.mrf.mxu0
      %v3657 = vadd.f32 0.0, %v3656
      %3658 = vdwg.mxu0
      %3659 = vmatpush.msra.mxu0 %v2680
      %3660 = vmatpush.msra.mxu0 %v2676
      %3661 = vmatpush.msra.mxu0 %v2672
      %3662 = vmatpush.msra.mxu0 %v2668
      %3663 = vmatpush.msra.mxu0 %v2664
      %3664 = vmatpush.msra.mxu0 %v2660
      %3665 = vmatpush.msra.mxu0 %v2656
      %3666 = vmatpush.msra.mxu0 %v2652
      %3667 = vmatpush.msra.mxu0 %v2648
      %3668 = vmatpush.msra.mxu0 %v2644
      %3669 = vmatpush.msra.mxu0 %v2640
      %3670 = vmatpush.msra.mxu0 %v2636
      %3671 = vmatpush.msra.mxu0 %v2632
      %3672 = vmatpush.msra.mxu0 %v2628
      %3673 = vmatpush.msra.mxu0 %v2624
      %3674 = vmatpush.msra.mxu0 %v2620
      %3675 = vmatmul.f32.gmra.mxu0 %v3615
      %v3676 = vpop.f32.mrf.mxu0
      %v3677 = vadd.f32 0.0, %v3676
      %3678 = vdwg.mxu0
      %3679 = vmatpush.msra.mxu0 %v2681
      %3680 = vmatpush.msra.mxu0 %v2677
      %3681 = vmatpush.msra.mxu0 %v2673
      %3682 = vmatpush.msra.mxu0 %v2669
      %3683 = vmatpush.msra.mxu0 %v2665
      %3684 = vmatpush.msra.mxu0 %v2661
      %3685 = vmatpush.msra.mxu0 %v2657
      %3686 = vmatpush.msra.mxu0 %v2653
      %3687 = vmatpush.msra.mxu0 %v2649
      %3688 = vmatpush.msra.mxu0 %v2645
      %3689 = vmatpush.msra.mxu0 %v2641
      %3690 = vmatpush.msra.mxu0 %v2637
      %3691 = vmatpush.msra.mxu0 %v2633
      %3692 = vmatpush.msra.mxu0 %v2629
      %3693 = vmatpush.msra.mxu0 %v2625
      %3694 = vmatpush.msra.mxu0 %v2621
      %3695 = vmatmul.f32.gmra.mxu0 %v3615
      %v3696 = vpop.f32.mrf.mxu0
      %v3697 = vadd.f32 0.0, %v3696
      %3698 = vdwg.mxu0
      %v3699 = vadd.f32 %v2899, %v3637
      %v3700 = vadd.f32 %v2928, %v3657
      %v3701 = vadd.f32 %v2957, %v3677
      %v3702 = vadd.f32 %v2986, %v3697
      %v3703 = vmul.f32 %v3699, 0.5
      %v3704 = vmul.f32 %v3700, 0.5
      %v3705 = vmul.f32 %v3701, 0.5
      %v3706 = vtanh.pop %v3703
      %v3707 = vtanh.pop %v3704
      %v3708 = vtanh.pop %v3705
      %v3709 = vmul.f32 %v3706, 0.5
      %v3710 = vmul.f32 %v3707, 0.5
      %v3711 = vmul.f32 %v3708, 0.5
      %v3712 = vadd.f32 %v3709, 0.5
      %v3713 = vadd.f32 %v3710, 0.5
      %v3714 = vadd.f32 %v3711, 0.5
      %v3715 = vtanh.pop %v3702
      %v3716 = vmul.f32 %v3713, %v3613
      %v3717 = vmul.f32 %v3712, %v3715
      %v3718 = vadd.f32 %v3716, %v3717
      %v3719 = vtanh.pop %v3718
      %v3720 = vmul.f32 %v3714, %v3719
      %s3721 = sadd.s32 %s2691, 48
      %s3722 = scalar_lea.vmem [#allocation3], %s3721
      %3723 = vst [vmem:[%s3722] sm:$0xff] %v3720
      %3724 = vmatpush.msra.mxu0 %v2678
      %3725 = vmatpush.msra.mxu0 %v2674
      %3726 = vmatpush.msra.mxu0 %v2670
      %3727 = vmatpush.msra.mxu0 %v2666
      %3728 = vmatpush.msra.mxu0 %v2662
      %3729 = vmatpush.msra.mxu0 %v2658
      %3730 = vmatpush.msra.mxu0 %v2654
      %3731 = vmatpush.msra.mxu0 %v2650
      %3732 = vmatpush.msra.mxu0 %v2646
      %3733 = vmatpush.msra.mxu0 %v2642
      %3734 = vmatpush.msra.mxu0 %v2638
      %3735 = vmatpush.msra.mxu0 %v2634
      %3736 = vmatpush.msra.mxu0 %v2630
      %3737 = vmatpush.msra.mxu0 %v2626
      %3738 = vmatpush.msra.mxu0 %v2622
      %3739 = vmatpush.msra.mxu0 %v2618
      %3740 = vmatmul.f32.gmra.mxu0 %v3720
      %v3741 = vpop.f32.mrf.mxu0
      %v3742 = vadd.f32 0.0, %v3741
      %3743 = vdwg.mxu0
      %3744 = vmatpush.msra.mxu0 %v2679
      %3745 = vmatpush.msra.mxu0 %v2675
      %3746 = vmatpush.msra.mxu0 %v2671
      %3747 = vmatpush.msra.mxu0 %v2667
      %3748 = vmatpush.msra.mxu0 %v2663
      %3749 = vmatpush.msra.mxu0 %v2659
      %3750 = vmatpush.msra.mxu0 %v2655
      %3751 = vmatpush.msra.mxu0 %v2651
      %3752 = vmatpush.msra.mxu0 %v2647
      %3753 = vmatpush.msra.mxu0 %v2643
      %3754 = vmatpush.msra.mxu0 %v2639
      %3755 = vmatpush.msra.mxu0 %v2635
      %3756 = vmatpush.msra.mxu0 %v2631
      %3757 = vmatpush.msra.mxu0 %v2627
      %3758 = vmatpush.msra.mxu0 %v2623
      %3759 = vmatpush.msra.mxu0 %v2619
      %3760 = vmatmul.f32.gmra.mxu0 %v3720
      %v3761 = vpop.f32.mrf.mxu0
      %v3762 = vadd.f32 0.0, %v3761
      %3763 = vdwg.mxu0
      %3764 = vmatpush.msra.mxu0 %v2680
      %3765 = vmatpush.msra.mxu0 %v2676
      %3766 = vmatpush.msra.mxu0 %v2672
      %3767 = vmatpush.msra.mxu0 %v2668
      %3768 = vmatpush.msra.mxu0 %v2664
      %3769 = vmatpush.msra.mxu0 %v2660
      %3770 = vmatpush.msra.mxu0 %v2656
      %3771 = vmatpush.msra.mxu0 %v2652
      %3772 = vmatpush.msra.mxu0 %v2648
      %3773 = vmatpush.msra.mxu0 %v2644
      %3774 = vmatpush.msra.mxu0 %v2640
      %3775 = vmatpush.msra.mxu0 %v2636
      %3776 = vmatpush.msra.mxu0 %v2632
      %3777 = vmatpush.msra.mxu0 %v2628
      %3778 = vmatpush.msra.mxu0 %v2624
      %3779 = vmatpush.msra.mxu0 %v2620
      %3780 = vmatmul.f32.gmra.mxu0 %v3720
      %v3781 = vpop.f32.mrf.mxu0
      %v3782 = vadd.f32 0.0, %v3781
      %3783 = vdwg.mxu0
      %3784 = vmatpush.msra.mxu0 %v2681
      %3785 = vmatpush.msra.mxu0 %v2677
      %3786 = vmatpush.msra.mxu0 %v2673
      %3787 = vmatpush.msra.mxu0 %v2669
      %3788 = vmatpush.msra.mxu0 %v2665
      %3789 = vmatpush.msra.mxu0 %v2661
      %3790 = vmatpush.msra.mxu0 %v2657
      %3791 = vmatpush.msra.mxu0 %v2653
      %3792 = vmatpush.msra.mxu0 %v2649
      %3793 = vmatpush.msra.mxu0 %v2645
      %3794 = vmatpush.msra.mxu0 %v2641
      %3795 = vmatpush.msra.mxu0 %v2637
      %3796 = vmatpush.msra.mxu0 %v2633
      %3797 = vmatpush.msra.mxu0 %v2629
      %3798 = vmatpush.msra.mxu0 %v2625
      %3799 = vmatpush.msra.mxu0 %v2621
      %3800 = vmatmul.f32.gmra.mxu0 %v3720
      %v3801 = vpop.f32.mrf.mxu0
      %v3802 = vadd.f32 0.0, %v3801
      %3803 = vdwg.mxu0
      %v3804 = vadd.f32 %v2901, %v3742
      %v3805 = vadd.f32 %v2930, %v3762
      %v3806 = vadd.f32 %v2959, %v3782
      %v3807 = vadd.f32 %v2988, %v3802
      %v3808 = vmul.f32 %v3804, 0.5
      %v3809 = vmul.f32 %v3805, 0.5
      %v3810 = vmul.f32 %v3806, 0.5
      %v3811 = vtanh.pop %v3808
      %v3812 = vtanh.pop %v3809
      %v3813 = vtanh.pop %v3810
      %v3814 = vmul.f32 %v3811, 0.5
      %v3815 = vmul.f32 %v3812, 0.5
      %v3816 = vmul.f32 %v3813, 0.5
      %v3817 = vadd.f32 %v3814, 0.5
      %v3818 = vadd.f32 %v3815, 0.5
      %v3819 = vadd.f32 %v3816, 0.5
      %v3820 = vtanh.pop %v3807
      %v3821 = vmul.f32 %v3818, %v3718
      %v3822 = vmul.f32 %v3817, %v3820
      %v3823 = vadd.f32 %v3821, %v3822
      %v3824 = vtanh.pop %v3823
      %v3825 = vmul.f32 %v3819, %v3824
      %s3826 = sadd.s32 %s2691, 56
      %s3827 = scalar_lea.vmem [#allocation3], %s3826
      %3828 = vst [vmem:[%s3827] sm:$0xff] %v3825
    $region90: #{tpu_custom_call.1} parent=1 // loop_footer
      %s2688 = sadd.s32 1, %s2684
    $region91: #{tpu_custom_call.1} parent=1 // loop_footer_branch
      %2683 = sbr.rel target = $region87
    $region92: #{tpu_custom_call.1} parent=1 // loop_exit
      _
    %v3829 = vld [vmem:[#allocation9] sm:$0xff]
    %v3830 = vld [vmem:[#allocation9 + $0x8] sm:$0xff]
    %v3831 = vld [vmem:[#allocation9 + $0x10] sm:$0xff]
    %v3832 = vld [vmem:[#allocation9 + $0x18] sm:$0xff]
    %v3833 = vld [vmem:[#allocation9 + $0x20] sm:$0xff]
    %v3834 = vld [vmem:[#allocation9 + $0x28] sm:$0xff]
    %v3835 = vld [vmem:[#allocation9 + $0x30] sm:$0xff]
    %v3836 = vld [vmem:[#allocation9 + $0x38] sm:$0xff]
    %v3837 = vld [vmem:[#allocation9 + $0x40] sm:$0xff]
    %v3838 = vld [vmem:[#allocation9 + $0x48] sm:$0xff]
    %v3839 = vld [vmem:[#allocation9 + $0x50] sm:$0xff]
    %v3840 = vld [vmem:[#allocation9 + $0x58] sm:$0xff]
    %v3841 = vld [vmem:[#allocation9 + $0x60] sm:$0xff]
    %v3842 = vld [vmem:[#allocation9 + $0x68] sm:$0xff]
    %v3843 = vld [vmem:[#allocation9 + $0x70] sm:$0xff]
    %v3844 = vld [vmem:[#allocation9 + $0x78] sm:$0xff]
    %v3845 = vld [vmem:[#allocation9 + $0x80] sm:$0xff]
    %v3846 = vld [vmem:[#allocation9 + $0x88] sm:$0xff]
    %v3847 = vld [vmem:[#allocation9 + $0x90] sm:$0xff]
    %v3848 = vld [vmem:[#allocation9 + $0x98] sm:$0xff]
    %v3849 = vld [vmem:[#allocation9 + $0xa0] sm:$0xff]
    %v3850 = vld [vmem:[#allocation9 + $0xa8] sm:$0xff]
    %v3851 = vld [vmem:[#allocation9 + $0xb0] sm:$0xff]
    %v3852 = vld [vmem:[#allocation9 + $0xb8] sm:$0xff]
    %v3853 = vld [vmem:[#allocation9 + $0xc0] sm:$0xff]
    %v3854 = vld [vmem:[#allocation9 + $0xc8] sm:$0xff]
    %v3855 = vld [vmem:[#allocation9 + $0xd0] sm:$0xff]
    %v3856 = vld [vmem:[#allocation9 + $0xd8] sm:$0xff]
    %v3857 = vld [vmem:[#allocation9 + $0xe0] sm:$0xff]
    %v3858 = vld [vmem:[#allocation9 + $0xe8] sm:$0xff]
    %v3859 = vld [vmem:[#allocation9 + $0xf0] sm:$0xff]
    %v3860 = vld [vmem:[#allocation9 + $0xf8] sm:$0xff]
    %v3861 = vld [vmem:[#allocation10] sm:$0xff]
    %v3862 = vld [vmem:[#allocation10 + $0x8] sm:$0xff]
    %v3863 = vld [vmem:[#allocation10 + $0x10] sm:$0xff]
    %v3864 = vld [vmem:[#allocation10 + $0x18] sm:$0xff]
    %v3865 = vld [vmem:[#allocation10 + $0x20] sm:$0xff]
    %v3866 = vld [vmem:[#allocation10 + $0x28] sm:$0xff]
    %v3867 = vld [vmem:[#allocation10 + $0x30] sm:$0xff]
    %v3868 = vld [vmem:[#allocation10 + $0x38] sm:$0xff]
    %v3869 = vld [vmem:[#allocation10 + $0x40] sm:$0xff]
    %v3870 = vld [vmem:[#allocation10 + $0x48] sm:$0xff]
    %v3871 = vld [vmem:[#allocation10 + $0x50] sm:$0xff]
    %v3872 = vld [vmem:[#allocation10 + $0x58] sm:$0xff]
    %v3873 = vld [vmem:[#allocation10 + $0x60] sm:$0xff]
    %v3874 = vld [vmem:[#allocation10 + $0x68] sm:$0xff]
    %v3875 = vld [vmem:[#allocation10 + $0x70] sm:$0xff]
    %v3876 = vld [vmem:[#allocation10 + $0x78] sm:$0xff]
    %v3877 = vld [vmem:[#allocation10 + $0x80] sm:$0xff]
    %v3878 = vld [vmem:[#allocation10 + $0x88] sm:$0xff]
    %v3879 = vld [vmem:[#allocation10 + $0x90] sm:$0xff]
    %v3880 = vld [vmem:[#allocation10 + $0x98] sm:$0xff]
    %v3881 = vld [vmem:[#allocation10 + $0xa0] sm:$0xff]
    %v3882 = vld [vmem:[#allocation10 + $0xa8] sm:$0xff]
    %v3883 = vld [vmem:[#allocation10 + $0xb0] sm:$0xff]
    %v3884 = vld [vmem:[#allocation10 + $0xb8] sm:$0xff]
    %v3885 = vld [vmem:[#allocation10 + $0xc0] sm:$0xff]
    %v3886 = vld [vmem:[#allocation10 + $0xc8] sm:$0xff]
    %v3887 = vld [vmem:[#allocation10 + $0xd0] sm:$0xff]
    %v3888 = vld [vmem:[#allocation10 + $0xd8] sm:$0xff]
    %v3889 = vld [vmem:[#allocation10 + $0xe0] sm:$0xff]
    %v3890 = vld [vmem:[#allocation10 + $0xe8] sm:$0xff]
    %v3891 = vld [vmem:[#allocation10 + $0xf0] sm:$0xff]
    %v3892 = vld [vmem:[#allocation10 + $0xf8] sm:$0xff]
    %v3893 = vld [vmem:[#allocation10 + $0x100] sm:$0xff]
    %v3894 = vld [vmem:[#allocation10 + $0x108] sm:$0xff]
    %v3895 = vld [vmem:[#allocation10 + $0x110] sm:$0xff]
    %v3896 = vld [vmem:[#allocation10 + $0x118] sm:$0xff]
    %v3897 = vld [vmem:[#allocation10 + $0x120] sm:$0xff]
    %v3898 = vld [vmem:[#allocation10 + $0x128] sm:$0xff]
    %v3899 = vld [vmem:[#allocation10 + $0x130] sm:$0xff]
    %v3900 = vld [vmem:[#allocation10 + $0x138] sm:$0xff]
    %v3901 = vld [vmem:[#allocation10 + $0x140] sm:$0xff]
    %v3902 = vld [vmem:[#allocation10 + $0x148] sm:$0xff]
    %v3903 = vld [vmem:[#allocation10 + $0x150] sm:$0xff]
    %v3904 = vld [vmem:[#allocation10 + $0x158] sm:$0xff]
    %v3905 = vld [vmem:[#allocation10 + $0x160] sm:$0xff]
    %v3906 = vld [vmem:[#allocation10 + $0x168] sm:$0xff]
    %v3907 = vld [vmem:[#allocation10 + $0x170] sm:$0xff]
    %v3908 = vld [vmem:[#allocation10 + $0x178] sm:$0xff]
    %v3909 = vld [vmem:[#allocation10 + $0x180] sm:$0xff]
    %v3910 = vld [vmem:[#allocation10 + $0x188] sm:$0xff]
    %v3911 = vld [vmem:[#allocation10 + $0x190] sm:$0xff]
    %v3912 = vld [vmem:[#allocation10 + $0x198] sm:$0xff]
    %v3913 = vld [vmem:[#allocation10 + $0x1a0] sm:$0xff]
    %v3914 = vld [vmem:[#allocation10 + $0x1a8] sm:$0xff]
    %v3915 = vld [vmem:[#allocation10 + $0x1b0] sm:$0xff]
    %v3916 = vld [vmem:[#allocation10 + $0x1b8] sm:$0xff]
    %v3917 = vld [vmem:[#allocation10 + $0x1c0] sm:$0xff]
    %v3918 = vld [vmem:[#allocation10 + $0x1c8] sm:$0xff]
    %v3919 = vld [vmem:[#allocation10 + $0x1d0] sm:$0xff]
    %v3920 = vld [vmem:[#allocation10 + $0x1d8] sm:$0xff]
    %v3921 = vld [vmem:[#allocation10 + $0x1e0] sm:$0xff]
    %v3922 = vld [vmem:[#allocation10 + $0x1e8] sm:$0xff]
    %v3923 = vld [vmem:[#allocation10 + $0x1f0] sm:$0xff]
    %v3924 = vld [vmem:[#allocation10 + $0x1f8] sm:$0xff]
    %v3925 = vld [vmem:[%s16] sm:$0xf]
    loop: start=0, step=1, limit=2
    $region93: #{tpu_custom_call.1} parent=1 // loop_pre_header
      _
    $region94: #{tpu_custom_call.1} parent=1 // loop_header
      %s3927 = sphi 0, %s3931
      %p3928 = scmp.ge.s32.totalorder %s3927, 2
      %v3932 = vphi 0.0, %v5068
      %v3933 = vphi 0.0, %v5066
    $region95: #{tpu_custom_call.1} parent=1 // loop_header_branch
      %3930 = sbr.rel (%p3928) target = $region99
    $region96: #{tpu_custom_call.1} parent=1 // loop_body
      %s3934 = smul.u32 %s3927, 64
      %s3935 = scalar_lea.vmem [#allocation3], %s3934
      %v3936 = vld [vmem:[%s3935] sm:$0xff]
      %v3937 = vld [vmem:[%s3935 + $0x8] sm:$0xff]
      %v3938 = vld [vmem:[%s3935 + $0x10] sm:$0xff]
      %v3939 = vld [vmem:[%s3935 + $0x18] sm:$0xff]
      %v3940 = vld [vmem:[%s3935 + $0x20] sm:$0xff]
      %v3941 = vld [vmem:[%s3935 + $0x28] sm:$0xff]
      %v3942 = vld [vmem:[%s3935 + $0x30] sm:$0xff]
      %v3943 = vld [vmem:[%s3935 + $0x38] sm:$0xff]
      %v3944 = vpack.c.bf16 %v3937, %v3936
      %v3945 = vpack.c.bf16 %v3939, %v3938
      %v3946 = vpack.c.bf16 %v3941, %v3940
      %v3947 = vpack.c.bf16 %v3943, %v3942
      %v3949 = vperm.slane %v3925, 0
      %v3950 = vperm.slane %v3925, 1
      %v3951 = vperm.slane %v3925, 2
      %v3952 = vperm.slane %v3925, 3
      %v3989 = vunpack.c.l.b16 %v3829
      %v3990 = vunpack.c.h.b16 %v3829
      %v3991 = vunpack.c.l.b16 %v3830
      %v3992 = vunpack.c.h.b16 %v3830
      %v3993 = vunpack.c.l.b16 %v3831
      %v3994 = vunpack.c.h.b16 %v3831
      %v3995 = vunpack.c.l.b16 %v3832
      %v3996 = vunpack.c.h.b16 %v3832
      %v3997 = vunpack.c.l.b16 %v3833
      %v3998 = vunpack.c.h.b16 %v3833
      %v3999 = vunpack.c.l.b16 %v3834
      %v4000 = vunpack.c.h.b16 %v3834
      %v4001 = vunpack.c.l.b16 %v3835
      %v4002 = vunpack.c.h.b16 %v3835
      %v4003 = vunpack.c.l.b16 %v3836
      %v4004 = vunpack.c.h.b16 %v3836
      %v4005 = vunpack.c.l.b16 %v3837
      %v4006 = vunpack.c.h.b16 %v3837
      %v4007 = vunpack.c.l.b16 %v3838
      %v4008 = vunpack.c.h.b16 %v3838
      %v4009 = vunpack.c.l.b16 %v3839
      %v4010 = vunpack.c.h.b16 %v3839
      %v4011 = vunpack.c.l.b16 %v3840
      %v4012 = vunpack.c.h.b16 %v3840
      %v4013 = vunpack.c.l.b16 %v3841
      %v4014 = vunpack.c.h.b16 %v3841
      %v4015 = vunpack.c.l.b16 %v3842
      %v4016 = vunpack.c.h.b16 %v3842
      %v4017 = vunpack.c.l.b16 %v3843
      %v4018 = vunpack.c.h.b16 %v3843
      %v4019 = vunpack.c.l.b16 %v3844
      %v4020 = vunpack.c.h.b16 %v3844
      %v4021 = vunpack.c.l.b16 %v3845
      %v4022 = vunpack.c.h.b16 %v3845
      %v4023 = vunpack.c.l.b16 %v3846
      %v4024 = vunpack.c.h.b16 %v3846
      %v4025 = vunpack.c.l.b16 %v3847
      %v4026 = vunpack.c.h.b16 %v3847
      %v4027 = vunpack.c.l.b16 %v3848
      %v4028 = vunpack.c.h.b16 %v3848
      %v4029 = vunpack.c.l.b16 %v3849
      %v4030 = vunpack.c.h.b16 %v3849
      %v4031 = vunpack.c.l.b16 %v3850
      %v4032 = vunpack.c.h.b16 %v3850
      %v4033 = vunpack.c.l.b16 %v3851
      %v4034 = vunpack.c.h.b16 %v3851
      %v4035 = vunpack.c.l.b16 %v3852
      %v4036 = vunpack.c.h.b16 %v3852
      %v4037 = vunpack.c.l.b16 %v3853
      %v4038 = vunpack.c.h.b16 %v3853
      %v4039 = vunpack.c.l.b16 %v3854
      %v4040 = vunpack.c.h.b16 %v3854
      %v4041 = vunpack.c.l.b16 %v3855
      %v4042 = vunpack.c.h.b16 %v3855
      %v4043 = vunpack.c.l.b16 %v3856
      %v4044 = vunpack.c.h.b16 %v3856
      %v4045 = vunpack.c.l.b16 %v3857
      %v4046 = vunpack.c.h.b16 %v3857
      %v4047 = vunpack.c.l.b16 %v3858
      %v4048 = vunpack.c.h.b16 %v3858
      %v4049 = vunpack.c.l.b16 %v3859
      %v4050 = vunpack.c.h.b16 %v3859
      %v4051 = vunpack.c.l.b16 %v3860
      %v4052 = vunpack.c.h.b16 %v3860
      %v4053 = vpack.c.b16 %v3993, %v3989
      %v4054 = vpack.c.b16 %v3994, %v3990
      %v4055 = vpack.c.b16 %v3995, %v3991
      %v4056 = vpack.c.b16 %v3996, %v3992
      %v4057 = vpack.c.b16 %v4001, %v3997
      %v4058 = vpack.c.b16 %v4002, %v3998
      %v4059 = vpack.c.b16 %v4003, %v3999
      %v4060 = vpack.c.b16 %v4004, %v4000
      %v4061 = vpack.c.b16 %v4009, %v4005
      %v4062 = vpack.c.b16 %v4010, %v4006
      %v4063 = vpack.c.b16 %v4011, %v4007
      %v4064 = vpack.c.b16 %v4012, %v4008
      %v4065 = vpack.c.b16 %v4017, %v4013
      %v4066 = vpack.c.b16 %v4018, %v4014
      %v4067 = vpack.c.b16 %v4019, %v4015
      %v4068 = vpack.c.b16 %v4020, %v4016
      %v4069 = vpack.c.b16 %v4025, %v4021
      %v4070 = vpack.c.b16 %v4026, %v4022
      %v4071 = vpack.c.b16 %v4027, %v4023
      %v4072 = vpack.c.b16 %v4028, %v4024
      %v4073 = vpack.c.b16 %v4033, %v4029
      %v4074 = vpack.c.b16 %v4034, %v4030
      %v4075 = vpack.c.b16 %v4035, %v4031
      %v4076 = vpack.c.b16 %v4036, %v4032
      %v4077 = vpack.c.b16 %v4041, %v4037
      %v4078 = vpack.c.b16 %v4042, %v4038
      %v4079 = vpack.c.b16 %v4043, %v4039
      %v4080 = vpack.c.b16 %v4044, %v4040
      %v4081 = vpack.c.b16 %v4049, %v4045
      %v4082 = vpack.c.b16 %v4050, %v4046
      %v4083 = vpack.c.b16 %v4051, %v4047
      %v4084 = vpack.c.b16 %v4052, %v4048
      %4117 = vmatpush.bf16.msra.mxu0 %v4081
      %4118 = vmatpush.bf16.msra.mxu0 %v4077
      %4119 = vmatpush.bf16.msra.mxu0 %v4073
      %4120 = vmatpush.bf16.msra.mxu0 %v4069
      %4121 = vmatpush.bf16.msra.mxu0 %v4065
      %4122 = vmatpush.bf16.msra.mxu0 %v4061
      %4123 = vmatpush.bf16.msra.mxu0 %v4057
      %4124 = vmatpush.bf16.msra.mxu0 %v4053
      %4125 = vmatmul.bf16.gmra.mxu0 %v3944
      %v4126 = vpop.f32.mrf.mxu0
      %v4127 = vadd.f32 %v3949, %v4126
      %v4128 = vpop.f32.mrf.mxu0
      %v4129 = vadd.f32 %v3949, %v4128
      %4130 = vmatmul.bf16.gmra.mxu0 %v3945
      %v4131 = vpop.f32.mrf.mxu0
      %v4132 = vadd.f32 %v3949, %v4131
      %v4133 = vpop.f32.mrf.mxu0
      %v4134 = vadd.f32 %v3949, %v4133
      %4135 = vmatmul.bf16.gmra.mxu0 %v3946
      %v4136 = vpop.f32.mrf.mxu0
      %v4137 = vadd.f32 %v3949, %v4136
      %v4138 = vpop.f32.mrf.mxu0
      %v4139 = vadd.f32 %v3949, %v4138
      %4140 = vmatmul.bf16.gmra.mxu0 %v3947
      %v4141 = vpop.f32.mrf.mxu0
      %v4142 = vadd.f32 %v3949, %v4141
      %v4143 = vpop.f32.mrf.mxu0
      %v4144 = vadd.f32 %v3949, %v4143
      %4145 = vdwg.mxu0
      %4146 = vmatpush.bf16.msra.mxu0 %v4082
      %4147 = vmatpush.bf16.msra.mxu0 %v4078
      %4148 = vmatpush.bf16.msra.mxu0 %v4074
      %4149 = vmatpush.bf16.msra.mxu0 %v4070
      %4150 = vmatpush.bf16.msra.mxu0 %v4066
      %4151 = vmatpush.bf16.msra.mxu0 %v4062
      %4152 = vmatpush.bf16.msra.mxu0 %v4058
      %4153 = vmatpush.bf16.msra.mxu0 %v4054
      %4154 = vmatmul.bf16.gmra.mxu0 %v3944
      %v4155 = vpop.f32.mrf.mxu0
      %v4156 = vadd.f32 %v3950, %v4155
      %v4157 = vpop.f32.mrf.mxu0
      %v4158 = vadd.f32 %v3950, %v4157
      %4159 = vmatmul.bf16.gmra.mxu0 %v3945
      %v4160 = vpop.f32.mrf.mxu0
      %v4161 = vadd.f32 %v3950, %v4160
      %v4162 = vpop.f32.mrf.mxu0
      %v4163 = vadd.f32 %v3950, %v4162
      %4164 = vmatmul.bf16.gmra.mxu0 %v3946
      %v4165 = vpop.f32.mrf.mxu0
      %v4166 = vadd.f32 %v3950, %v4165
      %v4167 = vpop.f32.mrf.mxu0
      %v4168 = vadd.f32 %v3950, %v4167
      %4169 = vmatmul.bf16.gmra.mxu0 %v3947
      %v4170 = vpop.f32.mrf.mxu0
      %v4171 = vadd.f32 %v3950, %v4170
      %v4172 = vpop.f32.mrf.mxu0
      %v4173 = vadd.f32 %v3950, %v4172
      %4174 = vdwg.mxu0
      %4175 = vmatpush.bf16.msra.mxu0 %v4083
      %4176 = vmatpush.bf16.msra.mxu0 %v4079
      %4177 = vmatpush.bf16.msra.mxu0 %v4075
      %4178 = vmatpush.bf16.msra.mxu0 %v4071
      %4179 = vmatpush.bf16.msra.mxu0 %v4067
      %4180 = vmatpush.bf16.msra.mxu0 %v4063
      %4181 = vmatpush.bf16.msra.mxu0 %v4059
      %4182 = vmatpush.bf16.msra.mxu0 %v4055
      %4183 = vmatmul.bf16.gmra.mxu0 %v3944
      %v4184 = vpop.f32.mrf.mxu0
      %v4185 = vadd.f32 %v3951, %v4184
      %v4186 = vpop.f32.mrf.mxu0
      %v4187 = vadd.f32 %v3951, %v4186
      %4188 = vmatmul.bf16.gmra.mxu0 %v3945
      %v4189 = vpop.f32.mrf.mxu0
      %v4190 = vadd.f32 %v3951, %v4189
      %v4191 = vpop.f32.mrf.mxu0
      %v4192 = vadd.f32 %v3951, %v4191
      %4193 = vmatmul.bf16.gmra.mxu0 %v3946
      %v4194 = vpop.f32.mrf.mxu0
      %v4195 = vadd.f32 %v3951, %v4194
      %v4196 = vpop.f32.mrf.mxu0
      %v4197 = vadd.f32 %v3951, %v4196
      %4198 = vmatmul.bf16.gmra.mxu0 %v3947
      %v4199 = vpop.f32.mrf.mxu0
      %v4200 = vadd.f32 %v3951, %v4199
      %v4201 = vpop.f32.mrf.mxu0
      %v4202 = vadd.f32 %v3951, %v4201
      %4203 = vdwg.mxu0
      %4204 = vmatpush.bf16.msra.mxu0 %v4084
      %4205 = vmatpush.bf16.msra.mxu0 %v4080
      %4206 = vmatpush.bf16.msra.mxu0 %v4076
      %4207 = vmatpush.bf16.msra.mxu0 %v4072
      %4208 = vmatpush.bf16.msra.mxu0 %v4068
      %4209 = vmatpush.bf16.msra.mxu0 %v4064
      %4210 = vmatpush.bf16.msra.mxu0 %v4060
      %4211 = vmatpush.bf16.msra.mxu0 %v4056
      %4212 = vmatmul.bf16.gmra.mxu0 %v3944
      %v4213 = vpop.f32.mrf.mxu0
      %v4214 = vadd.f32 %v3952, %v4213
      %v4215 = vpop.f32.mrf.mxu0
      %v4216 = vadd.f32 %v3952, %v4215
      %4217 = vmatmul.bf16.gmra.mxu0 %v3945
      %v4218 = vpop.f32.mrf.mxu0
      %v4219 = vadd.f32 %v3952, %v4218
      %v4220 = vpop.f32.mrf.mxu0
      %v4221 = vadd.f32 %v3952, %v4220
      %4222 = vmatmul.bf16.gmra.mxu0 %v3946
      %v4223 = vpop.f32.mrf.mxu0
      %v4224 = vadd.f32 %v3952, %v4223
      %v4225 = vpop.f32.mrf.mxu0
      %v4226 = vadd.f32 %v3952, %v4225
      %4227 = vmatmul.bf16.gmra.mxu0 %v3947
      %v4228 = vpop.f32.mrf.mxu0
      %v4229 = vadd.f32 %v3952, %v4228
      %v4230 = vpop.f32.mrf.mxu0
      %v4231 = vadd.f32 %v3952, %v4230
      %4232 = vdwg.mxu0
      %4233 = vmatpush.msra.mxu0 %v3921
      %4234 = vmatpush.msra.mxu0 %v3917
      %4235 = vmatpush.msra.mxu0 %v3913
      %4236 = vmatpush.msra.mxu0 %v3909
      %4237 = vmatpush.msra.mxu0 %v3905
      %4238 = vmatpush.msra.mxu0 %v3901
      %4239 = vmatpush.msra.mxu0 %v3897
      %4240 = vmatpush.msra.mxu0 %v3893
      %4241 = vmatpush.msra.mxu0 %v3889
      %4242 = vmatpush.msra.mxu0 %v3885
      %4243 = vmatpush.msra.mxu0 %v3881
      %4244 = vmatpush.msra.mxu0 %v3877
      %4245 = vmatpush.msra.mxu0 %v3873
      %4246 = vmatpush.msra.mxu0 %v3869
      %4247 = vmatpush.msra.mxu0 %v3865
      %4248 = vmatpush.msra.mxu0 %v3861
      %4249 = vmatmul.f32.gmra.mxu0 %v3932
      %v4250 = vpop.f32.mrf.mxu0
      %v4251 = vadd.f32 0.0, %v4250
      %4252 = vdwg.mxu0
      %4253 = vmatpush.msra.mxu0 %v3922
      %4254 = vmatpush.msra.mxu0 %v3918
      %4255 = vmatpush.msra.mxu0 %v3914
      %4256 = vmatpush.msra.mxu0 %v3910
      %4257 = vmatpush.msra.mxu0 %v3906
      %4258 = vmatpush.msra.mxu0 %v3902
      %4259 = vmatpush.msra.mxu0 %v3898
      %4260 = vmatpush.msra.mxu0 %v3894
      %4261 = vmatpush.msra.mxu0 %v3890
      %4262 = vmatpush.msra.mxu0 %v3886
      %4263 = vmatpush.msra.mxu0 %v3882
      %4264 = vmatpush.msra.mxu0 %v3878
      %4265 = vmatpush.msra.mxu0 %v3874
      %4266 = vmatpush.msra.mxu0 %v3870
      %4267 = vmatpush.msra.mxu0 %v3866
      %4268 = vmatpush.msra.mxu0 %v3862
      %4269 = vmatmul.f32.gmra.mxu0 %v3932
      %v4270 = vpop.f32.mrf.mxu0
      %v4271 = vadd.f32 0.0, %v4270
      %4272 = vdwg.mxu0
      %4273 = vmatpush.msra.mxu0 %v3923
      %4274 = vmatpush.msra.mxu0 %v3919
      %4275 = vmatpush.msra.mxu0 %v3915
      %4276 = vmatpush.msra.mxu0 %v3911
      %4277 = vmatpush.msra.mxu0 %v3907
      %4278 = vmatpush.msra.mxu0 %v3903
      %4279 = vmatpush.msra.mxu0 %v3899
      %4280 = vmatpush.msra.mxu0 %v3895
      %4281 = vmatpush.msra.mxu0 %v3891
      %4282 = vmatpush.msra.mxu0 %v3887
      %4283 = vmatpush.msra.mxu0 %v3883
      %4284 = vmatpush.msra.mxu0 %v3879
      %4285 = vmatpush.msra.mxu0 %v3875
      %4286 = vmatpush.msra.mxu0 %v3871
      %4287 = vmatpush.msra.mxu0 %v3867
      %4288 = vmatpush.msra.mxu0 %v3863
      %4289 = vmatmul.f32.gmra.mxu0 %v3932
      %v4290 = vpop.f32.mrf.mxu0
      %v4291 = vadd.f32 0.0, %v4290
      %4292 = vdwg.mxu0
      %4293 = vmatpush.msra.mxu0 %v3924
      %4294 = vmatpush.msra.mxu0 %v3920
      %4295 = vmatpush.msra.mxu0 %v3916
      %4296 = vmatpush.msra.mxu0 %v3912
      %4297 = vmatpush.msra.mxu0 %v3908
      %4298 = vmatpush.msra.mxu0 %v3904
      %4299 = vmatpush.msra.mxu0 %v3900
      %4300 = vmatpush.msra.mxu0 %v3896
      %4301 = vmatpush.msra.mxu0 %v3892
      %4302 = vmatpush.msra.mxu0 %v3888
      %4303 = vmatpush.msra.mxu0 %v3884
      %4304 = vmatpush.msra.mxu0 %v3880
      %4305 = vmatpush.msra.mxu0 %v3876
      %4306 = vmatpush.msra.mxu0 %v3872
      %4307 = vmatpush.msra.mxu0 %v3868
      %4308 = vmatpush.msra.mxu0 %v3864
      %4309 = vmatmul.f32.gmra.mxu0 %v3932
      %v4310 = vpop.f32.mrf.mxu0
      %v4311 = vadd.f32 0.0, %v4310
      %4312 = vdwg.mxu0
      %v4313 = vadd.f32 %v4127, %v4251
      %v4314 = vadd.f32 %v4156, %v4271
      %v4315 = vadd.f32 %v4185, %v4291
      %v4316 = vadd.f32 %v4214, %v4311
      %v4317 = vmul.f32 %v4313, 0.5
      %v4318 = vmul.f32 %v4314, 0.5
      %v4319 = vmul.f32 %v4315, 0.5
      %v4320 = vtanh.pop %v4317
      %v4321 = vtanh.pop %v4318
      %v4322 = vtanh.pop %v4319
      %v4323 = vmul.f32 %v4320, 0.5
      %v4324 = vmul.f32 %v4321, 0.5
      %v4325 = vmul.f32 %v4322, 0.5
      %v4326 = vadd.f32 %v4323, 0.5
      %v4327 = vadd.f32 %v4324, 0.5
      %v4328 = vadd.f32 %v4325, 0.5
      %v4329 = vtanh.pop %v4316
      %v4330 = vmul.f32 %v4327, %v3933
      %v4331 = vmul.f32 %v4326, %v4329
      %v4332 = vadd.f32 %v4330, %v4331
      %v4333 = vtanh.pop %v4332
      %v4334 = vmul.f32 %v4328, %v4333
      %s4335 = scalar_lea.vmem [#allocation12], %s3934
      %4336 = vst [vmem:[%s4335] sm:$0xff] %v4334
      %4337 = vmatpush.msra.mxu0 %v3921
      %4338 = vmatpush.msra.mxu0 %v3917
      %4339 = vmatpush.msra.mxu0 %v3913
      %4340 = vmatpush.msra.mxu0 %v3909
      %4341 = vmatpush.msra.mxu0 %v3905
      %4342 = vmatpush.msra.mxu0 %v3901
      %4343 = vmatpush.msra.mxu0 %v3897
      %4344 = vmatpush.msra.mxu0 %v3893
      %4345 = vmatpush.msra.mxu0 %v3889
      %4346 = vmatpush.msra.mxu0 %v3885
      %4347 = vmatpush.msra.mxu0 %v3881
      %4348 = vmatpush.msra.mxu0 %v3877
      %4349 = vmatpush.msra.mxu0 %v3873
      %4350 = vmatpush.msra.mxu0 %v3869
      %4351 = vmatpush.msra.mxu0 %v3865
      %4352 = vmatpush.msra.mxu0 %v3861
      %4353 = vmatmul.f32.gmra.mxu0 %v4334
      %v4354 = vpop.f32.mrf.mxu0
      %v4355 = vadd.f32 0.0, %v4354
      %4356 = vdwg.mxu0
      %4357 = vmatpush.msra.mxu0 %v3922
      %4358 = vmatpush.msra.mxu0 %v3918
      %4359 = vmatpush.msra.mxu0 %v3914
      %4360 = vmatpush.msra.mxu0 %v3910
      %4361 = vmatpush.msra.mxu0 %v3906
      %4362 = vmatpush.msra.mxu0 %v3902
      %4363 = vmatpush.msra.mxu0 %v3898
      %4364 = vmatpush.msra.mxu0 %v3894
      %4365 = vmatpush.msra.mxu0 %v3890
      %4366 = vmatpush.msra.mxu0 %v3886
      %4367 = vmatpush.msra.mxu0 %v3882
      %4368 = vmatpush.msra.mxu0 %v3878
      %4369 = vmatpush.msra.mxu0 %v3874
      %4370 = vmatpush.msra.mxu0 %v3870
      %4371 = vmatpush.msra.mxu0 %v3866
      %4372 = vmatpush.msra.mxu0 %v3862
      %4373 = vmatmul.f32.gmra.mxu0 %v4334
      %v4374 = vpop.f32.mrf.mxu0
      %v4375 = vadd.f32 0.0, %v4374
      %4376 = vdwg.mxu0
      %4377 = vmatpush.msra.mxu0 %v3923
      %4378 = vmatpush.msra.mxu0 %v3919
      %4379 = vmatpush.msra.mxu0 %v3915
      %4380 = vmatpush.msra.mxu0 %v3911
      %4381 = vmatpush.msra.mxu0 %v3907
      %4382 = vmatpush.msra.mxu0 %v3903
      %4383 = vmatpush.msra.mxu0 %v3899
      %4384 = vmatpush.msra.mxu0 %v3895
      %4385 = vmatpush.msra.mxu0 %v3891
      %4386 = vmatpush.msra.mxu0 %v3887
      %4387 = vmatpush.msra.mxu0 %v3883
      %4388 = vmatpush.msra.mxu0 %v3879
      %4389 = vmatpush.msra.mxu0 %v3875
      %4390 = vmatpush.msra.mxu0 %v3871
      %4391 = vmatpush.msra.mxu0 %v3867
      %4392 = vmatpush.msra.mxu0 %v3863
      %4393 = vmatmul.f32.gmra.mxu0 %v4334
      %v4394 = vpop.f32.mrf.mxu0
      %v4395 = vadd.f32 0.0, %v4394
      %4396 = vdwg.mxu0
      %4397 = vmatpush.msra.mxu0 %v3924
      %4398 = vmatpush.msra.mxu0 %v3920
      %4399 = vmatpush.msra.mxu0 %v3916
      %4400 = vmatpush.msra.mxu0 %v3912
      %4401 = vmatpush.msra.mxu0 %v3908
      %4402 = vmatpush.msra.mxu0 %v3904
      %4403 = vmatpush.msra.mxu0 %v3900
      %4404 = vmatpush.msra.mxu0 %v3896
      %4405 = vmatpush.msra.mxu0 %v3892
      %4406 = vmatpush.msra.mxu0 %v3888
      %4407 = vmatpush.msra.mxu0 %v3884
      %4408 = vmatpush.msra.mxu0 %v3880
      %4409 = vmatpush.msra.mxu0 %v3876
      %4410 = vmatpush.msra.mxu0 %v3872
      %4411 = vmatpush.msra.mxu0 %v3868
      %4412 = vmatpush.msra.mxu0 %v3864
      %4413 = vmatmul.f32.gmra.mxu0 %v4334
      %v4414 = vpop.f32.mrf.mxu0
      %v4415 = vadd.f32 0.0, %v4414
      %4416 = vdwg.mxu0
      %v4417 = vadd.f32 %v4129, %v4355
      %v4418 = vadd.f32 %v4158, %v4375
      %v4419 = vadd.f32 %v4187, %v4395
      %v4420 = vadd.f32 %v4216, %v4415
      %v4421 = vmul.f32 %v4417, 0.5
      %v4422 = vmul.f32 %v4418, 0.5
      %v4423 = vmul.f32 %v4419, 0.5
      %v4424 = vtanh.pop %v4421
      %v4425 = vtanh.pop %v4422
      %v4426 = vtanh.pop %v4423
      %v4427 = vmul.f32 %v4424, 0.5
      %v4428 = vmul.f32 %v4425, 0.5
      %v4429 = vmul.f32 %v4426, 0.5
      %v4430 = vadd.f32 %v4427, 0.5
      %v4431 = vadd.f32 %v4428, 0.5
      %v4432 = vadd.f32 %v4429, 0.5
      %v4433 = vtanh.pop %v4420
      %v4434 = vmul.f32 %v4431, %v4332
      %v4435 = vmul.f32 %v4430, %v4433
      %v4436 = vadd.f32 %v4434, %v4435
      %v4437 = vtanh.pop %v4436
      %v4438 = vmul.f32 %v4432, %v4437
      %s4439 = sadd.s32 %s3934, 8
      %s4440 = scalar_lea.vmem [#allocation12], %s4439
      %4441 = vst [vmem:[%s4440] sm:$0xff] %v4438
      %4442 = vmatpush.msra.mxu0 %v3921
      %4443 = vmatpush.msra.mxu0 %v3917
      %4444 = vmatpush.msra.mxu0 %v3913
      %4445 = vmatpush.msra.mxu0 %v3909
      %4446 = vmatpush.msra.mxu0 %v3905
      %4447 = vmatpush.msra.mxu0 %v3901
      %4448 = vmatpush.msra.mxu0 %v3897
      %4449 = vmatpush.msra.mxu0 %v3893
      %4450 = vmatpush.msra.mxu0 %v3889
      %4451 = vmatpush.msra.mxu0 %v3885
      %4452 = vmatpush.msra.mxu0 %v3881
      %4453 = vmatpush.msra.mxu0 %v3877
      %4454 = vmatpush.msra.mxu0 %v3873
      %4455 = vmatpush.msra.mxu0 %v3869
      %4456 = vmatpush.msra.mxu0 %v3865
      %4457 = vmatpush.msra.mxu0 %v3861
      %4458 = vmatmul.f32.gmra.mxu0 %v4438
      %v4459 = vpop.f32.mrf.mxu0
      %v4460 = vadd.f32 0.0, %v4459
      %4461 = vdwg.mxu0
      %4462 = vmatpush.msra.mxu0 %v3922
      %4463 = vmatpush.msra.mxu0 %v3918
      %4464 = vmatpush.msra.mxu0 %v3914
      %4465 = vmatpush.msra.mxu0 %v3910
      %4466 = vmatpush.msra.mxu0 %v3906
      %4467 = vmatpush.msra.mxu0 %v3902
      %4468 = vmatpush.msra.mxu0 %v3898
      %4469 = vmatpush.msra.mxu0 %v3894
      %4470 = vmatpush.msra.mxu0 %v3890
      %4471 = vmatpush.msra.mxu0 %v3886
      %4472 = vmatpush.msra.mxu0 %v3882
      %4473 = vmatpush.msra.mxu0 %v3878
      %4474 = vmatpush.msra.mxu0 %v3874
      %4475 = vmatpush.msra.mxu0 %v3870
      %4476 = vmatpush.msra.mxu0 %v3866
      %4477 = vmatpush.msra.mxu0 %v3862
      %4478 = vmatmul.f32.gmra.mxu0 %v4438
      %v4479 = vpop.f32.mrf.mxu0
      %v4480 = vadd.f32 0.0, %v4479
      %4481 = vdwg.mxu0
      %4482 = vmatpush.msra.mxu0 %v3923
      %4483 = vmatpush.msra.mxu0 %v3919
      %4484 = vmatpush.msra.mxu0 %v3915
      %4485 = vmatpush.msra.mxu0 %v3911
      %4486 = vmatpush.msra.mxu0 %v3907
      %4487 = vmatpush.msra.mxu0 %v3903
      %4488 = vmatpush.msra.mxu0 %v3899
      %4489 = vmatpush.msra.mxu0 %v3895
      %4490 = vmatpush.msra.mxu0 %v3891
      %4491 = vmatpush.msra.mxu0 %v3887
      %4492 = vmatpush.msra.mxu0 %v3883
      %4493 = vmatpush.msra.mxu0 %v3879
      %4494 = vmatpush.msra.mxu0 %v3875
      %4495 = vmatpush.msra.mxu0 %v3871
      %4496 = vmatpush.msra.mxu0 %v3867
      %4497 = vmatpush.msra.mxu0 %v3863
      %4498 = vmatmul.f32.gmra.mxu0 %v4438
      %v4499 = vpop.f32.mrf.mxu0
      %v4500 = vadd.f32 0.0, %v4499
      %4501 = vdwg.mxu0
      %4502 = vmatpush.msra.mxu0 %v3924
      %4503 = vmatpush.msra.mxu0 %v3920
      %4504 = vmatpush.msra.mxu0 %v3916
      %4505 = vmatpush.msra.mxu0 %v3912
      %4506 = vmatpush.msra.mxu0 %v3908
      %4507 = vmatpush.msra.mxu0 %v3904
      %4508 = vmatpush.msra.mxu0 %v3900
      %4509 = vmatpush.msra.mxu0 %v3896
      %4510 = vmatpush.msra.mxu0 %v3892
      %4511 = vmatpush.msra.mxu0 %v3888
      %4512 = vmatpush.msra.mxu0 %v3884
      %4513 = vmatpush.msra.mxu0 %v3880
      %4514 = vmatpush.msra.mxu0 %v3876
      %4515 = vmatpush.msra.mxu0 %v3872
      %4516 = vmatpush.msra.mxu0 %v3868
      %4517 = vmatpush.msra.mxu0 %v3864
      %4518 = vmatmul.f32.gmra.mxu0 %v4438
      %v4519 = vpop.f32.mrf.mxu0
      %v4520 = vadd.f32 0.0, %v4519
      %4521 = vdwg.mxu0
      %v4522 = vadd.f32 %v4132, %v4460
      %v4523 = vadd.f32 %v4161, %v4480
      %v4524 = vadd.f32 %v4190, %v4500
      %v4525 = vadd.f32 %v4219, %v4520
      %v4526 = vmul.f32 %v4522, 0.5
      %v4527 = vmul.f32 %v4523, 0.5
      %v4528 = vmul.f32 %v4524, 0.5
      %v4529 = vtanh.pop %v4526
      %v4530 = vtanh.pop %v4527
      %v4531 = vtanh.pop %v4528
      %v4532 = vmul.f32 %v4529, 0.5
      %v4533 = vmul.f32 %v4530, 0.5
      %v4534 = vmul.f32 %v4531, 0.5
      %v4535 = vadd.f32 %v4532, 0.5
      %v4536 = vadd.f32 %v4533, 0.5
      %v4537 = vadd.f32 %v4534, 0.5
      %v4538 = vtanh.pop %v4525
      %v4539 = vmul.f32 %v4536, %v4436
      %v4540 = vmul.f32 %v4535, %v4538
      %v4541 = vadd.f32 %v4539, %v4540
      %v4542 = vtanh.pop %v4541
      %v4543 = vmul.f32 %v4537, %v4542
      %s4544 = sadd.s32 %s3934, 16
      %s4545 = scalar_lea.vmem [#allocation12], %s4544
      %4546 = vst [vmem:[%s4545] sm:$0xff] %v4543
      %4547 = vmatpush.msra.mxu0 %v3921
      %4548 = vmatpush.msra.mxu0 %v3917
      %4549 = vmatpush.msra.mxu0 %v3913
      %4550 = vmatpush.msra.mxu0 %v3909
      %4551 = vmatpush.msra.mxu0 %v3905
      %4552 = vmatpush.msra.mxu0 %v3901
      %4553 = vmatpush.msra.mxu0 %v3897
      %4554 = vmatpush.msra.mxu0 %v3893
      %4555 = vmatpush.msra.mxu0 %v3889
      %4556 = vmatpush.msra.mxu0 %v3885
      %4557 = vmatpush.msra.mxu0 %v3881
      %4558 = vmatpush.msra.mxu0 %v3877
      %4559 = vmatpush.msra.mxu0 %v3873
      %4560 = vmatpush.msra.mxu0 %v3869
      %4561 = vmatpush.msra.mxu0 %v3865
      %4562 = vmatpush.msra.mxu0 %v3861
      %4563 = vmatmul.f32.gmra.mxu0 %v4543
      %v4564 = vpop.f32.mrf.mxu0
      %v4565 = vadd.f32 0.0, %v4564
      %4566 = vdwg.mxu0
      %4567 = vmatpush.msra.mxu0 %v3922
      %4568 = vmatpush.msra.mxu0 %v3918
      %4569 = vmatpush.msra.mxu0 %v3914
      %4570 = vmatpush.msra.mxu0 %v3910
      %4571 = vmatpush.msra.mxu0 %v3906
      %4572 = vmatpush.msra.mxu0 %v3902
      %4573 = vmatpush.msra.mxu0 %v3898
      %4574 = vmatpush.msra.mxu0 %v3894
      %4575 = vmatpush.msra.mxu0 %v3890
      %4576 = vmatpush.msra.mxu0 %v3886
      %4577 = vmatpush.msra.mxu0 %v3882
      %4578 = vmatpush.msra.mxu0 %v3878
      %4579 = vmatpush.msra.mxu0 %v3874
      %4580 = vmatpush.msra.mxu0 %v3870
      %4581 = vmatpush.msra.mxu0 %v3866
      %4582 = vmatpush.msra.mxu0 %v3862
      %4583 = vmatmul.f32.gmra.mxu0 %v4543
      %v4584 = vpop.f32.mrf.mxu0
      %v4585 = vadd.f32 0.0, %v4584
      %4586 = vdwg.mxu0
      %4587 = vmatpush.msra.mxu0 %v3923
      %4588 = vmatpush.msra.mxu0 %v3919
      %4589 = vmatpush.msra.mxu0 %v3915
      %4590 = vmatpush.msra.mxu0 %v3911
      %4591 = vmatpush.msra.mxu0 %v3907
      %4592 = vmatpush.msra.mxu0 %v3903
      %4593 = vmatpush.msra.mxu0 %v3899
      %4594 = vmatpush.msra.mxu0 %v3895
      %4595 = vmatpush.msra.mxu0 %v3891
      %4596 = vmatpush.msra.mxu0 %v3887
      %4597 = vmatpush.msra.mxu0 %v3883
      %4598 = vmatpush.msra.mxu0 %v3879
      %4599 = vmatpush.msra.mxu0 %v3875
      %4600 = vmatpush.msra.mxu0 %v3871
      %4601 = vmatpush.msra.mxu0 %v3867
      %4602 = vmatpush.msra.mxu0 %v3863
      %4603 = vmatmul.f32.gmra.mxu0 %v4543
      %v4604 = vpop.f32.mrf.mxu0
      %v4605 = vadd.f32 0.0, %v4604
      %4606 = vdwg.mxu0
      %4607 = vmatpush.msra.mxu0 %v3924
      %4608 = vmatpush.msra.mxu0 %v3920
      %4609 = vmatpush.msra.mxu0 %v3916
      %4610 = vmatpush.msra.mxu0 %v3912
      %4611 = vmatpush.msra.mxu0 %v3908
      %4612 = vmatpush.msra.mxu0 %v3904
      %4613 = vmatpush.msra.mxu0 %v3900
      %4614 = vmatpush.msra.mxu0 %v3896
      %4615 = vmatpush.msra.mxu0 %v3892
      %4616 = vmatpush.msra.mxu0 %v3888
      %4617 = vmatpush.msra.mxu0 %v3884
      %4618 = vmatpush.msra.mxu0 %v3880
      %4619 = vmatpush.msra.mxu0 %v3876
      %4620 = vmatpush.msra.mxu0 %v3872
      %4621 = vmatpush.msra.mxu0 %v3868
      %4622 = vmatpush.msra.mxu0 %v3864
      %4623 = vmatmul.f32.gmra.mxu0 %v4543
      %v4624 = vpop.f32.mrf.mxu0
      %v4625 = vadd.f32 0.0, %v4624
      %4626 = vdwg.mxu0
      %v4627 = vadd.f32 %v4134, %v4565
      %v4628 = vadd.f32 %v4163, %v4585
      %v4629 = vadd.f32 %v4192, %v4605
      %v4630 = vadd.f32 %v4221, %v4625
      %v4631 = vmul.f32 %v4627, 0.5
      %v4632 = vmul.f32 %v4628, 0.5
      %v4633 = vmul.f32 %v4629, 0.5
      %v4634 = vtanh.pop %v4631
      %v4635 = vtanh.pop %v4632
      %v4636 = vtanh.pop %v4633
      %v4637 = vmul.f32 %v4634, 0.5
      %v4638 = vmul.f32 %v4635, 0.5
      %v4639 = vmul.f32 %v4636, 0.5
      %v4640 = vadd.f32 %v4637, 0.5
      %v4641 = vadd.f32 %v4638, 0.5
      %v4642 = vadd.f32 %v4639, 0.5
      %v4643 = vtanh.pop %v4630
      %v4644 = vmul.f32 %v4641, %v4541
      %v4645 = vmul.f32 %v4640, %v4643
      %v4646 = vadd.f32 %v4644, %v4645
      %v4647 = vtanh.pop %v4646
      %v4648 = vmul.f32 %v4642, %v4647
      %s4649 = sadd.s32 %s3934, 24
      %s4650 = scalar_lea.vmem [#allocation12], %s4649
      %4651 = vst [vmem:[%s4650] sm:$0xff] %v4648
      %4652 = vmatpush.msra.mxu0 %v3921
      %4653 = vmatpush.msra.mxu0 %v3917
      %4654 = vmatpush.msra.mxu0 %v3913
      %4655 = vmatpush.msra.mxu0 %v3909
      %4656 = vmatpush.msra.mxu0 %v3905
      %4657 = vmatpush.msra.mxu0 %v3901
      %4658 = vmatpush.msra.mxu0 %v3897
      %4659 = vmatpush.msra.mxu0 %v3893
      %4660 = vmatpush.msra.mxu0 %v3889
      %4661 = vmatpush.msra.mxu0 %v3885
      %4662 = vmatpush.msra.mxu0 %v3881
      %4663 = vmatpush.msra.mxu0 %v3877
      %4664 = vmatpush.msra.mxu0 %v3873
      %4665 = vmatpush.msra.mxu0 %v3869
      %4666 = vmatpush.msra.mxu0 %v3865
      %4667 = vmatpush.msra.mxu0 %v3861
      %4668 = vmatmul.f32.gmra.mxu0 %v4648
      %v4669 = vpop.f32.mrf.mxu0
      %v4670 = vadd.f32 0.0, %v4669
      %4671 = vdwg.mxu0
      %4672 = vmatpush.msra.mxu0 %v3922
      %4673 = vmatpush.msra.mxu0 %v3918
      %4674 = vmatpush.msra.mxu0 %v3914
      %4675 = vmatpush.msra.mxu0 %v3910
      %4676 = vmatpush.msra.mxu0 %v3906
      %4677 = vmatpush.msra.mxu0 %v3902
      %4678 = vmatpush.msra.mxu0 %v3898
      %4679 = vmatpush.msra.mxu0 %v3894
      %4680 = vmatpush.msra.mxu0 %v3890
      %4681 = vmatpush.msra.mxu0 %v3886
      %4682 = vmatpush.msra.mxu0 %v3882
      %4683 = vmatpush.msra.mxu0 %v3878
      %4684 = vmatpush.msra.mxu0 %v3874
      %4685 = vmatpush.msra.mxu0 %v3870
      %4686 = vmatpush.msra.mxu0 %v3866
      %4687 = vmatpush.msra.mxu0 %v3862
      %4688 = vmatmul.f32.gmra.mxu0 %v4648
      %v4689 = vpop.f32.mrf.mxu0
      %v4690 = vadd.f32 0.0, %v4689
      %4691 = vdwg.mxu0
      %4692 = vmatpush.msra.mxu0 %v3923
      %4693 = vmatpush.msra.mxu0 %v3919
      %4694 = vmatpush.msra.mxu0 %v3915
      %4695 = vmatpush.msra.mxu0 %v3911
      %4696 = vmatpush.msra.mxu0 %v3907
      %4697 = vmatpush.msra.mxu0 %v3903
      %4698 = vmatpush.msra.mxu0 %v3899
      %4699 = vmatpush.msra.mxu0 %v3895
      %4700 = vmatpush.msra.mxu0 %v3891
      %4701 = vmatpush.msra.mxu0 %v3887
      %4702 = vmatpush.msra.mxu0 %v3883
      %4703 = vmatpush.msra.mxu0 %v3879
      %4704 = vmatpush.msra.mxu0 %v3875
      %4705 = vmatpush.msra.mxu0 %v3871
      %4706 = vmatpush.msra.mxu0 %v3867
      %4707 = vmatpush.msra.mxu0 %v3863
      %4708 = vmatmul.f32.gmra.mxu0 %v4648
      %v4709 = vpop.f32.mrf.mxu0
      %v4710 = vadd.f32 0.0, %v4709
      %4711 = vdwg.mxu0
      %4712 = vmatpush.msra.mxu0 %v3924
      %4713 = vmatpush.msra.mxu0 %v3920
      %4714 = vmatpush.msra.mxu0 %v3916
      %4715 = vmatpush.msra.mxu0 %v3912
      %4716 = vmatpush.msra.mxu0 %v3908
      %4717 = vmatpush.msra.mxu0 %v3904
      %4718 = vmatpush.msra.mxu0 %v3900
      %4719 = vmatpush.msra.mxu0 %v3896
      %4720 = vmatpush.msra.mxu0 %v3892
      %4721 = vmatpush.msra.mxu0 %v3888
      %4722 = vmatpush.msra.mxu0 %v3884
      %4723 = vmatpush.msra.mxu0 %v3880
      %4724 = vmatpush.msra.mxu0 %v3876
      %4725 = vmatpush.msra.mxu0 %v3872
      %4726 = vmatpush.msra.mxu0 %v3868
      %4727 = vmatpush.msra.mxu0 %v3864
      %4728 = vmatmul.f32.gmra.mxu0 %v4648
      %v4729 = vpop.f32.mrf.mxu0
      %v4730 = vadd.f32 0.0, %v4729
      %4731 = vdwg.mxu0
      %v4732 = vadd.f32 %v4137, %v4670
      %v4733 = vadd.f32 %v4166, %v4690
      %v4734 = vadd.f32 %v4195, %v4710
      %v4735 = vadd.f32 %v4224, %v4730
      %v4736 = vmul.f32 %v4732, 0.5
      %v4737 = vmul.f32 %v4733, 0.5
      %v4738 = vmul.f32 %v4734, 0.5
      %v4739 = vtanh.pop %v4736
      %v4740 = vtanh.pop %v4737
      %v4741 = vtanh.pop %v4738
      %v4742 = vmul.f32 %v4739, 0.5
      %v4743 = vmul.f32 %v4740, 0.5
      %v4744 = vmul.f32 %v4741, 0.5
      %v4745 = vadd.f32 %v4742, 0.5
      %v4746 = vadd.f32 %v4743, 0.5
      %v4747 = vadd.f32 %v4744, 0.5
      %v4748 = vtanh.pop %v4735
      %v4749 = vmul.f32 %v4746, %v4646
      %v4750 = vmul.f32 %v4745, %v4748
      %v4751 = vadd.f32 %v4749, %v4750
      %v4752 = vtanh.pop %v4751
      %v4753 = vmul.f32 %v4747, %v4752
      %s4754 = sadd.s32 %s3934, 32
      %s4755 = scalar_lea.vmem [#allocation12], %s4754
      %4756 = vst [vmem:[%s4755] sm:$0xff] %v4753
      %4757 = vmatpush.msra.mxu0 %v3921
      %4758 = vmatpush.msra.mxu0 %v3917
      %4759 = vmatpush.msra.mxu0 %v3913
      %4760 = vmatpush.msra.mxu0 %v3909
      %4761 = vmatpush.msra.mxu0 %v3905
      %4762 = vmatpush.msra.mxu0 %v3901
      %4763 = vmatpush.msra.mxu0 %v3897
      %4764 = vmatpush.msra.mxu0 %v3893
      %4765 = vmatpush.msra.mxu0 %v3889
      %4766 = vmatpush.msra.mxu0 %v3885
      %4767 = vmatpush.msra.mxu0 %v3881
      %4768 = vmatpush.msra.mxu0 %v3877
      %4769 = vmatpush.msra.mxu0 %v3873
      %4770 = vmatpush.msra.mxu0 %v3869
      %4771 = vmatpush.msra.mxu0 %v3865
      %4772 = vmatpush.msra.mxu0 %v3861
      %4773 = vmatmul.f32.gmra.mxu0 %v4753
      %v4774 = vpop.f32.mrf.mxu0
      %v4775 = vadd.f32 0.0, %v4774
      %4776 = vdwg.mxu0
      %4777 = vmatpush.msra.mxu0 %v3922
      %4778 = vmatpush.msra.mxu0 %v3918
      %4779 = vmatpush.msra.mxu0 %v3914
      %4780 = vmatpush.msra.mxu0 %v3910
      %4781 = vmatpush.msra.mxu0 %v3906
      %4782 = vmatpush.msra.mxu0 %v3902
      %4783 = vmatpush.msra.mxu0 %v3898
      %4784 = vmatpush.msra.mxu0 %v3894
      %4785 = vmatpush.msra.mxu0 %v3890
      %4786 = vmatpush.msra.mxu0 %v3886
      %4787 = vmatpush.msra.mxu0 %v3882
      %4788 = vmatpush.msra.mxu0 %v3878
      %4789 = vmatpush.msra.mxu0 %v3874
      %4790 = vmatpush.msra.mxu0 %v3870
      %4791 = vmatpush.msra.mxu0 %v3866
      %4792 = vmatpush.msra.mxu0 %v3862
      %4793 = vmatmul.f32.gmra.mxu0 %v4753
      %v4794 = vpop.f32.mrf.mxu0
      %v4795 = vadd.f32 0.0, %v4794
      %4796 = vdwg.mxu0
      %4797 = vmatpush.msra.mxu0 %v3923
      %4798 = vmatpush.msra.mxu0 %v3919
      %4799 = vmatpush.msra.mxu0 %v3915
      %4800 = vmatpush.msra.mxu0 %v3911
      %4801 = vmatpush.msra.mxu0 %v3907
      %4802 = vmatpush.msra.mxu0 %v3903
      %4803 = vmatpush.msra.mxu0 %v3899
      %4804 = vmatpush.msra.mxu0 %v3895
      %4805 = vmatpush.msra.mxu0 %v3891
      %4806 = vmatpush.msra.mxu0 %v3887
      %4807 = vmatpush.msra.mxu0 %v3883
      %4808 = vmatpush.msra.mxu0 %v3879
      %4809 = vmatpush.msra.mxu0 %v3875
      %4810 = vmatpush.msra.mxu0 %v3871
      %4811 = vmatpush.msra.mxu0 %v3867
      %4812 = vmatpush.msra.mxu0 %v3863
      %4813 = vmatmul.f32.gmra.mxu0 %v4753
      %v4814 = vpop.f32.mrf.mxu0
      %v4815 = vadd.f32 0.0, %v4814
      %4816 = vdwg.mxu0
      %4817 = vmatpush.msra.mxu0 %v3924
      %4818 = vmatpush.msra.mxu0 %v3920
      %4819 = vmatpush.msra.mxu0 %v3916
      %4820 = vmatpush.msra.mxu0 %v3912
      %4821 = vmatpush.msra.mxu0 %v3908
      %4822 = vmatpush.msra.mxu0 %v3904
      %4823 = vmatpush.msra.mxu0 %v3900
      %4824 = vmatpush.msra.mxu0 %v3896
      %4825 = vmatpush.msra.mxu0 %v3892
      %4826 = vmatpush.msra.mxu0 %v3888
      %4827 = vmatpush.msra.mxu0 %v3884
      %4828 = vmatpush.msra.mxu0 %v3880
      %4829 = vmatpush.msra.mxu0 %v3876
      %4830 = vmatpush.msra.mxu0 %v3872
      %4831 = vmatpush.msra.mxu0 %v3868
      %4832 = vmatpush.msra.mxu0 %v3864
      %4833 = vmatmul.f32.gmra.mxu0 %v4753
      %v4834 = vpop.f32.mrf.mxu0
      %v4835 = vadd.f32 0.0, %v4834
      %4836 = vdwg.mxu0
      %v4837 = vadd.f32 %v4139, %v4775
      %v4838 = vadd.f32 %v4168, %v4795
      %v4839 = vadd.f32 %v4197, %v4815
      %v4840 = vadd.f32 %v4226, %v4835
      %v4841 = vmul.f32 %v4837, 0.5
      %v4842 = vmul.f32 %v4838, 0.5
      %v4843 = vmul.f32 %v4839, 0.5
      %v4844 = vtanh.pop %v4841
      %v4845 = vtanh.pop %v4842
      %v4846 = vtanh.pop %v4843
      %v4847 = vmul.f32 %v4844, 0.5
      %v4848 = vmul.f32 %v4845, 0.5
      %v4849 = vmul.f32 %v4846, 0.5
      %v4850 = vadd.f32 %v4847, 0.5
      %v4851 = vadd.f32 %v4848, 0.5
      %v4852 = vadd.f32 %v4849, 0.5
      %v4853 = vtanh.pop %v4840
      %v4854 = vmul.f32 %v4851, %v4751
      %v4855 = vmul.f32 %v4850, %v4853
      %v4856 = vadd.f32 %v4854, %v4855
      %v4857 = vtanh.pop %v4856
      %v4858 = vmul.f32 %v4852, %v4857
      %s4859 = sadd.s32 %s3934, 40
      %s4860 = scalar_lea.vmem [#allocation12], %s4859
      %4861 = vst [vmem:[%s4860] sm:$0xff] %v4858
      %4862 = vmatpush.msra.mxu0 %v3921
      %4863 = vmatpush.msra.mxu0 %v3917
      %4864 = vmatpush.msra.mxu0 %v3913
      %4865 = vmatpush.msra.mxu0 %v3909
      %4866 = vmatpush.msra.mxu0 %v3905
      %4867 = vmatpush.msra.mxu0 %v3901
      %4868 = vmatpush.msra.mxu0 %v3897
      %4869 = vmatpush.msra.mxu0 %v3893
      %4870 = vmatpush.msra.mxu0 %v3889
      %4871 = vmatpush.msra.mxu0 %v3885
      %4872 = vmatpush.msra.mxu0 %v3881
      %4873 = vmatpush.msra.mxu0 %v3877
      %4874 = vmatpush.msra.mxu0 %v3873
      %4875 = vmatpush.msra.mxu0 %v3869
      %4876 = vmatpush.msra.mxu0 %v3865
      %4877 = vmatpush.msra.mxu0 %v3861
      %4878 = vmatmul.f32.gmra.mxu0 %v4858
      %v4879 = vpop.f32.mrf.mxu0
      %v4880 = vadd.f32 0.0, %v4879
      %4881 = vdwg.mxu0
      %4882 = vmatpush.msra.mxu0 %v3922
      %4883 = vmatpush.msra.mxu0 %v3918
      %4884 = vmatpush.msra.mxu0 %v3914
      %4885 = vmatpush.msra.mxu0 %v3910
      %4886 = vmatpush.msra.mxu0 %v3906
      %4887 = vmatpush.msra.mxu0 %v3902
      %4888 = vmatpush.msra.mxu0 %v3898
      %4889 = vmatpush.msra.mxu0 %v3894
      %4890 = vmatpush.msra.mxu0 %v3890
      %4891 = vmatpush.msra.mxu0 %v3886
      %4892 = vmatpush.msra.mxu0 %v3882
      %4893 = vmatpush.msra.mxu0 %v3878
      %4894 = vmatpush.msra.mxu0 %v3874
      %4895 = vmatpush.msra.mxu0 %v3870
      %4896 = vmatpush.msra.mxu0 %v3866
      %4897 = vmatpush.msra.mxu0 %v3862
      %4898 = vmatmul.f32.gmra.mxu0 %v4858
      %v4899 = vpop.f32.mrf.mxu0
      %v4900 = vadd.f32 0.0, %v4899
      %4901 = vdwg.mxu0
      %4902 = vmatpush.msra.mxu0 %v3923
      %4903 = vmatpush.msra.mxu0 %v3919
      %4904 = vmatpush.msra.mxu0 %v3915
      %4905 = vmatpush.msra.mxu0 %v3911
      %4906 = vmatpush.msra.mxu0 %v3907
      %4907 = vmatpush.msra.mxu0 %v3903
      %4908 = vmatpush.msra.mxu0 %v3899
      %4909 = vmatpush.msra.mxu0 %v3895
      %4910 = vmatpush.msra.mxu0 %v3891
      %4911 = vmatpush.msra.mxu0 %v3887
      %4912 = vmatpush.msra.mxu0 %v3883
      %4913 = vmatpush.msra.mxu0 %v3879
      %4914 = vmatpush.msra.mxu0 %v3875
      %4915 = vmatpush.msra.mxu0 %v3871
      %4916 = vmatpush.msra.mxu0 %v3867
      %4917 = vmatpush.msra.mxu0 %v3863
      %4918 = vmatmul.f32.gmra.mxu0 %v4858
      %v4919 = vpop.f32.mrf.mxu0
      %v4920 = vadd.f32 0.0, %v4919
      %4921 = vdwg.mxu0
      %4922 = vmatpush.msra.mxu0 %v3924
      %4923 = vmatpush.msra.mxu0 %v3920
      %4924 = vmatpush.msra.mxu0 %v3916
      %4925 = vmatpush.msra.mxu0 %v3912
      %4926 = vmatpush.msra.mxu0 %v3908
      %4927 = vmatpush.msra.mxu0 %v3904
      %4928 = vmatpush.msra.mxu0 %v3900
      %4929 = vmatpush.msra.mxu0 %v3896
      %4930 = vmatpush.msra.mxu0 %v3892
      %4931 = vmatpush.msra.mxu0 %v3888
      %4932 = vmatpush.msra.mxu0 %v3884
      %4933 = vmatpush.msra.mxu0 %v3880
      %4934 = vmatpush.msra.mxu0 %v3876
      %4935 = vmatpush.msra.mxu0 %v3872
      %4936 = vmatpush.msra.mxu0 %v3868
      %4937 = vmatpush.msra.mxu0 %v3864
      %4938 = vmatmul.f32.gmra.mxu0 %v4858
      %v4939 = vpop.f32.mrf.mxu0
      %v4940 = vadd.f32 0.0, %v4939
      %4941 = vdwg.mxu0
      %v4942 = vadd.f32 %v4142, %v4880
      %v4943 = vadd.f32 %v4171, %v4900
      %v4944 = vadd.f32 %v4200, %v4920
      %v4945 = vadd.f32 %v4229, %v4940
      %v4946 = vmul.f32 %v4942, 0.5
      %v4947 = vmul.f32 %v4943, 0.5
      %v4948 = vmul.f32 %v4944, 0.5
      %v4949 = vtanh.pop %v4946
      %v4950 = vtanh.pop %v4947
      %v4951 = vtanh.pop %v4948
      %v4952 = vmul.f32 %v4949, 0.5
      %v4953 = vmul.f32 %v4950, 0.5
      %v4954 = vmul.f32 %v4951, 0.5
      %v4955 = vadd.f32 %v4952, 0.5
      %v4956 = vadd.f32 %v4953, 0.5
      %v4957 = vadd.f32 %v4954, 0.5
      %v4958 = vtanh.pop %v4945
      %v4959 = vmul.f32 %v4956, %v4856
      %v4960 = vmul.f32 %v4955, %v4958
      %v4961 = vadd.f32 %v4959, %v4960
      %v4962 = vtanh.pop %v4961
      %v4963 = vmul.f32 %v4957, %v4962
      %s4964 = sadd.s32 %s3934, 48
      %s4965 = scalar_lea.vmem [#allocation12], %s4964
      %4966 = vst [vmem:[%s4965] sm:$0xff] %v4963
      %4967 = vmatpush.msra.mxu0 %v3921
      %4968 = vmatpush.msra.mxu0 %v3917
      %4969 = vmatpush.msra.mxu0 %v3913
      %4970 = vmatpush.msra.mxu0 %v3909
      %4971 = vmatpush.msra.mxu0 %v3905
      %4972 = vmatpush.msra.mxu0 %v3901
      %4973 = vmatpush.msra.mxu0 %v3897
      %4974 = vmatpush.msra.mxu0 %v3893
      %4975 = vmatpush.msra.mxu0 %v3889
      %4976 = vmatpush.msra.mxu0 %v3885
      %4977 = vmatpush.msra.mxu0 %v3881
      %4978 = vmatpush.msra.mxu0 %v3877
      %4979 = vmatpush.msra.mxu0 %v3873
      %4980 = vmatpush.msra.mxu0 %v3869
      %4981 = vmatpush.msra.mxu0 %v3865
      %4982 = vmatpush.msra.mxu0 %v3861
      %4983 = vmatmul.f32.gmra.mxu0 %v4963
      %v4984 = vpop.f32.mrf.mxu0
      %v4985 = vadd.f32 0.0, %v4984
      %4986 = vdwg.mxu0
      %4987 = vmatpush.msra.mxu0 %v3922
      %4988 = vmatpush.msra.mxu0 %v3918
      %4989 = vmatpush.msra.mxu0 %v3914
      %4990 = vmatpush.msra.mxu0 %v3910
      %4991 = vmatpush.msra.mxu0 %v3906
      %4992 = vmatpush.msra.mxu0 %v3902
      %4993 = vmatpush.msra.mxu0 %v3898
      %4994 = vmatpush.msra.mxu0 %v3894
      %4995 = vmatpush.msra.mxu0 %v3890
      %4996 = vmatpush.msra.mxu0 %v3886
      %4997 = vmatpush.msra.mxu0 %v3882
      %4998 = vmatpush.msra.mxu0 %v3878
      %4999 = vmatpush.msra.mxu0 %v3874
      %5000 = vmatpush.msra.mxu0 %v3870
      %5001 = vmatpush.msra.mxu0 %v3866
      %5002 = vmatpush.msra.mxu0 %v3862
      %5003 = vmatmul.f32.gmra.mxu0 %v4963
      %v5004 = vpop.f32.mrf.mxu0
      %v5005 = vadd.f32 0.0, %v5004
      %5006 = vdwg.mxu0
      %5007 = vmatpush.msra.mxu0 %v3923
      %5008 = vmatpush.msra.mxu0 %v3919
      %5009 = vmatpush.msra.mxu0 %v3915
      %5010 = vmatpush.msra.mxu0 %v3911
      %5011 = vmatpush.msra.mxu0 %v3907
      %5012 = vmatpush.msra.mxu0 %v3903
      %5013 = vmatpush.msra.mxu0 %v3899
      %5014 = vmatpush.msra.mxu0 %v3895
      %5015 = vmatpush.msra.mxu0 %v3891
      %5016 = vmatpush.msra.mxu0 %v3887
      %5017 = vmatpush.msra.mxu0 %v3883
      %5018 = vmatpush.msra.mxu0 %v3879
      %5019 = vmatpush.msra.mxu0 %v3875
      %5020 = vmatpush.msra.mxu0 %v3871
      %5021 = vmatpush.msra.mxu0 %v3867
      %5022 = vmatpush.msra.mxu0 %v3863
      %5023 = vmatmul.f32.gmra.mxu0 %v4963
      %v5024 = vpop.f32.mrf.mxu0
      %v5025 = vadd.f32 0.0, %v5024
      %5026 = vdwg.mxu0
      %5027 = vmatpush.msra.mxu0 %v3924
      %5028 = vmatpush.msra.mxu0 %v3920
      %5029 = vmatpush.msra.mxu0 %v3916
      %5030 = vmatpush.msra.mxu0 %v3912
      %5031 = vmatpush.msra.mxu0 %v3908
      %5032 = vmatpush.msra.mxu0 %v3904
      %5033 = vmatpush.msra.mxu0 %v3900
      %5034 = vmatpush.msra.mxu0 %v3896
      %5035 = vmatpush.msra.mxu0 %v3892
      %5036 = vmatpush.msra.mxu0 %v3888
      %5037 = vmatpush.msra.mxu0 %v3884
      %5038 = vmatpush.msra.mxu0 %v3880
      %5039 = vmatpush.msra.mxu0 %v3876
      %5040 = vmatpush.msra.mxu0 %v3872
      %5041 = vmatpush.msra.mxu0 %v3868
      %5042 = vmatpush.msra.mxu0 %v3864
      %5043 = vmatmul.f32.gmra.mxu0 %v4963
      %v5044 = vpop.f32.mrf.mxu0
      %v5045 = vadd.f32 0.0, %v5044
      %5046 = vdwg.mxu0
      %v5047 = vadd.f32 %v4144, %v4985
      %v5048 = vadd.f32 %v4173, %v5005
      %v5049 = vadd.f32 %v4202, %v5025
      %v5050 = vadd.f32 %v4231, %v5045
      %v5051 = vmul.f32 %v5047, 0.5
      %v5052 = vmul.f32 %v5048, 0.5
      %v5053 = vmul.f32 %v5049, 0.5
      %v5054 = vtanh.pop %v5051
      %v5055 = vtanh.pop %v5052
      %v5056 = vtanh.pop %v5053
      %v5057 = vmul.f32 %v5054, 0.5
      %v5058 = vmul.f32 %v5055, 0.5
      %v5059 = vmul.f32 %v5056, 0.5
      %v5060 = vadd.f32 %v5057, 0.5
      %v5061 = vadd.f32 %v5058, 0.5
      %v5062 = vadd.f32 %v5059, 0.5
      %v5063 = vtanh.pop %v5050
      %v5064 = vmul.f32 %v5061, %v4961
      %v5065 = vmul.f32 %v5060, %v5063
      %v5066 = vadd.f32 %v5064, %v5065
      %v5067 = vtanh.pop %v5066
      %v5068 = vmul.f32 %v5062, %v5067
      %s5069 = sadd.s32 %s3934, 56
      %s5070 = scalar_lea.vmem [#allocation12], %s5069
      %5071 = vst [vmem:[%s5070] sm:$0xff] %v5068
    $region97: #{tpu_custom_call.1} parent=1 // loop_footer
      %s3931 = sadd.s32 1, %s3927
    $region98: #{tpu_custom_call.1} parent=1 // loop_footer_branch
      %3926 = sbr.rel target = $region94
    $region99: #{tpu_custom_call.1} parent=1 // loop_exit
      _
    // Predicated region
    $region100: #{tpu_custom_call.1} parent=1 // pred_check
      _
    $region101: #{tpu_custom_call.1} parent=1 // pred_check_branch
      %5073 = sbr.rel (0) target = $region103
    $region102: #{tpu_custom_call.1} parent=1 // pred_region
      %5075 = vsyncadd [#allocation6], 0
      %s5076 = sshll.u32 [#allocation12], 4
      %s5077 = int_to_ptr.vmem [resolvable:$true] %s5076
      %s5078 = sshll.u32 %s17, 4
      %s5079 = int_to_ptr.hbm [resolvable:$true] %s5078
      %5084 = dma.vmem_to_hbm [thread:$0]  %s5077, 2048, %s5079, [#allocation6], 128, 128, 8
    $region103: #{tpu_custom_call.1} parent=1 // pred_fallthru
      _
    // Predicated region
    $region104: #{tpu_custom_call.1} parent=1 // pred_check
      _
    $region105: #{tpu_custom_call.1} parent=1 // pred_check_branch
      %5086 = sbr.rel (0) target = $region107
    $region106: #{tpu_custom_call.1} parent=1 // pred_region
      %5088 = dma.done [#allocation6], 2048
    $region107: #{tpu_custom_call.1} parent=1 // pred_fallthru
      _
    %5089 = vsyncpa [#allocation5], 1
    %5090 = vsyncpa [#allocation8], 1
    %5091 = vsyncpa [#allocation11], 1
    %5092 = vsyncpa [#allocation6], 1

</llo_original>
